<compile_context>
chip_gen: v7x
topology: tpu7x:2x2x1
jax: 0.10.0
libtpu: 0.0.40
codegen_flags: <defaults>
</compile_context>

<pallas_src>
import functools

import jax
import jax.numpy as jnp
from jax.experimental import pallas as pl
from jax.experimental.pallas import tpu as pltpu

EPS = 1e-5      # nn.BatchNorm2d default eps
LANE = 128      # TPU lane width; channel dims padded to a multiple of this


def _round_up(v, m):
    return (v + m - 1) // m * m


def _pick_tile_rows(H, max_tm=32):
    """Largest even divisor of H that is <= max_tm (H is even)."""
    tm = 2
    for d in range(2, min(H, max_tm) + 1, 2):
        if H % d == 0:
            tm = d
    return tm


def _make_conv3x3_kernel(R, HB, Wg, W, Cp, apply_act):
    """3x3 'same' conv (no bias) on TM image rows + BN batch-stat partials.

    apply_act=True additionally applies the previous stage's folded BatchNorm
    (scale/shift) + ReLU to the input while assembling the haloed tile.
    """
    zn = R + 2 * Wg

    def kernel(*refs):
        if apply_act:
            (above_ref, main_ref, below_ref, scale_ref, shift_ref, w_ref,
             y_ref, stats_ref, xs, z) = refs
        else:
            (above_ref, main_ref, below_ref, w_ref,
             y_ref, stats_ref, xs, z) = refs

        t = pl.program_id(1)
        last_t = pl.num_programs(1) - 1

        # Gutter-column validity masks, synthesized in-kernel (no mask input).
        col_r = jax.lax.broadcasted_iota(jnp.int32, (R, 1), 0) % Wg < W
        col_h = jax.lax.broadcasted_iota(jnp.int32, (HB, 1), 0) % Wg < W

        if apply_act:
            def stage_in(v, ok):
                a = v.astype(jnp.float32)
                a = jnp.maximum(a * scale_ref[...] + shift_ref[...], 0.0)
                return jnp.where(ok, a, 0.0).astype(jnp.bfloat16)
        else:
            def stage_in(v, ok):
                # Host-prepared input already has zero gutters / zero channel pad.
                return v

        # ---- assemble the haloed tile (bf16), no full-scratch zeroing ----
        # rows [0, HB)          : 2 image rows above the tile (or zeros at top)
        # rows [HB, HB+R)       : the TM main rows
        # rows [HB+R, HB+R+HB)  : 2 image rows below (or zeros at bottom)
        @pl.when(t > 0)
        def _():
            xs[0:HB, :] = stage_in(above_ref[...], col_h)

        @pl.when(t == 0)
        def _():
            xs[0:HB, :] = jnp.zeros((HB, Cp), jnp.bfloat16)

        xs[HB:HB + R, :] = stage_in(main_ref[...], col_r)

        @pl.when(t < last_t)
        def _():
            xs[HB + R:HB + R + HB, :] = stage_in(below_ref[...], col_h)

        @pl.when(t == last_t)
        def _():
            xs[HB + R:HB + R + HB, :] = jnp.zeros((HB, Cp), jnp.bfloat16)

        # ---- kw-concatenated tap stream: z[q, kw*Cp + c] = xs[... + kw - 1, c]
        z[:, 0 * Cp:1 * Cp] = xs[pl.ds(HB - Wg - 1, zn), :]
        z[:, 1 * Cp:2 * Cp] = xs[pl.ds(HB - Wg, zn), :]
        z[:, 2 * Cp:3 * Cp] = xs[pl.ds(HB - Wg + 1, zn), :]

        # ---- 3x3 conv = three MXU dots with contraction depth K = 3*Cp ----
        acc = jnp.dot(z[pl.ds(0, R), :], w_ref[0],
                      preferred_element_type=jnp.float32)
        acc = acc + jnp.dot(z[pl.ds(Wg, R), :], w_ref[1],
                            preferred_element_type=jnp.float32)
        acc = acc + jnp.dot(z[pl.ds(2 * Wg, R), :], w_ref[2],
                            preferred_element_type=jnp.float32)

        # ---- BN batch-stat partials via two skinny MXU dots (no XLU chain) --
        mrow = (jax.lax.broadcasted_iota(jnp.int32, (1, R), 1) % Wg
                < W).astype(jnp.float32)
        ssum = jnp.dot(mrow, acc, preferred_element_type=jnp.float32)
        ssq = jnp.dot(mrow, acc * acc, preferred_element_type=jnp.float32)

        @pl.when(t == 0)
        def _():
            stats_ref[...] = jnp.zeros_like(stats_ref)

        stats_ref[...] = stats_ref[...] + jnp.concatenate([ssum, ssq], axis=0)

        # Pre-BN conv output, bf16, same flat lane-dense layout.
        y_ref[...] = acc.astype(y_ref.dtype)

    return kernel


def _pool_kernel(y_ref, scale_ref, shift_ref, qt_ref, o_ref):
    """Folded BN2 + ReLU + 2x2 avg-pool on TM rows (pool via one small dot)."""
    a = y_ref[...].astype(jnp.float32)
    a = jnp.maximum(a * scale_ref[...] + shift_ref[...], 0.0)
    o_ref[...] = jnp.dot(qt_ref[...], a, preferred_element_type=jnp.float32)


def conv_block_forward(x, w1, g1, b1, w2, g2, b2, *, tile_rows=None):
    """ConvBlock.forward(x, pool_size=(2,2), pool_type='avg').

    x: (N, C, H, W) f32; w1: (OC, C, 3, 3); w2: (OC, OC, 3, 3);
    g*/b*: (OC,) BatchNorm affine params.  Returns (N, OC, H//2, W//2) f32.
    """
    N, C, H, W = x.shape
    OC = w1.shape[0]
    assert H % 2 == 0 and W % 2 == 0, "2x2 avg-pool needs even spatial dims"
    Ho, Wo = H // 2, W // 2

    Wg = _round_up(W + 2, 8)          # image row width incl. zero gutter
    LF = H * Wg                       # flat rows per image
    Cp = _round_up(C, LANE)
    OCp = _round_up(OC, LANE)

    TM = tile_rows if tile_rows is not None else _pick_tile_rows(H)
    assert TM % 2 == 0 and H % TM == 0 and 2 <= TM <= H
    nT = H // TM                      # row tiles per image
    R = TM * Wg                       # flat rows per tile
    HB = 2 * Wg                       # halo block: 2 image rows
    S = TM // 2                       # halo blocks per tile
    nHB = LF // HB                    # total halo blocks per image (= H//2)

    # ---- one-time layout prep (network boundary only) ----
    xg = jnp.transpose(x, (0, 2, 3, 1))
    xg = jnp.pad(xg, ((0, 0), (0, 0), (0, Wg - W), (0, Cp - C)))
    xg = xg.reshape(N, LF, Cp).astype(jnp.bfloat16)

    def prep_w(w, cin_p):
        oc, cin = w.shape[0], w.shape[1]
        wt = jnp.transpose(w, (2, 3, 1, 0))                     # (kh, kw, cin, oc)
        wt = jnp.pad(wt, ((0, 0), (0, 0), (0, cin_p - cin), (0, OCp - oc)))
        return wt.reshape(3, 3 * cin_p, OCp).astype(jnp.bfloat16)

    w1_t = prep_w(w1, Cp)             # (3, 3*Cp,  OCp)
    w2_t = prep_w(w2, OCp)            # (3, 3*OCp, OCp)

    def pad_c(v):
        return jnp.pad(v.astype(jnp.float32), (0, OCp - OC))

    g1p, b1p, g2p, b2p = pad_c(g1), pad_c(b1), pad_c(g2), pad_c(b2)

    count = float(N * H * W)

    def folded_bn(stats, gamma, beta):
        # stats: (N, 2, OCp); row 0 = sum, row 1 = sum of squares (valid pixels).
        s = jnp.sum(stats[:, 0, :], axis=0)
        ss = jnp.sum(stats[:, 1, :], axis=0)
        mean = s / count
        var = jnp.maximum(ss / count - mean * mean, 0.0)   # biased, like PyTorch
        scale = gamma * jax.lax.rsqrt(var + EPS)
        shift = beta - mean * scale
        return scale.reshape(1, OCp), shift.reshape(1, OCp)

    cparams = pltpu.CompilerParams(
        dimension_semantics=("parallel", "arbitrary"),   # batch || , row tiles seq
        vmem_limit_bytes=48 * 1024 * 1024,               # safe on v7x (64 MiB phys)
    )

    main_map = lambda n, t: (n, t, 0)
    above_map = lambda n, t: (n, jnp.maximum(t * S - 1, 0), 0)
    below_map = lambda n, t: (n, jnp.minimum((t + 1) * S, nHB - 1), 0)

    def conv_call(apply_act, cin_p):
        kern = _make_conv3x3_kernel(R, HB, Wg, W, cin_p, apply_act)
        in_specs = [
            pl.BlockSpec((None, HB, cin_p), above_map),     # 2-row top halo
            pl.BlockSpec((None, R, cin_p), main_map),       # TM main rows
            pl.BlockSpec((None, HB, cin_p), below_map),     # 2-row bottom halo
        ]
        if apply_act:
            in_specs += [pl.BlockSpec((1, cin_p), lambda n, t: (0, 0)),
                         pl.BlockSpec((1, cin_p), lambda n, t: (0, 0))]
        in_specs += [pl.BlockSpec((3, 3 * cin_p, OCp), lambda n, t: (0, 0, 0))]
        return pl.pallas_call(
            kern,
            grid=(N, nT),
            in_specs=in_specs,
            out_specs=(pl.BlockSpec((None, R, OCp), lambda n, t: (n, t, 0)),
                       pl.BlockSpec((None, 2, OCp), lambda n, t: (n, 0, 0))),
            out_shape=(jax.ShapeDtypeStruct((N, LF, OCp), jnp.bfloat16),
                       jax.ShapeDtypeStruct((N, 2, OCp), jnp.float32)),
            scratch_shapes=[pltpu.VMEM((R + 2 * HB, cin_p), jnp.bfloat16),
                            pltpu.VMEM((R + 2 * Wg, 3 * cin_p), jnp.bfloat16)],
            compiler_params=cparams,
            cost_estimate=pl.CostEstimate(
                flops=2 * N * LF * 9 * cin_p * OCp,
                transcendentals=0,
                bytes_accessed=(N * LF * (cin_p + OCp) * 2
                                + 9 * cin_p * OCp * 2 + N * 2 * OCp * 4)),
        )

    # ---- stage 1: conv1 + BN1 batch-stat partials ----
    y1, stats1 = conv_call(False, Cp)(xg, xg, xg, w1_t)
    scale1, shift1 = folded_bn(stats1, g1p, b1p)

    # ---- stage 2: (BN1 + ReLU fused) -> conv2 + BN2 batch-stat partials ----
    y2, stats2 = conv_call(True, OCp)(y1, y1, y1, scale1, shift1, w2_t)
    scale2, shift2 = folded_bn(stats2, g2p, b2p)

    # ---- stage 3: BN2 + ReLU + 2x2 avg-pool (row-tiled, no relayout) ----
    P2 = S * Wo                        # pooled outputs per tile (row-major ho,wo)
    p = jnp.arange(P2)
    r = jnp.arange(R)
    tl = 2 * (p // Wo) * Wg + 2 * (p % Wo)      # top-left flat index of each window
    hit = ((r[None, :] == tl[:, None]) | (r[None, :] == tl[:, None] + 1) |
           (r[None, :] == tl[:, None] + Wg) | (r[None, :] == tl[:, None] + Wg + 1))
    qt = hit.astype(jnp.float32) * 0.25         # (P2, R) selection/scale matrix

    pooled = pl.pallas_call(
        _pool_kernel,
        grid=(N, nT),
        in_specs=[pl.BlockSpec((None, R, OCp), main_map),
                  pl.BlockSpec((1, OCp), lambda n, t: (0, 0)),
                  pl.BlockSpec((1, OCp), lambda n, t: (0, 0)),
                  pl.BlockSpec((P2, R), lambda n, t: (0, 0))],
        out_specs=pl.BlockSpec((None, None, P2, OCp), lambda n, t: (n, t, 0, 0)),
        out_shape=jax.ShapeDtypeStruct((N, nT, P2, OCp), jnp.float32),
        compiler_params=cparams,
        cost_estimate=pl.CostEstimate(
            flops=2 * N * nT * P2 * R * OCp,
            transcendentals=0,
            bytes_accessed=N * LF * OCp * 2 + N * Ho * Wo * OCp * 4),
    )(y2, scale2, shift2, qt)

    # Drop channel padding, return PyTorch-facing NCHW (quarter-size tensor).
    out = pooled.reshape(N, Ho, Wo, OCp)[:, :, :, :OC]
    return jnp.transpose(out, (0, 3, 1, 2))


def _reference_forward(x, w1, g1, b1, w2, g2, b2):
    """Pure-JAX f32 reference mirroring the PyTorch train-mode forward."""
    def conv(a, w):
        return jax.lax.conv_general_dilated(
            a, w, window_strides=(1, 1), padding=((1, 1), (1, 1)),
            dimension_numbers=("NCHW", "OIHW", "NCHW"),
            precision=jax.lax.Precision.HIGHEST)

    def bn_relu(a, g, b):
        mean = jnp.mean(a, axis=(0, 2, 3), keepdims=True)
        var = jnp.mean(jnp.square(a), axis=(0, 2, 3), keepdims=True) - mean ** 2
        an = (a - mean) * jax.lax.rsqrt(var + EPS)
        return jnp.maximum(an * g.reshape(1, -1, 1, 1) + b.reshape(1, -1, 1, 1),
                           0.0)

    h = bn_relu(conv(x, w1), g1, b1)
    h = bn_relu(conv(h, w2), g2, b2)
    n, c, hh, ww = h.shape
    return h.reshape(n, c, hh // 2, 2, ww // 2, 2).mean(axis=(3, 5))


if __name__ == "__main__":
    N, C, H, W = 2, 4, 16, 16
    OC = 8

    key = jax.random.PRNGKey(0)
    kx, k1, k2 = jax.random.split(key, 3)
    x = jax.random.normal(kx, (N, C, H, W), dtype=jnp.float32)

    def xavier_uniform(k, oc, ic):
        # nn.init.xavier_uniform_ for a (oc, ic, 3, 3) conv weight.
        bound = (6.0 / (ic * 9 + oc * 9)) ** 0.5
        return jax.random.uniform(k, (oc, ic, 3, 3), jnp.float32, -bound, bound)

    w1 = xavier_uniform(k1, OC, C)
    w2 = xavier_uniform(k2, OC, OC)
    g1 = jnp.ones((OC,), jnp.float32)    # init_bn: weight = 1
    b1 = jnp.zeros((OC,), jnp.float32)   # init_bn: bias = 0
    g2 = jnp.ones((OC,), jnp.float32)
    b2 = jnp.zeros((OC,), jnp.float32)

    # tile_rows=8 -> 2 row tiles per image: exercises the halo path at test size.
    fwd = jax.jit(functools.partial(conv_block_forward, tile_rows=8))
    out = jax.block_until_ready(fwd(x, w1, g1, b1, w2, g2, b2))

    assert out.shape == (N, OC, H // 2, W // 2), out.shape
    assert bool(jnp.all(jnp.isfinite(out)))

    ref = _reference_forward(x, w1, g1, b1, w2, g2, b2)
    max_err = float(jnp.max(jnp.abs(out - ref)))
    assert max_err < 0.15, f"max abs error vs reference: {max_err}"

    print("KERNEL_OK")
</pallas_src>

<mosaic_0001>
module attributes {stable_mosaic.version = 11 : i64} {
  func.func @kernel(%arg0: i32, %arg1: i32, %arg2: memref<1x48x128xbf16, #tpu.memory_space<vmem>>, %arg3: memref<1x192x128xbf16, #tpu.memory_space<vmem>>, %arg4: memref<1x48x128xbf16, #tpu.memory_space<vmem>>, %arg5: memref<3x384x128xbf16, #tpu.memory_space<vmem>>, %arg6: memref<1x192x128xbf16, #tpu.memory_space<vmem>>, %arg7: memref<1x2x128xf32, #tpu.memory_space<vmem>>, %arg8: memref<288x128xbf16, #tpu.memory_space<vmem>>, %arg9: memref<240x384xbf16, #tpu.memory_space<vmem>>) attributes {dimension_semantics = [#tpu.dimension_semantics<parallel>, #tpu.dimension_semantics<arbitrary>], iteration_bounds = array<i64: 2, 2>, scalar_prefetch = 0 : i64, scratch_operands = 2 : i64, tpu.core_type = #tpu.core_type<tc>, window_params = [{transform_indices = @transform_0, window_bounds = array<i64: 1, 48, 128>}, {transform_indices = @transform_1, window_bounds = array<i64: 1, 192, 128>}, {transform_indices = @transform_2, window_bounds = array<i64: 1, 48, 128>}, {pipeline_mode = #tpu.pipeline_mode<synchronous>, transform_indices = @transform_3, window_bounds = array<i64: 3, 384, 128>}, {transform_indices = @transform_4, window_bounds = array<i64: 1, 192, 128>}, {transform_indices = @transform_5, window_bounds = array<i64: 1, 2, 128>}]} {
    %c0_i32 = arith.constant 0 : i32
    %0 = arith.cmpi sgt, %arg1, %c0_i32 : i32
    %1 = arith.extui %0 : i1 to i32
    %c0_i32_0 = arith.constant 0 : i32
    %2 = arith.cmpi ne, %1, %c0_i32_0 : i32
    scf.if %2 {
      %c0_49 = arith.constant 0 : index
      %c0_50 = arith.constant 0 : index
      %c0_51 = arith.constant 0 : index
      %73 = vector.load %arg2[%c0_49, %c0_50, %c0_51] : memref<1x48x128xbf16, #tpu.memory_space<vmem>>, vector<1x48x128xbf16>
      %74 = vector.shape_cast %73 : vector<1x48x128xbf16> to vector<48x128xbf16>
      %c0_52 = arith.constant 0 : index
      %c0_53 = arith.constant 0 : index
      %75 = vector.load %arg8[%c0_52, %c0_53] : memref<288x128xbf16, #tpu.memory_space<vmem>>, vector<48x128xbf16>
      tpu.vector_store %arg8[%c0_52, %c0_53], %74 {strides = array<i32>} : memref<288x128xbf16, #tpu.memory_space<vmem>>, vector<48x128xbf16>,
    } else {
    }
    %c0_i32_1 = arith.constant 0 : i32
    %3 = arith.cmpi eq, %arg1, %c0_i32_1 : i32
    %4 = arith.extui %3 : i1 to i32
    %c0_i32_2 = arith.constant 0 : i32
    %5 = arith.cmpi ne, %4, %c0_i32_2 : i32
    scf.if %5 {
      %cst_49 = arith.constant 0.000000e+00 : bf16
      %73 = vector.broadcast %cst_49 : bf16 to vector<48x128xbf16>
      %c0_50 = arith.constant 0 : index
      %c0_51 = arith.constant 0 : index
      %74 = vector.load %arg8[%c0_50, %c0_51] : memref<288x128xbf16, #tpu.memory_space<vmem>>, vector<48x128xbf16>
      tpu.vector_store %arg8[%c0_50, %c0_51], %73 {strides = array<i32>} : memref<288x128xbf16, #tpu.memory_space<vmem>>, vector<48x128xbf16>,
    } else {
    }
    %c0 = arith.constant 0 : index
    %c0_3 = arith.constant 0 : index
    %c0_4 = arith.constant 0 : index
    %6 = vector.load %arg3[%c0, %c0_3, %c0_4] : memref<1x192x128xbf16, #tpu.memory_space<vmem>>, vector<1x192x128xbf16>
    %7 = vector.shape_cast %6 : vector<1x192x128xbf16> to vector<192x128xbf16>
    %c48 = arith.constant 48 : index
    %c0_5 = arith.constant 0 : index
    %8 = vector.load %arg8[%c48, %c0_5] : memref<288x128xbf16, #tpu.memory_space<vmem>>, vector<192x128xbf16>
    tpu.vector_store %arg8[%c48, %c0_5], %7 {strides = array<i32>} : memref<288x128xbf16, #tpu.memory_space<vmem>>, vector<192x128xbf16>,
    %c1_i32 = arith.constant 1 : i32
    %9 = arith.cmpi slt, %arg1, %c1_i32 : i32
    %10 = arith.extui %9 : i1 to i32
    %c0_i32_6 = arith.constant 0 : i32
    %11 = arith.cmpi ne, %10, %c0_i32_6 : i32
    scf.if %11 {
      %c0_49 = arith.constant 0 : index
      %c0_50 = arith.constant 0 : index
      %c0_51 = arith.constant 0 : index
      %73 = vector.load %arg4[%c0_49, %c0_50, %c0_51] : memref<1x48x128xbf16, #tpu.memory_space<vmem>>, vector<1x48x128xbf16>
      %74 = vector.shape_cast %73 : vector<1x48x128xbf16> to vector<48x128xbf16>
      %c240 = arith.constant 240 : index
      %c0_52 = arith.constant 0 : index
      %75 = vector.load %arg8[%c240, %c0_52] : memref<288x128xbf16, #tpu.memory_space<vmem>>, vector<48x128xbf16>
      tpu.vector_store %arg8[%c240, %c0_52], %74 {strides = array<i32>} : memref<288x128xbf16, #tpu.memory_space<vmem>>, vector<48x128xbf16>,
    } else {
    }
    %c1_i32_7 = arith.constant 1 : i32
    %12 = arith.cmpi eq, %arg1, %c1_i32_7 : i32
    %13 = arith.extui %12 : i1 to i32
    %c0_i32_8 = arith.constant 0 : i32
    %14 = arith.cmpi ne, %13, %c0_i32_8 : i32
    scf.if %14 {
      %cst_49 = arith.constant 0.000000e+00 : bf16
      %73 = vector.broadcast %cst_49 : bf16 to vector<48x128xbf16>
      %c240 = arith.constant 240 : index
      %c0_50 = arith.constant 0 : index
      %74 = vector.load %arg8[%c240, %c0_50] : memref<288x128xbf16, #tpu.memory_space<vmem>>, vector<48x128xbf16>
      tpu.vector_store %arg8[%c240, %c0_50], %73 {strides = array<i32>} : memref<288x128xbf16, #tpu.memory_space<vmem>>, vector<48x128xbf16>,
    } else {
    }
    %c23 = arith.constant 23 : index
    %c0_9 = arith.constant 0 : index
    %15 = vector.load %arg8[%c23, %c0_9] : memref<288x128xbf16, #tpu.memory_space<vmem>>, vector<240x128xbf16>
    %c0_10 = arith.constant 0 : index
    %c0_11 = arith.constant 0 : index
    %16 = vector.load %arg9[%c0_10, %c0_11] : memref<240x384xbf16, #tpu.memory_space<vmem>>, vector<240x128xbf16>
    tpu.vector_store %arg9[%c0_10, %c0_11], %15 {strides = array<i32>} : memref<240x384xbf16, #tpu.memory_space<vmem>>, vector<240x128xbf16>,
    %c24 = arith.constant 24 : index
    %c0_12 = arith.constant 0 : index
    %17 = vector.load %arg8[%c24, %c0_12] : memref<288x128xbf16, #tpu.memory_space<vmem>>, vector<240x128xbf16>
    %c0_13 = arith.constant 0 : index
    %c128 = arith.constant 128 : index
    %18 = vector.load %arg9[%c0_13, %c128] : memref<240x384xbf16, #tpu.memory_space<vmem>>, vector<240x128xbf16>
    tpu.vector_store %arg9[%c0_13, %c128], %17 {strides = array<i32>} : memref<240x384xbf16, #tpu.memory_space<vmem>>, vector<240x128xbf16>,
    %c25 = arith.constant 25 : index
    %c0_14 = arith.constant 0 : index
    %19 = vector.load %arg8[%c25, %c0_14] : memref<288x128xbf16, #tpu.memory_space<vmem>>, vector<240x128xbf16>
    %c0_15 = arith.constant 0 : index
    %c256 = arith.constant 256 : index
    %20 = vector.load %arg9[%c0_15, %c256] : memref<240x384xbf16, #tpu.memory_space<vmem>>, vector<240x128xbf16>
    tpu.vector_store %arg9[%c0_15, %c256], %19 {strides = array<i32>} : memref<240x384xbf16, #tpu.memory_space<vmem>>, vector<240x128xbf16>,
    %c0_16 = arith.constant 0 : index
    %c0_17 = arith.constant 0 : index
    %21 = vector.load %arg9[%c0_16, %c0_17] : memref<240x384xbf16, #tpu.memory_space<vmem>>, vector<192x384xbf16>
    %c0_18 = arith.constant 0 : index
    %c0_19 = arith.constant 0 : index
    %c0_20 = arith.constant 0 : index
    %22 = vector.load %arg5[%c0_18, %c0_19, %c0_20] : memref<3x384x128xbf16, #tpu.memory_space<vmem>>, vector<1x384x128xbf16>
    %23 = vector.shape_cast %22 : vector<1x384x128xbf16> to vector<384x128xbf16>
    %cst = arith.constant dense<0.000000e+00> : vector<192x128xf32>
    %24 = tpu.matmul %21, %23, %cst {dimension_numbers = #tpu.dot_dimension_numbers<[1], [0], [0], [1], [0, 0, 1, 1], [], []>} : vector<192x384xbf16>, vector<384x128xbf16>, vector<192x128xf32> -> vector<192x128xf32>
    %c24_21 = arith.constant 24 : index
    %c0_22 = arith.constant 0 : index
    %25 = vector.load %arg9[%c24_21, %c0_22] : memref<240x384xbf16, #tpu.memory_space<vmem>>, vector<192x384xbf16>
    %c1 = arith.constant 1 : index
    %c0_23 = arith.constant 0 : index
    %c0_24 = arith.constant 0 : index
    %26 = vector.load %arg5[%c1, %c0_23, %c0_24] : memref<3x384x128xbf16, #tpu.memory_space<vmem>>, vector<1x384x128xbf16>
    %27 = vector.shape_cast %26 : vector<1x384x128xbf16> to vector<384x128xbf16>
    %cst_25 = arith.constant dense<0.000000e+00> : vector<192x128xf32>
    %28 = tpu.matmul %25, %27, %cst_25 {dimension_numbers = #tpu.dot_dimension_numbers<[1], [0], [0], [1], [0, 0, 1, 1], [], []>} : vector<192x384xbf16>, vector<384x128xbf16>, vector<192x128xf32> -> vector<192x128xf32>
    %29 = arith.addf %24, %28 : vector<192x128xf32>
    %c48_26 = arith.constant 48 : index
    %c0_27 = arith.constant 0 : index
    %30 = vector.load %arg9[%c48_26, %c0_27] : memref<240x384xbf16, #tpu.memory_space<vmem>>, vector<192x384xbf16>
    %c2 = arith.constant 2 : index
    %c0_28 = arith.constant 0 : index
    %c0_29 = arith.constant 0 : index
    %31 = vector.load %arg5[%c2, %c0_28, %c0_29] : memref<3x384x128xbf16, #tpu.memory_space<vmem>>, vector<1x384x128xbf16>
    %32 = vector.shape_cast %31 : vector<1x384x128xbf16> to vector<384x128xbf16>
    %cst_30 = arith.constant dense<0.000000e+00> : vector<192x128xf32>
    %33 = tpu.matmul %30, %32, %cst_30 {dimension_numbers = #tpu.dot_dimension_numbers<[1], [0], [0], [1], [0, 0, 1, 1], [], []>} : vector<192x384xbf16>, vector<384x128xbf16>, vector<192x128xf32> -> vector<192x128xf32>
    %34 = arith.addf %29, %33 : vector<192x128xf32>
    %35 = tpu.iota {dimensions = array<i32: 1>} : vector<1x192xi32>
    %c24_i32 = arith.constant 24 : i32
    %c0_i32_31 = arith.constant 0 : i32
    %36 = arith.cmpi eq, %c24_i32, %c0_i32_31 : i32
    %c1_i32_32 = arith.constant 1 : i32
    %37 = arith.select %36, %c1_i32_32, %c24_i32 : i32
    %38 = vector.broadcast %37 : i32 to vector<1x192xi32>
    %39 = arith.remsi %35, %38 : vector<1x192xi32>
    %c0_i32_33 = arith.constant 0 : i32
    %40 = vector.broadcast %c0_i32_33 : i32 to vector<1x192xi32>
    %41 = arith.cmpi ne, %39, %40 : vector<1x192xi32>
    %c0_i32_34 = arith.constant 0 : i32
    %42 = vector.broadcast %c0_i32_34 : i32 to vector<1x192xi32>
    %43 = arith.cmpi slt, %39, %42 : vector<1x192xi32>
    %c0_i32_35 = arith.constant 0 : i32
    %44 = arith.cmpi slt, %37, %c0_i32_35 : i32
    %45 = vector.broadcast %44 : i1 to vector<1x192xi1>
    %46 = vector.broadcast %45 : vector<1x192xi1> to vector<1x192xi1>
    %47 = arith.xori %43, %46 : vector<1x192xi1>
    %48 = arith.andi %47, %41 : vector<1x192xi1>
    %49 = vector.broadcast %37 : i32 to vector<1x192xi32>
    %50 = arith.addi %39, %49 : vector<1x192xi32>
    %51 = arith.select %48, %50, %39 : vector<1x192xi1>, vector<1x192xi32>
    %c16_i32 = arith.constant 16 : i32
    %52 = vector.broadcast %c16_i32 : i32 to vector<1x192xi32>
    %53 = arith.cmpi slt, %51, %52 : vector<1x192xi32>
    %54 = arith.extui %53 : vector<1x192xi1> to vector<1x192xi32>
    %55 = arith.sitofp %54 : vector<1x192xi32> to vector<1x192xf32>
    %cst_36 = arith.constant dense<0.000000e+00> : vector<1x128xf32>
    %56 = tpu.matmul %55, %34, %cst_36 {dimension_numbers = #tpu.dot_dimension_numbers<[1], [0], [0], [1], [0, 0, 1, 1], [], []>} : vector<1x192xf32>, vector<192x128xf32>, vector<1x128xf32> -> vector<1x128xf32>
    %57 = arith.mulf %34, %34 : vector<192x128xf32>
    %cst_37 = arith.constant dense<0.000000e+00> : vector<1x128xf32>
    %58 = tpu.matmul %55, %57, %cst_37 {dimension_numbers = #tpu.dot_dimension_numbers<[1], [0], [0], [1], [0, 0, 1, 1], [], []>} : vector<1x192xf32>, vector<192x128xf32>, vector<1x128xf32> -> vector<1x128xf32>
    %c0_i32_38 = arith.constant 0 : i32
    %59 = arith.cmpi eq, %arg1, %c0_i32_38 : i32
    %60 = arith.extui %59 : i1 to i32
    %c0_i32_39 = arith.constant 0 : i32
    %61 = arith.cmpi ne, %60, %c0_i32_39 : i32
    scf.if %61 {
      %cst_49 = arith.constant 0.000000e+00 : f32
      %73 = vector.broadcast %cst_49 : f32 to vector<2x128xf32>
      %c0_50 = arith.constant 0 : index
      %c0_51 = arith.constant 0 : index
      %c0_52 = arith.constant 0 : index
      %74 = vector.load %arg7[%c0_50, %c0_51, %c0_52] : memref<1x2x128xf32, #tpu.memory_space<vmem>>, vector<1x2x128xf32>
      %75 = vector.shape_cast %74 : vector<1x2x128xf32> to vector<2x128xf32>
      %76 = vector.shape_cast %73 : vector<2x128xf32> to vector<1x2x128xf32>
      tpu.vector_store %arg7[%c0_50, %c0_51, %c0_52], %76 {strides = array<i32>} : memref<1x2x128xf32, #tpu.memory_space<vmem>>, vector<1x2x128xf32>,
    } else {
    }
    %c0_40 = arith.constant 0 : index
    %c0_41 = arith.constant 0 : index
    %c0_42 = arith.constant 0 : index
    %62 = vector.load %arg7[%c0_40, %c0_41, %c0_42] : memref<1x2x128xf32, #tpu.memory_space<vmem>>, vector<1x2x128xf32>
    %63 = vector.shape_cast %62 : vector<1x2x128xf32> to vector<2x128xf32>
    %64 = tpu.concatenate %56, %58 in 0 : vector<1x128xf32>, vector<1x128xf32> -> vector<2x128xf32>
    %65 = arith.addf %63, %64 : vector<2x128xf32>
    %c0_43 = arith.constant 0 : index
    %c0_44 = arith.constant 0 : index
    %c0_45 = arith.constant 0 : index
    %66 = vector.load %arg7[%c0_43, %c0_44, %c0_45] : memref<1x2x128xf32, #tpu.memory_space<vmem>>, vector<1x2x128xf32>
    %67 = vector.shape_cast %66 : vector<1x2x128xf32> to vector<2x128xf32>
    %68 = vector.shape_cast %65 : vector<2x128xf32> to vector<1x2x128xf32>
    tpu.vector_store %arg7[%c0_43, %c0_44, %c0_45], %68 {strides = array<i32>} : memref<1x2x128xf32, #tpu.memory_space<vmem>>, vector<1x2x128xf32>,
    %69 = arith.truncf %34 : vector<192x128xf32> to vector<192x128xbf16>
    %c0_46 = arith.constant 0 : index
    %c0_47 = arith.constant 0 : index
    %c0_48 = arith.constant 0 : index
    %70 = vector.load %arg6[%c0_46, %c0_47, %c0_48] : memref<1x192x128xbf16, #tpu.memory_space<vmem>>, vector<1x192x128xbf16>
    %71 = vector.shape_cast %70 : vector<1x192x128xbf16> to vector<192x128xbf16>
    %72 = vector.shape_cast %69 : vector<192x128xbf16> to vector<1x192x128xbf16>
    tpu.vector_store %arg6[%c0_46, %c0_47, %c0_48], %72 {strides = array<i32>} : memref<1x192x128xbf16, #tpu.memory_space<vmem>>, vector<1x192x128xbf16>,
    return
  }
  func.func @transform_0(%arg0: i32, %arg1: i32) -> (i32, i32, i32) {
    %c4_i32 = arith.constant 4 : i32
    %0 = arith.muli %arg1, %c4_i32 : i32
    %c1_i32 = arith.constant 1 : i32
    %1 = arith.subi %0, %c1_i32 : i32
    %c0_i32 = arith.constant 0 : i32
    %2 = arith.maxsi %1, %c0_i32 : i32
    %c0_i32_0 = arith.constant 0 : i32
    %c0_i32_1 = arith.constant 0 : i32
    return %arg0, %2, %c0_i32_0 : i32, i32, i32
  }
  func.func @transform_1(%arg0: i32, %arg1: i32) -> (i32, i32, i32) {
    %c0_i32 = arith.constant 0 : i32
    %c0_i32_0 = arith.constant 0 : i32
    return %arg0, %arg1, %c0_i32 : i32, i32, i32
  }
  func.func @transform_2(%arg0: i32, %arg1: i32) -> (i32, i32, i32) {
    %c1_i32 = arith.constant 1 : i32
    %0 = arith.addi %arg1, %c1_i32 : i32
    %c4_i32 = arith.constant 4 : i32
    %1 = arith.muli %0, %c4_i32 : i32
    %c7_i32 = arith.constant 7 : i32
    %2 = arith.minsi %1, %c7_i32 : i32
    %c0_i32 = arith.constant 0 : i32
    %c0_i32_0 = arith.constant 0 : i32
    return %arg0, %2, %c0_i32 : i32, i32, i32
  }
  func.func @transform_3(%arg0: i32, %arg1: i32) -> (i32, i32, i32) {
    %c0_i32 = arith.constant 0 : i32
    %c0_i32_0 = arith.constant 0 : i32
    %c0_i32_1 = arith.constant 0 : i32
    %c0_i32_2 = arith.constant 0 : i32
    return %c0_i32, %c0_i32_0, %c0_i32_1 : i32, i32, i32
  }
  func.func @transform_4(%arg0: i32, %arg1: i32) -> (i32, i32, i32) {
    %c0_i32 = arith.constant 0 : i32
    %c0_i32_0 = arith.constant 0 : i32
    return %arg0, %arg1, %c0_i32 : i32, i32, i32
  }
  func.func @transform_5(%arg0: i32, %arg1: i32) -> (i32, i32, i32) {
    %c0_i32 = arith.constant 0 : i32
    %c0_i32_0 = arith.constant 0 : i32
    %c0_i32_1 = arith.constant 0 : i32
    return %arg0, %c0_i32, %c0_i32_0 : i32, i32, i32
  }
}

module attributes {stable_mosaic.version = 11 : i64} {
  func.func @kernel(%arg0: i32, %arg1: i32, %arg2: memref<1x48x128xbf16, #tpu.memory_space<vmem>>, %arg3: memref<1x192x128xbf16, #tpu.memory_space<vmem>>, %arg4: memref<1x48x128xbf16, #tpu.memory_space<vmem>>, %arg5: memref<1x128xf32, #tpu.memory_space<vmem>>, %arg6: memref<1x128xf32, #tpu.memory_space<vmem>>, %arg7: memref<3x384x128xbf16, #tpu.memory_space<vmem>>, %arg8: memref<1x192x128xbf16, #tpu.memory_space<vmem>>, %arg9: memref<1x2x128xf32, #tpu.memory_space<vmem>>, %arg10: memref<288x128xbf16, #tpu.memory_space<vmem>>, %arg11: memref<240x384xbf16, #tpu.memory_space<vmem>>) attributes {dimension_semantics = [#tpu.dimension_semantics<parallel>, #tpu.dimension_semantics<arbitrary>], iteration_bounds = array<i64: 2, 2>, scalar_prefetch = 0 : i64, scratch_operands = 2 : i64, tpu.core_type = #tpu.core_type<tc>, window_params = [{transform_indices = @transform_0, window_bounds = array<i64: 1, 48, 128>}, {transform_indices = @transform_1, window_bounds = array<i64: 1, 192, 128>}, {transform_indices = @transform_2, window_bounds = array<i64: 1, 48, 128>}, {pipeline_mode = #tpu.pipeline_mode<synchronous>, transform_indices = @transform_3, window_bounds = array<i64: 1, 128>}, {pipeline_mode = #tpu.pipeline_mode<synchronous>, transform_indices = @transform_4, window_bounds = array<i64: 1, 128>}, {pipeline_mode = #tpu.pipeline_mode<synchronous>, transform_indices = @transform_5, window_bounds = array<i64: 3, 384, 128>}, {transform_indices = @transform_6, window_bounds = array<i64: 1, 192, 128>}, {transform_indices = @transform_7, window_bounds = array<i64: 1, 2, 128>}]} {
    %0 = tpu.iota {dimensions = array<i32: 0>} : vector<192x1xi32>
    %c24_i32 = arith.constant 24 : i32
    %c0_i32 = arith.constant 0 : i32
    %1 = arith.cmpi eq, %c24_i32, %c0_i32 : i32
    %c1_i32 = arith.constant 1 : i32
    %2 = arith.select %1, %c1_i32, %c24_i32 : i32
    %3 = vector.broadcast %2 : i32 to vector<192x1xi32>
    %4 = arith.remsi %0, %3 : vector<192x1xi32>
    %c0_i32_0 = arith.constant 0 : i32
    %5 = vector.broadcast %c0_i32_0 : i32 to vector<192x1xi32>
    %6 = arith.cmpi ne, %4, %5 : vector<192x1xi32>
    %c0_i32_1 = arith.constant 0 : i32
    %7 = vector.broadcast %c0_i32_1 : i32 to vector<192x1xi32>
    %8 = arith.cmpi slt, %4, %7 : vector<192x1xi32>
    %c0_i32_2 = arith.constant 0 : i32
    %9 = arith.cmpi slt, %2, %c0_i32_2 : i32
    %10 = vector.broadcast %9 : i1 to vector<192x1xi1>
    %11 = vector.broadcast %10 : vector<192x1xi1> to vector<192x1xi1>
    %12 = arith.xori %8, %11 : vector<192x1xi1>
    %13 = arith.andi %12, %6 : vector<192x1xi1>
    %14 = vector.broadcast %2 : i32 to vector<192x1xi32>
    %15 = arith.addi %4, %14 : vector<192x1xi32>
    %16 = arith.select %13, %15, %4 : vector<192x1xi1>, vector<192x1xi32>
    %c16_i32 = arith.constant 16 : i32
    %17 = vector.broadcast %c16_i32 : i32 to vector<192x1xi32>
    %18 = arith.cmpi slt, %16, %17 : vector<192x1xi32>
    %19 = tpu.iota {dimensions = array<i32: 0>} : vector<48x1xi32>
    %c24_i32_3 = arith.constant 24 : i32
    %c0_i32_4 = arith.constant 0 : i32
    %20 = arith.cmpi eq, %c24_i32_3, %c0_i32_4 : i32
    %c1_i32_5 = arith.constant 1 : i32
    %21 = arith.select %20, %c1_i32_5, %c24_i32_3 : i32
    %22 = vector.broadcast %21 : i32 to vector<48x1xi32>
    %23 = arith.remsi %19, %22 : vector<48x1xi32>
    %c0_i32_6 = arith.constant 0 : i32
    %24 = vector.broadcast %c0_i32_6 : i32 to vector<48x1xi32>
    %25 = arith.cmpi ne, %23, %24 : vector<48x1xi32>
    %c0_i32_7 = arith.constant 0 : i32
    %26 = vector.broadcast %c0_i32_7 : i32 to vector<48x1xi32>
    %27 = arith.cmpi slt, %23, %26 : vector<48x1xi32>
    %c0_i32_8 = arith.constant 0 : i32
    %28 = arith.cmpi slt, %21, %c0_i32_8 : i32
    %29 = vector.broadcast %28 : i1 to vector<48x1xi1>
    %30 = vector.broadcast %29 : vector<48x1xi1> to vector<48x1xi1>
    %31 = arith.xori %27, %30 : vector<48x1xi1>
    %32 = arith.andi %31, %25 : vector<48x1xi1>
    %33 = vector.broadcast %21 : i32 to vector<48x1xi32>
    %34 = arith.addi %23, %33 : vector<48x1xi32>
    %35 = arith.select %32, %34, %23 : vector<48x1xi1>, vector<48x1xi32>
    %c16_i32_9 = arith.constant 16 : i32
    %36 = vector.broadcast %c16_i32_9 : i32 to vector<48x1xi32>
    %37 = arith.cmpi slt, %35, %36 : vector<48x1xi32>
    %c0_i32_10 = arith.constant 0 : i32
    %38 = arith.cmpi sgt, %arg1, %c0_i32_10 : i32
    %39 = arith.extui %38 : i1 to i32
    %c0_i32_11 = arith.constant 0 : i32
    %40 = arith.cmpi ne, %39, %c0_i32_11 : i32
    scf.if %40 {
      %c0_69 = arith.constant 0 : index
      %c0_70 = arith.constant 0 : index
      %c0_71 = arith.constant 0 : index
      %125 = vector.load %arg2[%c0_69, %c0_70, %c0_71] : memref<1x48x128xbf16, #tpu.memory_space<vmem>>, vector<1x48x128xbf16>
      %126 = vector.shape_cast %125 : vector<1x48x128xbf16> to vector<48x128xbf16>
      %127 = arith.extf %126 : vector<48x128xbf16> to vector<48x128xf32>
      %c0_72 = arith.constant 0 : index
      %c0_73 = arith.constant 0 : index
      %128 = vector.load %arg5[%c0_72, %c0_73] : memref<1x128xf32, #tpu.memory_space<vmem>>, vector<1x128xf32>
      %129 = vector.broadcast %128 : vector<1x128xf32> to vector<48x128xf32>
      %130 = arith.mulf %127, %129 : vector<48x128xf32>
      %c0_74 = arith.constant 0 : index
      %c0_75 = arith.constant 0 : index
      %131 = vector.load %arg6[%c0_74, %c0_75] : memref<1x128xf32, #tpu.memory_space<vmem>>, vector<1x128xf32>
      %132 = vector.broadcast %131 : vector<1x128xf32> to vector<48x128xf32>
      %133 = arith.addf %130, %132 : vector<48x128xf32>
      %cst_76 = arith.constant 0.000000e+00 : f32
      %134 = vector.broadcast %cst_76 : f32 to vector<48x128xf32>
      %135 = arith.maximumf %133, %134 : vector<48x128xf32>
      %cst_77 = arith.constant 0.000000e+00 : f32
      %136 = vector.shape_cast %37 : vector<48x1xi1> to vector<48x1xi1>
      %137 = vector.broadcast %136 : vector<48x1xi1> to vector<48x128xi1>
      %138 = vector.broadcast %cst_77 : f32 to vector<48x128xf32>
      %139 = arith.select %137, %135, %138 : vector<48x128xi1>, vector<48x128xf32>
      %140 = arith.truncf %139 : vector<48x128xf32> to vector<48x128xbf16>
      %c0_78 = arith.constant 0 : index
      %c0_79 = arith.constant 0 : index
      %141 = vector.load %arg10[%c0_78, %c0_79] : memref<288x128xbf16, #tpu.memory_space<vmem>>, vector<48x128xbf16>
      tpu.vector_store %arg10[%c0_78, %c0_79], %140 {strides = array<i32>} : memref<288x128xbf16, #tpu.memory_space<vmem>>, vector<48x128xbf16>,
    } else {
    }
    %c0_i32_12 = arith.constant 0 : i32
    %41 = arith.cmpi eq, %arg1, %c0_i32_12 : i32
    %42 = arith.extui %41 : i1 to i32
    %c0_i32_13 = arith.constant 0 : i32
    %43 = arith.cmpi ne, %42, %c0_i32_13 : i32
    scf.if %43 {
      %cst_69 = arith.constant 0.000000e+00 : bf16
      %125 = vector.broadcast %cst_69 : bf16 to vector<48x128xbf16>
      %c0_70 = arith.constant 0 : index
      %c0_71 = arith.constant 0 : index
      %126 = vector.load %arg10[%c0_70, %c0_71] : memref<288x128xbf16, #tpu.memory_space<vmem>>, vector<48x128xbf16>
      tpu.vector_store %arg10[%c0_70, %c0_71], %125 {strides = array<i32>} : memref<288x128xbf16, #tpu.memory_space<vmem>>, vector<48x128xbf16>,
    } else {
    }
    %c0 = arith.constant 0 : index
    %c0_14 = arith.constant 0 : index
    %c0_15 = arith.constant 0 : index
    %44 = vector.load %arg3[%c0, %c0_14, %c0_15] : memref<1x192x128xbf16, #tpu.memory_space<vmem>>, vector<1x192x128xbf16>
    %45 = vector.shape_cast %44 : vector<1x192x128xbf16> to vector<192x128xbf16>
    %46 = arith.extf %45 : vector<192x128xbf16> to vector<192x128xf32>
    %c0_16 = arith.constant 0 : index
    %c0_17 = arith.constant 0 : index
    %47 = vector.load %arg5[%c0_16, %c0_17] : memref<1x128xf32, #tpu.memory_space<vmem>>, vector<1x128xf32>
    %48 = vector.broadcast %47 : vector<1x128xf32> to vector<192x128xf32>
    %49 = arith.mulf %46, %48 : vector<192x128xf32>
    %c0_18 = arith.constant 0 : index
    %c0_19 = arith.constant 0 : index
    %50 = vector.load %arg6[%c0_18, %c0_19] : memref<1x128xf32, #tpu.memory_space<vmem>>, vector<1x128xf32>
    %51 = vector.broadcast %50 : vector<1x128xf32> to vector<192x128xf32>
    %52 = arith.addf %49, %51 : vector<192x128xf32>
    %cst = arith.constant 0.000000e+00 : f32
    %53 = vector.broadcast %cst : f32 to vector<192x128xf32>
    %54 = arith.maximumf %52, %53 : vector<192x128xf32>
    %cst_20 = arith.constant 0.000000e+00 : f32
    %55 = vector.shape_cast %18 : vector<192x1xi1> to vector<192x1xi1>
    %56 = vector.broadcast %55 : vector<192x1xi1> to vector<192x128xi1>
    %57 = vector.broadcast %cst_20 : f32 to vector<192x128xf32>
    %58 = arith.select %56, %54, %57 : vector<192x128xi1>, vector<192x128xf32>
    %59 = arith.truncf %58 : vector<192x128xf32> to vector<192x128xbf16>
    %c48 = arith.constant 48 : index
    %c0_21 = arith.constant 0 : index
    %60 = vector.load %arg10[%c48, %c0_21] : memref<288x128xbf16, #tpu.memory_space<vmem>>, vector<192x128xbf16>
    tpu.vector_store %arg10[%c48, %c0_21], %59 {strides = array<i32>} : memref<288x128xbf16, #tpu.memory_space<vmem>>, vector<192x128xbf16>,
    %c1_i32_22 = arith.constant 1 : i32
    %61 = arith.cmpi slt, %arg1, %c1_i32_22 : i32
    %62 = arith.extui %61 : i1 to i32
    %c0_i32_23 = arith.constant 0 : i32
    %63 = arith.cmpi ne, %62, %c0_i32_23 : i32
    scf.if %63 {
      %c0_69 = arith.constant 0 : index
      %c0_70 = arith.constant 0 : index
      %c0_71 = arith.constant 0 : index
      %125 = vector.load %arg4[%c0_69, %c0_70, %c0_71] : memref<1x48x128xbf16, #tpu.memory_space<vmem>>, vector<1x48x128xbf16>
      %126 = vector.shape_cast %125 : vector<1x48x128xbf16> to vector<48x128xbf16>
      %127 = arith.extf %126 : vector<48x128xbf16> to vector<48x128xf32>
      %c0_72 = arith.constant 0 : index
      %c0_73 = arith.constant 0 : index
      %128 = vector.load %arg5[%c0_72, %c0_73] : memref<1x128xf32, #tpu.memory_space<vmem>>, vector<1x128xf32>
      %129 = vector.broadcast %128 : vector<1x128xf32> to vector<48x128xf32>
      %130 = arith.mulf %127, %129 : vector<48x128xf32>
      %c0_74 = arith.constant 0 : index
      %c0_75 = arith.constant 0 : index
      %131 = vector.load %arg6[%c0_74, %c0_75] : memref<1x128xf32, #tpu.memory_space<vmem>>, vector<1x128xf32>
      %132 = vector.broadcast %131 : vector<1x128xf32> to vector<48x128xf32>
      %133 = arith.addf %130, %132 : vector<48x128xf32>
      %cst_76 = arith.constant 0.000000e+00 : f32
      %134 = vector.broadcast %cst_76 : f32 to vector<48x128xf32>
      %135 = arith.maximumf %133, %134 : vector<48x128xf32>
      %cst_77 = arith.constant 0.000000e+00 : f32
      %136 = vector.shape_cast %37 : vector<48x1xi1> to vector<48x1xi1>
      %137 = vector.broadcast %136 : vector<48x1xi1> to vector<48x128xi1>
      %138 = vector.broadcast %cst_77 : f32 to vector<48x128xf32>
      %139 = arith.select %137, %135, %138 : vector<48x128xi1>, vector<48x128xf32>
      %140 = arith.truncf %139 : vector<48x128xf32> to vector<48x128xbf16>
      %c240 = arith.constant 240 : index
      %c0_78 = arith.constant 0 : index
      %141 = vector.load %arg10[%c240, %c0_78] : memref<288x128xbf16, #tpu.memory_space<vmem>>, vector<48x128xbf16>
      tpu.vector_store %arg10[%c240, %c0_78], %140 {strides = array<i32>} : memref<288x128xbf16, #tpu.memory_space<vmem>>, vector<48x128xbf16>,
    } else {
    }
    %c1_i32_24 = arith.constant 1 : i32
    %64 = arith.cmpi eq, %arg1, %c1_i32_24 : i32
    %65 = arith.extui %64 : i1 to i32
    %c0_i32_25 = arith.constant 0 : i32
    %66 = arith.cmpi ne, %65, %c0_i32_25 : i32
    scf.if %66 {
      %cst_69 = arith.constant 0.000000e+00 : bf16
      %125 = vector.broadcast %cst_69 : bf16 to vector<48x128xbf16>
      %c240 = arith.constant 240 : index
      %c0_70 = arith.constant 0 : index
      %126 = vector.load %arg10[%c240, %c0_70] : memref<288x128xbf16, #tpu.memory_space<vmem>>, vector<48x128xbf16>
      tpu.vector_store %arg10[%c240, %c0_70], %125 {strides = array<i32>} : memref<288x128xbf16, #tpu.memory_space<vmem>>, vector<48x128xbf16>,
    } else {
    }
    %c23 = arith.constant 23 : index
    %c0_26 = arith.constant 0 : index
    %67 = vector.load %arg10[%c23, %c0_26] : memref<288x128xbf16, #tpu.memory_space<vmem>>, vector<240x128xbf16>
    %c0_27 = arith.constant 0 : index
    %c0_28 = arith.constant 0 : index
    %68 = vector.load %arg11[%c0_27, %c0_28] : memref<240x384xbf16, #tpu.memory_space<vmem>>, vector<240x128xbf16>
    tpu.vector_store %arg11[%c0_27, %c0_28], %67 {strides = array<i32>} : memref<240x384xbf16, #tpu.memory_space<vmem>>, vector<240x128xbf16>,
    %c24 = arith.constant 24 : index
    %c0_29 = arith.constant 0 : index
    %69 = vector.load %arg10[%c24, %c0_29] : memref<288x128xbf16, #tpu.memory_space<vmem>>, vector<240x128xbf16>
    %c0_30 = arith.constant 0 : index
    %c128 = arith.constant 128 : index
    %70 = vector.load %arg11[%c0_30, %c128] : memref<240x384xbf16, #tpu.memory_space<vmem>>, vector<240x128xbf16>
    tpu.vector_store %arg11[%c0_30, %c128], %69 {strides = array<i32>} : memref<240x384xbf16, #tpu.memory_space<vmem>>, vector<240x128xbf16>,
    %c25 = arith.constant 25 : index
    %c0_31 = arith.constant 0 : index
    %71 = vector.load %arg10[%c25, %c0_31] : memref<288x128xbf16, #tpu.memory_space<vmem>>, vector<240x128xbf16>
    %c0_32 = arith.constant 0 : index
    %c256 = arith.constant 256 : index
    %72 = vector.load %arg11[%c0_32, %c256] : memref<240x384xbf16, #tpu.memory_space<vmem>>, vector<240x128xbf16>
    tpu.vector_store %arg11[%c0_32, %c256], %71 {strides = array<i32>} : memref<240x384xbf16, #tpu.memory_space<vmem>>, vector<240x128xbf16>,
    %c0_33 = arith.constant 0 : index
    %c0_34 = arith.constant 0 : index
    %73 = vector.load %arg11[%c0_33, %c0_34] : memref<240x384xbf16, #tpu.memory_space<vmem>>, vector<192x384xbf16>
    %c0_35 = arith.constant 0 : index
    %c0_36 = arith.constant 0 : index
    %c0_37 = arith.constant 0 : index
    %74 = vector.load %arg7[%c0_35, %c0_36, %c0_37] : memref<3x384x128xbf16, #tpu.memory_space<vmem>>, vector<1x384x128xbf16>
    %75 = vector.shape_cast %74 : vector<1x384x128xbf16> to vector<384x128xbf16>
    %cst_38 = arith.constant dense<0.000000e+00> : vector<192x128xf32>
    %76 = tpu.matmul %73, %75, %cst_38 {dimension_numbers = #tpu.dot_dimension_numbers<[1], [0], [0], [1], [0, 0, 1, 1], [], []>} : vector<192x384xbf16>, vector<384x128xbf16>, vector<192x128xf32> -> vector<192x128xf32>
    %c24_39 = arith.constant 24 : index
    %c0_40 = arith.constant 0 : index
    %77 = vector.load %arg11[%c24_39, %c0_40] : memref<240x384xbf16, #tpu.memory_space<vmem>>, vector<192x384xbf16>
    %c1 = arith.constant 1 : index
    %c0_41 = arith.constant 0 : index
    %c0_42 = arith.constant 0 : index
    %78 = vector.load %arg7[%c1, %c0_41, %c0_42] : memref<3x384x128xbf16, #tpu.memory_space<vmem>>, vector<1x384x128xbf16>
    %79 = vector.shape_cast %78 : vector<1x384x128xbf16> to vector<384x128xbf16>
    %cst_43 = arith.constant dense<0.000000e+00> : vector<192x128xf32>
    %80 = tpu.matmul %77, %79, %cst_43 {dimension_numbers = #tpu.dot_dimension_numbers<[1], [0], [0], [1], [0, 0, 1, 1], [], []>} : vector<192x384xbf16>, vector<384x128xbf16>, vector<192x128xf32> -> vector<192x128xf32>
    %81 = arith.addf %76, %80 : vector<192x128xf32>
    %c48_44 = arith.constant 48 : index
    %c0_45 = arith.constant 0 : index
    %82 = vector.load %arg11[%c48_44, %c0_45] : memref<240x384xbf16, #tpu.memory_space<vmem>>, vector<192x384xbf16>
    %c2 = arith.constant 2 : index
    %c0_46 = arith.constant 0 : index
    %c0_47 = arith.constant 0 : index
    %83 = vector.load %arg7[%c2, %c0_46, %c0_47] : memref<3x384x128xbf16, #tpu.memory_space<vmem>>, vector<1x384x128xbf16>
    %84 = vector.shape_cast %83 : vector<1x384x128xbf16> to vector<384x128xbf16>
    %cst_48 = arith.constant dense<0.000000e+00> : vector<192x128xf32>
    %85 = tpu.matmul %82, %84, %cst_48 {dimension_numbers = #tpu.dot_dimension_numbers<[1], [0], [0], [1], [0, 0, 1, 1], [], []>} : vector<192x384xbf16>, vector<384x128xbf16>, vector<192x128xf32> -> vector<192x128xf32>
    %86 = arith.addf %81, %85 : vector<192x128xf32>
    %87 = tpu.iota {dimensions = array<i32: 1>} : vector<1x192xi32>
    %c24_i32_49 = arith.constant 24 : i32
    %c0_i32_50 = arith.constant 0 : i32
    %88 = arith.cmpi eq, %c24_i32_49, %c0_i32_50 : i32
    %c1_i32_51 = arith.constant 1 : i32
    %89 = arith.select %88, %c1_i32_51, %c24_i32_49 : i32
    %90 = vector.broadcast %89 : i32 to vector<1x192xi32>
    %91 = arith.remsi %87, %90 : vector<1x192xi32>
    %c0_i32_52 = arith.constant 0 : i32
    %92 = vector.broadcast %c0_i32_52 : i32 to vector<1x192xi32>
    %93 = arith.cmpi ne, %91, %92 : vector<1x192xi32>
    %c0_i32_53 = arith.constant 0 : i32
    %94 = vector.broadcast %c0_i32_53 : i32 to vector<1x192xi32>
    %95 = arith.cmpi slt, %91, %94 : vector<1x192xi32>
    %c0_i32_54 = arith.constant 0 : i32
    %96 = arith.cmpi slt, %89, %c0_i32_54 : i32
    %97 = vector.broadcast %96 : i1 to vector<1x192xi1>
    %98 = vector.broadcast %97 : vector<1x192xi1> to vector<1x192xi1>
    %99 = arith.xori %95, %98 : vector<1x192xi1>
    %100 = arith.andi %99, %93 : vector<1x192xi1>
    %101 = vector.broadcast %89 : i32 to vector<1x192xi32>
    %102 = arith.addi %91, %101 : vector<1x192xi32>
    %103 = arith.select %100, %102, %91 : vector<1x192xi1>, vector<1x192xi32>
    %c16_i32_55 = arith.constant 16 : i32
    %104 = vector.broadcast %c16_i32_55 : i32 to vector<1x192xi32>
    %105 = arith.cmpi slt, %103, %104 : vector<1x192xi32>
    %106 = arith.extui %105 : vector<1x192xi1> to vector<1x192xi32>
    %107 = arith.sitofp %106 : vector<1x192xi32> to vector<1x192xf32>
    %cst_56 = arith.constant dense<0.000000e+00> : vector<1x128xf32>
    %108 = tpu.matmul %107, %86, %cst_56 {dimension_numbers = #tpu.dot_dimension_numbers<[1], [0], [0], [1], [0, 0, 1, 1], [], []>} : vector<1x192xf32>, vector<192x128xf32>, vector<1x128xf32> -> vector<1x128xf32>
    %109 = arith.mulf %86, %86 : vector<192x128xf32>
    %cst_57 = arith.constant dense<0.000000e+00> : vector<1x128xf32>
    %110 = tpu.matmul %107, %109, %cst_57 {dimension_numbers = #tpu.dot_dimension_numbers<[1], [0], [0], [1], [0, 0, 1, 1], [], []>} : vector<1x192xf32>, vector<192x128xf32>, vector<1x128xf32> -> vector<1x128xf32>
    %c0_i32_58 = arith.constant 0 : i32
    %111 = arith.cmpi eq, %arg1, %c0_i32_58 : i32
    %112 = arith.extui %111 : i1 to i32
    %c0_i32_59 = arith.constant 0 : i32
    %113 = arith.cmpi ne, %112, %c0_i32_59 : i32
    scf.if %113 {
      %cst_69 = arith.constant 0.000000e+00 : f32
      %125 = vector.broadcast %cst_69 : f32 to vector<2x128xf32>
      %c0_70 = arith.constant 0 : index
      %c0_71 = arith.constant 0 : index
      %c0_72 = arith.constant 0 : index
      %126 = vector.load %arg9[%c0_70, %c0_71, %c0_72] : memref<1x2x128xf32, #tpu.memory_space<vmem>>, vector<1x2x128xf32>
      %127 = vector.shape_cast %126 : vector<1x2x128xf32> to vector<2x128xf32>
      %128 = vector.shape_cast %125 : vector<2x128xf32> to vector<1x2x128xf32>
      tpu.vector_store %arg9[%c0_70, %c0_71, %c0_72], %128 {strides = array<i32>} : memref<1x2x128xf32, #tpu.memory_space<vmem>>, vector<1x2x128xf32>,
    } else {
    }
    %c0_60 = arith.constant 0 : index
    %c0_61 = arith.constant 0 : index
    %c0_62 = arith.constant 0 : index
    %114 = vector.load %arg9[%c0_60, %c0_61, %c0_62] : memref<1x2x128xf32, #tpu.memory_space<vmem>>, vector<1x2x128xf32>
    %115 = vector.shape_cast %114 : vector<1x2x128xf32> to vector<2x128xf32>
    %116 = tpu.concatenate %108, %110 in 0 : vector<1x128xf32>, vector<1x128xf32> -> vector<2x128xf32>
    %117 = arith.addf %115, %116 : vector<2x128xf32>
    %c0_63 = arith.constant 0 : index
    %c0_64 = arith.constant 0 : index
    %c0_65 = arith.constant 0 : index
    %118 = vector.load %arg9[%c0_63, %c0_64, %c0_65] : memref<1x2x128xf32, #tpu.memory_space<vmem>>, vector<1x2x128xf32>
    %119 = vector.shape_cast %118 : vector<1x2x128xf32> to vector<2x128xf32>
    %120 = vector.shape_cast %117 : vector<2x128xf32> to vector<1x2x128xf32>
    tpu.vector_store %arg9[%c0_63, %c0_64, %c0_65], %120 {strides = array<i32>} : memref<1x2x128xf32, #tpu.memory_space<vmem>>, vector<1x2x128xf32>,
    %121 = arith.truncf %86 : vector<192x128xf32> to vector<192x128xbf16>
    %c0_66 = arith.constant 0 : index
    %c0_67 = arith.constant 0 : index
    %c0_68 = arith.constant 0 : index
    %122 = vector.load %arg8[%c0_66, %c0_67, %c0_68] : memref<1x192x128xbf16, #tpu.memory_space<vmem>>, vector<1x192x128xbf16>
    %123 = vector.shape_cast %122 : vector<1x192x128xbf16> to vector<192x128xbf16>
    %124 = vector.shape_cast %121 : vector<192x128xbf16> to vector<1x192x128xbf16>
    tpu.vector_store %arg8[%c0_66, %c0_67, %c0_68], %124 {strides = array<i32>} : memref<1x192x128xbf16, #tpu.memory_space<vmem>>, vector<1x192x128xbf16>,
    return
  }
  func.func @transform_0(%arg0: i32, %arg1: i32) -> (i32, i32, i32) {
    %c4_i32 = arith.constant 4 : i32
    %0 = arith.muli %arg1, %c4_i32 : i32
    %c1_i32 = arith.constant 1 : i32
    %1 = arith.subi %0, %c1_i32 : i32
    %c0_i32 = arith.constant 0 : i32
    %2 = arith.maxsi %1, %c0_i32 : i32
    %c0_i32_0 = arith.constant 0 : i32
    %c0_i32_1 = arith.constant 0 : i32
    return %arg0, %2, %c0_i32_0 : i32, i32, i32
  }
  func.func @transform_1(%arg0: i32, %arg1: i32) -> (i32, i32, i32) {
    %c0_i32 = arith.constant 0 : i32
    %c0_i32_0 = arith.constant 0 : i32
    return %arg0, %arg1, %c0_i32 : i32, i32, i32
  }
  func.func @transform_2(%arg0: i32, %arg1: i32) -> (i32, i32, i32) {
    %c1_i32 = arith.constant 1 : i32
    %0 = arith.addi %arg1, %c1_i32 : i32
    %c4_i32 = arith.constant 4 : i32
    %1 = arith.muli %0, %c4_i32 : i32
    %c7_i32 = arith.constant 7 : i32
    %2 = arith.minsi %1, %c7_i32 : i32
    %c0_i32 = arith.constant 0 : i32
    %c0_i32_0 = arith.constant 0 : i32
    return %arg0, %2, %c0_i32 : i32, i32, i32
  }
  func.func @transform_3(%arg0: i32, %arg1: i32) -> (i32, i32) {
    %c0_i32 = arith.constant 0 : i32
    %c0_i32_0 = arith.constant 0 : i32
    %c0_i32_1 = arith.constant 0 : i32
    return %c0_i32, %c0_i32_0 : i32, i32
  }
  func.func @transform_4(%arg0: i32, %arg1: i32) -> (i32, i32) {
    %c0_i32 = arith.constant 0 : i32
    %c0_i32_0 = arith.constant 0 : i32
    %c0_i32_1 = arith.constant 0 : i32
    return %c0_i32, %c0_i32_0 : i32, i32
  }
  func.func @transform_5(%arg0: i32, %arg1: i32) -> (i32, i32, i32) {
    %c0_i32 = arith.constant 0 : i32
    %c0_i32_0 = arith.constant 0 : i32
    %c0_i32_1 = arith.constant 0 : i32
    %c0_i32_2 = arith.constant 0 : i32
    return %c0_i32, %c0_i32_0, %c0_i32_1 : i32, i32, i32
  }
  func.func @transform_6(%arg0: i32, %arg1: i32) -> (i32, i32, i32) {
    %c0_i32 = arith.constant 0 : i32
    %c0_i32_0 = arith.constant 0 : i32
    return %arg0, %arg1, %c0_i32 : i32, i32, i32
  }
  func.func @transform_7(%arg0: i32, %arg1: i32) -> (i32, i32, i32) {
    %c0_i32 = arith.constant 0 : i32
    %c0_i32_0 = arith.constant 0 : i32
    %c0_i32_1 = arith.constant 0 : i32
    return %arg0, %c0_i32, %c0_i32_0 : i32, i32, i32
  }
}

module attributes {stable_mosaic.version = 11 : i64} {
  func.func @_pool_kernel(%arg0: i32, %arg1: i32, %arg2: memref<1x192x128xbf16, #tpu.memory_space<vmem>>, %arg3: memref<1x128xf32, #tpu.memory_space<vmem>>, %arg4: memref<1x128xf32, #tpu.memory_space<vmem>>, %arg5: memref<32x192xf32, #tpu.memory_space<vmem>>, %arg6: memref<1x1x32x128xf32, #tpu.memory_space<vmem>>) attributes {dimension_semantics = [#tpu.dimension_semantics<parallel>, #tpu.dimension_semantics<arbitrary>], iteration_bounds = array<i64: 2, 2>, scalar_prefetch = 0 : i64, scratch_operands = 0 : i64, tpu.core_type = #tpu.core_type<tc>, window_params = [{transform_indices = @transform_0, window_bounds = array<i64: 1, 192, 128>}, {pipeline_mode = #tpu.pipeline_mode<synchronous>, transform_indices = @transform_1, window_bounds = array<i64: 1, 128>}, {pipeline_mode = #tpu.pipeline_mode<synchronous>, transform_indices = @transform_2, window_bounds = array<i64: 1, 128>}, {pipeline_mode = #tpu.pipeline_mode<synchronous>, transform_indices = @transform_3, window_bounds = array<i64: 32, 192>}, {transform_indices = @transform_4, window_bounds = array<i64: 1, 1, 32, 128>}]} {
    %c0 = arith.constant 0 : index
    %c0_0 = arith.constant 0 : index
    %c0_1 = arith.constant 0 : index
    %0 = vector.load %arg2[%c0, %c0_0, %c0_1] : memref<1x192x128xbf16, #tpu.memory_space<vmem>>, vector<1x192x128xbf16>
    %1 = vector.shape_cast %0 : vector<1x192x128xbf16> to vector<192x128xbf16>
    %2 = arith.extf %1 : vector<192x128xbf16> to vector<192x128xf32>
    %c0_2 = arith.constant 0 : index
    %c0_3 = arith.constant 0 : index
    %3 = vector.load %arg3[%c0_2, %c0_3] : memref<1x128xf32, #tpu.memory_space<vmem>>, vector<1x128xf32>
    %4 = vector.broadcast %3 : vector<1x128xf32> to vector<192x128xf32>
    %5 = arith.mulf %2, %4 : vector<192x128xf32>
    %c0_4 = arith.constant 0 : index
    %c0_5 = arith.constant 0 : index
    %6 = vector.load %arg4[%c0_4, %c0_5] : memref<1x128xf32, #tpu.memory_space<vmem>>, vector<1x128xf32>
    %7 = vector.broadcast %6 : vector<1x128xf32> to vector<192x128xf32>
    %8 = arith.addf %5, %7 : vector<192x128xf32>
    %cst = arith.constant 0.000000e+00 : f32
    %9 = vector.broadcast %cst : f32 to vector<192x128xf32>
    %10 = arith.maximumf %8, %9 : vector<192x128xf32>
    %c0_6 = arith.constant 0 : index
    %c0_7 = arith.constant 0 : index
    %11 = vector.load %arg5[%c0_6, %c0_7] : memref<32x192xf32, #tpu.memory_space<vmem>>, vector<32x192xf32>
    %cst_8 = arith.constant dense<0.000000e+00> : vector<32x128xf32>
    %12 = tpu.matmul %11, %10, %cst_8 {dimension_numbers = #tpu.dot_dimension_numbers<[1], [0], [0], [1], [0, 0, 1, 1], [], []>} : vector<32x192xf32>, vector<192x128xf32>, vector<32x128xf32> -> vector<32x128xf32>
    %c0_9 = arith.constant 0 : index
    %c0_10 = arith.constant 0 : index
    %c0_11 = arith.constant 0 : index
    %c0_12 = arith.constant 0 : index
    %13 = vector.load %arg6[%c0_9, %c0_10, %c0_11, %c0_12] : memref<1x1x32x128xf32, #tpu.memory_space<vmem>>, vector<1x1x32x128xf32>
    %14 = vector.shape_cast %13 : vector<1x1x32x128xf32> to vector<32x128xf32>
    %15 = vector.shape_cast %12 : vector<32x128xf32> to vector<1x1x32x128xf32>
    tpu.vector_store %arg6[%c0_9, %c0_10, %c0_11, %c0_12], %15 {strides = array<i32>} : memref<1x1x32x128xf32, #tpu.memory_space<vmem>>, vector<1x1x32x128xf32>,
    return
  }
  func.func @transform_0(%arg0: i32, %arg1: i32) -> (i32, i32, i32) {
    %c0_i32 = arith.constant 0 : i32
    %c0_i32_0 = arith.constant 0 : i32
    return %arg0, %arg1, %c0_i32 : i32, i32, i32
  }
  func.func @transform_1(%arg0: i32, %arg1: i32) -> (i32, i32) {
    %c0_i32 = arith.constant 0 : i32
    %c0_i32_0 = arith.constant 0 : i32
    %c0_i32_1 = arith.constant 0 : i32
    return %c0_i32, %c0_i32_0 : i32, i32
  }
  func.func @transform_2(%arg0: i32, %arg1: i32) -> (i32, i32) {
    %c0_i32 = arith.constant 0 : i32
    %c0_i32_0 = arith.constant 0 : i32
    %c0_i32_1 = arith.constant 0 : i32
    return %c0_i32, %c0_i32_0 : i32, i32
  }
  func.func @transform_3(%arg0: i32, %arg1: i32) -> (i32, i32) {
    %c0_i32 = arith.constant 0 : i32
    %c0_i32_0 = arith.constant 0 : i32
    %c0_i32_1 = arith.constant 0 : i32
    return %c0_i32, %c0_i32_0 : i32, i32
  }
  func.func @transform_4(%arg0: i32, %arg1: i32) -> (i32, i32, i32, i32) {
    %c0_i32 = arith.constant 0 : i32
    %c0_i32_0 = arith.constant 0 : i32
    %c0_i32_1 = arith.constant 0 : i32
    return %arg0, %arg1, %c0_i32, %c0_i32_0 : i32, i32, i32, i32
  }
}

</mosaic_0001>

<llo_original>
// kernel: conv_block_forward.5
$region0: #{conv_block_forward.5}
  #allocation0 [shape = 'u32[]', space=smem, size = 0x4, offset = 0x4, fixed_abs, tag = 'smem constant byte address 0x4 - core index']
  #allocation1 [shape = 'u32[144,128]{1,0:T(1,128)}', space=vmem, size = 0x12000, scoped, tag = 'internal scratch']
  %s0 = inlined_call_operand.vmem [shape: bf16[2,384,128], index: 0, kind: input, shape index: {}]
  %s1 = inlined_call_operand.vmem [shape: f32[1,128], index: 1, kind: input, shape index: {}]
  %s2 = inlined_call_operand.vmem [shape: f32[1,128], index: 2, kind: input, shape index: {}]
  %s3 = inlined_call_operand.vmem [shape: f32[32,192], index: 3, kind: input, shape index: {}]
  %s4 = inlined_call_operand.vmem [shape: f32[2,2,32,128], index: 4, kind: output, shape index: {}]
  %s5 = sld [smem:[#allocation0]]
  $region49: #{conv_block_forward.5} parent=0
    _
  %s7 = ssub.s32 1, %s5
  %s8 = scalar_select 0, %s7, %s5
  loop: start=0, step=1, limit=6
  $region2: #{conv_block_forward.5} parent=0 // loop_pre_header
    _
  $region3: #{conv_block_forward.5} parent=0 // loop_header
    %s10 = sphi 0, %s14
    %p11 = scmp.ge.s32.totalorder %s10, 6
    %s17 = sphi 0, %s29
    %s18 = sphi 0, %s25
    %s19 = sphi 0, %s17
    %s20 = sphi 0, %s18
    %s21 = sphi 0, %s19
    %s22 = sphi 0, %s20
    %s34 = sphi 0, %s36
    %s37 = sphi 0, %s34
    %s38 = sphi 0, %s37
    %s54 = sphi 0, %s38
    %s58 = sphi 0, %s58
    %s60 = sphi 0, %s58
    %s61 = sphi 0, %s60
    %s75 = sphi 0, %s61
    %s79 = sphi 0, %s79
    %s81 = sphi 0, %s79
    %s82 = sphi 0, %s81
    %s96 = sphi 0, %s82
    %s100 = sphi 0, %s100
    %s102 = sphi 0, %s100
    %s103 = sphi 0, %s102
    %s117 = sphi 0, %s103
    %s125 = sphi 0, %s127
    %s128 = sphi 0, %s125
    %s129 = sphi 0, %s128
    %s145 = sphi 0, %s129
  $region4: #{conv_block_forward.5} parent=0 // loop_header_branch
    %13 = sbr.rel (%p11) target = $region8
  $region5: #{conv_block_forward.5} parent=0 // loop_body
    %s15 = ssub.s32 %s10, 1
    %s16 = ssub.s32 %s10, 2
    %s23 = sadd.s32 1, %s18
    %p24 = scmp.ge.s32.totalorder %s23, 2
    %s25 = scalar_select %p24, 0, %s23
    %s26 = sadd.s32 1, %s17
    %s27 = scalar_select %p24, %s26, %s17
    %p28 = scmp.ge.s32.totalorder %s27, 2
    %s29 = scalar_select %p28, 0, %s27
    %s30 = ssub.s32 %s17, %s29
    %s31 = ssub.s32 %s18, %s25
    %s32 = sor.u32 %s30, %s31
    %p33 = scmp.eq.s32.totalorder %s32, 0
    %s35 = sadd.s32 %s34, 1
    %s36 = scalar_select %p33, %s34, %s35
    %p39 = pneg %p33
    %p40 = scmp.eq.s32.totalorder %s10, 3
    %p41 = por %p39, %p40
    %p42 = scmp.ne.s32.totalorder %s34, %s37
    %p43 = scmp.eq.s32.totalorder %s10, 0
    %p44 = por %p42, %p43
    %p45 = scmp.ne.s32.totalorder %s34, %s37
    %p46 = scmp.eq.s32.totalorder %s15, 3
    %p47 = por %p45, %p46
    %p48 = scmp.ne.s32.totalorder %s37, %s38
    %p49 = scmp.eq.s32.totalorder %s15, 0
    %p50 = por %p48, %p49
    %p51 = scmp.ne.s32.totalorder %s37, %s38
    %p52 = scmp.eq.s32.totalorder %s16, 3
    %p53 = por %p51, %p52
    %p55 = scmp.ne.s32.totalorder %s38, %s54
    %p56 = scmp.eq.s32.totalorder %s16, 0
    %p57 = por %p55, %p56
    %s59 = sadd.s32 %s58, 1
    %p62 = scmp.eq.s32.totalorder %s10, 3
    %p63 = scmp.ne.s32.totalorder %s58, %s60
    %p64 = scmp.eq.s32.totalorder %s10, 0
    %p65 = por %p63, %p64
    %p66 = scmp.ne.s32.totalorder %s58, %s60
    %p67 = scmp.eq.s32.totalorder %s15, 3
    %p68 = por %p66, %p67
    %p69 = scmp.ne.s32.totalorder %s60, %s61
    %p70 = scmp.eq.s32.totalorder %s15, 0
    %p71 = por %p69, %p70
    %p72 = scmp.ne.s32.totalorder %s60, %s61
    %p73 = scmp.eq.s32.totalorder %s16, 3
    %p74 = por %p72, %p73
    %p76 = scmp.ne.s32.totalorder %s61, %s75
    %p77 = scmp.eq.s32.totalorder %s16, 0
    %p78 = por %p76, %p77
    %s80 = sadd.s32 %s79, 1
    %p83 = scmp.eq.s32.totalorder %s10, 3
    %p84 = scmp.ne.s32.totalorder %s79, %s81
    %p85 = scmp.eq.s32.totalorder %s10, 0
    %p86 = por %p84, %p85
    %p87 = scmp.ne.s32.totalorder %s79, %s81
    %p88 = scmp.eq.s32.totalorder %s15, 3
    %p89 = por %p87, %p88
    %p90 = scmp.ne.s32.totalorder %s81, %s82
    %p91 = scmp.eq.s32.totalorder %s15, 0
    %p92 = por %p90, %p91
    %p93 = scmp.ne.s32.totalorder %s81, %s82
    %p94 = scmp.eq.s32.totalorder %s16, 3
    %p95 = por %p93, %p94
    %p97 = scmp.ne.s32.totalorder %s82, %s96
    %p98 = scmp.eq.s32.totalorder %s16, 0
    %p99 = por %p97, %p98
    %s101 = sadd.s32 %s100, 1
    %p104 = scmp.eq.s32.totalorder %s10, 3
    %p105 = scmp.ne.s32.totalorder %s100, %s102
    %p106 = scmp.eq.s32.totalorder %s10, 0
    %p107 = por %p105, %p106
    %p108 = scmp.ne.s32.totalorder %s100, %s102
    %p109 = scmp.eq.s32.totalorder %s15, 3
    %p110 = por %p108, %p109
    %p111 = scmp.ne.s32.totalorder %s102, %s103
    %p112 = scmp.eq.s32.totalorder %s15, 0
    %p113 = por %p111, %p112
    %p114 = scmp.ne.s32.totalorder %s102, %s103
    %p115 = scmp.eq.s32.totalorder %s16, 3
    %p116 = por %p114, %p115
    %p118 = scmp.ne.s32.totalorder %s103, %s117
    %p119 = scmp.eq.s32.totalorder %s16, 0
    %p120 = por %p118, %p119
    %s121 = ssub.s32 %s17, %s29
    %s122 = ssub.s32 %s18, %s25
    %s123 = sor.u32 %s121, %s122
    %p124 = scmp.eq.s32.totalorder %s123, 0
    %s126 = sadd.s32 %s125, 1
    %s127 = scalar_select %p124, %s125, %s126
    %p130 = pneg %p124
    %p131 = scmp.eq.s32.totalorder %s10, 3
    %p132 = por %p130, %p131
    %p133 = scmp.ne.s32.totalorder %s125, %s128
    %p134 = scmp.eq.s32.totalorder %s10, 0
    %p135 = por %p133, %p134
    %p136 = scmp.ne.s32.totalorder %s125, %s128
    %p137 = scmp.eq.s32.totalorder %s15, 3
    %p138 = por %p136, %p137
    %p139 = scmp.ne.s32.totalorder %s128, %s129
    %p140 = scmp.eq.s32.totalorder %s15, 0
    %p141 = por %p139, %p140
    %p142 = scmp.ne.s32.totalorder %s128, %s129
    %p143 = scmp.eq.s32.totalorder %s16, 3
    %p144 = por %p142, %p143
    %p146 = scmp.ne.s32.totalorder %s129, %s145
    %p147 = scmp.eq.s32.totalorder %s16, 0
    %p148 = por %p146, %p147
    %p149 = scmp.le.s32.totalorder 1, %s10
    %p150 = scmp.lt.s32.totalorder %s10, 5
    %p151 = pnand %p149, %p150
    %p152 = pneg %p151
    // Predicated region
    $region9: #{conv_block_forward.5} parent=5 // pred_check
      _
    $region10: #{conv_block_forward.5} parent=5 // pred_check_branch
      %154 = sbr.rel (%p151) target = $region12
    $region11: #{conv_block_forward.5} parent=5 // pred_region
      %s155 = ssub.s32 %s10, 1
      // Predicated region
      $region13: #{conv_block_forward.5} parent=11 // pred_check
        %p156 = pneg %p71
      $region14: #{conv_block_forward.5} parent=11 // pred_check_branch
        %158 = sbr.rel (%p156) target = $region16
      $region15: #{conv_block_forward.5} parent=11 // pred_region
        _
      $region16: #{conv_block_forward.5} parent=11 // pred_fallthru
        _
      // Predicated region
      $region17: #{conv_block_forward.5} parent=11 // pred_check
        %p159 = pneg %p92
      $region18: #{conv_block_forward.5} parent=11 // pred_check_branch
        %161 = sbr.rel (%p159) target = $region20
      $region19: #{conv_block_forward.5} parent=11 // pred_region
        _
      $region20: #{conv_block_forward.5} parent=11 // pred_fallthru
        _
      // Predicated region
      $region21: #{conv_block_forward.5} parent=11 // pred_check
        %p162 = pneg %p113
      $region22: #{conv_block_forward.5} parent=11 // pred_check_branch
        %164 = sbr.rel (%p162) target = $region24
      $region23: #{conv_block_forward.5} parent=11 // pred_region
        _
      $region24: #{conv_block_forward.5} parent=11 // pred_fallthru
        _
    $region12: #{conv_block_forward.5} parent=5 // pred_fallthru
      _
    %p165 = scmp.lt.s32.totalorder %s10, 4
    // Predicated region
    $region25: #{conv_block_forward.5} parent=5 // pred_check
      %p166 = pneg %p165
    $region26: #{conv_block_forward.5} parent=5 // pred_check_branch
      %168 = sbr.rel (%p166) target = $region28
    $region27: #{conv_block_forward.5} parent=5 // pred_region
      // Predicated region
      $region29: #{conv_block_forward.5} parent=27 // pred_check
        %p169 = pneg %p44
      $region30: #{conv_block_forward.5} parent=27 // pred_check_branch
        %171 = sbr.rel (%p169) target = $region32
      $region31: #{conv_block_forward.5} parent=27 // pred_region
        %s172 = smul.u32 24, %s18
        %p173 = scmp.lt.s32.totalorder %s17, 1
        %s174 = scalar_select %p173, %s17, 1
        %p175 = scmp.lt.s32.totalorder %s172, 47
        %s176 = scalar_select %p175, %s172, 47
        %s177 = smul.addr %s174, 48
        %s178 = sadd.s32 %s176, %s177
        %s179 = smul.addr %s178, 4
        %s180 = scalar_lea.vmem %s0, %s179
        %s181 = smul.u32 24, %s18
      $region32: #{conv_block_forward.5} parent=27 // pred_fallthru
        _
    $region28: #{conv_block_forward.5} parent=5 // pred_fallthru
      _
    %p182 = scmp.le.s32.totalorder 1, %s10
    %p183 = scmp.lt.s32.totalorder %s10, 5
    %p184 = pnand %p182, %p183
    %p185 = pneg %p184
    // Predicated region
    $region33: #{conv_block_forward.5} parent=5 // pred_check
      _
    $region34: #{conv_block_forward.5} parent=5 // pred_check_branch
      %187 = sbr.rel (%p184) target = $region36
    $region35: #{conv_block_forward.5} parent=5 // pred_region
      %s188 = ssub.s32 %s10, 1
      %s189 = smul.u32 24, %s20
      %p190 = scmp.lt.s32.totalorder %s19, 1
      %s191 = scalar_select %p190, %s19, 1
      %p192 = scmp.lt.s32.totalorder %s189, 47
      %s193 = scalar_select %p192, %s189, 47
      %s194 = smul.addr %s191, 48
      %s195 = sadd.s32 %s193, %s194
      %s196 = smul.addr %s195, 4
      %s197 = scalar_lea.vmem %s0, %s196
      %p198 = pneg %p50
      %p199 = pneg %p47
      %p200 = pneg %p71
      %p201 = pneg %p68
      %p202 = pneg %p92
      %p203 = pneg %p89
      %p204 = pneg %p113
      %p205 = pneg %p110
      %p206 = pneg %p141
      %p207 = pneg %p138
      %p208 = scmp.lt.s32.totalorder %s19, 1
      %s209 = scalar_select %p208, %s19, 1
      %p210 = scmp.lt.s32.totalorder %s20, 1
      %s211 = scalar_select %p210, %s20, 1
      %s212 = smul.addr %s211, 4
      %s213 = smul.addr %s209, 8
      %s214 = sadd.s32 %s212, %s213
      %s215 = smul.addr %s214, 8
      %s216 = scalar_lea.vmem %s4, %s215
      %s217 = smul.u32 24, %s20
      %p218 = scmp.lt.s32.totalorder %s19, 1
      %s219 = scalar_select %p218, %s19, 1
      %p220 = scmp.lt.s32.totalorder %s217, 47
      %s221 = scalar_select %p220, %s217, 47
      %s222 = smul.addr %s219, 48
      %s223 = sadd.s32 %s221, %s222
      %s224 = smul.addr %s223, 4
      %s225 = scalar_lea.vmem %s0, %s224
      %s226 = smul.u32 24, %s20
      %p227 = scmp.lt.s32.totalorder %s19, 1
      %s228 = scalar_select %p227, %s19, 1
      %p229 = scmp.lt.s32.totalorder %s20, 1
      %s230 = scalar_select %p229, %s20, 1
      %s231 = smul.addr %s230, 4
      %s232 = smul.addr %s228, 8
      %s233 = sadd.s32 %s231, %s232
      %s234 = smul.addr %s233, 8
      %s235 = scalar_lea.vmem %s4, %s234
      %v236 = vld [vmem:[%s225] sm:$0xf]
      %v237 = vld [vmem:[%s225 + $0x4] sm:$0xf]
      %v238 = vld [vmem:[%s225 + $0x8] sm:$0xf]
      %v239 = vld [vmem:[%s225 + $0xc] sm:$0xf]
      %v240 = vld [vmem:[%s225 + $0x10] sm:$0xf]
      %v241 = vld [vmem:[%s225 + $0x14] sm:$0xf]
      %v242 = vld [vmem:[%s225 + $0x18] sm:$0xf]
      %v243 = vld [vmem:[%s225 + $0x1c] sm:$0xf]
      %v244 = vld [vmem:[%s225 + $0x20] sm:$0xf]
      %v245 = vld [vmem:[%s225 + $0x24] sm:$0xf]
      %v246 = vld [vmem:[%s225 + $0x28] sm:$0xf]
      %v247 = vld [vmem:[%s225 + $0x2c] sm:$0xf]
      %v248 = vld [vmem:[%s225 + $0x30] sm:$0xf]
      %v249 = vld [vmem:[%s225 + $0x34] sm:$0xf]
      %v250 = vld [vmem:[%s225 + $0x38] sm:$0xf]
      %v251 = vld [vmem:[%s225 + $0x3c] sm:$0xf]
      %v252 = vld [vmem:[%s225 + $0x40] sm:$0xf]
      %v253 = vld [vmem:[%s225 + $0x44] sm:$0xf]
      %v254 = vld [vmem:[%s225 + $0x48] sm:$0xf]
      %v255 = vld [vmem:[%s225 + $0x4c] sm:$0xf]
      %v256 = vld [vmem:[%s225 + $0x50] sm:$0xf]
      %v257 = vld [vmem:[%s225 + $0x54] sm:$0xf]
      %v258 = vld [vmem:[%s225 + $0x58] sm:$0xf]
      %v259 = vld [vmem:[%s225 + $0x5c] sm:$0xf]
      %v260 = vunpack.c.l.bf16 %v236
      %v261 = vunpack.c.l.bf16 %v237
      %v262 = vunpack.c.l.bf16 %v238
      %v263 = vunpack.c.l.bf16 %v239
      %v264 = vunpack.c.l.bf16 %v240
      %v265 = vunpack.c.l.bf16 %v241
      %v266 = vunpack.c.l.bf16 %v242
      %v267 = vunpack.c.l.bf16 %v243
      %v268 = vunpack.c.l.bf16 %v244
      %v269 = vunpack.c.l.bf16 %v245
      %v270 = vunpack.c.l.bf16 %v246
      %v271 = vunpack.c.l.bf16 %v247
      %v272 = vunpack.c.l.bf16 %v248
      %v273 = vunpack.c.l.bf16 %v249
      %v274 = vunpack.c.l.bf16 %v250
      %v275 = vunpack.c.l.bf16 %v251
      %v276 = vunpack.c.l.bf16 %v252
      %v277 = vunpack.c.l.bf16 %v253
      %v278 = vunpack.c.l.bf16 %v254
      %v279 = vunpack.c.l.bf16 %v255
      %v280 = vunpack.c.l.bf16 %v256
      %v281 = vunpack.c.l.bf16 %v257
      %v282 = vunpack.c.l.bf16 %v258
      %v283 = vunpack.c.l.bf16 %v259
      %v284 = vld [vmem:[%s1] sm:$0x1]
      %v286 = vlaneseq
      %v287 = vshrl.u32 %v286, 7
      %v288 = vsub.s32 0, %v287
      %v289 = vrot.slane %v284, %v288
      %v291 = vmul.f32 %v260, %v289
      %v292 = vmul.f32 %v261, %v289
      %v293 = vmul.f32 %v262, %v289
      %v294 = vmul.f32 %v263, %v289
      %v295 = vmul.f32 %v264, %v289
      %v296 = vmul.f32 %v265, %v289
      %v297 = vmul.f32 %v266, %v289
      %v298 = vmul.f32 %v267, %v289
      %v299 = vmul.f32 %v268, %v289
      %v300 = vmul.f32 %v269, %v289
      %v301 = vmul.f32 %v270, %v289
      %v302 = vmul.f32 %v271, %v289
      %v303 = vmul.f32 %v272, %v289
      %v304 = vmul.f32 %v273, %v289
      %v305 = vmul.f32 %v274, %v289
      %v306 = vmul.f32 %v275, %v289
      %v307 = vmul.f32 %v276, %v289
      %v308 = vmul.f32 %v277, %v289
      %v309 = vmul.f32 %v278, %v289
      %v310 = vmul.f32 %v279, %v289
      %v311 = vmul.f32 %v280, %v289
      %v312 = vmul.f32 %v281, %v289
      %v313 = vmul.f32 %v282, %v289
      %v314 = vmul.f32 %v283, %v289
      %v315 = vld [vmem:[%s2] sm:$0x1]
      %v317 = vlaneseq
      %v318 = vshrl.u32 %v317, 7
      %v319 = vsub.s32 0, %v318
      %v320 = vrot.slane %v315, %v319
      %v322 = vadd.f32 %v291, %v320
      %v323 = vadd.f32 %v292, %v320
      %v324 = vadd.f32 %v293, %v320
      %v325 = vadd.f32 %v294, %v320
      %v326 = vadd.f32 %v295, %v320
      %v327 = vadd.f32 %v296, %v320
      %v328 = vadd.f32 %v297, %v320
      %v329 = vadd.f32 %v298, %v320
      %v330 = vadd.f32 %v299, %v320
      %v331 = vadd.f32 %v300, %v320
      %v332 = vadd.f32 %v301, %v320
      %v333 = vadd.f32 %v302, %v320
      %v334 = vadd.f32 %v303, %v320
      %v335 = vadd.f32 %v304, %v320
      %v336 = vadd.f32 %v305, %v320
      %v337 = vadd.f32 %v306, %v320
      %v338 = vadd.f32 %v307, %v320
      %v339 = vadd.f32 %v308, %v320
      %v340 = vadd.f32 %v309, %v320
      %v341 = vadd.f32 %v310, %v320
      %v342 = vadd.f32 %v311, %v320
      %v343 = vadd.f32 %v312, %v320
      %v344 = vadd.f32 %v313, %v320
      %v345 = vadd.f32 %v314, %v320
      %v346 = vmax.f32 %v322, 0.0
      %v347 = vmax.f32 %v323, 0.0
      %v348 = vmax.f32 %v324, 0.0
      %v349 = vmax.f32 %v325, 0.0
      %v350 = vmax.f32 %v326, 0.0
      %v351 = vmax.f32 %v327, 0.0
      %v352 = vmax.f32 %v328, 0.0
      %v353 = vmax.f32 %v329, 0.0
      %v354 = vmax.f32 %v330, 0.0
      %v355 = vmax.f32 %v331, 0.0
      %v356 = vmax.f32 %v332, 0.0
      %v357 = vmax.f32 %v333, 0.0
      %v358 = vmax.f32 %v334, 0.0
      %v359 = vmax.f32 %v335, 0.0
      %v360 = vmax.f32 %v336, 0.0
      %v361 = vmax.f32 %v337, 0.0
      %v362 = vmax.f32 %v338, 0.0
      %v363 = vmax.f32 %v339, 0.0
      %v364 = vmax.f32 %v340, 0.0
      %v365 = vmax.f32 %v341, 0.0
      %v366 = vmax.f32 %v342, 0.0
      %v367 = vmax.f32 %v343, 0.0
      %v368 = vmax.f32 %v344, 0.0
      %v369 = vmax.f32 %v345, 0.0
      %v370 = vld [vmem:[%s3] sm:$0xff]
      %v371 = vld [vmem:[%s3 + $0x8] sm:$0xff]
      %v372 = vld [vmem:[%s3 + $0x10] sm:$0xff]
      %v373 = vld [vmem:[%s3 + $0x18] sm:$0xff]
      %v374 = vld [vmem:[%s3 + $0x20] sm:$0xff]
      %v375 = vld [vmem:[%s3 + $0x28] sm:$0xff]
      %v376 = vld [vmem:[%s3 + $0x30] sm:$0xff]
      %v377 = vld [vmem:[%s3 + $0x38] sm:$0xff]
      %vm378 = vcmask 523264
      %v380 = vsel %vm378, %v371, 0
      %v383 = vsel %vm378, %v373, 0
      %v386 = vsel %vm378, %v375, 0
      %v389 = vsel %vm378, %v377, 0
      %391 = vmatprep.subr.mxu0 0.0
      %392 = vmatpush1.msra.mxu0 %v346
      %393 = vmatprep.subr.mxu0 0.0
      %394 = vmatpush1.msra.mxu0 %v347
      %395 = vmatprep.subr.mxu0 0.0
      %396 = vmatpush1.msra.mxu0 %v348
      %397 = vmatprep.subr.mxu0 0.0
      %398 = vmatpush1.msra.mxu0 %v349
      %399 = vmatprep.subr.mxu0 0.0
      %400 = vmatpush1.msra.mxu0 %v350
      %401 = vmatprep.subr.mxu0 0.0
      %402 = vmatpush1.msra.mxu0 %v351
      %403 = vmatprep.subr.mxu0 0.0
      %404 = vmatpush1.msra.mxu0 %v352
      %405 = vmatprep.subr.mxu0 0.0
      %406 = vmatpush1.msra.mxu0 %v353
      %407 = vmatprep.subr.mxu0 0.0
      %408 = vmatpush1.msra.mxu0 %v354
      %409 = vmatprep.subr.mxu0 0.0
      %410 = vmatpush1.msra.mxu0 %v355
      %411 = vmatprep.subr.mxu0 0.0
      %412 = vmatpush1.msra.mxu0 %v356
      %413 = vmatprep.subr.mxu0 0.0
      %414 = vmatpush1.msra.mxu0 %v357
      %415 = vmatprep.subr.mxu0 0.0
      %416 = vmatpush1.msra.mxu0 %v358
      %417 = vmatprep.subr.mxu0 0.0
      %418 = vmatpush1.msra.mxu0 %v359
      %419 = vmatprep.subr.mxu0 0.0
      %420 = vmatpush1.msra.mxu0 %v360
      %421 = vmatprep.subr.mxu0 0.0
      %422 = vmatpush1.msra.mxu0 %v361
      %423 = vmatprep.subr.mxu0 0.0
      %424 = vmatpush1.msra.mxu0 %v362
      %425 = vmatprep.subr.mxu0 0.0
      %426 = vmatpush1.msra.mxu0 %v363
      %427 = vmatprep.subr.mxu0 0.0
      %428 = vmatpush1.msra.mxu0 %v364
      %429 = vmatprep.subr.mxu0 0.0
      %430 = vmatpush1.msra.mxu0 %v365
      %431 = vmatprep.subr.mxu0 0.0
      %432 = vmatpush1.msra.mxu0 %v366
      %433 = vmatprep.subr.mxu0 0.0
      %434 = vmatpush1.msra.mxu0 %v367
      %435 = vmatprep.subr.mxu0 0.0
      %436 = vmatpush1.msra.mxu0 %v368
      %437 = vmatprep.subr.mxu0 0.0
      %438 = vmatpush1.msra.mxu0 %v369
      %439 = vmatprep.subr.mxu0 0.0
      %440 = vmatpush1.msra.mxu0 0.0
      %441 = vmatprep.subr.mxu0 0.0
      %442 = vmatpush1.msra.mxu0 0.0
      %443 = vmatprep.subr.mxu0 0.0
      %444 = vmatpush1.msra.mxu0 0.0
      %445 = vmatprep.subr.mxu0 0.0
      %446 = vmatpush1.msra.mxu0 0.0
      %447 = vmatprep.subr.mxu0 0.0
      %448 = vmatpush1.msra.mxu0 0.0
      %449 = vmatprep.subr.mxu0 0.0
      %450 = vmatpush1.msra.mxu0 0.0
      %451 = vmatprep.subr.mxu0 0.0
      %452 = vmatpush1.msra.mxu0 0.0
      %453 = vmatprep.subr.mxu0 0.0
      %454 = vmatpush1.msra.mxu0 0.0
      %455 = vmatprep.mubr.f32.mxu0 %v380
      %456 = vmatmul.mubr.f32.gmra.mrb[0].mxu0 %v370
      %v457 = vpop.f32.mrb[0].mxu0
      %v458 = vadd.f32 0.0, %v457
      %v459 = vpop.f32.mrb[0].mxu0
      %460 = vmatprep.mubr.f32.mxu0 %v383
      %461 = vmatmul.mubr.f32.gmra.mrb[0].mxu0 %v372
      %v462 = vpop.f32.mrb[0].mxu0
      %v463 = vadd.f32 0.0, %v462
      %v464 = vpop.f32.mrb[0].mxu0
      %465 = vmatprep.mubr.f32.mxu0 %v386
      %466 = vmatmul.mubr.f32.gmra.mrb[0].mxu0 %v374
      %v467 = vpop.f32.mrb[0].mxu0
      %v468 = vadd.f32 0.0, %v467
      %v469 = vpop.f32.mrb[0].mxu0
      %470 = vmatprep.mubr.f32.mxu0 %v389
      %471 = vmatmul.mubr.f32.gmra.mrb[0].mxu0 %v376
      %v472 = vpop.f32.mrb[0].mxu0
      %v473 = vadd.f32 0.0, %v472
      %v474 = vpop.f32.mrb[0].mxu0
      %475 = vdwg.mxu0
      %476 = vst [vmem:[%s235] sm:$0xff] %v458
      %477 = vst [vmem:[%s235 + $0x8] sm:$0xff] %v463
      %478 = vst [vmem:[%s235 + $0x10] sm:$0xff] %v468
      %479 = vst [vmem:[%s235 + $0x18] sm:$0xff] %v473
      %p480 = scmp.lt.s32.totalorder %s19, 1
      %s481 = scalar_select %p480, %s19, 1
      %p482 = scmp.lt.s32.totalorder %s20, 1
      %s483 = scalar_select %p482, %s20, 1
      %s484 = smul.addr %s483, 4
      %s485 = smul.addr %s481, 8
      %s486 = sadd.s32 %s484, %s485
      %s487 = smul.addr %s486, 8
      %s488 = scalar_lea.vmem %s4, %s487
      // Predicated region
      $region37: #{conv_block_forward.5} parent=35 // pred_check
        %p489 = pneg %p138
      $region38: #{conv_block_forward.5} parent=35 // pred_check_branch
        %491 = sbr.rel (%p489) target = $region40
      $region39: #{conv_block_forward.5} parent=35 // pred_region
        _
      $region40: #{conv_block_forward.5} parent=35 // pred_fallthru
        _
    $region36: #{conv_block_forward.5} parent=5 // pred_fallthru
      _
    %p492 = scmp.le.s32.totalorder 2, %s10
    // Predicated region
    $region41: #{conv_block_forward.5} parent=5 // pred_check
      %p493 = pneg %p492
    $region42: #{conv_block_forward.5} parent=5 // pred_check_branch
      %495 = sbr.rel (%p493) target = $region44
    $region43: #{conv_block_forward.5} parent=5 // pred_region
      %s496 = ssub.s32 %s10, 2
      // Predicated region
      $region45: #{conv_block_forward.5} parent=43 // pred_check
        %p497 = pneg %p144
      $region46: #{conv_block_forward.5} parent=43 // pred_check_branch
        %499 = sbr.rel (%p497) target = $region48
      $region47: #{conv_block_forward.5} parent=43 // pred_region
        %p500 = scmp.lt.s32.totalorder %s21, 1
        %s501 = scalar_select %p500, %s21, 1
        %p502 = scmp.lt.s32.totalorder %s22, 1
        %s503 = scalar_select %p502, %s22, 1
        %s504 = smul.addr %s503, 4
        %s505 = smul.addr %s501, 8
        %s506 = sadd.s32 %s504, %s505
        %s507 = smul.addr %s506, 8
        %s508 = scalar_lea.vmem %s4, %s507
      $region48: #{conv_block_forward.5} parent=43 // pred_fallthru
        _
    $region44: #{conv_block_forward.5} parent=5 // pred_fallthru
      _
  $region6: #{conv_block_forward.5} parent=0 // loop_footer
    %s14 = sadd.s32 1, %s10
  $region7: #{conv_block_forward.5} parent=0 // loop_footer_branch
    %9 = sbr.rel target = $region3
  $region8: #{conv_block_forward.5} parent=0 // loop_exit
    _

// kernel: conv_block_forward.3
$region0: #{conv_block_forward.3}
  #allocation0 [shape = 'u32[]', space=smem, size = 0x4, offset = 0x4, fixed_abs, tag = 'smem constant byte address 0x4 - core index']
  #allocation1 [shape = 'u32[144,128]{1,0:T(1,128)}', space=vmem, size = 0x12000, scoped, tag = 'internal scratch']
  #allocation2 [shape = 'bf16[288,128]{1,0:T(16,128)(2,1)}', space=vmem, size = 0x12000, scoped, tag = 'scratch operand']
  #allocation3 [shape = 'bf16[240,384]{1,0:T(16,128)(2,1)}', space=vmem, size = 0x2d000, scoped, tag = 'scratch operand']
  %s0 = inlined_call_operand.vmem [shape: bf16[2,384,128], index: 0, kind: input, shape index: {}, may-alias: {0,1,2}]
  %s1 = inlined_call_operand.vmem [shape: bf16[2,384,128], index: 1, kind: input, shape index: {}, may-alias: {0,1,2}]
  %s2 = inlined_call_operand.vmem [shape: bf16[2,384,128], index: 2, kind: input, shape index: {}, may-alias: {0,1,2}]
  %s3 = inlined_call_operand.vmem [shape: bf16[3,384,128], index: 3, kind: input, shape index: {}]
  %s4 = inlined_call_operand.vmem [shape: bf16[2,384,128], index: 4, kind: output, shape index: {0}]
  %s5 = inlined_call_operand.vmem [shape: f32[2,2,128], index: 5, kind: output, shape index: {1}]
  %6 = xla_tuple %s4, %s5
  %s7 = sld [smem:[#allocation0]]
  $region77: #{conv_block_forward.3} parent=0
    _
  %s9 = ssub.s32 1, %s7
  %s10 = scalar_select 0, %s9, %s7
  loop: start=0, step=1, limit=6
  $region2: #{conv_block_forward.3} parent=0 // loop_pre_header
    _
  $region3: #{conv_block_forward.3} parent=0 // loop_header
    %s12 = sphi 0, %s16
    %p13 = scmp.ge.s32.totalorder %s12, 6
    %s19 = sphi 0, %s31
    %s20 = sphi 0, %s27
    %s21 = sphi 0, %s19
    %s22 = sphi 0, %s20
    %s23 = sphi 0, %s21
    %s24 = sphi 0, %s22
    %s44 = sphi 0, %s46
    %s47 = sphi 0, %s44
    %s48 = sphi 0, %s47
    %s64 = sphi 0, %s48
    %s72 = sphi 0, %s74
    %s75 = sphi 0, %s72
    %s76 = sphi 0, %s75
    %s92 = sphi 0, %s76
    %s108 = sphi 0, %s110
    %s111 = sphi 0, %s108
    %s112 = sphi 0, %s111
    %s128 = sphi 0, %s112
    %s132 = sphi 0, %s132
    %s134 = sphi 0, %s132
    %s135 = sphi 0, %s134
    %s149 = sphi 0, %s135
    %s157 = sphi 0, %s159
    %s160 = sphi 0, %s157
    %s161 = sphi 0, %s160
    %s177 = sphi 0, %s161
    %s183 = sphi 0, %s185
    %s186 = sphi 0, %s183
    %s187 = sphi 0, %s186
    %s203 = sphi 0, %s187
  $region4: #{conv_block_forward.3} parent=0 // loop_header_branch
    %15 = sbr.rel (%p13) target = $region8
  $region5: #{conv_block_forward.3} parent=0 // loop_body
    %s17 = ssub.s32 %s12, 1
    %s18 = ssub.s32 %s12, 2
    %s25 = sadd.s32 1, %s20
    %p26 = scmp.ge.s32.totalorder %s25, 2
    %s27 = scalar_select %p26, 0, %s25
    %s28 = sadd.s32 1, %s19
    %s29 = scalar_select %p26, %s28, %s19
    %p30 = scmp.ge.s32.totalorder %s29, 2
    %s31 = scalar_select %p30, 0, %s29
    %s32 = smul.u32 %s20, 4
    %s33 = ssub.s32 %s32, 1
    %p34 = scmp.gt.s32.totalorder %s33, 0
    %s35 = scalar_select %p34, %s33, 0
    %s36 = smul.u32 %s27, 4
    %s37 = ssub.s32 %s36, 1
    %p38 = scmp.gt.s32.totalorder %s37, 0
    %s39 = scalar_select %p38, %s37, 0
    %s40 = ssub.s32 %s19, %s31
    %s41 = ssub.s32 %s35, %s39
    %s42 = sor.u32 %s40, %s41
    %p43 = scmp.eq.s32.totalorder %s42, 0
    %s45 = sadd.s32 %s44, 1
    %s46 = scalar_select %p43, %s44, %s45
    %p49 = pneg %p43
    %p50 = scmp.eq.s32.totalorder %s12, 3
    %p51 = por %p49, %p50
    %p52 = scmp.ne.s32.totalorder %s44, %s47
    %p53 = scmp.eq.s32.totalorder %s12, 0
    %p54 = por %p52, %p53
    %p55 = scmp.ne.s32.totalorder %s44, %s47
    %p56 = scmp.eq.s32.totalorder %s17, 3
    %p57 = por %p55, %p56
    %p58 = scmp.ne.s32.totalorder %s47, %s48
    %p59 = scmp.eq.s32.totalorder %s17, 0
    %p60 = por %p58, %p59
    %p61 = scmp.ne.s32.totalorder %s47, %s48
    %p62 = scmp.eq.s32.totalorder %s18, 3
    %p63 = por %p61, %p62
    %p65 = scmp.ne.s32.totalorder %s48, %s64
    %p66 = scmp.eq.s32.totalorder %s18, 0
    %p67 = por %p65, %p66
    %s68 = ssub.s32 %s19, %s31
    %s69 = ssub.s32 %s20, %s27
    %s70 = sor.u32 %s68, %s69
    %p71 = scmp.eq.s32.totalorder %s70, 0
    %s73 = sadd.s32 %s72, 1
    %s74 = scalar_select %p71, %s72, %s73
    %p77 = pneg %p71
    %p78 = scmp.eq.s32.totalorder %s12, 3
    %p79 = por %p77, %p78
    %p80 = scmp.ne.s32.totalorder %s72, %s75
    %p81 = scmp.eq.s32.totalorder %s12, 0
    %p82 = por %p80, %p81
    %p83 = scmp.ne.s32.totalorder %s72, %s75
    %p84 = scmp.eq.s32.totalorder %s17, 3
    %p85 = por %p83, %p84
    %p86 = scmp.ne.s32.totalorder %s75, %s76
    %p87 = scmp.eq.s32.totalorder %s17, 0
    %p88 = por %p86, %p87
    %p89 = scmp.ne.s32.totalorder %s75, %s76
    %p90 = scmp.eq.s32.totalorder %s18, 3
    %p91 = por %p89, %p90
    %p93 = scmp.ne.s32.totalorder %s76, %s92
    %p94 = scmp.eq.s32.totalorder %s18, 0
    %p95 = por %p93, %p94
    %s96 = sadd.s32 %s20, 1
    %s97 = smul.u32 %s96, 4
    %p98 = scmp.lt.s32.totalorder %s97, 7
    %s99 = scalar_select %p98, %s97, 7
    %s100 = sadd.s32 %s27, 1
    %s101 = smul.u32 %s100, 4
    %p102 = scmp.lt.s32.totalorder %s101, 7
    %s103 = scalar_select %p102, %s101, 7
    %s104 = ssub.s32 %s19, %s31
    %s105 = ssub.s32 %s99, %s103
    %s106 = sor.u32 %s104, %s105
    %p107 = scmp.eq.s32.totalorder %s106, 0
    %s109 = sadd.s32 %s108, 1
    %s110 = scalar_select %p107, %s108, %s109
    %p113 = pneg %p107
    %p114 = scmp.eq.s32.totalorder %s12, 3
    %p115 = por %p113, %p114
    %p116 = scmp.ne.s32.totalorder %s108, %s111
    %p117 = scmp.eq.s32.totalorder %s12, 0
    %p118 = por %p116, %p117
    %p119 = scmp.ne.s32.totalorder %s108, %s111
    %p120 = scmp.eq.s32.totalorder %s17, 3
    %p121 = por %p119, %p120
    %p122 = scmp.ne.s32.totalorder %s111, %s112
    %p123 = scmp.eq.s32.totalorder %s17, 0
    %p124 = por %p122, %p123
    %p125 = scmp.ne.s32.totalorder %s111, %s112
    %p126 = scmp.eq.s32.totalorder %s18, 3
    %p127 = por %p125, %p126
    %p129 = scmp.ne.s32.totalorder %s112, %s128
    %p130 = scmp.eq.s32.totalorder %s18, 0
    %p131 = por %p129, %p130
    %s133 = sadd.s32 %s132, 1
    %p136 = scmp.eq.s32.totalorder %s12, 3
    %p137 = scmp.ne.s32.totalorder %s132, %s134
    %p138 = scmp.eq.s32.totalorder %s12, 0
    %p139 = por %p137, %p138
    %p140 = scmp.ne.s32.totalorder %s132, %s134
    %p141 = scmp.eq.s32.totalorder %s17, 3
    %p142 = por %p140, %p141
    %p143 = scmp.ne.s32.totalorder %s134, %s135
    %p144 = scmp.eq.s32.totalorder %s17, 0
    %p145 = por %p143, %p144
    %p146 = scmp.ne.s32.totalorder %s134, %s135
    %p147 = scmp.eq.s32.totalorder %s18, 3
    %p148 = por %p146, %p147
    %p150 = scmp.ne.s32.totalorder %s135, %s149
    %p151 = scmp.eq.s32.totalorder %s18, 0
    %p152 = por %p150, %p151
    %s153 = ssub.s32 %s19, %s31
    %s154 = ssub.s32 %s20, %s27
    %s155 = sor.u32 %s153, %s154
    %p156 = scmp.eq.s32.totalorder %s155, 0
    %s158 = sadd.s32 %s157, 1
    %s159 = scalar_select %p156, %s157, %s158
    %p162 = pneg %p156
    %p163 = scmp.eq.s32.totalorder %s12, 3
    %p164 = por %p162, %p163
    %p165 = scmp.ne.s32.totalorder %s157, %s160
    %p166 = scmp.eq.s32.totalorder %s12, 0
    %p167 = por %p165, %p166
    %p168 = scmp.ne.s32.totalorder %s157, %s160
    %p169 = scmp.eq.s32.totalorder %s17, 3
    %p170 = por %p168, %p169
    %p171 = scmp.ne.s32.totalorder %s160, %s161
    %p172 = scmp.eq.s32.totalorder %s17, 0
    %p173 = por %p171, %p172
    %p174 = scmp.ne.s32.totalorder %s160, %s161
    %p175 = scmp.eq.s32.totalorder %s18, 3
    %p176 = por %p174, %p175
    %p178 = scmp.ne.s32.totalorder %s161, %s177
    %p179 = scmp.eq.s32.totalorder %s18, 0
    %p180 = por %p178, %p179
    %s181 = ssub.s32 %s19, %s31
    %p182 = scmp.eq.s32.totalorder %s181, 0
    %s184 = sadd.s32 %s183, 1
    %s185 = scalar_select %p182, %s183, %s184
    %p188 = pneg %p182
    %p189 = scmp.eq.s32.totalorder %s12, 3
    %p190 = por %p188, %p189
    %p191 = scmp.ne.s32.totalorder %s183, %s186
    %p192 = scmp.eq.s32.totalorder %s12, 0
    %p193 = por %p191, %p192
    %p194 = scmp.ne.s32.totalorder %s183, %s186
    %p195 = scmp.eq.s32.totalorder %s17, 3
    %p196 = por %p194, %p195
    %p197 = scmp.ne.s32.totalorder %s186, %s187
    %p198 = scmp.eq.s32.totalorder %s17, 0
    %p199 = por %p197, %p198
    %p200 = scmp.ne.s32.totalorder %s186, %s187
    %p201 = scmp.eq.s32.totalorder %s18, 3
    %p202 = por %p200, %p201
    %p204 = scmp.ne.s32.totalorder %s187, %s203
    %p205 = scmp.eq.s32.totalorder %s18, 0
    %p206 = por %p204, %p205
    %p207 = scmp.le.s32.totalorder 1, %s12
    %p208 = scmp.lt.s32.totalorder %s12, 5
    %p209 = pnand %p207, %p208
    %p210 = pneg %p209
    // Predicated region
    $region9: #{conv_block_forward.3} parent=5 // pred_check
      _
    $region10: #{conv_block_forward.3} parent=5 // pred_check_branch
      %212 = sbr.rel (%p209) target = $region12
    $region11: #{conv_block_forward.3} parent=5 // pred_region
      %s213 = ssub.s32 %s12, 1
      // Predicated region
      $region13: #{conv_block_forward.3} parent=11 // pred_check
        %p214 = pneg %p145
      $region14: #{conv_block_forward.3} parent=11 // pred_check_branch
        %216 = sbr.rel (%p214) target = $region16
      $region15: #{conv_block_forward.3} parent=11 // pred_region
        _
      $region16: #{conv_block_forward.3} parent=11 // pred_fallthru
        _
    $region12: #{conv_block_forward.3} parent=5 // pred_fallthru
      _
    %p217 = scmp.lt.s32.totalorder %s12, 4
    // Predicated region
    $region17: #{conv_block_forward.3} parent=5 // pred_check
      %p218 = pneg %p217
    $region18: #{conv_block_forward.3} parent=5 // pred_check_branch
      %220 = sbr.rel (%p218) target = $region20
    $region19: #{conv_block_forward.3} parent=5 // pred_region
      // Predicated region
      $region21: #{conv_block_forward.3} parent=19 // pred_check
        %p221 = pneg %p54
      $region22: #{conv_block_forward.3} parent=19 // pred_check_branch
        %223 = sbr.rel (%p221) target = $region24
      $region23: #{conv_block_forward.3} parent=19 // pred_region
        %s224 = smul.u32 %s20, 4
        %s225 = ssub.s32 %s224, 1
        %p226 = scmp.gt.s32.totalorder %s225, 0
        %s227 = scalar_select %p226, %s225, 0
        %s228 = smul.u32 6, %s227
        %p229 = scmp.lt.s32.totalorder %s19, 1
        %s230 = scalar_select %p229, %s19, 1
        %p231 = scmp.lt.s32.totalorder %s228, 47
        %s232 = scalar_select %p231, %s228, 47
        %s233 = smul.addr %s230, 48
        %s234 = sadd.s32 %s232, %s233
        %s235 = smul.addr %s234, 4
        %s236 = scalar_lea.vmem %s0, %s235
        %s237 = smul.u32 %s20, 4
        %s238 = ssub.s32 %s237, 1
        %p239 = scmp.gt.s32.totalorder %s238, 0
        %s240 = scalar_select %p239, %s238, 0
        %s241 = smul.u32 6, %s240
      $region24: #{conv_block_forward.3} parent=19 // pred_fallthru
        _
      // Predicated region
      $region25: #{conv_block_forward.3} parent=19 // pred_check
        %p242 = pneg %p82
      $region26: #{conv_block_forward.3} parent=19 // pred_check_branch
        %244 = sbr.rel (%p242) target = $region28
      $region27: #{conv_block_forward.3} parent=19 // pred_region
        %s245 = smul.u32 24, %s20
        %p246 = scmp.lt.s32.totalorder %s19, 1
        %s247 = scalar_select %p246, %s19, 1
        %p248 = scmp.lt.s32.totalorder %s245, 47
        %s249 = scalar_select %p248, %s245, 47
        %s250 = smul.addr %s247, 48
        %s251 = sadd.s32 %s249, %s250
        %s252 = smul.addr %s251, 4
        %s253 = scalar_lea.vmem %s1, %s252
        %s254 = smul.u32 24, %s20
      $region28: #{conv_block_forward.3} parent=19 // pred_fallthru
        _
      // Predicated region
      $region29: #{conv_block_forward.3} parent=19 // pred_check
        %p255 = pneg %p118
      $region30: #{conv_block_forward.3} parent=19 // pred_check_branch
        %257 = sbr.rel (%p255) target = $region32
      $region31: #{conv_block_forward.3} parent=19 // pred_region
        %s258 = sadd.s32 %s20, 1
        %s259 = smul.u32 %s258, 4
        %p260 = scmp.lt.s32.totalorder %s259, 7
        %s261 = scalar_select %p260, %s259, 7
        %s262 = smul.u32 6, %s261
        %p263 = scmp.lt.s32.totalorder %s19, 1
        %s264 = scalar_select %p263, %s19, 1
        %p265 = scmp.lt.s32.totalorder %s262, 47
        %s266 = scalar_select %p265, %s262, 47
        %s267 = smul.addr %s264, 48
        %s268 = sadd.s32 %s266, %s267
        %s269 = smul.addr %s268, 4
        %s270 = scalar_lea.vmem %s2, %s269
        %s271 = sadd.s32 %s20, 1
        %s272 = smul.u32 %s271, 4
        %p273 = scmp.lt.s32.totalorder %s272, 7
        %s274 = scalar_select %p273, %s272, 7
        %s275 = smul.u32 6, %s274
      $region32: #{conv_block_forward.3} parent=19 // pred_fallthru
        _
    $region20: #{conv_block_forward.3} parent=5 // pred_fallthru
      _
    %p276 = scmp.le.s32.totalorder 1, %s12
    %p277 = scmp.lt.s32.totalorder %s12, 5
    %p278 = pnand %p276, %p277
    %p279 = pneg %p278
    // Predicated region
    $region33: #{conv_block_forward.3} parent=5 // pred_check
      _
    $region34: #{conv_block_forward.3} parent=5 // pred_check_branch
      %281 = sbr.rel (%p278) target = $region36
    $region35: #{conv_block_forward.3} parent=5 // pred_region
      %s282 = ssub.s32 %s12, 1
      %s283 = smul.u32 %s22, 4
      %s284 = ssub.s32 %s283, 1
      %p285 = scmp.gt.s32.totalorder %s284, 0
      %s286 = scalar_select %p285, %s284, 0
      %s287 = smul.u32 6, %s286
      %p288 = scmp.lt.s32.totalorder %s21, 1
      %s289 = scalar_select %p288, %s21, 1
      %p290 = scmp.lt.s32.totalorder %s287, 47
      %s291 = scalar_select %p290, %s287, 47
      %s292 = smul.addr %s289, 48
      %s293 = sadd.s32 %s291, %s292
      %s294 = smul.addr %s293, 4
      %s295 = scalar_lea.vmem %s0, %s294
      %p296 = pneg %p60
      %p297 = pneg %p57
      %s298 = smul.u32 24, %s22
      %p299 = scmp.lt.s32.totalorder %s21, 1
      %s300 = scalar_select %p299, %s21, 1
      %p301 = scmp.lt.s32.totalorder %s298, 47
      %s302 = scalar_select %p301, %s298, 47
      %s303 = smul.addr %s300, 48
      %s304 = sadd.s32 %s302, %s303
      %s305 = smul.addr %s304, 4
      %s306 = scalar_lea.vmem %s1, %s305
      %p307 = pneg %p88
      %p308 = pneg %p85
      %s309 = sadd.s32 %s22, 1
      %s310 = smul.u32 %s309, 4
      %p311 = scmp.lt.s32.totalorder %s310, 7
      %s312 = scalar_select %p311, %s310, 7
      %s313 = smul.u32 6, %s312
      %p314 = scmp.lt.s32.totalorder %s21, 1
      %s315 = scalar_select %p314, %s21, 1
      %p316 = scmp.lt.s32.totalorder %s313, 47
      %s317 = scalar_select %p316, %s313, 47
      %s318 = smul.addr %s315, 48
      %s319 = sadd.s32 %s317, %s318
      %s320 = smul.addr %s319, 4
      %s321 = scalar_lea.vmem %s2, %s320
      %p322 = pneg %p124
      %p323 = pneg %p121
      %p324 = pneg %p145
      %p325 = pneg %p142
      %p326 = pneg %p173
      %p327 = pneg %p170
      %s328 = smul.u32 24, %s22
      %p329 = scmp.lt.s32.totalorder %s21, 1
      %s330 = scalar_select %p329, %s21, 1
      %p331 = scmp.lt.s32.totalorder %s328, 47
      %s332 = scalar_select %p331, %s328, 47
      %s333 = smul.addr %s330, 48
      %s334 = sadd.s32 %s332, %s333
      %s335 = smul.addr %s334, 4
      %s336 = scalar_lea.vmem %s4, %s335
      %p337 = pneg %p199
      %p338 = pneg %p196
      %p339 = scmp.lt.s32.totalorder %s21, 1
      %s340 = scalar_select %p339, %s21, 1
      %s341 = smul.addr %s340, 2
      %s342 = scalar_lea.vmem %s5, %s341
      %s343 = smul.u32 %s22, 4
      %s344 = ssub.s32 %s343, 1
      %p345 = scmp.gt.s32.totalorder %s344, 0
      %s346 = scalar_select %p345, %s344, 0
      %s347 = smul.u32 6, %s346
      %p348 = scmp.lt.s32.totalorder %s21, 1
      %s349 = scalar_select %p348, %s21, 1
      %p350 = scmp.lt.s32.totalorder %s347, 47
      %s351 = scalar_select %p350, %s347, 47
      %s352 = smul.addr %s349, 48
      %s353 = sadd.s32 %s351, %s352
      %s354 = smul.addr %s353, 4
      %s355 = scalar_lea.vmem %s0, %s354
      %s356 = smul.u32 %s22, 4
      %s357 = ssub.s32 %s356, 1
      %p358 = scmp.gt.s32.totalorder %s357, 0
      %s359 = scalar_select %p358, %s357, 0
      %s360 = smul.u32 6, %s359
      %s361 = smul.u32 24, %s22
      %p362 = scmp.lt.s32.totalorder %s21, 1
      %s363 = scalar_select %p362, %s21, 1
      %p364 = scmp.lt.s32.totalorder %s361, 47
      %s365 = scalar_select %p364, %s361, 47
      %s366 = smul.addr %s363, 48
      %s367 = sadd.s32 %s365, %s366
      %s368 = smul.addr %s367, 4
      %s369 = scalar_lea.vmem %s1, %s368
      %s370 = smul.u32 24, %s22
      %s371 = sadd.s32 %s22, 1
      %s372 = smul.u32 %s371, 4
      %p373 = scmp.lt.s32.totalorder %s372, 7
      %s374 = scalar_select %p373, %s372, 7
      %s375 = smul.u32 6, %s374
      %p376 = scmp.lt.s32.totalorder %s21, 1
      %s377 = scalar_select %p376, %s21, 1
      %p378 = scmp.lt.s32.totalorder %s375, 47
      %s379 = scalar_select %p378, %s375, 47
      %s380 = smul.addr %s377, 48
      %s381 = sadd.s32 %s379, %s380
      %s382 = smul.addr %s381, 4
      %s383 = scalar_lea.vmem %s2, %s382
      %s384 = sadd.s32 %s22, 1
      %s385 = smul.u32 %s384, 4
      %p386 = scmp.lt.s32.totalorder %s385, 7
      %s387 = scalar_select %p386, %s385, 7
      %s388 = smul.u32 6, %s387
      %s389 = smul.u32 24, %s22
      %p390 = scmp.lt.s32.totalorder %s21, 1
      %s391 = scalar_select %p390, %s21, 1
      %p392 = scmp.lt.s32.totalorder %s389, 47
      %s393 = scalar_select %p392, %s389, 47
      %s394 = smul.addr %s391, 48
      %s395 = sadd.s32 %s393, %s394
      %s396 = smul.addr %s395, 4
      %s397 = scalar_lea.vmem %s4, %s396
      %s398 = smul.u32 24, %s22
      %p399 = scmp.lt.s32.totalorder %s21, 1
      %s400 = scalar_select %p399, %s21, 1
      %s401 = smul.addr %s400, 2
      %s402 = scalar_lea.vmem %s5, %s401
      %p404 = scmp.gt.s32.totalorder %s22, 0
      // Predicated region
      $region37: #{conv_block_forward.3} parent=35 // pred_check
        %p405 = pneg %p404
      $region38: #{conv_block_forward.3} parent=35 // pred_check_branch
        %407 = sbr.rel (%p405) target = $region40
      $region39: #{conv_block_forward.3} parent=35 // pred_region
        %v408 = vld [vmem:[%s355] sm:$0xf]
        %v409 = vld [vmem:[%s355 + $0x4] sm:$0xf]
        %v410 = vld [vmem:[%s355 + $0x8] sm:$0xf]
        %v411 = vld [vmem:[%s355 + $0xc] sm:$0xf]
        %v412 = vld [vmem:[%s355 + $0x10] sm:$0xf]
        %v413 = vld [vmem:[%s355 + $0x14] sm:$0xf]
        %v420 = vunpack.c.l.b16 %v408
        %v421 = vunpack.c.l.b16 %v409
        %v422 = vunpack.c.l.b16 %v410
        %v423 = vunpack.c.l.b16 %v411
        %v424 = vunpack.c.l.b16 %v412
        %v425 = vunpack.c.l.b16 %v413
        %v426 = vpack.c.b16 %v421, %v420
        %v427 = vpack.c.b16 %v423, %v422
        %v428 = vpack.c.b16 %v425, %v424
        %432 = vst [vmem:[#allocation2] sm:$0xff] %v426
        %433 = vst [vmem:[#allocation2 + $0x8] sm:$0xff] %v427
        %434 = vst [vmem:[#allocation2 + $0x10] sm:$0xff] %v428
      $region40: #{conv_block_forward.3} parent=35 // pred_fallthru
        _
      %p435 = scmp.eq.s32.totalorder %s22, 0
      // Predicated region
      $region41: #{conv_block_forward.3} parent=35 // pred_check
        %p436 = pneg %p435
      $region42: #{conv_block_forward.3} parent=35 // pred_check_branch
        %438 = sbr.rel (%p436) target = $region44
      $region43: #{conv_block_forward.3} parent=35 // pred_region
        %439 = vst [vmem:[#allocation2] sm:$0xff] 0
        %440 = vst [vmem:[#allocation2 + $0x8] sm:$0xff] 0
        %441 = vst [vmem:[#allocation2 + $0x10] sm:$0xff] 0
      $region44: #{conv_block_forward.3} parent=35 // pred_fallthru
        _
      %v442 = vld [vmem:[%s369] sm:$0xf]
      %v443 = vld [vmem:[%s369 + $0x4] sm:$0xf]
      %v444 = vld [vmem:[%s369 + $0x8] sm:$0xf]
      %v445 = vld [vmem:[%s369 + $0xc] sm:$0xf]
      %v446 = vld [vmem:[%s369 + $0x10] sm:$0xf]
      %v447 = vld [vmem:[%s369 + $0x14] sm:$0xf]
      %v448 = vld [vmem:[%s369 + $0x18] sm:$0xf]
      %v449 = vld [vmem:[%s369 + $0x1c] sm:$0xf]
      %v450 = vld [vmem:[%s369 + $0x20] sm:$0xf]
      %v451 = vld [vmem:[%s369 + $0x24] sm:$0xf]
      %v452 = vld [vmem:[%s369 + $0x28] sm:$0xf]
      %v453 = vld [vmem:[%s369 + $0x2c] sm:$0xf]
      %v454 = vld [vmem:[%s369 + $0x30] sm:$0xf]
      %v455 = vld [vmem:[%s369 + $0x34] sm:$0xf]
      %v456 = vld [vmem:[%s369 + $0x38] sm:$0xf]
      %v457 = vld [vmem:[%s369 + $0x3c] sm:$0xf]
      %v458 = vld [vmem:[%s369 + $0x40] sm:$0xf]
      %v459 = vld [vmem:[%s369 + $0x44] sm:$0xf]
      %v460 = vld [vmem:[%s369 + $0x48] sm:$0xf]
      %v461 = vld [vmem:[%s369 + $0x4c] sm:$0xf]
      %v462 = vld [vmem:[%s369 + $0x50] sm:$0xf]
      %v463 = vld [vmem:[%s369 + $0x54] sm:$0xf]
      %v464 = vld [vmem:[%s369 + $0x58] sm:$0xf]
      %v465 = vld [vmem:[%s369 + $0x5c] sm:$0xf]
      %v490 = vunpack.c.l.b16 %v442
      %v491 = vunpack.c.l.b16 %v443
      %v492 = vunpack.c.l.b16 %v444
      %v493 = vunpack.c.l.b16 %v445
      %v494 = vunpack.c.l.b16 %v446
      %v495 = vunpack.c.l.b16 %v447
      %v496 = vunpack.c.l.b16 %v448
      %v497 = vunpack.c.l.b16 %v449
      %v498 = vunpack.c.l.b16 %v450
      %v499 = vunpack.c.l.b16 %v451
      %v500 = vunpack.c.l.b16 %v452
      %v501 = vunpack.c.l.b16 %v453
      %v502 = vunpack.c.l.b16 %v454
      %v503 = vunpack.c.l.b16 %v455
      %v504 = vunpack.c.l.b16 %v456
      %v505 = vunpack.c.l.b16 %v457
      %v506 = vunpack.c.l.b16 %v458
      %v507 = vunpack.c.l.b16 %v459
      %v508 = vunpack.c.l.b16 %v460
      %v509 = vunpack.c.l.b16 %v461
      %v510 = vunpack.c.l.b16 %v462
      %v511 = vunpack.c.l.b16 %v463
      %v512 = vunpack.c.l.b16 %v464
      %v513 = vunpack.c.l.b16 %v465
      %v514 = vpack.c.b16 %v491, %v490
      %v515 = vpack.c.b16 %v493, %v492
      %v516 = vpack.c.b16 %v495, %v494
      %v517 = vpack.c.b16 %v497, %v496
      %v518 = vpack.c.b16 %v499, %v498
      %v519 = vpack.c.b16 %v501, %v500
      %v520 = vpack.c.b16 %v503, %v502
      %v521 = vpack.c.b16 %v505, %v504
      %v522 = vpack.c.b16 %v507, %v506
      %v523 = vpack.c.b16 %v509, %v508
      %v524 = vpack.c.b16 %v511, %v510
      %v525 = vpack.c.b16 %v513, %v512
      %538 = vst [vmem:[#allocation2 + $0x18] sm:$0xff] %v514
      %539 = vst [vmem:[#allocation2 + $0x20] sm:$0xff] %v515
      %540 = vst [vmem:[#allocation2 + $0x28] sm:$0xff] %v516
      %541 = vst [vmem:[#allocation2 + $0x30] sm:$0xff] %v517
      %542 = vst [vmem:[#allocation2 + $0x38] sm:$0xff] %v518
      %543 = vst [vmem:[#allocation2 + $0x40] sm:$0xff] %v519
      %544 = vst [vmem:[#allocation2 + $0x48] sm:$0xff] %v520
      %545 = vst [vmem:[#allocation2 + $0x50] sm:$0xff] %v521
      %546 = vst [vmem:[#allocation2 + $0x58] sm:$0xff] %v522
      %547 = vst [vmem:[#allocation2 + $0x60] sm:$0xff] %v523
      %548 = vst [vmem:[#allocation2 + $0x68] sm:$0xff] %v524
      %549 = vst [vmem:[#allocation2 + $0x70] sm:$0xff] %v525
      %p550 = scmp.lt.s32.totalorder %s22, 1
      // Predicated region
      $region45: #{conv_block_forward.3} parent=35 // pred_check
        %p551 = pneg %p550
      $region46: #{conv_block_forward.3} parent=35 // pred_check_branch
        %553 = sbr.rel (%p551) target = $region48
      $region47: #{conv_block_forward.3} parent=35 // pred_region
        %v554 = vld [vmem:[%s383] sm:$0xf]
        %v555 = vld [vmem:[%s383 + $0x4] sm:$0xf]
        %v556 = vld [vmem:[%s383 + $0x8] sm:$0xf]
        %v557 = vld [vmem:[%s383 + $0xc] sm:$0xf]
        %v558 = vld [vmem:[%s383 + $0x10] sm:$0xf]
        %v559 = vld [vmem:[%s383 + $0x14] sm:$0xf]
        %v566 = vunpack.c.l.b16 %v554
        %v567 = vunpack.c.l.b16 %v555
        %v568 = vunpack.c.l.b16 %v556
        %v569 = vunpack.c.l.b16 %v557
        %v570 = vunpack.c.l.b16 %v558
        %v571 = vunpack.c.l.b16 %v559
        %v572 = vpack.c.b16 %v567, %v566
        %v573 = vpack.c.b16 %v569, %v568
        %v574 = vpack.c.b16 %v571, %v570
        %578 = vst [vmem:[#allocation2 + $0x78] sm:$0xff] %v572
        %579 = vst [vmem:[#allocation2 + $0x80] sm:$0xff] %v573
        %580 = vst [vmem:[#allocation2 + $0x88] sm:$0xff] %v574
      $region48: #{conv_block_forward.3} parent=35 // pred_fallthru
        _
      %p581 = scmp.eq.s32.totalorder %s22, 1
      // Predicated region
      $region49: #{conv_block_forward.3} parent=35 // pred_check
        %p582 = pneg %p581
      $region50: #{conv_block_forward.3} parent=35 // pred_check_branch
        %584 = sbr.rel (%p582) target = $region52
      $region51: #{conv_block_forward.3} parent=35 // pred_region
        %585 = vst [vmem:[#allocation2 + $0x78] sm:$0xff] 0
        %586 = vst [vmem:[#allocation2 + $0x80] sm:$0xff] 0
        %587 = vst [vmem:[#allocation2 + $0x88] sm:$0xff] 0
      $region52: #{conv_block_forward.3} parent=35 // pred_fallthru
        _
      %v588 = vld [vmem:[#allocation2 + $0x8] sm:$0xf8]
      %v589 = vld [vmem:[#allocation2 + $0x10] sm:$0xff]
      %v590 = vld [vmem:[#allocation2 + $0x18] sm:$0xff]
      %v591 = vld [vmem:[#allocation2 + $0x20] sm:$0xff]
      %v592 = vld [vmem:[#allocation2 + $0x28] sm:$0xff]
      %v593 = vld [vmem:[#allocation2 + $0x30] sm:$0xff]
      %v594 = vld [vmem:[#allocation2 + $0x38] sm:$0xff]
      %v595 = vld [vmem:[#allocation2 + $0x40] sm:$0xff]
      %v596 = vld [vmem:[#allocation2 + $0x48] sm:$0xff]
      %v597 = vld [vmem:[#allocation2 + $0x50] sm:$0xff]
      %v598 = vld [vmem:[#allocation2 + $0x58] sm:$0xff]
      %v599 = vld [vmem:[#allocation2 + $0x60] sm:$0xff]
      %v600 = vld [vmem:[#allocation2 + $0x68] sm:$0xff]
      %v601 = vld [vmem:[#allocation2 + $0x70] sm:$0xff]
      %v602 = vld [vmem:[#allocation2 + $0x78] sm:$0xff]
      %v603 = vld [vmem:[#allocation2 + $0x80] sm:$0xf]
      %vm604 = vsmask.f32 4352
      %v606 = vshrl.u32 %v588, 16
      %v608 = vrot.slane %v606, 3
      %v609 = vshll.u32 %v588, 16
      %v611 = vrot.slane %v609, 4
      %v612 = vor.u32 %v608, %v611
      %v614 = vshrl.u32 %v589, 16
      %v616 = vrot.slane %v614, 3
      %v617 = vshll.u32 %v589, 16
      %v619 = vrot.slane %v617, 4
      %v620 = vor.u32 %v616, %v619
      %v621 = vsel %vm604, %v612, %v620
      %v623 = vshrl.u32 %v590, 16
      %v625 = vrot.slane %v623, 3
      %v626 = vshll.u32 %v590, 16
      %v628 = vrot.slane %v626, 4
      %v629 = vor.u32 %v625, %v628
      %v630 = vsel %vm604, %v620, %v629
      %v632 = vshrl.u32 %v591, 16
      %v634 = vrot.slane %v632, 3
      %v635 = vshll.u32 %v591, 16
      %v637 = vrot.slane %v635, 4
      %v638 = vor.u32 %v634, %v637
      %v639 = vsel %vm604, %v629, %v638
      %v641 = vshrl.u32 %v592, 16
      %v643 = vrot.slane %v641, 3
      %v644 = vshll.u32 %v592, 16
      %v646 = vrot.slane %v644, 4
      %v647 = vor.u32 %v643, %v646
      %v648 = vsel %vm604, %v638, %v647
      %v650 = vshrl.u32 %v593, 16
      %v652 = vrot.slane %v650, 3
      %v653 = vshll.u32 %v593, 16
      %v655 = vrot.slane %v653, 4
      %v656 = vor.u32 %v652, %v655
      %v657 = vsel %vm604, %v647, %v656
      %v659 = vshrl.u32 %v594, 16
      %v661 = vrot.slane %v659, 3
      %v662 = vshll.u32 %v594, 16
      %v664 = vrot.slane %v662, 4
      %v665 = vor.u32 %v661, %v664
      %v666 = vsel %vm604, %v656, %v665
      %v668 = vshrl.u32 %v595, 16
      %v670 = vrot.slane %v668, 3
      %v671 = vshll.u32 %v595, 16
      %v673 = vrot.slane %v671, 4
      %v674 = vor.u32 %v670, %v673
      %v675 = vsel %vm604, %v665, %v674
      %v677 = vshrl.u32 %v596, 16
      %v679 = vrot.slane %v677, 3
      %v680 = vshll.u32 %v596, 16
      %v682 = vrot.slane %v680, 4
      %v683 = vor.u32 %v679, %v682
      %v684 = vsel %vm604, %v674, %v683
      %v686 = vshrl.u32 %v597, 16
      %v688 = vrot.slane %v686, 3
      %v689 = vshll.u32 %v597, 16
      %v691 = vrot.slane %v689, 4
      %v692 = vor.u32 %v688, %v691
      %v693 = vsel %vm604, %v683, %v692
      %v695 = vshrl.u32 %v598, 16
      %v697 = vrot.slane %v695, 3
      %v698 = vshll.u32 %v598, 16
      %v700 = vrot.slane %v698, 4
      %v701 = vor.u32 %v697, %v700
      %v702 = vsel %vm604, %v692, %v701
      %v704 = vshrl.u32 %v599, 16
      %v706 = vrot.slane %v704, 3
      %v707 = vshll.u32 %v599, 16
      %v709 = vrot.slane %v707, 4
      %v710 = vor.u32 %v706, %v709
      %v711 = vsel %vm604, %v701, %v710
      %v713 = vshrl.u32 %v600, 16
      %v715 = vrot.slane %v713, 3
      %v716 = vshll.u32 %v600, 16
      %v718 = vrot.slane %v716, 4
      %v719 = vor.u32 %v715, %v718
      %v720 = vsel %vm604, %v710, %v719
      %v722 = vshrl.u32 %v601, 16
      %v724 = vrot.slane %v722, 3
      %v725 = vshll.u32 %v601, 16
      %v727 = vrot.slane %v725, 4
      %v728 = vor.u32 %v724, %v727
      %v729 = vsel %vm604, %v719, %v728
      %v731 = vshrl.u32 %v602, 16
      %v733 = vrot.slane %v731, 3
      %v734 = vshll.u32 %v602, 16
      %v736 = vrot.slane %v734, 4
      %v737 = vor.u32 %v733, %v736
      %v738 = vsel %vm604, %v728, %v737
      %v740 = vshrl.u32 %v603, 16
      %v742 = vrot.slane %v740, 3
      %v743 = vshll.u32 %v603, 16
      %v745 = vrot.slane %v743, 4
      %v746 = vor.u32 %v742, %v745
      %v747 = vsel %vm604, %v737, %v746
      %763 = vst [vmem:[#allocation3] sm:$0xff] %v621
      %764 = vst [vmem:[#allocation3 + $0x18] sm:$0xff] %v630
      %765 = vst [vmem:[#allocation3 + $0x30] sm:$0xff] %v639
      %766 = vst [vmem:[#allocation3 + $0x48] sm:$0xff] %v648
      %767 = vst [vmem:[#allocation3 + $0x60] sm:$0xff] %v657
      %768 = vst [vmem:[#allocation3 + $0x78] sm:$0xff] %v666
      %769 = vst [vmem:[#allocation3 + $0x90] sm:$0xff] %v675
      %770 = vst [vmem:[#allocation3 + $0xa8] sm:$0xff] %v684
      %771 = vst [vmem:[#allocation3 + $0xc0] sm:$0xff] %v693
      %772 = vst [vmem:[#allocation3 + $0xd8] sm:$0xff] %v702
      %773 = vst [vmem:[#allocation3 + $0xf0] sm:$0xff] %v711
      %774 = vst [vmem:[#allocation3 + $0x108] sm:$0xff] %v720
      %775 = vst [vmem:[#allocation3 + $0x120] sm:$0xff] %v729
      %776 = vst [vmem:[#allocation3 + $0x138] sm:$0xff] %v738
      %777 = vst [vmem:[#allocation3 + $0x150] sm:$0xff] %v747
      %v778 = vld [vmem:[#allocation2 + $0x8] sm:$0xf0]
      %v779 = vld [vmem:[#allocation2 + $0x10] sm:$0xff]
      %v780 = vld [vmem:[#allocation2 + $0x18] sm:$0xff]
      %v781 = vld [vmem:[#allocation2 + $0x20] sm:$0xff]
      %v782 = vld [vmem:[#allocation2 + $0x28] sm:$0xff]
      %v783 = vld [vmem:[#allocation2 + $0x30] sm:$0xff]
      %v784 = vld [vmem:[#allocation2 + $0x38] sm:$0xff]
      %v785 = vld [vmem:[#allocation2 + $0x40] sm:$0xff]
      %v786 = vld [vmem:[#allocation2 + $0x48] sm:$0xff]
      %v787 = vld [vmem:[#allocation2 + $0x50] sm:$0xff]
      %v788 = vld [vmem:[#allocation2 + $0x58] sm:$0xff]
      %v789 = vld [vmem:[#allocation2 + $0x60] sm:$0xff]
      %v790 = vld [vmem:[#allocation2 + $0x68] sm:$0xff]
      %v791 = vld [vmem:[#allocation2 + $0x70] sm:$0xff]
      %v792 = vld [vmem:[#allocation2 + $0x78] sm:$0xff]
      %v793 = vld [vmem:[#allocation2 + $0x80] sm:$0xf]
      %vm810 = vcmask 1043456
      %v811 = vrot.slane %v778, 4
      %v812 = vrot.slane %v779, 4
      %v813 = vsel %vm810, %v811, %v812
      %v814 = vrot.slane %v780, 4
      %v815 = vsel %vm810, %v812, %v814
      %v816 = vrot.slane %v781, 4
      %v817 = vsel %vm810, %v814, %v816
      %v818 = vrot.slane %v782, 4
      %v819 = vsel %vm810, %v816, %v818
      %v820 = vrot.slane %v783, 4
      %v821 = vsel %vm810, %v818, %v820
      %v822 = vrot.slane %v784, 4
      %v823 = vsel %vm810, %v820, %v822
      %v824 = vrot.slane %v785, 4
      %v825 = vsel %vm810, %v822, %v824
      %v826 = vrot.slane %v786, 4
      %v827 = vsel %vm810, %v824, %v826
      %v828 = vrot.slane %v787, 4
      %v829 = vsel %vm810, %v826, %v828
      %v830 = vrot.slane %v788, 4
      %v831 = vsel %vm810, %v828, %v830
      %v832 = vrot.slane %v789, 4
      %v833 = vsel %vm810, %v830, %v832
      %v834 = vrot.slane %v790, 4
      %v835 = vsel %vm810, %v832, %v834
      %v836 = vrot.slane %v791, 4
      %v837 = vsel %vm810, %v834, %v836
      %v838 = vrot.slane %v792, 4
      %v839 = vsel %vm810, %v836, %v838
      %v840 = vrot.slane %v793, 4
      %v841 = vsel %vm810, %v838, %v840
      %857 = vst [vmem:[#allocation3 + $0x8] sm:$0xff] %v813
      %858 = vst [vmem:[#allocation3 + $0x20] sm:$0xff] %v815
      %859 = vst [vmem:[#allocation3 + $0x38] sm:$0xff] %v817
      %860 = vst [vmem:[#allocation3 + $0x50] sm:$0xff] %v819
      %861 = vst [vmem:[#allocation3 + $0x68] sm:$0xff] %v821
      %862 = vst [vmem:[#allocation3 + $0x80] sm:$0xff] %v823
      %863 = vst [vmem:[#allocation3 + $0x98] sm:$0xff] %v825
      %864 = vst [vmem:[#allocation3 + $0xb0] sm:$0xff] %v827
      %865 = vst [vmem:[#allocation3 + $0xc8] sm:$0xff] %v829
      %866 = vst [vmem:[#allocation3 + $0xe0] sm:$0xff] %v831
      %867 = vst [vmem:[#allocation3 + $0xf8] sm:$0xff] %v833
      %868 = vst [vmem:[#allocation3 + $0x110] sm:$0xff] %v835
      %869 = vst [vmem:[#allocation3 + $0x128] sm:$0xff] %v837
      %870 = vst [vmem:[#allocation3 + $0x140] sm:$0xff] %v839
      %871 = vst [vmem:[#allocation3 + $0x158] sm:$0xff] %v841
      %v872 = vld [vmem:[#allocation2 + $0x8] sm:$0xf0]
      %v873 = vld [vmem:[#allocation2 + $0x10] sm:$0xff]
      %v874 = vld [vmem:[#allocation2 + $0x18] sm:$0xff]
      %v875 = vld [vmem:[#allocation2 + $0x20] sm:$0xff]
      %v876 = vld [vmem:[#allocation2 + $0x28] sm:$0xff]
      %v877 = vld [vmem:[#allocation2 + $0x30] sm:$0xff]
      %v878 = vld [vmem:[#allocation2 + $0x38] sm:$0xff]
      %v879 = vld [vmem:[#allocation2 + $0x40] sm:$0xff]
      %v880 = vld [vmem:[#allocation2 + $0x48] sm:$0xff]
      %v881 = vld [vmem:[#allocation2 + $0x50] sm:$0xff]
      %v882 = vld [vmem:[#allocation2 + $0x58] sm:$0xff]
      %v883 = vld [vmem:[#allocation2 + $0x60] sm:$0xff]
      %v884 = vld [vmem:[#allocation2 + $0x68] sm:$0xff]
      %v885 = vld [vmem:[#allocation2 + $0x70] sm:$0xff]
      %v886 = vld [vmem:[#allocation2 + $0x78] sm:$0xff]
      %v887 = vld [vmem:[#allocation2 + $0x80] sm:$0x1f]
      %vm888 = vsmask.f32 3328
      %v890 = vshrl.u32 %v872, 16
      %v892 = vrot.slane %v890, 4
      %v893 = vshll.u32 %v872, 16
      %v895 = vrot.slane %v893, 5
      %v896 = vor.u32 %v892, %v895
      %v898 = vshrl.u32 %v873, 16
      %v900 = vrot.slane %v898, 4
      %v901 = vshll.u32 %v873, 16
      %v903 = vrot.slane %v901, 5
      %v904 = vor.u32 %v900, %v903
      %v905 = vsel %vm888, %v896, %v904
      %v907 = vshrl.u32 %v874, 16
      %v909 = vrot.slane %v907, 4
      %v910 = vshll.u32 %v874, 16
      %v912 = vrot.slane %v910, 5
      %v913 = vor.u32 %v909, %v912
      %v914 = vsel %vm888, %v904, %v913
      %v916 = vshrl.u32 %v875, 16
      %v918 = vrot.slane %v916, 4
      %v919 = vshll.u32 %v875, 16
      %v921 = vrot.slane %v919, 5
      %v922 = vor.u32 %v918, %v921
      %v923 = vsel %vm888, %v913, %v922
      %v925 = vshrl.u32 %v876, 16
      %v927 = vrot.slane %v925, 4
      %v928 = vshll.u32 %v876, 16
      %v930 = vrot.slane %v928, 5
      %v931 = vor.u32 %v927, %v930
      %v932 = vsel %vm888, %v922, %v931
      %v934 = vshrl.u32 %v877, 16
      %v936 = vrot.slane %v934, 4
      %v937 = vshll.u32 %v877, 16
      %v939 = vrot.slane %v937, 5
      %v940 = vor.u32 %v936, %v939
      %v941 = vsel %vm888, %v931, %v940
      %v943 = vshrl.u32 %v878, 16
      %v945 = vrot.slane %v943, 4
      %v946 = vshll.u32 %v878, 16
      %v948 = vrot.slane %v946, 5
      %v949 = vor.u32 %v945, %v948
      %v950 = vsel %vm888, %v940, %v949
      %v952 = vshrl.u32 %v879, 16
      %v954 = vrot.slane %v952, 4
      %v955 = vshll.u32 %v879, 16
      %v957 = vrot.slane %v955, 5
      %v958 = vor.u32 %v954, %v957
      %v959 = vsel %vm888, %v949, %v958
      %v961 = vshrl.u32 %v880, 16
      %v963 = vrot.slane %v961, 4
      %v964 = vshll.u32 %v880, 16
      %v966 = vrot.slane %v964, 5
      %v967 = vor.u32 %v963, %v966
      %v968 = vsel %vm888, %v958, %v967
      %v970 = vshrl.u32 %v881, 16
      %v972 = vrot.slane %v970, 4
      %v973 = vshll.u32 %v881, 16
      %v975 = vrot.slane %v973, 5
      %v976 = vor.u32 %v972, %v975
      %v977 = vsel %vm888, %v967, %v976
      %v979 = vshrl.u32 %v882, 16
      %v981 = vrot.slane %v979, 4
      %v982 = vshll.u32 %v882, 16
      %v984 = vrot.slane %v982, 5
      %v985 = vor.u32 %v981, %v984
      %v986 = vsel %vm888, %v976, %v985
      %v988 = vshrl.u32 %v883, 16
      %v990 = vrot.slane %v988, 4
      %v991 = vshll.u32 %v883, 16
      %v993 = vrot.slane %v991, 5
      %v994 = vor.u32 %v990, %v993
      %v995 = vsel %vm888, %v985, %v994
      %v997 = vshrl.u32 %v884, 16
      %v999 = vrot.slane %v997, 4
      %v1000 = vshll.u32 %v884, 16
      %v1002 = vrot.slane %v1000, 5
      %v1003 = vor.u32 %v999, %v1002
      %v1004 = vsel %vm888, %v994, %v1003
      %v1006 = vshrl.u32 %v885, 16
      %v1008 = vrot.slane %v1006, 4
      %v1009 = vshll.u32 %v885, 16
      %v1011 = vrot.slane %v1009, 5
      %v1012 = vor.u32 %v1008, %v1011
      %v1013 = vsel %vm888, %v1003, %v1012
      %v1015 = vshrl.u32 %v886, 16
      %v1017 = vrot.slane %v1015, 4
      %v1018 = vshll.u32 %v886, 16
      %v1020 = vrot.slane %v1018, 5
      %v1021 = vor.u32 %v1017, %v1020
      %v1022 = vsel %vm888, %v1012, %v1021
      %v1024 = vshrl.u32 %v887, 16
      %v1026 = vrot.slane %v1024, 4
      %v1027 = vshll.u32 %v887, 16
      %v1029 = vrot.slane %v1027, 5
      %v1030 = vor.u32 %v1026, %v1029
      %v1031 = vsel %vm888, %v1021, %v1030
      %1047 = vst [vmem:[#allocation3 + $0x10] sm:$0xff] %v905
      %1048 = vst [vmem:[#allocation3 + $0x28] sm:$0xff] %v914
      %1049 = vst [vmem:[#allocation3 + $0x40] sm:$0xff] %v923
      %1050 = vst [vmem:[#allocation3 + $0x58] sm:$0xff] %v932
      %1051 = vst [vmem:[#allocation3 + $0x70] sm:$0xff] %v941
      %1052 = vst [vmem:[#allocation3 + $0x88] sm:$0xff] %v950
      %1053 = vst [vmem:[#allocation3 + $0xa0] sm:$0xff] %v959
      %1054 = vst [vmem:[#allocation3 + $0xb8] sm:$0xff] %v968
      %1055 = vst [vmem:[#allocation3 + $0xd0] sm:$0xff] %v977
      %1056 = vst [vmem:[#allocation3 + $0xe8] sm:$0xff] %v986
      %1057 = vst [vmem:[#allocation3 + $0x100] sm:$0xff] %v995
      %1058 = vst [vmem:[#allocation3 + $0x118] sm:$0xff] %v1004
      %1059 = vst [vmem:[#allocation3 + $0x130] sm:$0xff] %v1013
      %1060 = vst [vmem:[#allocation3 + $0x148] sm:$0xff] %v1022
      %1061 = vst [vmem:[#allocation3 + $0x160] sm:$0xff] %v1031
      %v1062 = vld [vmem:[#allocation3] sm:$0xff]
      %v1063 = vld [vmem:[#allocation3 + $0x8] sm:$0xff]
      %v1064 = vld [vmem:[#allocation3 + $0x10] sm:$0xff]
      %v1065 = vld [vmem:[#allocation3 + $0x18] sm:$0xff]
      %v1066 = vld [vmem:[#allocation3 + $0x20] sm:$0xff]
      %v1067 = vld [vmem:[#allocation3 + $0x28] sm:$0xff]
      %v1068 = vld [vmem:[#allocation3 + $0x30] sm:$0xff]
      %v1069 = vld [vmem:[#allocation3 + $0x38] sm:$0xff]
      %v1070 = vld [vmem:[#allocation3 + $0x40] sm:$0xff]
      %v1071 = vld [vmem:[#allocation3 + $0x48] sm:$0xff]
      %v1072 = vld [vmem:[#allocation3 + $0x50] sm:$0xff]
      %v1073 = vld [vmem:[#allocation3 + $0x58] sm:$0xff]
      %v1074 = vld [vmem:[#allocation3 + $0x60] sm:$0xff]
      %v1075 = vld [vmem:[#allocation3 + $0x68] sm:$0xff]
      %v1076 = vld [vmem:[#allocation3 + $0x70] sm:$0xff]
      %v1077 = vld [vmem:[#allocation3 + $0x78] sm:$0xff]
      %v1078 = vld [vmem:[#allocation3 + $0x80] sm:$0xff]
      %v1079 = vld [vmem:[#allocation3 + $0x88] sm:$0xff]
      %v1080 = vld [vmem:[#allocation3 + $0x90] sm:$0xff]
      %v1081 = vld [vmem:[#allocation3 + $0x98] sm:$0xff]
      %v1082 = vld [vmem:[#allocation3 + $0xa0] sm:$0xff]
      %v1083 = vld [vmem:[#allocation3 + $0xa8] sm:$0xff]
      %v1084 = vld [vmem:[#allocation3 + $0xb0] sm:$0xff]
      %v1085 = vld [vmem:[#allocation3 + $0xb8] sm:$0xff]
      %v1086 = vld [vmem:[#allocation3 + $0xc0] sm:$0xff]
      %v1087 = vld [vmem:[#allocation3 + $0xc8] sm:$0xff]
      %v1088 = vld [vmem:[#allocation3 + $0xd0] sm:$0xff]
      %v1089 = vld [vmem:[#allocation3 + $0xd8] sm:$0xff]
      %v1090 = vld [vmem:[#allocation3 + $0xe0] sm:$0xff]
      %v1091 = vld [vmem:[#allocation3 + $0xe8] sm:$0xff]
      %v1092 = vld [vmem:[#allocation3 + $0xf0] sm:$0xff]
      %v1093 = vld [vmem:[#allocation3 + $0xf8] sm:$0xff]
      %v1094 = vld [vmem:[#allocation3 + $0x100] sm:$0xff]
      %v1095 = vld [vmem:[#allocation3 + $0x108] sm:$0xff]
      %v1096 = vld [vmem:[#allocation3 + $0x110] sm:$0xff]
      %v1097 = vld [vmem:[#allocation3 + $0x118] sm:$0xff]
      %v1098 = vld [vmem:[%s3] sm:$0xf]
      %v1099 = vld [vmem:[%s3 + $0x4] sm:$0xf]
      %v1100 = vld [vmem:[%s3 + $0x8] sm:$0xf]
      %v1101 = vld [vmem:[%s3 + $0xc] sm:$0xf]
      %v1102 = vld [vmem:[%s3 + $0x10] sm:$0xf]
      %v1103 = vld [vmem:[%s3 + $0x14] sm:$0xf]
      %v1104 = vld [vmem:[%s3 + $0x18] sm:$0xf]
      %v1105 = vld [vmem:[%s3 + $0x1c] sm:$0xf]
      %v1106 = vld [vmem:[%s3 + $0x20] sm:$0xf]
      %v1107 = vld [vmem:[%s3 + $0x24] sm:$0xf]
      %v1108 = vld [vmem:[%s3 + $0x28] sm:$0xf]
      %v1109 = vld [vmem:[%s3 + $0x2c] sm:$0xf]
      %v1110 = vld [vmem:[%s3 + $0x30] sm:$0xf]
      %v1111 = vld [vmem:[%s3 + $0x34] sm:$0xf]
      %v1112 = vld [vmem:[%s3 + $0x38] sm:$0xf]
      %v1113 = vld [vmem:[%s3 + $0x3c] sm:$0xf]
      %v1114 = vld [vmem:[%s3 + $0x40] sm:$0xf]
      %v1115 = vld [vmem:[%s3 + $0x44] sm:$0xf]
      %v1116 = vld [vmem:[%s3 + $0x48] sm:$0xf]
      %v1117 = vld [vmem:[%s3 + $0x4c] sm:$0xf]
      %v1118 = vld [vmem:[%s3 + $0x50] sm:$0xf]
      %v1119 = vld [vmem:[%s3 + $0x54] sm:$0xf]
      %v1120 = vld [vmem:[%s3 + $0x58] sm:$0xf]
      %v1121 = vld [vmem:[%s3 + $0x5c] sm:$0xf]
      %v1122 = vld [vmem:[%s3 + $0x60] sm:$0xf]
      %v1123 = vld [vmem:[%s3 + $0x64] sm:$0xf]
      %v1124 = vld [vmem:[%s3 + $0x68] sm:$0xf]
      %v1125 = vld [vmem:[%s3 + $0x6c] sm:$0xf]
      %v1126 = vld [vmem:[%s3 + $0x70] sm:$0xf]
      %v1127 = vld [vmem:[%s3 + $0x74] sm:$0xf]
      %v1128 = vld [vmem:[%s3 + $0x78] sm:$0xf]
      %v1129 = vld [vmem:[%s3 + $0x7c] sm:$0xf]
      %v1130 = vld [vmem:[%s3 + $0x80] sm:$0xf]
      %v1131 = vld [vmem:[%s3 + $0x84] sm:$0xf]
      %v1132 = vld [vmem:[%s3 + $0x88] sm:$0xf]
      %v1133 = vld [vmem:[%s3 + $0x8c] sm:$0xf]
      %v1134 = vld [vmem:[%s3 + $0x90] sm:$0xf]
      %v1135 = vld [vmem:[%s3 + $0x94] sm:$0xf]
      %v1136 = vld [vmem:[%s3 + $0x98] sm:$0xf]
      %v1137 = vld [vmem:[%s3 + $0x9c] sm:$0xf]
      %v1138 = vld [vmem:[%s3 + $0xa0] sm:$0xf]
      %v1139 = vld [vmem:[%s3 + $0xa4] sm:$0xf]
      %v1140 = vld [vmem:[%s3 + $0xa8] sm:$0xf]
      %v1141 = vld [vmem:[%s3 + $0xac] sm:$0xf]
      %v1142 = vld [vmem:[%s3 + $0xb0] sm:$0xf]
      %v1143 = vld [vmem:[%s3 + $0xb4] sm:$0xf]
      %v1144 = vld [vmem:[%s3 + $0xb8] sm:$0xf]
      %v1145 = vld [vmem:[%s3 + $0xbc] sm:$0xf]
      %v1146 = vld [vmem:[#allocation3 + $0x18] sm:$0xf0]
      %v1147 = vld [vmem:[#allocation3 + $0x20] sm:$0xf0]
      %v1148 = vld [vmem:[#allocation3 + $0x28] sm:$0xf0]
      %v1149 = vld [vmem:[#allocation3 + $0x120] sm:$0xff]
      %v1150 = vld [vmem:[#allocation3 + $0x128] sm:$0xff]
      %v1151 = vld [vmem:[#allocation3 + $0x130] sm:$0xff]
      %v1152 = vld [vmem:[#allocation3 + $0x138] sm:$0xf]
      %v1153 = vld [vmem:[#allocation3 + $0x140] sm:$0xf]
      %v1154 = vld [vmem:[#allocation3 + $0x148] sm:$0xf]
      %s1155 = scalar_lea.vmem %s3, 192
      %v1156 = vld [vmem:[%s1155] sm:$0xf]
      %v1157 = vld [vmem:[%s1155 + $0x4] sm:$0xf]
      %v1158 = vld [vmem:[%s1155 + $0x8] sm:$0xf]
      %v1159 = vld [vmem:[%s1155 + $0xc] sm:$0xf]
      %v1160 = vld [vmem:[%s1155 + $0x10] sm:$0xf]
      %v1161 = vld [vmem:[%s1155 + $0x14] sm:$0xf]
      %v1162 = vld [vmem:[%s1155 + $0x18] sm:$0xf]
      %v1163 = vld [vmem:[%s1155 + $0x1c] sm:$0xf]
      %v1164 = vld [vmem:[%s1155 + $0x20] sm:$0xf]
      %v1165 = vld [vmem:[%s1155 + $0x24] sm:$0xf]
      %v1166 = vld [vmem:[%s1155 + $0x28] sm:$0xf]
      %v1167 = vld [vmem:[%s1155 + $0x2c] sm:$0xf]
      %v1168 = vld [vmem:[%s1155 + $0x30] sm:$0xf]
      %v1169 = vld [vmem:[%s1155 + $0x34] sm:$0xf]
      %v1170 = vld [vmem:[%s1155 + $0x38] sm:$0xf]
      %v1171 = vld [vmem:[%s1155 + $0x3c] sm:$0xf]
      %v1172 = vld [vmem:[%s1155 + $0x40] sm:$0xf]
      %v1173 = vld [vmem:[%s1155 + $0x44] sm:$0xf]
      %v1174 = vld [vmem:[%s1155 + $0x48] sm:$0xf]
      %v1175 = vld [vmem:[%s1155 + $0x4c] sm:$0xf]
      %v1176 = vld [vmem:[%s1155 + $0x50] sm:$0xf]
      %v1177 = vld [vmem:[%s1155 + $0x54] sm:$0xf]
      %v1178 = vld [vmem:[%s1155 + $0x58] sm:$0xf]
      %v1179 = vld [vmem:[%s1155 + $0x5c] sm:$0xf]
      %v1180 = vld [vmem:[%s1155 + $0x60] sm:$0xf]
      %v1181 = vld [vmem:[%s1155 + $0x64] sm:$0xf]
      %v1182 = vld [vmem:[%s1155 + $0x68] sm:$0xf]
      %v1183 = vld [vmem:[%s1155 + $0x6c] sm:$0xf]
      %v1184 = vld [vmem:[%s1155 + $0x70] sm:$0xf]
      %v1185 = vld [vmem:[%s1155 + $0x74] sm:$0xf]
      %v1186 = vld [vmem:[%s1155 + $0x78] sm:$0xf]
      %v1187 = vld [vmem:[%s1155 + $0x7c] sm:$0xf]
      %v1188 = vld [vmem:[%s1155 + $0x80] sm:$0xf]
      %v1189 = vld [vmem:[%s1155 + $0x84] sm:$0xf]
      %v1190 = vld [vmem:[%s1155 + $0x88] sm:$0xf]
      %v1191 = vld [vmem:[%s1155 + $0x8c] sm:$0xf]
      %v1192 = vld [vmem:[%s1155 + $0x90] sm:$0xf]
      %v1193 = vld [vmem:[%s1155 + $0x94] sm:$0xf]
      %v1194 = vld [vmem:[%s1155 + $0x98] sm:$0xf]
      %v1195 = vld [vmem:[%s1155 + $0x9c] sm:$0xf]
      %v1196 = vld [vmem:[%s1155 + $0xa0] sm:$0xf]
      %v1197 = vld [vmem:[%s1155 + $0xa4] sm:$0xf]
      %v1198 = vld [vmem:[%s1155 + $0xa8] sm:$0xf]
      %v1199 = vld [vmem:[%s1155 + $0xac] sm:$0xf]
      %v1200 = vld [vmem:[%s1155 + $0xb0] sm:$0xf]
      %v1201 = vld [vmem:[%s1155 + $0xb4] sm:$0xf]
      %v1202 = vld [vmem:[%s1155 + $0xb8] sm:$0xf]
      %v1203 = vld [vmem:[%s1155 + $0xbc] sm:$0xf]
      %v1243 = vrot.slane %v1146, 4
      %v1244 = vrot.slane %v1068, 4
      %v1245 = vsel %vm810, %v1243, %v1244
      %v1246 = vrot.slane %v1147, 4
      %v1247 = vrot.slane %v1069, 4
      %v1248 = vsel %vm810, %v1246, %v1247
      %v1249 = vrot.slane %v1148, 4
      %v1250 = vrot.slane %v1070, 4
      %v1251 = vsel %vm810, %v1249, %v1250
      %v1252 = vrot.slane %v1071, 4
      %v1253 = vsel %vm810, %v1244, %v1252
      %v1254 = vrot.slane %v1072, 4
      %v1255 = vsel %vm810, %v1247, %v1254
      %v1256 = vrot.slane %v1073, 4
      %v1257 = vsel %vm810, %v1250, %v1256
      %v1258 = vrot.slane %v1074, 4
      %v1259 = vsel %vm810, %v1252, %v1258
      %v1260 = vrot.slane %v1075, 4
      %v1261 = vsel %vm810, %v1254, %v1260
      %v1262 = vrot.slane %v1076, 4
      %v1263 = vsel %vm810, %v1256, %v1262
      %v1264 = vrot.slane %v1077, 4
      %v1265 = vsel %vm810, %v1258, %v1264
      %v1266 = vrot.slane %v1078, 4
      %v1267 = vsel %vm810, %v1260, %v1266
      %v1268 = vrot.slane %v1079, 4
      %v1269 = vsel %vm810, %v1262, %v1268
      %v1270 = vrot.slane %v1080, 4
      %v1271 = vsel %vm810, %v1264, %v1270
      %v1272 = vrot.slane %v1081, 4
      %v1273 = vsel %vm810, %v1266, %v1272
      %v1274 = vrot.slane %v1082, 4
      %v1275 = vsel %vm810, %v1268, %v1274
      %v1276 = vrot.slane %v1083, 4
      %v1277 = vsel %vm810, %v1270, %v1276
      %v1278 = vrot.slane %v1084, 4
      %v1279 = vsel %vm810, %v1272, %v1278
      %v1280 = vrot.slane %v1085, 4
      %v1281 = vsel %vm810, %v1274, %v1280
      %v1282 = vrot.slane %v1086, 4
      %v1283 = vsel %vm810, %v1276, %v1282
      %v1284 = vrot.slane %v1087, 4
      %v1285 = vsel %vm810, %v1278, %v1284
      %v1286 = vrot.slane %v1088, 4
      %v1287 = vsel %vm810, %v1280, %v1286
      %v1288 = vrot.slane %v1089, 4
      %v1289 = vsel %vm810, %v1282, %v1288
      %v1290 = vrot.slane %v1090, 4
      %v1291 = vsel %vm810, %v1284, %v1290
      %v1292 = vrot.slane %v1091, 4
      %v1293 = vsel %vm810, %v1286, %v1292
      %v1294 = vrot.slane %v1092, 4
      %v1295 = vsel %vm810, %v1288, %v1294
      %v1296 = vrot.slane %v1093, 4
      %v1297 = vsel %vm810, %v1290, %v1296
      %v1298 = vrot.slane %v1094, 4
      %v1299 = vsel %vm810, %v1292, %v1298
      %v1300 = vrot.slane %v1095, 4
      %v1301 = vsel %vm810, %v1294, %v1300
      %v1302 = vrot.slane %v1096, 4
      %v1303 = vsel %vm810, %v1296, %v1302
      %v1304 = vrot.slane %v1097, 4
      %v1305 = vsel %vm810, %v1298, %v1304
      %v1306 = vrot.slane %v1149, 4
      %v1307 = vsel %vm810, %v1300, %v1306
      %v1308 = vrot.slane %v1150, 4
      %v1309 = vsel %vm810, %v1302, %v1308
      %v1310 = vrot.slane %v1151, 4
      %v1311 = vsel %vm810, %v1304, %v1310
      %v1312 = vrot.slane %v1152, 4
      %v1313 = vsel %vm810, %v1306, %v1312
      %v1314 = vrot.slane %v1153, 4
      %v1315 = vsel %vm810, %v1308, %v1314
      %v1316 = vrot.slane %v1154, 4
      %v1317 = vsel %vm810, %v1310, %v1316
      %v1402 = vunpack.c.l.b16 %v1156
      %v1403 = vunpack.c.l.b16 %v1157
      %v1404 = vunpack.c.l.b16 %v1158
      %v1405 = vunpack.c.l.b16 %v1159
      %v1406 = vunpack.c.l.b16 %v1160
      %v1407 = vunpack.c.l.b16 %v1161
      %v1408 = vunpack.c.l.b16 %v1162
      %v1409 = vunpack.c.l.b16 %v1163
      %v1410 = vunpack.c.l.b16 %v1164
      %v1411 = vunpack.c.l.b16 %v1165
      %v1412 = vunpack.c.l.b16 %v1166
      %v1413 = vunpack.c.l.b16 %v1167
      %v1414 = vunpack.c.l.b16 %v1168
      %v1415 = vunpack.c.l.b16 %v1169
      %v1416 = vunpack.c.l.b16 %v1170
      %v1417 = vunpack.c.l.b16 %v1171
      %v1418 = vunpack.c.l.b16 %v1172
      %v1419 = vunpack.c.l.b16 %v1173
      %v1420 = vunpack.c.l.b16 %v1174
      %v1421 = vunpack.c.l.b16 %v1175
      %v1422 = vunpack.c.l.b16 %v1176
      %v1423 = vunpack.c.l.b16 %v1177
      %v1424 = vunpack.c.l.b16 %v1178
      %v1425 = vunpack.c.l.b16 %v1179
      %v1426 = vunpack.c.l.b16 %v1180
      %v1427 = vunpack.c.l.b16 %v1181
      %v1428 = vunpack.c.l.b16 %v1182
      %v1429 = vunpack.c.l.b16 %v1183
      %v1430 = vunpack.c.l.b16 %v1184
      %v1431 = vunpack.c.l.b16 %v1185
      %v1432 = vunpack.c.l.b16 %v1186
      %v1433 = vunpack.c.l.b16 %v1187
      %v1434 = vunpack.c.l.b16 %v1188
      %v1435 = vunpack.c.l.b16 %v1189
      %v1436 = vunpack.c.l.b16 %v1190
      %v1437 = vunpack.c.l.b16 %v1191
      %v1438 = vunpack.c.l.b16 %v1192
      %v1439 = vunpack.c.l.b16 %v1193
      %v1440 = vunpack.c.l.b16 %v1194
      %v1441 = vunpack.c.l.b16 %v1195
      %v1442 = vunpack.c.l.b16 %v1196
      %v1443 = vunpack.c.l.b16 %v1197
      %v1444 = vunpack.c.l.b16 %v1198
      %v1445 = vunpack.c.l.b16 %v1199
      %v1446 = vunpack.c.l.b16 %v1200
      %v1447 = vunpack.c.l.b16 %v1201
      %v1448 = vunpack.c.l.b16 %v1202
      %v1449 = vunpack.c.l.b16 %v1203
      %v1450 = vpack.c.b16 %v1403, %v1402
      %v1451 = vpack.c.b16 %v1405, %v1404
      %v1452 = vpack.c.b16 %v1407, %v1406
      %v1453 = vpack.c.b16 %v1409, %v1408
      %v1454 = vpack.c.b16 %v1411, %v1410
      %v1455 = vpack.c.b16 %v1413, %v1412
      %v1456 = vpack.c.b16 %v1415, %v1414
      %v1457 = vpack.c.b16 %v1417, %v1416
      %v1458 = vpack.c.b16 %v1419, %v1418
      %v1459 = vpack.c.b16 %v1421, %v1420
      %v1460 = vpack.c.b16 %v1423, %v1422
      %v1461 = vpack.c.b16 %v1425, %v1424
      %v1462 = vpack.c.b16 %v1427, %v1426
      %v1463 = vpack.c.b16 %v1429, %v1428
      %v1464 = vpack.c.b16 %v1431, %v1430
      %v1465 = vpack.c.b16 %v1433, %v1432
      %v1466 = vpack.c.b16 %v1435, %v1434
      %v1467 = vpack.c.b16 %v1437, %v1436
      %v1468 = vpack.c.b16 %v1439, %v1438
      %v1469 = vpack.c.b16 %v1441, %v1440
      %v1470 = vpack.c.b16 %v1443, %v1442
      %v1471 = vpack.c.b16 %v1445, %v1444
      %v1472 = vpack.c.b16 %v1447, %v1446
      %v1473 = vpack.c.b16 %v1449, %v1448
      %1498 = vmatprep.subr.bf16.mxu0 0
      %1499 = vmatpush1.bf16.msra.mxu0 %v1450
      %1500 = vmatprep.subr.bf16.mxu0 0
      %1501 = vmatpush1.bf16.msra.mxu0 %v1451
      %1502 = vmatprep.subr.bf16.mxu0 0
      %1503 = vmatpush1.bf16.msra.mxu0 %v1452
      %1504 = vmatprep.subr.bf16.mxu0 0
      %1505 = vmatpush1.bf16.msra.mxu0 %v1453
      %1506 = vmatprep.subr.bf16.mxu0 0
      %1507 = vmatpush1.bf16.msra.mxu0 %v1454
      %1508 = vmatprep.subr.bf16.mxu0 0
      %1509 = vmatpush1.bf16.msra.mxu0 %v1455
      %1510 = vmatprep.subr.bf16.mxu0 0
      %1511 = vmatpush1.bf16.msra.mxu0 %v1456
      %1512 = vmatprep.subr.bf16.mxu0 0
      %1513 = vmatpush1.bf16.msra.mxu0 %v1457
      %1514 = vmatprep.subr.bf16.mxu0 0
      %1515 = vmatpush1.bf16.msra.mxu0 %v1458
      %1516 = vmatprep.subr.bf16.mxu0 0
      %1517 = vmatpush1.bf16.msra.mxu0 %v1459
      %1518 = vmatprep.subr.bf16.mxu0 0
      %1519 = vmatpush1.bf16.msra.mxu0 %v1460
      %1520 = vmatprep.subr.bf16.mxu0 0
      %1521 = vmatpush1.bf16.msra.mxu0 %v1461
      %1522 = vmatprep.subr.bf16.mxu0 0
      %1523 = vmatpush1.bf16.msra.mxu0 %v1462
      %1524 = vmatprep.subr.bf16.mxu0 0
      %1525 = vmatpush1.bf16.msra.mxu0 %v1463
      %1526 = vmatprep.subr.bf16.mxu0 0
      %1527 = vmatpush1.bf16.msra.mxu0 %v1464
      %1528 = vmatprep.subr.bf16.mxu0 0
      %1529 = vmatpush1.bf16.msra.mxu0 %v1465
      %1530 = vmatprep.mubr.bf16.mxu0 %v1248
      %1531 = vmatmul.mubr.bf16.gmra.mrb[0].mxu0 %v1245
      %v1532 = vpop.f32.mrb[0].mxu0
      %v1533 = vadd.f32 0.0, %v1532
      %v1534 = vpop.f32.mrb[0].mxu0
      %v1535 = vpop.f32.mrb[0].mxu0
      %v1536 = vadd.f32 0.0, %v1535
      %v1537 = vpop.f32.mrb[0].mxu0
      %1538 = vmatprep.mubr.bf16.mxu0 %v1255
      %1539 = vmatmul.mubr.bf16.gmra.mrb[0].mxu0 %v1253
      %v1540 = vpop.f32.mrb[0].mxu0
      %v1541 = vadd.f32 0.0, %v1540
      %v1542 = vpop.f32.mrb[0].mxu0
      %v1543 = vpop.f32.mrb[0].mxu0
      %v1544 = vadd.f32 0.0, %v1543
      %v1545 = vpop.f32.mrb[0].mxu0
      %1546 = vmatprep.mubr.bf16.mxu0 %v1261
      %1547 = vmatmul.mubr.bf16.gmra.mrb[0].mxu0 %v1259
      %v1548 = vpop.f32.mrb[0].mxu0
      %v1549 = vadd.f32 0.0, %v1548
      %v1550 = vpop.f32.mrb[0].mxu0
      %v1551 = vpop.f32.mrb[0].mxu0
      %v1552 = vadd.f32 0.0, %v1551
      %v1553 = vpop.f32.mrb[0].mxu0
      %1554 = vmatprep.mubr.bf16.mxu0 %v1267
      %1555 = vmatmul.mubr.bf16.gmra.mrb[0].mxu0 %v1265
      %v1556 = vpop.f32.mrb[0].mxu0
      %v1557 = vadd.f32 0.0, %v1556
      %v1558 = vpop.f32.mrb[0].mxu0
      %v1559 = vpop.f32.mrb[0].mxu0
      %v1560 = vadd.f32 0.0, %v1559
      %v1561 = vpop.f32.mrb[0].mxu0
      %1562 = vmatprep.mubr.bf16.mxu0 %v1273
      %1563 = vmatmul.mubr.bf16.gmra.mrb[0].mxu0 %v1271
      %v1564 = vpop.f32.mrb[0].mxu0
      %v1565 = vadd.f32 0.0, %v1564
      %v1566 = vpop.f32.mrb[0].mxu0
      %v1567 = vpop.f32.mrb[0].mxu0
      %v1568 = vadd.f32 0.0, %v1567
      %v1569 = vpop.f32.mrb[0].mxu0
      %1570 = vmatprep.mubr.bf16.mxu0 %v1279
      %1571 = vmatmul.mubr.bf16.gmra.mrb[0].mxu0 %v1277
      %v1572 = vpop.f32.mrb[0].mxu0
      %v1573 = vadd.f32 0.0, %v1572
      %v1574 = vpop.f32.mrb[0].mxu0
      %v1575 = vpop.f32.mrb[0].mxu0
      %v1576 = vadd.f32 0.0, %v1575
      %v1577 = vpop.f32.mrb[0].mxu0
      %1578 = vmatprep.mubr.bf16.mxu0 %v1285
      %1579 = vmatmul.mubr.bf16.gmra.mrb[0].mxu0 %v1283
      %v1580 = vpop.f32.mrb[0].mxu0
      %v1581 = vadd.f32 0.0, %v1580
      %v1582 = vpop.f32.mrb[0].mxu0
      %v1583 = vpop.f32.mrb[0].mxu0
      %v1584 = vadd.f32 0.0, %v1583
      %v1585 = vpop.f32.mrb[0].mxu0
      %1586 = vmatprep.mubr.bf16.mxu0 %v1291
      %1587 = vmatmul.mubr.bf16.gmra.mrb[0].mxu0 %v1289
      %v1588 = vpop.f32.mrb[0].mxu0
      %v1589 = vadd.f32 0.0, %v1588
      %v1590 = vpop.f32.mrb[0].mxu0
      %v1591 = vpop.f32.mrb[0].mxu0
      %v1592 = vadd.f32 0.0, %v1591
      %v1593 = vpop.f32.mrb[0].mxu0
      %1594 = vmatprep.mubr.bf16.mxu0 %v1297
      %1595 = vmatmul.mubr.bf16.gmra.mrb[0].mxu0 %v1295
      %v1596 = vpop.f32.mrb[0].mxu0
      %v1597 = vadd.f32 0.0, %v1596
      %v1598 = vpop.f32.mrb[0].mxu0
      %v1599 = vpop.f32.mrb[0].mxu0
      %v1600 = vadd.f32 0.0, %v1599
      %v1601 = vpop.f32.mrb[0].mxu0
      %1602 = vmatprep.mubr.bf16.mxu0 %v1303
      %1603 = vmatmul.mubr.bf16.gmra.mrb[0].mxu0 %v1301
      %v1604 = vpop.f32.mrb[0].mxu0
      %v1605 = vadd.f32 0.0, %v1604
      %v1606 = vpop.f32.mrb[0].mxu0
      %v1607 = vpop.f32.mrb[0].mxu0
      %v1608 = vadd.f32 0.0, %v1607
      %v1609 = vpop.f32.mrb[0].mxu0
      %1610 = vmatprep.mubr.bf16.mxu0 %v1309
      %1611 = vmatmul.mubr.bf16.gmra.mrb[0].mxu0 %v1307
      %v1612 = vpop.f32.mrb[0].mxu0
      %v1613 = vadd.f32 0.0, %v1612
      %v1614 = vpop.f32.mrb[0].mxu0
      %v1615 = vpop.f32.mrb[0].mxu0
      %v1616 = vadd.f32 0.0, %v1615
      %v1617 = vpop.f32.mrb[0].mxu0
      %1618 = vmatprep.mubr.bf16.mxu0 %v1315
      %1619 = vmatmul.mubr.bf16.gmra.mrb[0].mxu0 %v1313
      %v1620 = vpop.f32.mrb[0].mxu0
      %v1621 = vadd.f32 0.0, %v1620
      %v1622 = vpop.f32.mrb[0].mxu0
      %v1623 = vpop.f32.mrb[0].mxu0
      %v1624 = vadd.f32 0.0, %v1623
      %v1625 = vpop.f32.mrb[0].mxu0
      %1626 = vdwg.mxu0
      %1627 = vmatprep.subr.bf16.mxu0 0
      %1628 = vmatpush1.bf16.msra.mxu0 %v1466
      %1629 = vmatprep.subr.bf16.mxu0 0
      %1630 = vmatpush1.bf16.msra.mxu0 %v1467
      %1631 = vmatprep.subr.bf16.mxu0 0
      %1632 = vmatpush1.bf16.msra.mxu0 %v1468
      %1633 = vmatprep.subr.bf16.mxu0 0
      %1634 = vmatpush1.bf16.msra.mxu0 %v1469
      %1635 = vmatprep.subr.bf16.mxu0 0
      %1636 = vmatpush1.bf16.msra.mxu0 %v1470
      %1637 = vmatprep.subr.bf16.mxu0 0
      %1638 = vmatpush1.bf16.msra.mxu0 %v1471
      %1639 = vmatprep.subr.bf16.mxu0 0
      %1640 = vmatpush1.bf16.msra.mxu0 %v1472
      %1641 = vmatprep.subr.bf16.mxu0 0
      %1642 = vmatpush1.bf16.msra.mxu0 %v1473
      %1643 = vmatprep.subr.bf16.mxu0 0
      %1644 = vmatpush1.bf16.msra.mxu0 0
      %1645 = vmatprep.subr.bf16.mxu0 0
      %1646 = vmatpush1.bf16.msra.mxu0 0
      %1647 = vmatprep.subr.bf16.mxu0 0
      %1648 = vmatpush1.bf16.msra.mxu0 0
      %1649 = vmatprep.subr.bf16.mxu0 0
      %1650 = vmatpush1.bf16.msra.mxu0 0
      %1651 = vmatprep.subr.bf16.mxu0 0
      %1652 = vmatpush1.bf16.msra.mxu0 0
      %1653 = vmatprep.subr.bf16.mxu0 0
      %1654 = vmatpush1.bf16.msra.mxu0 0
      %1655 = vmatprep.subr.bf16.mxu0 0
      %1656 = vmatpush1.bf16.msra.mxu0 0
      %1657 = vmatprep.subr.bf16.mxu0 0
      %1658 = vmatpush1.bf16.msra.mxu0 0
      %1659 = vmatprep.mubr.bf16.mxu0 0
      %1660 = vmatmul.mubr.bf16.gmra.mrb[0].mxu0 %v1251
      %v1661 = vpop.f32.mrb[0].mxu0
      %v1662 = vadd.f32 %v1533, %v1661
      %v1663 = vpop.f32.mrb[0].mxu0
      %v1664 = vpop.f32.mrb[0].mxu0
      %v1665 = vadd.f32 %v1536, %v1664
      %v1666 = vpop.f32.mrb[0].mxu0
      %1667 = vmatprep.mubr.bf16.mxu0 0
      %1668 = vmatmul.mubr.bf16.gmra.mrb[0].mxu0 %v1257
      %v1669 = vpop.f32.mrb[0].mxu0
      %v1670 = vadd.f32 %v1541, %v1669
      %v1671 = vpop.f32.mrb[0].mxu0
      %v1672 = vpop.f32.mrb[0].mxu0
      %v1673 = vadd.f32 %v1544, %v1672
      %v1674 = vpop.f32.mrb[0].mxu0
      %1675 = vmatprep.mubr.bf16.mxu0 0
      %1676 = vmatmul.mubr.bf16.gmra.mrb[0].mxu0 %v1263
      %v1677 = vpop.f32.mrb[0].mxu0
      %v1678 = vadd.f32 %v1549, %v1677
      %v1679 = vpop.f32.mrb[0].mxu0
      %v1680 = vpop.f32.mrb[0].mxu0
      %v1681 = vadd.f32 %v1552, %v1680
      %v1682 = vpop.f32.mrb[0].mxu0
      %1683 = vmatprep.mubr.bf16.mxu0 0
      %1684 = vmatmul.mubr.bf16.gmra.mrb[0].mxu0 %v1269
      %v1685 = vpop.f32.mrb[0].mxu0
      %v1686 = vadd.f32 %v1557, %v1685
      %v1687 = vpop.f32.mrb[0].mxu0
      %v1688 = vpop.f32.mrb[0].mxu0
      %v1689 = vadd.f32 %v1560, %v1688
      %v1690 = vpop.f32.mrb[0].mxu0
      %1691 = vmatprep.mubr.bf16.mxu0 0
      %1692 = vmatmul.mubr.bf16.gmra.mrb[0].mxu0 %v1275
      %v1693 = vpop.f32.mrb[0].mxu0
      %v1694 = vadd.f32 %v1565, %v1693
      %v1695 = vpop.f32.mrb[0].mxu0
      %v1696 = vpop.f32.mrb[0].mxu0
      %v1697 = vadd.f32 %v1568, %v1696
      %v1698 = vpop.f32.mrb[0].mxu0
      %1699 = vmatprep.mubr.bf16.mxu0 0
      %1700 = vmatmul.mubr.bf16.gmra.mrb[0].mxu0 %v1281
      %v1701 = vpop.f32.mrb[0].mxu0
      %v1702 = vadd.f32 %v1573, %v1701
      %v1703 = vpop.f32.mrb[0].mxu0
      %v1704 = vpop.f32.mrb[0].mxu0
      %v1705 = vadd.f32 %v1576, %v1704
      %v1706 = vpop.f32.mrb[0].mxu0
      %1707 = vmatprep.mubr.bf16.mxu0 0
      %1708 = vmatmul.mubr.bf16.gmra.mrb[0].mxu0 %v1287
      %v1709 = vpop.f32.mrb[0].mxu0
      %v1710 = vadd.f32 %v1581, %v1709
      %v1711 = vpop.f32.mrb[0].mxu0
      %v1712 = vpop.f32.mrb[0].mxu0
      %v1713 = vadd.f32 %v1584, %v1712
      %v1714 = vpop.f32.mrb[0].mxu0
      %1715 = vmatprep.mubr.bf16.mxu0 0
      %1716 = vmatmul.mubr.bf16.gmra.mrb[0].mxu0 %v1293
      %v1717 = vpop.f32.mrb[0].mxu0
      %v1718 = vadd.f32 %v1589, %v1717
      %v1719 = vpop.f32.mrb[0].mxu0
      %v1720 = vpop.f32.mrb[0].mxu0
      %v1721 = vadd.f32 %v1592, %v1720
      %v1722 = vpop.f32.mrb[0].mxu0
      %1723 = vmatprep.mubr.bf16.mxu0 0
      %1724 = vmatmul.mubr.bf16.gmra.mrb[0].mxu0 %v1299
      %v1725 = vpop.f32.mrb[0].mxu0
      %v1726 = vadd.f32 %v1597, %v1725
      %v1727 = vpop.f32.mrb[0].mxu0
      %v1728 = vpop.f32.mrb[0].mxu0
      %v1729 = vadd.f32 %v1600, %v1728
      %v1730 = vpop.f32.mrb[0].mxu0
      %1731 = vmatprep.mubr.bf16.mxu0 0
      %1732 = vmatmul.mubr.bf16.gmra.mrb[0].mxu0 %v1305
      %v1733 = vpop.f32.mrb[0].mxu0
      %v1734 = vadd.f32 %v1605, %v1733
      %v1735 = vpop.f32.mrb[0].mxu0
      %v1736 = vpop.f32.mrb[0].mxu0
      %v1737 = vadd.f32 %v1608, %v1736
      %v1738 = vpop.f32.mrb[0].mxu0
      %1739 = vmatprep.mubr.bf16.mxu0 0
      %1740 = vmatmul.mubr.bf16.gmra.mrb[0].mxu0 %v1311
      %v1741 = vpop.f32.mrb[0].mxu0
      %v1742 = vadd.f32 %v1613, %v1741
      %v1743 = vpop.f32.mrb[0].mxu0
      %v1744 = vpop.f32.mrb[0].mxu0
      %v1745 = vadd.f32 %v1616, %v1744
      %v1746 = vpop.f32.mrb[0].mxu0
      %1747 = vmatprep.mubr.bf16.mxu0 0
      %1748 = vmatmul.mubr.bf16.gmra.mrb[0].mxu0 %v1317
      %v1749 = vpop.f32.mrb[0].mxu0
      %v1750 = vadd.f32 %v1621, %v1749
      %v1751 = vpop.f32.mrb[0].mxu0
      %v1752 = vpop.f32.mrb[0].mxu0
      %v1753 = vadd.f32 %v1624, %v1752
      %v1754 = vpop.f32.mrb[0].mxu0
      %1755 = vdwg.mxu0
      %v1804 = vunpack.c.l.b16 %v1098
      %v1805 = vunpack.c.l.b16 %v1099
      %v1806 = vunpack.c.l.b16 %v1100
      %v1807 = vunpack.c.l.b16 %v1101
      %v1808 = vunpack.c.l.b16 %v1102
      %v1809 = vunpack.c.l.b16 %v1103
      %v1810 = vunpack.c.l.b16 %v1104
      %v1811 = vunpack.c.l.b16 %v1105
      %v1812 = vunpack.c.l.b16 %v1106
      %v1813 = vunpack.c.l.b16 %v1107
      %v1814 = vunpack.c.l.b16 %v1108
      %v1815 = vunpack.c.l.b16 %v1109
      %v1816 = vunpack.c.l.b16 %v1110
      %v1817 = vunpack.c.l.b16 %v1111
      %v1818 = vunpack.c.l.b16 %v1112
      %v1819 = vunpack.c.l.b16 %v1113
      %v1820 = vunpack.c.l.b16 %v1114
      %v1821 = vunpack.c.l.b16 %v1115
      %v1822 = vunpack.c.l.b16 %v1116
      %v1823 = vunpack.c.l.b16 %v1117
      %v1824 = vunpack.c.l.b16 %v1118
      %v1825 = vunpack.c.l.b16 %v1119
      %v1826 = vunpack.c.l.b16 %v1120
      %v1827 = vunpack.c.l.b16 %v1121
      %v1828 = vunpack.c.l.b16 %v1122
      %v1829 = vunpack.c.l.b16 %v1123
      %v1830 = vunpack.c.l.b16 %v1124
      %v1831 = vunpack.c.l.b16 %v1125
      %v1832 = vunpack.c.l.b16 %v1126
      %v1833 = vunpack.c.l.b16 %v1127
      %v1834 = vunpack.c.l.b16 %v1128
      %v1835 = vunpack.c.l.b16 %v1129
      %v1836 = vunpack.c.l.b16 %v1130
      %v1837 = vunpack.c.l.b16 %v1131
      %v1838 = vunpack.c.l.b16 %v1132
      %v1839 = vunpack.c.l.b16 %v1133
      %v1840 = vunpack.c.l.b16 %v1134
      %v1841 = vunpack.c.l.b16 %v1135
      %v1842 = vunpack.c.l.b16 %v1136
      %v1843 = vunpack.c.l.b16 %v1137
      %v1844 = vunpack.c.l.b16 %v1138
      %v1845 = vunpack.c.l.b16 %v1139
      %v1846 = vunpack.c.l.b16 %v1140
      %v1847 = vunpack.c.l.b16 %v1141
      %v1848 = vunpack.c.l.b16 %v1142
      %v1849 = vunpack.c.l.b16 %v1143
      %v1850 = vunpack.c.l.b16 %v1144
      %v1851 = vunpack.c.l.b16 %v1145
      %v1852 = vpack.c.b16 %v1805, %v1804
      %v1853 = vpack.c.b16 %v1807, %v1806
      %v1854 = vpack.c.b16 %v1809, %v1808
      %v1855 = vpack.c.b16 %v1811, %v1810
      %v1856 = vpack.c.b16 %v1813, %v1812
      %v1857 = vpack.c.b16 %v1815, %v1814
      %v1858 = vpack.c.b16 %v1817, %v1816
      %v1859 = vpack.c.b16 %v1819, %v1818
      %v1860 = vpack.c.b16 %v1821, %v1820
      %v1861 = vpack.c.b16 %v1823, %v1822
      %v1862 = vpack.c.b16 %v1825, %v1824
      %v1863 = vpack.c.b16 %v1827, %v1826
      %v1864 = vpack.c.b16 %v1829, %v1828
      %v1865 = vpack.c.b16 %v1831, %v1830
      %v1866 = vpack.c.b16 %v1833, %v1832
      %v1867 = vpack.c.b16 %v1835, %v1834
      %v1868 = vpack.c.b16 %v1837, %v1836
      %v1869 = vpack.c.b16 %v1839, %v1838
      %v1870 = vpack.c.b16 %v1841, %v1840
      %v1871 = vpack.c.b16 %v1843, %v1842
      %v1872 = vpack.c.b16 %v1845, %v1844
      %v1873 = vpack.c.b16 %v1847, %v1846
      %v1874 = vpack.c.b16 %v1849, %v1848
      %v1875 = vpack.c.b16 %v1851, %v1850
      %1900 = vmatprep.subr.bf16.mxu0 0
      %1901 = vmatpush1.bf16.msra.mxu0 %v1852
      %1902 = vmatprep.subr.bf16.mxu0 0
      %1903 = vmatpush1.bf16.msra.mxu0 %v1853
      %1904 = vmatprep.subr.bf16.mxu0 0
      %1905 = vmatpush1.bf16.msra.mxu0 %v1854
      %1906 = vmatprep.subr.bf16.mxu0 0
      %1907 = vmatpush1.bf16.msra.mxu0 %v1855
      %1908 = vmatprep.subr.bf16.mxu0 0
      %1909 = vmatpush1.bf16.msra.mxu0 %v1856
      %1910 = vmatprep.subr.bf16.mxu0 0
      %1911 = vmatpush1.bf16.msra.mxu0 %v1857
      %1912 = vmatprep.subr.bf16.mxu0 0
      %1913 = vmatpush1.bf16.msra.mxu0 %v1858
      %1914 = vmatprep.subr.bf16.mxu0 0
      %1915 = vmatpush1.bf16.msra.mxu0 %v1859
      %1916 = vmatprep.subr.bf16.mxu0 0
      %1917 = vmatpush1.bf16.msra.mxu0 %v1860
      %1918 = vmatprep.subr.bf16.mxu0 0
      %1919 = vmatpush1.bf16.msra.mxu0 %v1861
      %1920 = vmatprep.subr.bf16.mxu0 0
      %1921 = vmatpush1.bf16.msra.mxu0 %v1862
      %1922 = vmatprep.subr.bf16.mxu0 0
      %1923 = vmatpush1.bf16.msra.mxu0 %v1863
      %1924 = vmatprep.subr.bf16.mxu0 0
      %1925 = vmatpush1.bf16.msra.mxu0 %v1864
      %1926 = vmatprep.subr.bf16.mxu0 0
      %1927 = vmatpush1.bf16.msra.mxu0 %v1865
      %1928 = vmatprep.subr.bf16.mxu0 0
      %1929 = vmatpush1.bf16.msra.mxu0 %v1866
      %1930 = vmatprep.subr.bf16.mxu0 0
      %1931 = vmatpush1.bf16.msra.mxu0 %v1867
      %1932 = vmatprep.mubr.bf16.mxu0 %v1063
      %1933 = vmatmul.mubr.bf16.gmra.mrb[0].mxu0 %v1062
      %v1934 = vpop.f32.mrb[0].mxu0
      %v1935 = vadd.f32 %v1662, %v1934
      %v1936 = vpop.f32.mrb[0].mxu0
      %v1937 = vpop.f32.mrb[0].mxu0
      %v1938 = vadd.f32 %v1665, %v1937
      %v1939 = vpop.f32.mrb[0].mxu0
      %1940 = vmatprep.mubr.bf16.mxu0 %v1066
      %1941 = vmatmul.mubr.bf16.gmra.mrb[0].mxu0 %v1065
      %v1942 = vpop.f32.mrb[0].mxu0
      %v1943 = vadd.f32 %v1670, %v1942
      %v1944 = vpop.f32.mrb[0].mxu0
      %v1945 = vpop.f32.mrb[0].mxu0
      %v1946 = vadd.f32 %v1673, %v1945
      %v1947 = vpop.f32.mrb[0].mxu0
      %1948 = vmatprep.mubr.bf16.mxu0 %v1069
      %1949 = vmatmul.mubr.bf16.gmra.mrb[0].mxu0 %v1068
      %v1950 = vpop.f32.mrb[0].mxu0
      %v1951 = vadd.f32 %v1678, %v1950
      %v1952 = vpop.f32.mrb[0].mxu0
      %v1953 = vpop.f32.mrb[0].mxu0
      %v1954 = vadd.f32 %v1681, %v1953
      %v1955 = vpop.f32.mrb[0].mxu0
      %1956 = vmatprep.mubr.bf16.mxu0 %v1072
      %1957 = vmatmul.mubr.bf16.gmra.mrb[0].mxu0 %v1071
      %v1958 = vpop.f32.mrb[0].mxu0
      %v1959 = vadd.f32 %v1686, %v1958
      %v1960 = vpop.f32.mrb[0].mxu0
      %v1961 = vpop.f32.mrb[0].mxu0
      %v1962 = vadd.f32 %v1689, %v1961
      %v1963 = vpop.f32.mrb[0].mxu0
      %1964 = vmatprep.mubr.bf16.mxu0 %v1075
      %1965 = vmatmul.mubr.bf16.gmra.mrb[0].mxu0 %v1074
      %v1966 = vpop.f32.mrb[0].mxu0
      %v1967 = vadd.f32 %v1694, %v1966
      %v1968 = vpop.f32.mrb[0].mxu0
      %v1969 = vpop.f32.mrb[0].mxu0
      %v1970 = vadd.f32 %v1697, %v1969
      %v1971 = vpop.f32.mrb[0].mxu0
      %1972 = vmatprep.mubr.bf16.mxu0 %v1078
      %1973 = vmatmul.mubr.bf16.gmra.mrb[0].mxu0 %v1077
      %v1974 = vpop.f32.mrb[0].mxu0
      %v1975 = vadd.f32 %v1702, %v1974
      %v1976 = vpop.f32.mrb[0].mxu0
      %v1977 = vpop.f32.mrb[0].mxu0
      %v1978 = vadd.f32 %v1705, %v1977
      %v1979 = vpop.f32.mrb[0].mxu0
      %1980 = vmatprep.mubr.bf16.mxu0 %v1081
      %1981 = vmatmul.mubr.bf16.gmra.mrb[0].mxu0 %v1080
      %v1982 = vpop.f32.mrb[0].mxu0
      %v1983 = vadd.f32 %v1710, %v1982
      %v1984 = vpop.f32.mrb[0].mxu0
      %v1985 = vpop.f32.mrb[0].mxu0
      %v1986 = vadd.f32 %v1713, %v1985
      %v1987 = vpop.f32.mrb[0].mxu0
      %1988 = vmatprep.mubr.bf16.mxu0 %v1084
      %1989 = vmatmul.mubr.bf16.gmra.mrb[0].mxu0 %v1083
      %v1990 = vpop.f32.mrb[0].mxu0
      %v1991 = vadd.f32 %v1718, %v1990
      %v1992 = vpop.f32.mrb[0].mxu0
      %v1993 = vpop.f32.mrb[0].mxu0
      %v1994 = vadd.f32 %v1721, %v1993
      %v1995 = vpop.f32.mrb[0].mxu0
      %1996 = vmatprep.mubr.bf16.mxu0 %v1087
      %1997 = vmatmul.mubr.bf16.gmra.mrb[0].mxu0 %v1086
      %v1998 = vpop.f32.mrb[0].mxu0
      %v1999 = vadd.f32 %v1726, %v1998
      %v2000 = vpop.f32.mrb[0].mxu0
      %v2001 = vpop.f32.mrb[0].mxu0
      %v2002 = vadd.f32 %v1729, %v2001
      %v2003 = vpop.f32.mrb[0].mxu0
      %2004 = vmatprep.mubr.bf16.mxu0 %v1090
      %2005 = vmatmul.mubr.bf16.gmra.mrb[0].mxu0 %v1089
      %v2006 = vpop.f32.mrb[0].mxu0
      %v2007 = vadd.f32 %v1734, %v2006
      %v2008 = vpop.f32.mrb[0].mxu0
      %v2009 = vpop.f32.mrb[0].mxu0
      %v2010 = vadd.f32 %v1737, %v2009
      %v2011 = vpop.f32.mrb[0].mxu0
      %2012 = vmatprep.mubr.bf16.mxu0 %v1093
      %2013 = vmatmul.mubr.bf16.gmra.mrb[0].mxu0 %v1092
      %v2014 = vpop.f32.mrb[0].mxu0
      %v2015 = vadd.f32 %v1742, %v2014
      %v2016 = vpop.f32.mrb[0].mxu0
      %v2017 = vpop.f32.mrb[0].mxu0
      %v2018 = vadd.f32 %v1745, %v2017
      %v2019 = vpop.f32.mrb[0].mxu0
      %2020 = vmatprep.mubr.bf16.mxu0 %v1096
      %2021 = vmatmul.mubr.bf16.gmra.mrb[0].mxu0 %v1095
      %v2022 = vpop.f32.mrb[0].mxu0
      %v2023 = vadd.f32 %v1750, %v2022
      %v2024 = vpop.f32.mrb[0].mxu0
      %v2025 = vpop.f32.mrb[0].mxu0
      %v2026 = vadd.f32 %v1753, %v2025
      %v2027 = vpop.f32.mrb[0].mxu0
      %2028 = vdwg.mxu0
      %2029 = vmatprep.subr.bf16.mxu0 0
      %2030 = vmatpush1.bf16.msra.mxu0 %v1868
      %2031 = vmatprep.subr.bf16.mxu0 0
      %2032 = vmatpush1.bf16.msra.mxu0 %v1869
      %2033 = vmatprep.subr.bf16.mxu0 0
      %2034 = vmatpush1.bf16.msra.mxu0 %v1870
      %2035 = vmatprep.subr.bf16.mxu0 0
      %2036 = vmatpush1.bf16.msra.mxu0 %v1871
      %2037 = vmatprep.subr.bf16.mxu0 0
      %2038 = vmatpush1.bf16.msra.mxu0 %v1872
      %2039 = vmatprep.subr.bf16.mxu0 0
      %2040 = vmatpush1.bf16.msra.mxu0 %v1873
      %2041 = vmatprep.subr.bf16.mxu0 0
      %2042 = vmatpush1.bf16.msra.mxu0 %v1874
      %2043 = vmatprep.subr.bf16.mxu0 0
      %2044 = vmatpush1.bf16.msra.mxu0 %v1875
      %2045 = vmatprep.subr.bf16.mxu0 0
      %2046 = vmatpush1.bf16.msra.mxu0 0
      %2047 = vmatprep.subr.bf16.mxu0 0
      %2048 = vmatpush1.bf16.msra.mxu0 0
      %2049 = vmatprep.subr.bf16.mxu0 0
      %2050 = vmatpush1.bf16.msra.mxu0 0
      %2051 = vmatprep.subr.bf16.mxu0 0
      %2052 = vmatpush1.bf16.msra.mxu0 0
      %2053 = vmatprep.subr.bf16.mxu0 0
      %2054 = vmatpush1.bf16.msra.mxu0 0
      %2055 = vmatprep.subr.bf16.mxu0 0
      %2056 = vmatpush1.bf16.msra.mxu0 0
      %2057 = vmatprep.subr.bf16.mxu0 0
      %2058 = vmatpush1.bf16.msra.mxu0 0
      %2059 = vmatprep.subr.bf16.mxu0 0
      %2060 = vmatpush1.bf16.msra.mxu0 0
      %2061 = vmatprep.mubr.bf16.mxu0 0
      %2062 = vmatmul.mubr.bf16.gmra.mrb[0].mxu0 %v1064
      %v2063 = vpop.f32.mrb[0].mxu0
      %v2064 = vadd.f32 %v1935, %v2063
      %v2065 = vpop.f32.mrb[0].mxu0
      %v2066 = vpop.f32.mrb[0].mxu0
      %v2067 = vadd.f32 %v1938, %v2066
      %v2068 = vpop.f32.mrb[0].mxu0
      %2069 = vmatprep.mubr.bf16.mxu0 0
      %2070 = vmatmul.mubr.bf16.gmra.mrb[0].mxu0 %v1067
      %v2071 = vpop.f32.mrb[0].mxu0
      %v2072 = vadd.f32 %v1943, %v2071
      %v2073 = vpop.f32.mrb[0].mxu0
      %v2074 = vpop.f32.mrb[0].mxu0
      %v2075 = vadd.f32 %v1946, %v2074
      %v2076 = vpop.f32.mrb[0].mxu0
      %2077 = vmatprep.mubr.bf16.mxu0 0
      %2078 = vmatmul.mubr.bf16.gmra.mrb[0].mxu0 %v1070
      %v2079 = vpop.f32.mrb[0].mxu0
      %v2080 = vadd.f32 %v1951, %v2079
      %v2081 = vpop.f32.mrb[0].mxu0
      %v2082 = vpop.f32.mrb[0].mxu0
      %v2083 = vadd.f32 %v1954, %v2082
      %v2084 = vpop.f32.mrb[0].mxu0
      %2085 = vmatprep.mubr.bf16.mxu0 0
      %2086 = vmatmul.mubr.bf16.gmra.mrb[0].mxu0 %v1073
      %v2087 = vpop.f32.mrb[0].mxu0
      %v2088 = vadd.f32 %v1959, %v2087
      %v2089 = vpop.f32.mrb[0].mxu0
      %v2090 = vpop.f32.mrb[0].mxu0
      %v2091 = vadd.f32 %v1962, %v2090
      %v2092 = vpop.f32.mrb[0].mxu0
      %2093 = vmatprep.mubr.bf16.mxu0 0
      %2094 = vmatmul.mubr.bf16.gmra.mrb[0].mxu0 %v1076
      %v2095 = vpop.f32.mrb[0].mxu0
      %v2096 = vadd.f32 %v1967, %v2095
      %v2097 = vpop.f32.mrb[0].mxu0
      %v2098 = vpop.f32.mrb[0].mxu0
      %v2099 = vadd.f32 %v1970, %v2098
      %v2100 = vpop.f32.mrb[0].mxu0
      %2101 = vmatprep.mubr.bf16.mxu0 0
      %2102 = vmatmul.mubr.bf16.gmra.mrb[0].mxu0 %v1079
      %v2103 = vpop.f32.mrb[0].mxu0
      %v2104 = vadd.f32 %v1975, %v2103
      %v2105 = vpop.f32.mrb[0].mxu0
      %v2106 = vpop.f32.mrb[0].mxu0
      %v2107 = vadd.f32 %v1978, %v2106
      %v2108 = vpop.f32.mrb[0].mxu0
      %2109 = vmatprep.mubr.bf16.mxu0 0
      %2110 = vmatmul.mubr.bf16.gmra.mrb[0].mxu0 %v1082
      %v2111 = vpop.f32.mrb[0].mxu0
      %v2112 = vadd.f32 %v1983, %v2111
      %v2113 = vpop.f32.mrb[0].mxu0
      %v2114 = vpop.f32.mrb[0].mxu0
      %v2115 = vadd.f32 %v1986, %v2114
      %v2116 = vpop.f32.mrb[0].mxu0
      %2117 = vmatprep.mubr.bf16.mxu0 0
      %2118 = vmatmul.mubr.bf16.gmra.mrb[0].mxu0 %v1085
      %v2119 = vpop.f32.mrb[0].mxu0
      %v2120 = vadd.f32 %v1991, %v2119
      %v2121 = vpop.f32.mrb[0].mxu0
      %v2122 = vpop.f32.mrb[0].mxu0
      %v2123 = vadd.f32 %v1994, %v2122
      %v2124 = vpop.f32.mrb[0].mxu0
      %2125 = vmatprep.mubr.bf16.mxu0 0
      %2126 = vmatmul.mubr.bf16.gmra.mrb[0].mxu0 %v1088
      %v2127 = vpop.f32.mrb[0].mxu0
      %v2128 = vadd.f32 %v1999, %v2127
      %v2129 = vpop.f32.mrb[0].mxu0
      %v2130 = vpop.f32.mrb[0].mxu0
      %v2131 = vadd.f32 %v2002, %v2130
      %v2132 = vpop.f32.mrb[0].mxu0
      %2133 = vmatprep.mubr.bf16.mxu0 0
      %2134 = vmatmul.mubr.bf16.gmra.mrb[0].mxu0 %v1091
      %v2135 = vpop.f32.mrb[0].mxu0
      %v2136 = vadd.f32 %v2007, %v2135
      %v2137 = vpop.f32.mrb[0].mxu0
      %v2138 = vpop.f32.mrb[0].mxu0
      %v2139 = vadd.f32 %v2010, %v2138
      %v2140 = vpop.f32.mrb[0].mxu0
      %2141 = vmatprep.mubr.bf16.mxu0 0
      %2142 = vmatmul.mubr.bf16.gmra.mrb[0].mxu0 %v1094
      %v2143 = vpop.f32.mrb[0].mxu0
      %v2144 = vadd.f32 %v2015, %v2143
      %v2145 = vpop.f32.mrb[0].mxu0
      %v2146 = vpop.f32.mrb[0].mxu0
      %v2147 = vadd.f32 %v2018, %v2146
      %v2148 = vpop.f32.mrb[0].mxu0
      %2149 = vmatprep.mubr.bf16.mxu0 0
      %2150 = vmatmul.mubr.bf16.gmra.mrb[0].mxu0 %v1097
      %v2151 = vpop.f32.mrb[0].mxu0
      %v2152 = vadd.f32 %v2023, %v2151
      %v2153 = vpop.f32.mrb[0].mxu0
      %v2154 = vpop.f32.mrb[0].mxu0
      %v2155 = vadd.f32 %v2026, %v2154
      %v2156 = vpop.f32.mrb[0].mxu0
      %2157 = vdwg.mxu0
      %v2158 = vld [vmem:[#allocation3 + $0x48] sm:$0xff]
      %v2159 = vld [vmem:[#allocation3 + $0x50] sm:$0xff]
      %v2160 = vld [vmem:[#allocation3 + $0x58] sm:$0xff]
      %v2161 = vld [vmem:[#allocation3 + $0x60] sm:$0xff]
      %v2162 = vld [vmem:[#allocation3 + $0x68] sm:$0xff]
      %v2163 = vld [vmem:[#allocation3 + $0x70] sm:$0xff]
      %v2164 = vld [vmem:[#allocation3 + $0x78] sm:$0xff]
      %v2165 = vld [vmem:[#allocation3 + $0x80] sm:$0xff]
      %v2166 = vld [vmem:[#allocation3 + $0x88] sm:$0xff]
      %v2167 = vld [vmem:[#allocation3 + $0x90] sm:$0xff]
      %v2168 = vld [vmem:[#allocation3 + $0x98] sm:$0xff]
      %v2169 = vld [vmem:[#allocation3 + $0xa0] sm:$0xff]
      %v2170 = vld [vmem:[#allocation3 + $0xa8] sm:$0xff]
      %v2171 = vld [vmem:[#allocation3 + $0xb0] sm:$0xff]
      %v2172 = vld [vmem:[#allocation3 + $0xb8] sm:$0xff]
      %v2173 = vld [vmem:[#allocation3 + $0xc0] sm:$0xff]
      %v2174 = vld [vmem:[#allocation3 + $0xc8] sm:$0xff]
      %v2175 = vld [vmem:[#allocation3 + $0xd0] sm:$0xff]
      %v2176 = vld [vmem:[#allocation3 + $0xd8] sm:$0xff]
      %v2177 = vld [vmem:[#allocation3 + $0xe0] sm:$0xff]
      %v2178 = vld [vmem:[#allocation3 + $0xe8] sm:$0xff]
      %v2179 = vld [vmem:[#allocation3 + $0xf0] sm:$0xff]
      %v2180 = vld [vmem:[#allocation3 + $0xf8] sm:$0xff]
      %v2181 = vld [vmem:[#allocation3 + $0x100] sm:$0xff]
      %v2182 = vld [vmem:[#allocation3 + $0x108] sm:$0xff]
      %v2183 = vld [vmem:[#allocation3 + $0x110] sm:$0xff]
      %v2184 = vld [vmem:[#allocation3 + $0x118] sm:$0xff]
      %v2185 = vld [vmem:[#allocation3 + $0x120] sm:$0xff]
      %v2186 = vld [vmem:[#allocation3 + $0x128] sm:$0xff]
      %v2187 = vld [vmem:[#allocation3 + $0x130] sm:$0xff]
      %v2188 = vld [vmem:[#allocation3 + $0x138] sm:$0xff]
      %v2189 = vld [vmem:[#allocation3 + $0x140] sm:$0xff]
      %v2190 = vld [vmem:[#allocation3 + $0x148] sm:$0xff]
      %v2191 = vld [vmem:[#allocation3 + $0x150] sm:$0xff]
      %v2192 = vld [vmem:[#allocation3 + $0x158] sm:$0xff]
      %v2193 = vld [vmem:[#allocation3 + $0x160] sm:$0xff]
      %s2194 = scalar_lea.vmem %s3, 384
      %v2195 = vld [vmem:[%s2194] sm:$0xf]
      %v2196 = vld [vmem:[%s2194 + $0x4] sm:$0xf]
      %v2197 = vld [vmem:[%s2194 + $0x8] sm:$0xf]
      %v2198 = vld [vmem:[%s2194 + $0xc] sm:$0xf]
      %v2199 = vld [vmem:[%s2194 + $0x10] sm:$0xf]
      %v2200 = vld [vmem:[%s2194 + $0x14] sm:$0xf]
      %v2201 = vld [vmem:[%s2194 + $0x18] sm:$0xf]
      %v2202 = vld [vmem:[%s2194 + $0x1c] sm:$0xf]
      %v2203 = vld [vmem:[%s2194 + $0x20] sm:$0xf]
      %v2204 = vld [vmem:[%s2194 + $0x24] sm:$0xf]
      %v2205 = vld [vmem:[%s2194 + $0x28] sm:$0xf]
      %v2206 = vld [vmem:[%s2194 + $0x2c] sm:$0xf]
      %v2207 = vld [vmem:[%s2194 + $0x30] sm:$0xf]
      %v2208 = vld [vmem:[%s2194 + $0x34] sm:$0xf]
      %v2209 = vld [vmem:[%s2194 + $0x38] sm:$0xf]
      %v2210 = vld [vmem:[%s2194 + $0x3c] sm:$0xf]
      %v2211 = vld [vmem:[%s2194 + $0x40] sm:$0xf]
      %v2212 = vld [vmem:[%s2194 + $0x44] sm:$0xf]
      %v2213 = vld [vmem:[%s2194 + $0x48] sm:$0xf]
      %v2214 = vld [vmem:[%s2194 + $0x4c] sm:$0xf]
      %v2215 = vld [vmem:[%s2194 + $0x50] sm:$0xf]
      %v2216 = vld [vmem:[%s2194 + $0x54] sm:$0xf]
      %v2217 = vld [vmem:[%s2194 + $0x58] sm:$0xf]
      %v2218 = vld [vmem:[%s2194 + $0x5c] sm:$0xf]
      %v2219 = vld [vmem:[%s2194 + $0x60] sm:$0xf]
      %v2220 = vld [vmem:[%s2194 + $0x64] sm:$0xf]
      %v2221 = vld [vmem:[%s2194 + $0x68] sm:$0xf]
      %v2222 = vld [vmem:[%s2194 + $0x6c] sm:$0xf]
      %v2223 = vld [vmem:[%s2194 + $0x70] sm:$0xf]
      %v2224 = vld [vmem:[%s2194 + $0x74] sm:$0xf]
      %v2225 = vld [vmem:[%s2194 + $0x78] sm:$0xf]
      %v2226 = vld [vmem:[%s2194 + $0x7c] sm:$0xf]
      %v2227 = vld [vmem:[%s2194 + $0x80] sm:$0xf]
      %v2228 = vld [vmem:[%s2194 + $0x84] sm:$0xf]
      %v2229 = vld [vmem:[%s2194 + $0x88] sm:$0xf]
      %v2230 = vld [vmem:[%s2194 + $0x8c] sm:$0xf]
      %v2231 = vld [vmem:[%s2194 + $0x90] sm:$0xf]
      %v2232 = vld [vmem:[%s2194 + $0x94] sm:$0xf]
      %v2233 = vld [vmem:[%s2194 + $0x98] sm:$0xf]
      %v2234 = vld [vmem:[%s2194 + $0x9c] sm:$0xf]
      %v2235 = vld [vmem:[%s2194 + $0xa0] sm:$0xf]
      %v2236 = vld [vmem:[%s2194 + $0xa4] sm:$0xf]
      %v2237 = vld [vmem:[%s2194 + $0xa8] sm:$0xf]
      %v2238 = vld [vmem:[%s2194 + $0xac] sm:$0xf]
      %v2239 = vld [vmem:[%s2194 + $0xb0] sm:$0xf]
      %v2240 = vld [vmem:[%s2194 + $0xb4] sm:$0xf]
      %v2241 = vld [vmem:[%s2194 + $0xb8] sm:$0xf]
      %v2242 = vld [vmem:[%s2194 + $0xbc] sm:$0xf]
      %v2291 = vunpack.c.l.b16 %v2195
      %v2292 = vunpack.c.l.b16 %v2196
      %v2293 = vunpack.c.l.b16 %v2197
      %v2294 = vunpack.c.l.b16 %v2198
      %v2295 = vunpack.c.l.b16 %v2199
      %v2296 = vunpack.c.l.b16 %v2200
      %v2297 = vunpack.c.l.b16 %v2201
      %v2298 = vunpack.c.l.b16 %v2202
      %v2299 = vunpack.c.l.b16 %v2203
      %v2300 = vunpack.c.l.b16 %v2204
      %v2301 = vunpack.c.l.b16 %v2205
      %v2302 = vunpack.c.l.b16 %v2206
      %v2303 = vunpack.c.l.b16 %v2207
      %v2304 = vunpack.c.l.b16 %v2208
      %v2305 = vunpack.c.l.b16 %v2209
      %v2306 = vunpack.c.l.b16 %v2210
      %v2307 = vunpack.c.l.b16 %v2211
      %v2308 = vunpack.c.l.b16 %v2212
      %v2309 = vunpack.c.l.b16 %v2213
      %v2310 = vunpack.c.l.b16 %v2214
      %v2311 = vunpack.c.l.b16 %v2215
      %v2312 = vunpack.c.l.b16 %v2216
      %v2313 = vunpack.c.l.b16 %v2217
      %v2314 = vunpack.c.l.b16 %v2218
      %v2315 = vunpack.c.l.b16 %v2219
      %v2316 = vunpack.c.l.b16 %v2220
      %v2317 = vunpack.c.l.b16 %v2221
      %v2318 = vunpack.c.l.b16 %v2222
      %v2319 = vunpack.c.l.b16 %v2223
      %v2320 = vunpack.c.l.b16 %v2224
      %v2321 = vunpack.c.l.b16 %v2225
      %v2322 = vunpack.c.l.b16 %v2226
      %v2323 = vunpack.c.l.b16 %v2227
      %v2324 = vunpack.c.l.b16 %v2228
      %v2325 = vunpack.c.l.b16 %v2229
      %v2326 = vunpack.c.l.b16 %v2230
      %v2327 = vunpack.c.l.b16 %v2231
      %v2328 = vunpack.c.l.b16 %v2232
      %v2329 = vunpack.c.l.b16 %v2233
      %v2330 = vunpack.c.l.b16 %v2234
      %v2331 = vunpack.c.l.b16 %v2235
      %v2332 = vunpack.c.l.b16 %v2236
      %v2333 = vunpack.c.l.b16 %v2237
      %v2334 = vunpack.c.l.b16 %v2238
      %v2335 = vunpack.c.l.b16 %v2239
      %v2336 = vunpack.c.l.b16 %v2240
      %v2337 = vunpack.c.l.b16 %v2241
      %v2338 = vunpack.c.l.b16 %v2242
      %v2339 = vpack.c.b16 %v2292, %v2291
      %v2340 = vpack.c.b16 %v2294, %v2293
      %v2341 = vpack.c.b16 %v2296, %v2295
      %v2342 = vpack.c.b16 %v2298, %v2297
      %v2343 = vpack.c.b16 %v2300, %v2299
      %v2344 = vpack.c.b16 %v2302, %v2301
      %v2345 = vpack.c.b16 %v2304, %v2303
      %v2346 = vpack.c.b16 %v2306, %v2305
      %v2347 = vpack.c.b16 %v2308, %v2307
      %v2348 = vpack.c.b16 %v2310, %v2309
      %v2349 = vpack.c.b16 %v2312, %v2311
      %v2350 = vpack.c.b16 %v2314, %v2313
      %v2351 = vpack.c.b16 %v2316, %v2315
      %v2352 = vpack.c.b16 %v2318, %v2317
      %v2353 = vpack.c.b16 %v2320, %v2319
      %v2354 = vpack.c.b16 %v2322, %v2321
      %v2355 = vpack.c.b16 %v2324, %v2323
      %v2356 = vpack.c.b16 %v2326, %v2325
      %v2357 = vpack.c.b16 %v2328, %v2327
      %v2358 = vpack.c.b16 %v2330, %v2329
      %v2359 = vpack.c.b16 %v2332, %v2331
      %v2360 = vpack.c.b16 %v2334, %v2333
      %v2361 = vpack.c.b16 %v2336, %v2335
      %v2362 = vpack.c.b16 %v2338, %v2337
      %2387 = vmatprep.subr.bf16.mxu0 0
      %2388 = vmatpush1.bf16.msra.mxu0 %v2339
      %2389 = vmatprep.subr.bf16.mxu0 0
      %2390 = vmatpush1.bf16.msra.mxu0 %v2340
      %2391 = vmatprep.subr.bf16.mxu0 0
      %2392 = vmatpush1.bf16.msra.mxu0 %v2341
      %2393 = vmatprep.subr.bf16.mxu0 0
      %2394 = vmatpush1.bf16.msra.mxu0 %v2342
      %2395 = vmatprep.subr.bf16.mxu0 0
      %2396 = vmatpush1.bf16.msra.mxu0 %v2343
      %2397 = vmatprep.subr.bf16.mxu0 0
      %2398 = vmatpush1.bf16.msra.mxu0 %v2344
      %2399 = vmatprep.subr.bf16.mxu0 0
      %2400 = vmatpush1.bf16.msra.mxu0 %v2345
      %2401 = vmatprep.subr.bf16.mxu0 0
      %2402 = vmatpush1.bf16.msra.mxu0 %v2346
      %2403 = vmatprep.subr.bf16.mxu0 0
      %2404 = vmatpush1.bf16.msra.mxu0 %v2347
      %2405 = vmatprep.subr.bf16.mxu0 0
      %2406 = vmatpush1.bf16.msra.mxu0 %v2348
      %2407 = vmatprep.subr.bf16.mxu0 0
      %2408 = vmatpush1.bf16.msra.mxu0 %v2349
      %2409 = vmatprep.subr.bf16.mxu0 0
      %2410 = vmatpush1.bf16.msra.mxu0 %v2350
      %2411 = vmatprep.subr.bf16.mxu0 0
      %2412 = vmatpush1.bf16.msra.mxu0 %v2351
      %2413 = vmatprep.subr.bf16.mxu0 0
      %2414 = vmatpush1.bf16.msra.mxu0 %v2352
      %2415 = vmatprep.subr.bf16.mxu0 0
      %2416 = vmatpush1.bf16.msra.mxu0 %v2353
      %2417 = vmatprep.subr.bf16.mxu0 0
      %2418 = vmatpush1.bf16.msra.mxu0 %v2354
      %2419 = vmatprep.mubr.bf16.mxu0 %v2159
      %2420 = vmatmul.mubr.bf16.gmra.mrb[0].mxu0 %v2158
      %v2421 = vpop.f32.mrb[0].mxu0
      %v2422 = vadd.f32 0.0, %v2421
      %v2423 = vpop.f32.mrb[0].mxu0
      %v2424 = vpop.f32.mrb[0].mxu0
      %v2425 = vadd.f32 0.0, %v2424
      %v2426 = vpop.f32.mrb[0].mxu0
      %2427 = vmatprep.mubr.bf16.mxu0 %v2162
      %2428 = vmatmul.mubr.bf16.gmra.mrb[0].mxu0 %v2161
      %v2429 = vpop.f32.mrb[0].mxu0
      %v2430 = vadd.f32 0.0, %v2429
      %v2431 = vpop.f32.mrb[0].mxu0
      %v2432 = vpop.f32.mrb[0].mxu0
      %v2433 = vadd.f32 0.0, %v2432
      %v2434 = vpop.f32.mrb[0].mxu0
      %2435 = vmatprep.mubr.bf16.mxu0 %v2165
      %2436 = vmatmul.mubr.bf16.gmra.mrb[0].mxu0 %v2164
      %v2437 = vpop.f32.mrb[0].mxu0
      %v2438 = vadd.f32 0.0, %v2437
      %v2439 = vpop.f32.mrb[0].mxu0
      %v2440 = vpop.f32.mrb[0].mxu0
      %v2441 = vadd.f32 0.0, %v2440
      %v2442 = vpop.f32.mrb[0].mxu0
      %2443 = vmatprep.mubr.bf16.mxu0 %v2168
      %2444 = vmatmul.mubr.bf16.gmra.mrb[0].mxu0 %v2167
      %v2445 = vpop.f32.mrb[0].mxu0
      %v2446 = vadd.f32 0.0, %v2445
      %v2447 = vpop.f32.mrb[0].mxu0
      %v2448 = vpop.f32.mrb[0].mxu0
      %v2449 = vadd.f32 0.0, %v2448
      %v2450 = vpop.f32.mrb[0].mxu0
      %2451 = vmatprep.mubr.bf16.mxu0 %v2171
      %2452 = vmatmul.mubr.bf16.gmra.mrb[0].mxu0 %v2170
      %v2453 = vpop.f32.mrb[0].mxu0
      %v2454 = vadd.f32 0.0, %v2453
      %v2455 = vpop.f32.mrb[0].mxu0
      %v2456 = vpop.f32.mrb[0].mxu0
      %v2457 = vadd.f32 0.0, %v2456
      %v2458 = vpop.f32.mrb[0].mxu0
      %2459 = vmatprep.mubr.bf16.mxu0 %v2174
      %2460 = vmatmul.mubr.bf16.gmra.mrb[0].mxu0 %v2173
      %v2461 = vpop.f32.mrb[0].mxu0
      %v2462 = vadd.f32 0.0, %v2461
      %v2463 = vpop.f32.mrb[0].mxu0
      %v2464 = vpop.f32.mrb[0].mxu0
      %v2465 = vadd.f32 0.0, %v2464
      %v2466 = vpop.f32.mrb[0].mxu0
      %2467 = vmatprep.mubr.bf16.mxu0 %v2177
      %2468 = vmatmul.mubr.bf16.gmra.mrb[0].mxu0 %v2176
      %v2469 = vpop.f32.mrb[0].mxu0
      %v2470 = vadd.f32 0.0, %v2469
      %v2471 = vpop.f32.mrb[0].mxu0
      %v2472 = vpop.f32.mrb[0].mxu0
      %v2473 = vadd.f32 0.0, %v2472
      %v2474 = vpop.f32.mrb[0].mxu0
      %2475 = vmatprep.mubr.bf16.mxu0 %v2180
      %2476 = vmatmul.mubr.bf16.gmra.mrb[0].mxu0 %v2179
      %v2477 = vpop.f32.mrb[0].mxu0
      %v2478 = vadd.f32 0.0, %v2477
      %v2479 = vpop.f32.mrb[0].mxu0
      %v2480 = vpop.f32.mrb[0].mxu0
      %v2481 = vadd.f32 0.0, %v2480
      %v2482 = vpop.f32.mrb[0].mxu0
      %2483 = vmatprep.mubr.bf16.mxu0 %v2183
      %2484 = vmatmul.mubr.bf16.gmra.mrb[0].mxu0 %v2182
      %v2485 = vpop.f32.mrb[0].mxu0
      %v2486 = vadd.f32 0.0, %v2485
      %v2487 = vpop.f32.mrb[0].mxu0
      %v2488 = vpop.f32.mrb[0].mxu0
      %v2489 = vadd.f32 0.0, %v2488
      %v2490 = vpop.f32.mrb[0].mxu0
      %2491 = vmatprep.mubr.bf16.mxu0 %v2186
      %2492 = vmatmul.mubr.bf16.gmra.mrb[0].mxu0 %v2185
      %v2493 = vpop.f32.mrb[0].mxu0
      %v2494 = vadd.f32 0.0, %v2493
      %v2495 = vpop.f32.mrb[0].mxu0
      %v2496 = vpop.f32.mrb[0].mxu0
      %v2497 = vadd.f32 0.0, %v2496
      %v2498 = vpop.f32.mrb[0].mxu0
      %2499 = vmatprep.mubr.bf16.mxu0 %v2189
      %2500 = vmatmul.mubr.bf16.gmra.mrb[0].mxu0 %v2188
      %v2501 = vpop.f32.mrb[0].mxu0
      %v2502 = vadd.f32 0.0, %v2501
      %v2503 = vpop.f32.mrb[0].mxu0
      %v2504 = vpop.f32.mrb[0].mxu0
      %v2505 = vadd.f32 0.0, %v2504
      %v2506 = vpop.f32.mrb[0].mxu0
      %2507 = vmatprep.mubr.bf16.mxu0 %v2192
      %2508 = vmatmul.mubr.bf16.gmra.mrb[0].mxu0 %v2191
      %v2509 = vpop.f32.mrb[0].mxu0
      %v2510 = vadd.f32 0.0, %v2509
      %v2511 = vpop.f32.mrb[0].mxu0
      %v2512 = vpop.f32.mrb[0].mxu0
      %v2513 = vadd.f32 0.0, %v2512
      %v2514 = vpop.f32.mrb[0].mxu0
      %2515 = vdwg.mxu0
      %2516 = vmatprep.subr.bf16.mxu0 0
      %2517 = vmatpush1.bf16.msra.mxu0 %v2355
      %2518 = vmatprep.subr.bf16.mxu0 0
      %2519 = vmatpush1.bf16.msra.mxu0 %v2356
      %2520 = vmatprep.subr.bf16.mxu0 0
      %2521 = vmatpush1.bf16.msra.mxu0 %v2357
      %2522 = vmatprep.subr.bf16.mxu0 0
      %2523 = vmatpush1.bf16.msra.mxu0 %v2358
      %2524 = vmatprep.subr.bf16.mxu0 0
      %2525 = vmatpush1.bf16.msra.mxu0 %v2359
      %2526 = vmatprep.subr.bf16.mxu0 0
      %2527 = vmatpush1.bf16.msra.mxu0 %v2360
      %2528 = vmatprep.subr.bf16.mxu0 0
      %2529 = vmatpush1.bf16.msra.mxu0 %v2361
      %2530 = vmatprep.subr.bf16.mxu0 0
      %2531 = vmatpush1.bf16.msra.mxu0 %v2362
      %2532 = vmatprep.subr.bf16.mxu0 0
      %2533 = vmatpush1.bf16.msra.mxu0 0
      %2534 = vmatprep.subr.bf16.mxu0 0
      %2535 = vmatpush1.bf16.msra.mxu0 0
      %2536 = vmatprep.subr.bf16.mxu0 0
      %2537 = vmatpush1.bf16.msra.mxu0 0
      %2538 = vmatprep.subr.bf16.mxu0 0
      %2539 = vmatpush1.bf16.msra.mxu0 0
      %2540 = vmatprep.subr.bf16.mxu0 0
      %2541 = vmatpush1.bf16.msra.mxu0 0
      %2542 = vmatprep.subr.bf16.mxu0 0
      %2543 = vmatpush1.bf16.msra.mxu0 0
      %2544 = vmatprep.subr.bf16.mxu0 0
      %2545 = vmatpush1.bf16.msra.mxu0 0
      %2546 = vmatprep.subr.bf16.mxu0 0
      %2547 = vmatpush1.bf16.msra.mxu0 0
      %2548 = vmatprep.mubr.bf16.mxu0 0
      %2549 = vmatmul.mubr.bf16.gmra.mrb[0].mxu0 %v2160
      %v2550 = vpop.f32.mrb[0].mxu0
      %v2551 = vadd.f32 %v2422, %v2550
      %v2552 = vpop.f32.mrb[0].mxu0
      %v2553 = vpop.f32.mrb[0].mxu0
      %v2554 = vadd.f32 %v2425, %v2553
      %v2555 = vpop.f32.mrb[0].mxu0
      %2556 = vmatprep.mubr.bf16.mxu0 0
      %2557 = vmatmul.mubr.bf16.gmra.mrb[0].mxu0 %v2163
      %v2558 = vpop.f32.mrb[0].mxu0
      %v2559 = vadd.f32 %v2430, %v2558
      %v2560 = vpop.f32.mrb[0].mxu0
      %v2561 = vpop.f32.mrb[0].mxu0
      %v2562 = vadd.f32 %v2433, %v2561
      %v2563 = vpop.f32.mrb[0].mxu0
      %2564 = vmatprep.mubr.bf16.mxu0 0
      %2565 = vmatmul.mubr.bf16.gmra.mrb[0].mxu0 %v2166
      %v2566 = vpop.f32.mrb[0].mxu0
      %v2567 = vadd.f32 %v2438, %v2566
      %v2568 = vpop.f32.mrb[0].mxu0
      %v2569 = vpop.f32.mrb[0].mxu0
      %v2570 = vadd.f32 %v2441, %v2569
      %v2571 = vpop.f32.mrb[0].mxu0
      %2572 = vmatprep.mubr.bf16.mxu0 0
      %2573 = vmatmul.mubr.bf16.gmra.mrb[0].mxu0 %v2169
      %v2574 = vpop.f32.mrb[0].mxu0
      %v2575 = vadd.f32 %v2446, %v2574
      %v2576 = vpop.f32.mrb[0].mxu0
      %v2577 = vpop.f32.mrb[0].mxu0
      %v2578 = vadd.f32 %v2449, %v2577
      %v2579 = vpop.f32.mrb[0].mxu0
      %2580 = vmatprep.mubr.bf16.mxu0 0
      %2581 = vmatmul.mubr.bf16.gmra.mrb[0].mxu0 %v2172
      %v2582 = vpop.f32.mrb[0].mxu0
      %v2583 = vadd.f32 %v2454, %v2582
      %v2584 = vpop.f32.mrb[0].mxu0
      %v2585 = vpop.f32.mrb[0].mxu0
      %v2586 = vadd.f32 %v2457, %v2585
      %v2587 = vpop.f32.mrb[0].mxu0
      %2588 = vmatprep.mubr.bf16.mxu0 0
      %2589 = vmatmul.mubr.bf16.gmra.mrb[0].mxu0 %v2175
      %v2590 = vpop.f32.mrb[0].mxu0
      %v2591 = vadd.f32 %v2462, %v2590
      %v2592 = vpop.f32.mrb[0].mxu0
      %v2593 = vpop.f32.mrb[0].mxu0
      %v2594 = vadd.f32 %v2465, %v2593
      %v2595 = vpop.f32.mrb[0].mxu0
      %2596 = vmatprep.mubr.bf16.mxu0 0
      %2597 = vmatmul.mubr.bf16.gmra.mrb[0].mxu0 %v2178
      %v2598 = vpop.f32.mrb[0].mxu0
      %v2599 = vadd.f32 %v2470, %v2598
      %v2600 = vpop.f32.mrb[0].mxu0
      %v2601 = vpop.f32.mrb[0].mxu0
      %v2602 = vadd.f32 %v2473, %v2601
      %v2603 = vpop.f32.mrb[0].mxu0
      %2604 = vmatprep.mubr.bf16.mxu0 0
      %2605 = vmatmul.mubr.bf16.gmra.mrb[0].mxu0 %v2181
      %v2606 = vpop.f32.mrb[0].mxu0
      %v2607 = vadd.f32 %v2478, %v2606
      %v2608 = vpop.f32.mrb[0].mxu0
      %v2609 = vpop.f32.mrb[0].mxu0
      %v2610 = vadd.f32 %v2481, %v2609
      %v2611 = vpop.f32.mrb[0].mxu0
      %2612 = vmatprep.mubr.bf16.mxu0 0
      %2613 = vmatmul.mubr.bf16.gmra.mrb[0].mxu0 %v2184
      %v2614 = vpop.f32.mrb[0].mxu0
      %v2615 = vadd.f32 %v2486, %v2614
      %v2616 = vpop.f32.mrb[0].mxu0
      %v2617 = vpop.f32.mrb[0].mxu0
      %v2618 = vadd.f32 %v2489, %v2617
      %v2619 = vpop.f32.mrb[0].mxu0
      %2620 = vmatprep.mubr.bf16.mxu0 0
      %2621 = vmatmul.mubr.bf16.gmra.mrb[0].mxu0 %v2187
      %v2622 = vpop.f32.mrb[0].mxu0
      %v2623 = vadd.f32 %v2494, %v2622
      %v2624 = vpop.f32.mrb[0].mxu0
      %v2625 = vpop.f32.mrb[0].mxu0
      %v2626 = vadd.f32 %v2497, %v2625
      %v2627 = vpop.f32.mrb[0].mxu0
      %2628 = vmatprep.mubr.bf16.mxu0 0
      %2629 = vmatmul.mubr.bf16.gmra.mrb[0].mxu0 %v2190
      %v2630 = vpop.f32.mrb[0].mxu0
      %v2631 = vadd.f32 %v2502, %v2630
      %v2632 = vpop.f32.mrb[0].mxu0
      %v2633 = vpop.f32.mrb[0].mxu0
      %v2634 = vadd.f32 %v2505, %v2633
      %v2635 = vpop.f32.mrb[0].mxu0
      %2636 = vmatprep.mubr.bf16.mxu0 0
      %2637 = vmatmul.mubr.bf16.gmra.mrb[0].mxu0 %v2193
      %v2638 = vpop.f32.mrb[0].mxu0
      %v2639 = vadd.f32 %v2510, %v2638
      %v2640 = vpop.f32.mrb[0].mxu0
      %v2641 = vpop.f32.mrb[0].mxu0
      %v2642 = vadd.f32 %v2513, %v2641
      %v2643 = vpop.f32.mrb[0].mxu0
      %2644 = vdwg.mxu0
      %v2645 = vadd.f32 %v2064, %v2551
      %v2646 = vadd.f32 %v2067, %v2554
      %v2647 = vadd.f32 %v2072, %v2559
      %v2648 = vadd.f32 %v2075, %v2562
      %v2649 = vadd.f32 %v2080, %v2567
      %v2650 = vadd.f32 %v2083, %v2570
      %v2651 = vadd.f32 %v2088, %v2575
      %v2652 = vadd.f32 %v2091, %v2578
      %v2653 = vadd.f32 %v2096, %v2583
      %v2654 = vadd.f32 %v2099, %v2586
      %v2655 = vadd.f32 %v2104, %v2591
      %v2656 = vadd.f32 %v2107, %v2594
      %v2657 = vadd.f32 %v2112, %v2599
      %v2658 = vadd.f32 %v2115, %v2602
      %v2659 = vadd.f32 %v2120, %v2607
      %v2660 = vadd.f32 %v2123, %v2610
      %v2661 = vadd.f32 %v2128, %v2615
      %v2662 = vadd.f32 %v2131, %v2618
      %v2663 = vadd.f32 %v2136, %v2623
      %v2664 = vadd.f32 %v2139, %v2626
      %v2665 = vadd.f32 %v2144, %v2631
      %v2666 = vadd.f32 %v2147, %v2634
      %v2667 = vadd.f32 %v2152, %v2639
      %v2668 = vadd.f32 %v2155, %v2642
      %v2669 = vlaneseq
      %v2670 = vand.u32 %v2669, 127
      %v2671 = vadd.s32 %v2670, 128
      %vm2672 = vcmp.lt.s32.totalorder %v2670, 0
      %v2673 = vsub.s32 0, %v2670
      %v2674 = vsel %vm2672, %v2673, %v2670
      %v2675 = vmul.u32.u64.compose %v2674, 2863311531
      %v2676 = vextract.low.u32 %v2675
      %v2677 = vextract.high.u32 %v2675
      %v2678 = vshrl.u32 %v2677, 4
      %v2679 = vmul.u32 %v2678, 24
      %v2680 = vsub.s32 %v2674, %v2679
      %v2681 = vsub.s32 0, %v2680
      %v2682 = vsel %vm2672, %v2681, %v2680
      %vm2683 = vcmp.lt.s32.totalorder %v2671, 0
      %v2684 = vsub.s32 0, %v2671
      %v2685 = vsel %vm2683, %v2684, %v2671
      %v2686 = vmul.u32.u64.compose %v2685, 2863311531
      %v2687 = vextract.low.u32 %v2686
      %v2688 = vextract.high.u32 %v2686
      %v2689 = vshrl.u32 %v2688, 4
      %v2690 = vmul.u32 %v2689, 24
      %v2691 = vsub.s32 %v2685, %v2690
      %v2692 = vsub.s32 0, %v2691
      %v2693 = vsel %vm2683, %v2692, %v2691
      %vm2694 = vcmp.ne.s32.totalorder %v2682, 0
      %vm2695 = vcmp.ne.s32.totalorder %v2693, 0
      %vm2696 = vcmp.lt.s32.totalorder %v2682, 0
      %vm2697 = vcmp.lt.s32.totalorder %v2693, 0
      %vm2698 = vmand %vm2696, %vm2694
      %vm2699 = vmand %vm2697, %vm2695
      %v2700 = vadd.s32 %v2682, 24
      %v2701 = vadd.s32 %v2693, 24
      %v2702 = vsel %vm2698, %v2700, %v2682
      %v2703 = vsel %vm2699, %v2701, %v2693
      %vm2704 = vcmp.lt.s32.totalorder %v2702, 16
      %vm2705 = vcmp.lt.s32.totalorder %v2703, 16
      %v2706 = vsel %vm2704, 1, 0
      %v2707 = vsel %vm2705, 1, 0
      %v2708 = vcvt.s32.f32 %v2706
      %v2709 = vcvt.s32.f32 %v2707
      %vm2710 = vcmask 523264
      %v2712 = vsel %vm2710, %v2709, 0
      %2714 = vmatprep.subr.mxu0 0.0
      %2715 = vmatpush1.msra.mxu0 %v2645
      %2716 = vmatprep.subr.mxu0 0.0
      %2717 = vmatpush1.msra.mxu0 %v2646
      %2718 = vmatprep.subr.mxu0 0.0
      %2719 = vmatpush1.msra.mxu0 %v2647
      %2720 = vmatprep.subr.mxu0 0.0
      %2721 = vmatpush1.msra.mxu0 %v2648
      %2722 = vmatprep.subr.mxu0 0.0
      %2723 = vmatpush1.msra.mxu0 %v2649
      %2724 = vmatprep.subr.mxu0 0.0
      %2725 = vmatpush1.msra.mxu0 %v2650
      %2726 = vmatprep.subr.mxu0 0.0
      %2727 = vmatpush1.msra.mxu0 %v2651
      %2728 = vmatprep.subr.mxu0 0.0
      %2729 = vmatpush1.msra.mxu0 %v2652
      %2730 = vmatprep.subr.mxu0 0.0
      %2731 = vmatpush1.msra.mxu0 %v2653
      %2732 = vmatprep.subr.mxu0 0.0
      %2733 = vmatpush1.msra.mxu0 %v2654
      %2734 = vmatprep.subr.mxu0 0.0
      %2735 = vmatpush1.msra.mxu0 %v2655
      %2736 = vmatprep.subr.mxu0 0.0
      %2737 = vmatpush1.msra.mxu0 %v2656
      %2738 = vmatprep.subr.mxu0 0.0
      %2739 = vmatpush1.msra.mxu0 %v2657
      %2740 = vmatprep.subr.mxu0 0.0
      %2741 = vmatpush1.msra.mxu0 %v2658
      %2742 = vmatprep.subr.mxu0 0.0
      %2743 = vmatpush1.msra.mxu0 %v2659
      %2744 = vmatprep.subr.mxu0 0.0
      %2745 = vmatpush1.msra.mxu0 %v2660
      %2746 = vmatprep.subr.mxu0 0.0
      %2747 = vmatpush1.msra.mxu0 %v2661
      %2748 = vmatprep.subr.mxu0 0.0
      %2749 = vmatpush1.msra.mxu0 %v2662
      %2750 = vmatprep.subr.mxu0 0.0
      %2751 = vmatpush1.msra.mxu0 %v2663
      %2752 = vmatprep.subr.mxu0 0.0
      %2753 = vmatpush1.msra.mxu0 %v2664
      %2754 = vmatprep.subr.mxu0 0.0
      %2755 = vmatpush1.msra.mxu0 %v2665
      %2756 = vmatprep.subr.mxu0 0.0
      %2757 = vmatpush1.msra.mxu0 %v2666
      %2758 = vmatprep.subr.mxu0 0.0
      %2759 = vmatpush1.msra.mxu0 %v2667
      %2760 = vmatprep.subr.mxu0 0.0
      %2761 = vmatpush1.msra.mxu0 %v2668
      %2762 = vmatprep.subr.mxu0 0.0
      %2763 = vmatpush1.msra.mxu0 0.0
      %2764 = vmatprep.subr.mxu0 0.0
      %2765 = vmatpush1.msra.mxu0 0.0
      %2766 = vmatprep.subr.mxu0 0.0
      %2767 = vmatpush1.msra.mxu0 0.0
      %2768 = vmatprep.subr.mxu0 0.0
      %2769 = vmatpush1.msra.mxu0 0.0
      %2770 = vmatprep.subr.mxu0 0.0
      %2771 = vmatpush1.msra.mxu0 0.0
      %2772 = vmatprep.subr.mxu0 0.0
      %2773 = vmatpush1.msra.mxu0 0.0
      %2774 = vmatprep.subr.mxu0 0.0
      %2775 = vmatpush1.msra.mxu0 0.0
      %2776 = vmatprep.subr.mxu0 0.0
      %2777 = vmatpush1.msra.mxu0 0.0
      %2778 = vmatprep.mubr.f32.mxu0 %v2712
      %2779 = vmatmul.mubr.f32.gmra.mrb[0].mxu0 %v2708
      %v2780 = vpop.f32.mrb[0].mxu0
      %v2781 = vadd.f32 0.0, %v2780
      %v2782 = vpop.f32.mrb[0].mxu0
      %2783 = vdwg.mxu0
      %v2784 = vmul.f32 %v2645, %v2645
      %v2785 = vmul.f32 %v2646, %v2646
      %v2786 = vmul.f32 %v2647, %v2647
      %v2787 = vmul.f32 %v2648, %v2648
      %v2788 = vmul.f32 %v2649, %v2649
      %v2789 = vmul.f32 %v2650, %v2650
      %v2790 = vmul.f32 %v2651, %v2651
      %v2791 = vmul.f32 %v2652, %v2652
      %v2792 = vmul.f32 %v2653, %v2653
      %v2793 = vmul.f32 %v2654, %v2654
      %v2794 = vmul.f32 %v2655, %v2655
      %v2795 = vmul.f32 %v2656, %v2656
      %v2796 = vmul.f32 %v2657, %v2657
      %v2797 = vmul.f32 %v2658, %v2658
      %v2798 = vmul.f32 %v2659, %v2659
      %v2799 = vmul.f32 %v2660, %v2660
      %v2800 = vmul.f32 %v2661, %v2661
      %v2801 = vmul.f32 %v2662, %v2662
      %v2802 = vmul.f32 %v2663, %v2663
      %v2803 = vmul.f32 %v2664, %v2664
      %v2804 = vmul.f32 %v2665, %v2665
      %v2805 = vmul.f32 %v2666, %v2666
      %v2806 = vmul.f32 %v2667, %v2667
      %v2807 = vmul.f32 %v2668, %v2668
      %2808 = vmatprep.subr.mxu0 0.0
      %2809 = vmatpush1.msra.mxu0 %v2784
      %2810 = vmatprep.subr.mxu0 0.0
      %2811 = vmatpush1.msra.mxu0 %v2785
      %2812 = vmatprep.subr.mxu0 0.0
      %2813 = vmatpush1.msra.mxu0 %v2786
      %2814 = vmatprep.subr.mxu0 0.0
      %2815 = vmatpush1.msra.mxu0 %v2787
      %2816 = vmatprep.subr.mxu0 0.0
      %2817 = vmatpush1.msra.mxu0 %v2788
      %2818 = vmatprep.subr.mxu0 0.0
      %2819 = vmatpush1.msra.mxu0 %v2789
      %2820 = vmatprep.subr.mxu0 0.0
      %2821 = vmatpush1.msra.mxu0 %v2790
      %2822 = vmatprep.subr.mxu0 0.0
      %2823 = vmatpush1.msra.mxu0 %v2791
      %2824 = vmatprep.subr.mxu0 0.0
      %2825 = vmatpush1.msra.mxu0 %v2792
      %2826 = vmatprep.subr.mxu0 0.0
      %2827 = vmatpush1.msra.mxu0 %v2793
      %2828 = vmatprep.subr.mxu0 0.0
      %2829 = vmatpush1.msra.mxu0 %v2794
      %2830 = vmatprep.subr.mxu0 0.0
      %2831 = vmatpush1.msra.mxu0 %v2795
      %2832 = vmatprep.subr.mxu0 0.0
      %2833 = vmatpush1.msra.mxu0 %v2796
      %2834 = vmatprep.subr.mxu0 0.0
      %2835 = vmatpush1.msra.mxu0 %v2797
      %2836 = vmatprep.subr.mxu0 0.0
      %2837 = vmatpush1.msra.mxu0 %v2798
      %2838 = vmatprep.subr.mxu0 0.0
      %2839 = vmatpush1.msra.mxu0 %v2799
      %2840 = vmatprep.subr.mxu0 0.0
      %2841 = vmatpush1.msra.mxu0 %v2800
      %2842 = vmatprep.subr.mxu0 0.0
      %2843 = vmatpush1.msra.mxu0 %v2801
      %2844 = vmatprep.subr.mxu0 0.0
      %2845 = vmatpush1.msra.mxu0 %v2802
      %2846 = vmatprep.subr.mxu0 0.0
      %2847 = vmatpush1.msra.mxu0 %v2803
      %2848 = vmatprep.subr.mxu0 0.0
      %2849 = vmatpush1.msra.mxu0 %v2804
      %2850 = vmatprep.subr.mxu0 0.0
      %2851 = vmatpush1.msra.mxu0 %v2805
      %2852 = vmatprep.subr.mxu0 0.0
      %2853 = vmatpush1.msra.mxu0 %v2806
      %2854 = vmatprep.subr.mxu0 0.0
      %2855 = vmatpush1.msra.mxu0 %v2807
      %2856 = vmatprep.subr.mxu0 0.0
      %2857 = vmatpush1.msra.mxu0 0.0
      %2858 = vmatprep.subr.mxu0 0.0
      %2859 = vmatpush1.msra.mxu0 0.0
      %2860 = vmatprep.subr.mxu0 0.0
      %2861 = vmatpush1.msra.mxu0 0.0
      %2862 = vmatprep.subr.mxu0 0.0
      %2863 = vmatpush1.msra.mxu0 0.0
      %2864 = vmatprep.subr.mxu0 0.0
      %2865 = vmatpush1.msra.mxu0 0.0
      %2866 = vmatprep.subr.mxu0 0.0
      %2867 = vmatpush1.msra.mxu0 0.0
      %2868 = vmatprep.subr.mxu0 0.0
      %2869 = vmatpush1.msra.mxu0 0.0
      %2870 = vmatprep.subr.mxu0 0.0
      %2871 = vmatpush1.msra.mxu0 0.0
      %2872 = vmatprep.mubr.f32.mxu0 %v2712
      %2873 = vmatmul.mubr.f32.gmra.mrb[0].mxu0 %v2708
      %v2874 = vpop.f32.mrb[0].mxu0
      %v2875 = vadd.f32 0.0, %v2874
      %v2876 = vpop.f32.mrb[0].mxu0
      %2877 = vdwg.mxu0
      // Predicated region
      $region53: #{conv_block_forward.3} parent=35 // pred_check
        %p2878 = pneg %p435
      $region54: #{conv_block_forward.3} parent=35 // pred_check_branch
        %2880 = sbr.rel (%p2878) target = $region56
      $region55: #{conv_block_forward.3} parent=35 // pred_region
        %2881 = vst [vmem:[%s402] sm:$0x3] 0.0
      $region56: #{conv_block_forward.3} parent=35 // pred_fallthru
        _
      %v2882 = vld [vmem:[%s402] sm:$0x3]
      %v2884 = vrot.slane %v2875, 7
      %vm2886 = vcmask 1040384
      %v2887 = vsel %vm2886, %v2781, %v2884
      %v2888 = vadd.f32 %v2882, %v2887
      %2889 = vst [vmem:[%s402] sm:$0x3] %v2888
      %v2890 = vpack.c.bf16 %v2646, %v2645
      %v2891 = vpack.c.bf16 %v2648, %v2647
      %v2892 = vpack.c.bf16 %v2650, %v2649
      %v2893 = vpack.c.bf16 %v2652, %v2651
      %v2894 = vpack.c.bf16 %v2654, %v2653
      %v2895 = vpack.c.bf16 %v2656, %v2655
      %v2896 = vpack.c.bf16 %v2658, %v2657
      %v2897 = vpack.c.bf16 %v2660, %v2659
      %v2898 = vpack.c.bf16 %v2662, %v2661
      %v2899 = vpack.c.bf16 %v2664, %v2663
      %v2900 = vpack.c.bf16 %v2666, %v2665
      %v2901 = vpack.c.bf16 %v2668, %v2667
      %v2914 = vunpack.c.l.b16 %v2890
      %v2915 = vunpack.c.h.b16 %v2890
      %v2916 = vunpack.c.l.b16 %v2891
      %v2917 = vunpack.c.h.b16 %v2891
      %v2918 = vunpack.c.l.b16 %v2892
      %v2919 = vunpack.c.h.b16 %v2892
      %v2920 = vunpack.c.l.b16 %v2893
      %v2921 = vunpack.c.h.b16 %v2893
      %v2922 = vunpack.c.l.b16 %v2894
      %v2923 = vunpack.c.h.b16 %v2894
      %v2924 = vunpack.c.l.b16 %v2895
      %v2925 = vunpack.c.h.b16 %v2895
      %v2926 = vunpack.c.l.b16 %v2896
      %v2927 = vunpack.c.h.b16 %v2896
      %v2928 = vunpack.c.l.b16 %v2897
      %v2929 = vunpack.c.h.b16 %v2897
      %v2930 = vunpack.c.l.b16 %v2898
      %v2931 = vunpack.c.h.b16 %v2898
      %v2932 = vunpack.c.l.b16 %v2899
      %v2933 = vunpack.c.h.b16 %v2899
      %v2934 = vunpack.c.l.b16 %v2900
      %v2935 = vunpack.c.h.b16 %v2900
      %v2936 = vunpack.c.l.b16 %v2901
      %v2937 = vunpack.c.h.b16 %v2901
      %v2938 = vpack.c.b16 %v2914, %v2914
      %v2939 = vpack.c.b16 %v2915, %v2915
      %v2940 = vpack.c.b16 %v2916, %v2916
      %v2941 = vpack.c.b16 %v2917, %v2917
      %v2942 = vpack.c.b16 %v2918, %v2918
      %v2943 = vpack.c.b16 %v2919, %v2919
      %v2944 = vpack.c.b16 %v2920, %v2920
      %v2945 = vpack.c.b16 %v2921, %v2921
      %v2946 = vpack.c.b16 %v2922, %v2922
      %v2947 = vpack.c.b16 %v2923, %v2923
      %v2948 = vpack.c.b16 %v2924, %v2924
      %v2949 = vpack.c.b16 %v2925, %v2925
      %v2950 = vpack.c.b16 %v2926, %v2926
      %v2951 = vpack.c.b16 %v2927, %v2927
      %v2952 = vpack.c.b16 %v2928, %v2928
      %v2953 = vpack.c.b16 %v2929, %v2929
      %v2954 = vpack.c.b16 %v2930, %v2930
      %v2955 = vpack.c.b16 %v2931, %v2931
      %v2956 = vpack.c.b16 %v2932, %v2932
      %v2957 = vpack.c.b16 %v2933, %v2933
      %v2958 = vpack.c.b16 %v2934, %v2934
      %v2959 = vpack.c.b16 %v2935, %v2935
      %v2960 = vpack.c.b16 %v2936, %v2936
      %v2961 = vpack.c.b16 %v2937, %v2937
      %2986 = vst [vmem:[%s397] sm:$0xf] %v2938
      %2987 = vst [vmem:[%s397 + $0x4] sm:$0xf] %v2939
      %2988 = vst [vmem:[%s397 + $0x8] sm:$0xf] %v2940
      %2989 = vst [vmem:[%s397 + $0xc] sm:$0xf] %v2941
      %2990 = vst [vmem:[%s397 + $0x10] sm:$0xf] %v2942
      %2991 = vst [vmem:[%s397 + $0x14] sm:$0xf] %v2943
      %2992 = vst [vmem:[%s397 + $0x18] sm:$0xf] %v2944
      %2993 = vst [vmem:[%s397 + $0x1c] sm:$0xf] %v2945
      %2994 = vst [vmem:[%s397 + $0x20] sm:$0xf] %v2946
      %2995 = vst [vmem:[%s397 + $0x24] sm:$0xf] %v2947
      %2996 = vst [vmem:[%s397 + $0x28] sm:$0xf] %v2948
      %2997 = vst [vmem:[%s397 + $0x2c] sm:$0xf] %v2949
      %2998 = vst [vmem:[%s397 + $0x30] sm:$0xf] %v2950
      %2999 = vst [vmem:[%s397 + $0x34] sm:$0xf] %v2951
      %3000 = vst [vmem:[%s397 + $0x38] sm:$0xf] %v2952
      %3001 = vst [vmem:[%s397 + $0x3c] sm:$0xf] %v2953
      %3002 = vst [vmem:[%s397 + $0x40] sm:$0xf] %v2954
      %3003 = vst [vmem:[%s397 + $0x44] sm:$0xf] %v2955
      %3004 = vst [vmem:[%s397 + $0x48] sm:$0xf] %v2956
      %3005 = vst [vmem:[%s397 + $0x4c] sm:$0xf] %v2957
      %3006 = vst [vmem:[%s397 + $0x50] sm:$0xf] %v2958
      %3007 = vst [vmem:[%s397 + $0x54] sm:$0xf] %v2959
      %3008 = vst [vmem:[%s397 + $0x58] sm:$0xf] %v2960
      %3009 = vst [vmem:[%s397 + $0x5c] sm:$0xf] %v2961
      %s3010 = smul.u32 24, %s22
      %p3011 = scmp.lt.s32.totalorder %s21, 1
      %s3012 = scalar_select %p3011, %s21, 1
      %p3013 = scmp.lt.s32.totalorder %s3010, 47
      %s3014 = scalar_select %p3013, %s3010, 47
      %s3015 = smul.addr %s3012, 48
      %s3016 = sadd.s32 %s3014, %s3015
      %s3017 = smul.addr %s3016, 4
      %s3018 = scalar_lea.vmem %s4, %s3017
      %p3019 = scmp.lt.s32.totalorder %s21, 1
      %s3020 = scalar_select %p3019, %s21, 1
      %s3021 = smul.addr %s3020, 2
      %s3022 = scalar_lea.vmem %s5, %s3021
      // Predicated region
      $region57: #{conv_block_forward.3} parent=35 // pred_check
        %p3023 = pneg %p170
      $region58: #{conv_block_forward.3} parent=35 // pred_check_branch
        %3025 = sbr.rel (%p3023) target = $region60
      $region59: #{conv_block_forward.3} parent=35 // pred_region
        %s3026 = smul.u32 24, %s22
      $region60: #{conv_block_forward.3} parent=35 // pred_fallthru
        _
      // Predicated region
      $region61: #{conv_block_forward.3} parent=35 // pred_check
        %p3027 = pneg %p196
      $region62: #{conv_block_forward.3} parent=35 // pred_check_branch
        %3029 = sbr.rel (%p3027) target = $region64
      $region63: #{conv_block_forward.3} parent=35 // pred_region
        _
      $region64: #{conv_block_forward.3} parent=35 // pred_fallthru
        _
    $region36: #{conv_block_forward.3} parent=5 // pred_fallthru
      _
    %p3030 = scmp.le.s32.totalorder 2, %s12
    // Predicated region
    $region65: #{conv_block_forward.3} parent=5 // pred_check
      %p3031 = pneg %p3030
    $region66: #{conv_block_forward.3} parent=5 // pred_check_branch
      %3033 = sbr.rel (%p3031) target = $region68
    $region67: #{conv_block_forward.3} parent=5 // pred_region
      %s3034 = ssub.s32 %s12, 2
      // Predicated region
      $region69: #{conv_block_forward.3} parent=67 // pred_check
        %p3035 = pneg %p176
      $region70: #{conv_block_forward.3} parent=67 // pred_check_branch
        %3037 = sbr.rel (%p3035) target = $region72
      $region71: #{conv_block_forward.3} parent=67 // pred_region
        %s3038 = smul.u32 24, %s24
        %p3039 = scmp.lt.s32.totalorder %s23, 1
        %s3040 = scalar_select %p3039, %s23, 1
        %p3041 = scmp.lt.s32.totalorder %s3038, 47
        %s3042 = scalar_select %p3041, %s3038, 47
        %s3043 = smul.addr %s3040, 48
        %s3044 = sadd.s32 %s3042, %s3043
        %s3045 = smul.addr %s3044, 4
        %s3046 = scalar_lea.vmem %s4, %s3045
      $region72: #{conv_block_forward.3} parent=67 // pred_fallthru
        _
      // Predicated region
      $region73: #{conv_block_forward.3} parent=67 // pred_check
        %p3047 = pneg %p202
      $region74: #{conv_block_forward.3} parent=67 // pred_check_branch
        %3049 = sbr.rel (%p3047) target = $region76
      $region75: #{conv_block_forward.3} parent=67 // pred_region
        %p3050 = scmp.lt.s32.totalorder %s23, 1
        %s3051 = scalar_select %p3050, %s23, 1
        %s3052 = smul.addr %s3051, 2
        %s3053 = scalar_lea.vmem %s5, %s3052
      $region76: #{conv_block_forward.3} parent=67 // pred_fallthru
        _
    $region68: #{conv_block_forward.3} parent=5 // pred_fallthru
      _
  $region6: #{conv_block_forward.3} parent=0 // loop_footer
    %s16 = sadd.s32 1, %s12
  $region7: #{conv_block_forward.3} parent=0 // loop_footer_branch
    %11 = sbr.rel target = $region3
  $region8: #{conv_block_forward.3} parent=0 // loop_exit
    _

// kernel: conv_block_forward.4
$region0: #{conv_block_forward.4}
  #allocation0 [shape = 'u32[]', space=smem, size = 0x4, offset = 0x4, fixed_abs, tag = 'smem constant byte address 0x4 - core index']
  #allocation1 [shape = 'u32[144,128]{1,0:T(1,128)}', space=vmem, size = 0x12000, scoped, tag = 'internal scratch']
  #allocation2 [shape = 'bf16[288,128]{1,0:T(16,128)(2,1)}', space=vmem, size = 0x12000, scoped, tag = 'scratch operand']
  #allocation3 [shape = 'bf16[240,384]{1,0:T(16,128)(2,1)}', space=vmem, size = 0x2d000, scoped, tag = 'scratch operand']
  %s0 = inlined_call_operand.vmem [shape: bf16[2,384,128], index: 0, kind: input, shape index: {}, may-alias: {0,1,2}]
  %s1 = inlined_call_operand.vmem [shape: bf16[2,384,128], index: 1, kind: input, shape index: {}, may-alias: {0,1,2}]
  %s2 = inlined_call_operand.vmem [shape: bf16[2,384,128], index: 2, kind: input, shape index: {}, may-alias: {0,1,2}]
  %s3 = inlined_call_operand.vmem [shape: f32[1,128], index: 3, kind: input, shape index: {}]
  %s4 = inlined_call_operand.vmem [shape: f32[1,128], index: 4, kind: input, shape index: {}]
  %s5 = inlined_call_operand.vmem [shape: bf16[3,384,128], index: 5, kind: input, shape index: {}]
  %s6 = inlined_call_operand.vmem [shape: bf16[2,384,128], index: 6, kind: output, shape index: {0}]
  %s7 = inlined_call_operand.vmem [shape: f32[2,2,128], index: 7, kind: output, shape index: {1}]
  %8 = xla_tuple %s6, %s7
  %s9 = sld [smem:[#allocation0]]
  $region85: #{conv_block_forward.4} parent=0
    _
  %s11 = ssub.s32 1, %s9
  %s12 = scalar_select 0, %s11, %s9
  loop: start=0, step=1, limit=6
  $region2: #{conv_block_forward.4} parent=0 // loop_pre_header
    _
  $region3: #{conv_block_forward.4} parent=0 // loop_header
    %s14 = sphi 0, %s18
    %p15 = scmp.ge.s32.totalorder %s14, 6
    %s21 = sphi 0, %s33
    %s22 = sphi 0, %s29
    %s23 = sphi 0, %s21
    %s24 = sphi 0, %s22
    %s25 = sphi 0, %s23
    %s26 = sphi 0, %s24
    %s46 = sphi 0, %s48
    %s49 = sphi 0, %s46
    %s50 = sphi 0, %s49
    %s66 = sphi 0, %s50
    %s74 = sphi 0, %s76
    %s77 = sphi 0, %s74
    %s78 = sphi 0, %s77
    %s94 = sphi 0, %s78
    %s110 = sphi 0, %s112
    %s113 = sphi 0, %s110
    %s114 = sphi 0, %s113
    %s130 = sphi 0, %s114
    %s134 = sphi 0, %s134
    %s136 = sphi 0, %s134
    %s137 = sphi 0, %s136
    %s151 = sphi 0, %s137
    %s155 = sphi 0, %s155
    %s157 = sphi 0, %s155
    %s158 = sphi 0, %s157
    %s172 = sphi 0, %s158
    %s176 = sphi 0, %s176
    %s178 = sphi 0, %s176
    %s179 = sphi 0, %s178
    %s193 = sphi 0, %s179
    %s201 = sphi 0, %s203
    %s204 = sphi 0, %s201
    %s205 = sphi 0, %s204
    %s221 = sphi 0, %s205
    %s227 = sphi 0, %s229
    %s230 = sphi 0, %s227
    %s231 = sphi 0, %s230
    %s247 = sphi 0, %s231
  $region4: #{conv_block_forward.4} parent=0 // loop_header_branch
    %17 = sbr.rel (%p15) target = $region8
  $region5: #{conv_block_forward.4} parent=0 // loop_body
    %s19 = ssub.s32 %s14, 1
    %s20 = ssub.s32 %s14, 2
    %s27 = sadd.s32 1, %s22
    %p28 = scmp.ge.s32.totalorder %s27, 2
    %s29 = scalar_select %p28, 0, %s27
    %s30 = sadd.s32 1, %s21
    %s31 = scalar_select %p28, %s30, %s21
    %p32 = scmp.ge.s32.totalorder %s31, 2
    %s33 = scalar_select %p32, 0, %s31
    %s34 = smul.u32 %s22, 4
    %s35 = ssub.s32 %s34, 1
    %p36 = scmp.gt.s32.totalorder %s35, 0
    %s37 = scalar_select %p36, %s35, 0
    %s38 = smul.u32 %s29, 4
    %s39 = ssub.s32 %s38, 1
    %p40 = scmp.gt.s32.totalorder %s39, 0
    %s41 = scalar_select %p40, %s39, 0
    %s42 = ssub.s32 %s21, %s33
    %s43 = ssub.s32 %s37, %s41
    %s44 = sor.u32 %s42, %s43
    %p45 = scmp.eq.s32.totalorder %s44, 0
    %s47 = sadd.s32 %s46, 1
    %s48 = scalar_select %p45, %s46, %s47
    %p51 = pneg %p45
    %p52 = scmp.eq.s32.totalorder %s14, 3
    %p53 = por %p51, %p52
    %p54 = scmp.ne.s32.totalorder %s46, %s49
    %p55 = scmp.eq.s32.totalorder %s14, 0
    %p56 = por %p54, %p55
    %p57 = scmp.ne.s32.totalorder %s46, %s49
    %p58 = scmp.eq.s32.totalorder %s19, 3
    %p59 = por %p57, %p58
    %p60 = scmp.ne.s32.totalorder %s49, %s50
    %p61 = scmp.eq.s32.totalorder %s19, 0
    %p62 = por %p60, %p61
    %p63 = scmp.ne.s32.totalorder %s49, %s50
    %p64 = scmp.eq.s32.totalorder %s20, 3
    %p65 = por %p63, %p64
    %p67 = scmp.ne.s32.totalorder %s50, %s66
    %p68 = scmp.eq.s32.totalorder %s20, 0
    %p69 = por %p67, %p68
    %s70 = ssub.s32 %s21, %s33
    %s71 = ssub.s32 %s22, %s29
    %s72 = sor.u32 %s70, %s71
    %p73 = scmp.eq.s32.totalorder %s72, 0
    %s75 = sadd.s32 %s74, 1
    %s76 = scalar_select %p73, %s74, %s75
    %p79 = pneg %p73
    %p80 = scmp.eq.s32.totalorder %s14, 3
    %p81 = por %p79, %p80
    %p82 = scmp.ne.s32.totalorder %s74, %s77
    %p83 = scmp.eq.s32.totalorder %s14, 0
    %p84 = por %p82, %p83
    %p85 = scmp.ne.s32.totalorder %s74, %s77
    %p86 = scmp.eq.s32.totalorder %s19, 3
    %p87 = por %p85, %p86
    %p88 = scmp.ne.s32.totalorder %s77, %s78
    %p89 = scmp.eq.s32.totalorder %s19, 0
    %p90 = por %p88, %p89
    %p91 = scmp.ne.s32.totalorder %s77, %s78
    %p92 = scmp.eq.s32.totalorder %s20, 3
    %p93 = por %p91, %p92
    %p95 = scmp.ne.s32.totalorder %s78, %s94
    %p96 = scmp.eq.s32.totalorder %s20, 0
    %p97 = por %p95, %p96
    %s98 = sadd.s32 %s22, 1
    %s99 = smul.u32 %s98, 4
    %p100 = scmp.lt.s32.totalorder %s99, 7
    %s101 = scalar_select %p100, %s99, 7
    %s102 = sadd.s32 %s29, 1
    %s103 = smul.u32 %s102, 4
    %p104 = scmp.lt.s32.totalorder %s103, 7
    %s105 = scalar_select %p104, %s103, 7
    %s106 = ssub.s32 %s21, %s33
    %s107 = ssub.s32 %s101, %s105
    %s108 = sor.u32 %s106, %s107
    %p109 = scmp.eq.s32.totalorder %s108, 0
    %s111 = sadd.s32 %s110, 1
    %s112 = scalar_select %p109, %s110, %s111
    %p115 = pneg %p109
    %p116 = scmp.eq.s32.totalorder %s14, 3
    %p117 = por %p115, %p116
    %p118 = scmp.ne.s32.totalorder %s110, %s113
    %p119 = scmp.eq.s32.totalorder %s14, 0
    %p120 = por %p118, %p119
    %p121 = scmp.ne.s32.totalorder %s110, %s113
    %p122 = scmp.eq.s32.totalorder %s19, 3
    %p123 = por %p121, %p122
    %p124 = scmp.ne.s32.totalorder %s113, %s114
    %p125 = scmp.eq.s32.totalorder %s19, 0
    %p126 = por %p124, %p125
    %p127 = scmp.ne.s32.totalorder %s113, %s114
    %p128 = scmp.eq.s32.totalorder %s20, 3
    %p129 = por %p127, %p128
    %p131 = scmp.ne.s32.totalorder %s114, %s130
    %p132 = scmp.eq.s32.totalorder %s20, 0
    %p133 = por %p131, %p132
    %s135 = sadd.s32 %s134, 1
    %p138 = scmp.eq.s32.totalorder %s14, 3
    %p139 = scmp.ne.s32.totalorder %s134, %s136
    %p140 = scmp.eq.s32.totalorder %s14, 0
    %p141 = por %p139, %p140
    %p142 = scmp.ne.s32.totalorder %s134, %s136
    %p143 = scmp.eq.s32.totalorder %s19, 3
    %p144 = por %p142, %p143
    %p145 = scmp.ne.s32.totalorder %s136, %s137
    %p146 = scmp.eq.s32.totalorder %s19, 0
    %p147 = por %p145, %p146
    %p148 = scmp.ne.s32.totalorder %s136, %s137
    %p149 = scmp.eq.s32.totalorder %s20, 3
    %p150 = por %p148, %p149
    %p152 = scmp.ne.s32.totalorder %s137, %s151
    %p153 = scmp.eq.s32.totalorder %s20, 0
    %p154 = por %p152, %p153
    %s156 = sadd.s32 %s155, 1
    %p159 = scmp.eq.s32.totalorder %s14, 3
    %p160 = scmp.ne.s32.totalorder %s155, %s157
    %p161 = scmp.eq.s32.totalorder %s14, 0
    %p162 = por %p160, %p161
    %p163 = scmp.ne.s32.totalorder %s155, %s157
    %p164 = scmp.eq.s32.totalorder %s19, 3
    %p165 = por %p163, %p164
    %p166 = scmp.ne.s32.totalorder %s157, %s158
    %p167 = scmp.eq.s32.totalorder %s19, 0
    %p168 = por %p166, %p167
    %p169 = scmp.ne.s32.totalorder %s157, %s158
    %p170 = scmp.eq.s32.totalorder %s20, 3
    %p171 = por %p169, %p170
    %p173 = scmp.ne.s32.totalorder %s158, %s172
    %p174 = scmp.eq.s32.totalorder %s20, 0
    %p175 = por %p173, %p174
    %s177 = sadd.s32 %s176, 1
    %p180 = scmp.eq.s32.totalorder %s14, 3
    %p181 = scmp.ne.s32.totalorder %s176, %s178
    %p182 = scmp.eq.s32.totalorder %s14, 0
    %p183 = por %p181, %p182
    %p184 = scmp.ne.s32.totalorder %s176, %s178
    %p185 = scmp.eq.s32.totalorder %s19, 3
    %p186 = por %p184, %p185
    %p187 = scmp.ne.s32.totalorder %s178, %s179
    %p188 = scmp.eq.s32.totalorder %s19, 0
    %p189 = por %p187, %p188
    %p190 = scmp.ne.s32.totalorder %s178, %s179
    %p191 = scmp.eq.s32.totalorder %s20, 3
    %p192 = por %p190, %p191
    %p194 = scmp.ne.s32.totalorder %s179, %s193
    %p195 = scmp.eq.s32.totalorder %s20, 0
    %p196 = por %p194, %p195
    %s197 = ssub.s32 %s21, %s33
    %s198 = ssub.s32 %s22, %s29
    %s199 = sor.u32 %s197, %s198
    %p200 = scmp.eq.s32.totalorder %s199, 0
    %s202 = sadd.s32 %s201, 1
    %s203 = scalar_select %p200, %s201, %s202
    %p206 = pneg %p200
    %p207 = scmp.eq.s32.totalorder %s14, 3
    %p208 = por %p206, %p207
    %p209 = scmp.ne.s32.totalorder %s201, %s204
    %p210 = scmp.eq.s32.totalorder %s14, 0
    %p211 = por %p209, %p210
    %p212 = scmp.ne.s32.totalorder %s201, %s204
    %p213 = scmp.eq.s32.totalorder %s19, 3
    %p214 = por %p212, %p213
    %p215 = scmp.ne.s32.totalorder %s204, %s205
    %p216 = scmp.eq.s32.totalorder %s19, 0
    %p217 = por %p215, %p216
    %p218 = scmp.ne.s32.totalorder %s204, %s205
    %p219 = scmp.eq.s32.totalorder %s20, 3
    %p220 = por %p218, %p219
    %p222 = scmp.ne.s32.totalorder %s205, %s221
    %p223 = scmp.eq.s32.totalorder %s20, 0
    %p224 = por %p222, %p223
    %s225 = ssub.s32 %s21, %s33
    %p226 = scmp.eq.s32.totalorder %s225, 0
    %s228 = sadd.s32 %s227, 1
    %s229 = scalar_select %p226, %s227, %s228
    %p232 = pneg %p226
    %p233 = scmp.eq.s32.totalorder %s14, 3
    %p234 = por %p232, %p233
    %p235 = scmp.ne.s32.totalorder %s227, %s230
    %p236 = scmp.eq.s32.totalorder %s14, 0
    %p237 = por %p235, %p236
    %p238 = scmp.ne.s32.totalorder %s227, %s230
    %p239 = scmp.eq.s32.totalorder %s19, 3
    %p240 = por %p238, %p239
    %p241 = scmp.ne.s32.totalorder %s230, %s231
    %p242 = scmp.eq.s32.totalorder %s19, 0
    %p243 = por %p241, %p242
    %p244 = scmp.ne.s32.totalorder %s230, %s231
    %p245 = scmp.eq.s32.totalorder %s20, 3
    %p246 = por %p244, %p245
    %p248 = scmp.ne.s32.totalorder %s231, %s247
    %p249 = scmp.eq.s32.totalorder %s20, 0
    %p250 = por %p248, %p249
    %p251 = scmp.le.s32.totalorder 1, %s14
    %p252 = scmp.lt.s32.totalorder %s14, 5
    %p253 = pnand %p251, %p252
    %p254 = pneg %p253
    // Predicated region
    $region9: #{conv_block_forward.4} parent=5 // pred_check
      _
    $region10: #{conv_block_forward.4} parent=5 // pred_check_branch
      %256 = sbr.rel (%p253) target = $region12
    $region11: #{conv_block_forward.4} parent=5 // pred_region
      %s257 = ssub.s32 %s14, 1
      // Predicated region
      $region13: #{conv_block_forward.4} parent=11 // pred_check
        %p258 = pneg %p147
      $region14: #{conv_block_forward.4} parent=11 // pred_check_branch
        %260 = sbr.rel (%p258) target = $region16
      $region15: #{conv_block_forward.4} parent=11 // pred_region
        _
      $region16: #{conv_block_forward.4} parent=11 // pred_fallthru
        _
      // Predicated region
      $region17: #{conv_block_forward.4} parent=11 // pred_check
        %p261 = pneg %p168
      $region18: #{conv_block_forward.4} parent=11 // pred_check_branch
        %263 = sbr.rel (%p261) target = $region20
      $region19: #{conv_block_forward.4} parent=11 // pred_region
        _
      $region20: #{conv_block_forward.4} parent=11 // pred_fallthru
        _
      // Predicated region
      $region21: #{conv_block_forward.4} parent=11 // pred_check
        %p264 = pneg %p189
      $region22: #{conv_block_forward.4} parent=11 // pred_check_branch
        %266 = sbr.rel (%p264) target = $region24
      $region23: #{conv_block_forward.4} parent=11 // pred_region
        _
      $region24: #{conv_block_forward.4} parent=11 // pred_fallthru
        _
    $region12: #{conv_block_forward.4} parent=5 // pred_fallthru
      _
    %p267 = scmp.lt.s32.totalorder %s14, 4
    // Predicated region
    $region25: #{conv_block_forward.4} parent=5 // pred_check
      %p268 = pneg %p267
    $region26: #{conv_block_forward.4} parent=5 // pred_check_branch
      %270 = sbr.rel (%p268) target = $region28
    $region27: #{conv_block_forward.4} parent=5 // pred_region
      // Predicated region
      $region29: #{conv_block_forward.4} parent=27 // pred_check
        %p271 = pneg %p56
      $region30: #{conv_block_forward.4} parent=27 // pred_check_branch
        %273 = sbr.rel (%p271) target = $region32
      $region31: #{conv_block_forward.4} parent=27 // pred_region
        %s274 = smul.u32 %s22, 4
        %s275 = ssub.s32 %s274, 1
        %p276 = scmp.gt.s32.totalorder %s275, 0
        %s277 = scalar_select %p276, %s275, 0
        %s278 = smul.u32 6, %s277
        %p279 = scmp.lt.s32.totalorder %s21, 1
        %s280 = scalar_select %p279, %s21, 1
        %p281 = scmp.lt.s32.totalorder %s278, 47
        %s282 = scalar_select %p281, %s278, 47
        %s283 = smul.addr %s280, 48
        %s284 = sadd.s32 %s282, %s283
        %s285 = smul.addr %s284, 4
        %s286 = scalar_lea.vmem %s0, %s285
        %s287 = smul.u32 %s22, 4
        %s288 = ssub.s32 %s287, 1
        %p289 = scmp.gt.s32.totalorder %s288, 0
        %s290 = scalar_select %p289, %s288, 0
        %s291 = smul.u32 6, %s290
      $region32: #{conv_block_forward.4} parent=27 // pred_fallthru
        _
      // Predicated region
      $region33: #{conv_block_forward.4} parent=27 // pred_check
        %p292 = pneg %p84
      $region34: #{conv_block_forward.4} parent=27 // pred_check_branch
        %294 = sbr.rel (%p292) target = $region36
      $region35: #{conv_block_forward.4} parent=27 // pred_region
        %s295 = smul.u32 24, %s22
        %p296 = scmp.lt.s32.totalorder %s21, 1
        %s297 = scalar_select %p296, %s21, 1
        %p298 = scmp.lt.s32.totalorder %s295, 47
        %s299 = scalar_select %p298, %s295, 47
        %s300 = smul.addr %s297, 48
        %s301 = sadd.s32 %s299, %s300
        %s302 = smul.addr %s301, 4
        %s303 = scalar_lea.vmem %s1, %s302
        %s304 = smul.u32 24, %s22
      $region36: #{conv_block_forward.4} parent=27 // pred_fallthru
        _
      // Predicated region
      $region37: #{conv_block_forward.4} parent=27 // pred_check
        %p305 = pneg %p120
      $region38: #{conv_block_forward.4} parent=27 // pred_check_branch
        %307 = sbr.rel (%p305) target = $region40
      $region39: #{conv_block_forward.4} parent=27 // pred_region
        %s308 = sadd.s32 %s22, 1
        %s309 = smul.u32 %s308, 4
        %p310 = scmp.lt.s32.totalorder %s309, 7
        %s311 = scalar_select %p310, %s309, 7
        %s312 = smul.u32 6, %s311
        %p313 = scmp.lt.s32.totalorder %s21, 1
        %s314 = scalar_select %p313, %s21, 1
        %p315 = scmp.lt.s32.totalorder %s312, 47
        %s316 = scalar_select %p315, %s312, 47
        %s317 = smul.addr %s314, 48
        %s318 = sadd.s32 %s316, %s317
        %s319 = smul.addr %s318, 4
        %s320 = scalar_lea.vmem %s2, %s319
        %s321 = sadd.s32 %s22, 1
        %s322 = smul.u32 %s321, 4
        %p323 = scmp.lt.s32.totalorder %s322, 7
        %s324 = scalar_select %p323, %s322, 7
        %s325 = smul.u32 6, %s324
      $region40: #{conv_block_forward.4} parent=27 // pred_fallthru
        _
    $region28: #{conv_block_forward.4} parent=5 // pred_fallthru
      _
    %p326 = scmp.le.s32.totalorder 1, %s14
    %p327 = scmp.lt.s32.totalorder %s14, 5
    %p328 = pnand %p326, %p327
    %p329 = pneg %p328
    // Predicated region
    $region41: #{conv_block_forward.4} parent=5 // pred_check
      _
    $region42: #{conv_block_forward.4} parent=5 // pred_check_branch
      %331 = sbr.rel (%p328) target = $region44
    $region43: #{conv_block_forward.4} parent=5 // pred_region
      %s332 = ssub.s32 %s14, 1
      %s333 = smul.u32 %s24, 4
      %s334 = ssub.s32 %s333, 1
      %p335 = scmp.gt.s32.totalorder %s334, 0
      %s336 = scalar_select %p335, %s334, 0
      %s337 = smul.u32 6, %s336
      %p338 = scmp.lt.s32.totalorder %s23, 1
      %s339 = scalar_select %p338, %s23, 1
      %p340 = scmp.lt.s32.totalorder %s337, 47
      %s341 = scalar_select %p340, %s337, 47
      %s342 = smul.addr %s339, 48
      %s343 = sadd.s32 %s341, %s342
      %s344 = smul.addr %s343, 4
      %s345 = scalar_lea.vmem %s0, %s344
      %p346 = pneg %p62
      %p347 = pneg %p59
      %s348 = smul.u32 24, %s24
      %p349 = scmp.lt.s32.totalorder %s23, 1
      %s350 = scalar_select %p349, %s23, 1
      %p351 = scmp.lt.s32.totalorder %s348, 47
      %s352 = scalar_select %p351, %s348, 47
      %s353 = smul.addr %s350, 48
      %s354 = sadd.s32 %s352, %s353
      %s355 = smul.addr %s354, 4
      %s356 = scalar_lea.vmem %s1, %s355
      %p357 = pneg %p90
      %p358 = pneg %p87
      %s359 = sadd.s32 %s24, 1
      %s360 = smul.u32 %s359, 4
      %p361 = scmp.lt.s32.totalorder %s360, 7
      %s362 = scalar_select %p361, %s360, 7
      %s363 = smul.u32 6, %s362
      %p364 = scmp.lt.s32.totalorder %s23, 1
      %s365 = scalar_select %p364, %s23, 1
      %p366 = scmp.lt.s32.totalorder %s363, 47
      %s367 = scalar_select %p366, %s363, 47
      %s368 = smul.addr %s365, 48
      %s369 = sadd.s32 %s367, %s368
      %s370 = smul.addr %s369, 4
      %s371 = scalar_lea.vmem %s2, %s370
      %p372 = pneg %p126
      %p373 = pneg %p123
      %p374 = pneg %p147
      %p375 = pneg %p144
      %p376 = pneg %p168
      %p377 = pneg %p165
      %p378 = pneg %p189
      %p379 = pneg %p186
      %p380 = pneg %p217
      %p381 = pneg %p214
      %s382 = smul.u32 24, %s24
      %p383 = scmp.lt.s32.totalorder %s23, 1
      %s384 = scalar_select %p383, %s23, 1
      %p385 = scmp.lt.s32.totalorder %s382, 47
      %s386 = scalar_select %p385, %s382, 47
      %s387 = smul.addr %s384, 48
      %s388 = sadd.s32 %s386, %s387
      %s389 = smul.addr %s388, 4
      %s390 = scalar_lea.vmem %s6, %s389
      %p391 = pneg %p243
      %p392 = pneg %p240
      %p393 = scmp.lt.s32.totalorder %s23, 1
      %s394 = scalar_select %p393, %s23, 1
      %s395 = smul.addr %s394, 2
      %s396 = scalar_lea.vmem %s7, %s395
      %s397 = smul.u32 %s24, 4
      %s398 = ssub.s32 %s397, 1
      %p399 = scmp.gt.s32.totalorder %s398, 0
      %s400 = scalar_select %p399, %s398, 0
      %s401 = smul.u32 6, %s400
      %p402 = scmp.lt.s32.totalorder %s23, 1
      %s403 = scalar_select %p402, %s23, 1
      %p404 = scmp.lt.s32.totalorder %s401, 47
      %s405 = scalar_select %p404, %s401, 47
      %s406 = smul.addr %s403, 48
      %s407 = sadd.s32 %s405, %s406
      %s408 = smul.addr %s407, 4
      %s409 = scalar_lea.vmem %s0, %s408
      %s410 = smul.u32 %s24, 4
      %s411 = ssub.s32 %s410, 1
      %p412 = scmp.gt.s32.totalorder %s411, 0
      %s413 = scalar_select %p412, %s411, 0
      %s414 = smul.u32 6, %s413
      %s415 = smul.u32 24, %s24
      %p416 = scmp.lt.s32.totalorder %s23, 1
      %s417 = scalar_select %p416, %s23, 1
      %p418 = scmp.lt.s32.totalorder %s415, 47
      %s419 = scalar_select %p418, %s415, 47
      %s420 = smul.addr %s417, 48
      %s421 = sadd.s32 %s419, %s420
      %s422 = smul.addr %s421, 4
      %s423 = scalar_lea.vmem %s1, %s422
      %s424 = smul.u32 24, %s24
      %s425 = sadd.s32 %s24, 1
      %s426 = smul.u32 %s425, 4
      %p427 = scmp.lt.s32.totalorder %s426, 7
      %s428 = scalar_select %p427, %s426, 7
      %s429 = smul.u32 6, %s428
      %p430 = scmp.lt.s32.totalorder %s23, 1
      %s431 = scalar_select %p430, %s23, 1
      %p432 = scmp.lt.s32.totalorder %s429, 47
      %s433 = scalar_select %p432, %s429, 47
      %s434 = smul.addr %s431, 48
      %s435 = sadd.s32 %s433, %s434
      %s436 = smul.addr %s435, 4
      %s437 = scalar_lea.vmem %s2, %s436
      %s438 = sadd.s32 %s24, 1
      %s439 = smul.u32 %s438, 4
      %p440 = scmp.lt.s32.totalorder %s439, 7
      %s441 = scalar_select %p440, %s439, 7
      %s442 = smul.u32 6, %s441
      %s443 = smul.u32 24, %s24
      %p444 = scmp.lt.s32.totalorder %s23, 1
      %s445 = scalar_select %p444, %s23, 1
      %p446 = scmp.lt.s32.totalorder %s443, 47
      %s447 = scalar_select %p446, %s443, 47
      %s448 = smul.addr %s445, 48
      %s449 = sadd.s32 %s447, %s448
      %s450 = smul.addr %s449, 4
      %s451 = scalar_lea.vmem %s6, %s450
      %s452 = smul.u32 24, %s24
      %p453 = scmp.lt.s32.totalorder %s23, 1
      %s454 = scalar_select %p453, %s23, 1
      %s455 = smul.addr %s454, 2
      %s456 = scalar_lea.vmem %s7, %s455
      %v458 = vlaneseq
      %v459 = vshrl.u32 %v458, 7
      %v460 = vadd.s32 %v459, 8
      %v461 = vadd.s32 %v459, 16
      %v462 = vadd.s32 %v459, 24
      %v463 = vadd.s32 %v459, 32
      %v464 = vadd.s32 %v459, 40
      %v465 = vadd.s32 %v459, 48
      %v466 = vadd.s32 %v459, 56
      %v467 = vadd.s32 %v459, 64
      %v468 = vadd.s32 %v459, 72
      %v469 = vadd.s32 %v459, 80
      %v470 = vadd.s32 %v459, 88
      %v471 = vadd.s32 %v459, 96
      %v472 = vadd.s32 %v459, 104
      %v473 = vadd.s32 %v459, 112
      %v474 = vadd.s32 %v459, 120
      %v475 = vadd.s32 %v459, 128
      %v476 = vadd.s32 %v459, 136
      %v477 = vadd.s32 %v459, 144
      %v478 = vadd.s32 %v459, 152
      %v479 = vadd.s32 %v459, 160
      %v480 = vadd.s32 %v459, 168
      %v481 = vadd.s32 %v459, 176
      %v482 = vadd.s32 %v459, 184
      %vm483 = vcmp.lt.s32.totalorder %v459, 0
      %v484 = vsub.s32 0, %v459
      %v485 = vsel %vm483, %v484, %v459
      %v486 = vmul.u32.u64.compose %v485, 2863311531
      %v487 = vextract.low.u32 %v486
      %v488 = vextract.high.u32 %v486
      %v489 = vshrl.u32 %v488, 4
      %v490 = vmul.u32 %v489, 24
      %v491 = vsub.s32 %v485, %v490
      %v492 = vsub.s32 0, %v491
      %v493 = vsel %vm483, %v492, %v491
      %vm494 = vcmp.lt.s32.totalorder %v460, 0
      %v495 = vsub.s32 0, %v460
      %v496 = vsel %vm494, %v495, %v460
      %v497 = vmul.u32.u64.compose %v496, 2863311531
      %v498 = vextract.low.u32 %v497
      %v499 = vextract.high.u32 %v497
      %v500 = vshrl.u32 %v499, 4
      %v501 = vmul.u32 %v500, 24
      %v502 = vsub.s32 %v496, %v501
      %v503 = vsub.s32 0, %v502
      %v504 = vsel %vm494, %v503, %v502
      %vm505 = vcmp.lt.s32.totalorder %v461, 0
      %v506 = vsub.s32 0, %v461
      %v507 = vsel %vm505, %v506, %v461
      %v508 = vmul.u32.u64.compose %v507, 2863311531
      %v509 = vextract.low.u32 %v508
      %v510 = vextract.high.u32 %v508
      %v511 = vshrl.u32 %v510, 4
      %v512 = vmul.u32 %v511, 24
      %v513 = vsub.s32 %v507, %v512
      %v514 = vsub.s32 0, %v513
      %v515 = vsel %vm505, %v514, %v513
      %vm516 = vcmp.lt.s32.totalorder %v462, 0
      %v517 = vsub.s32 0, %v462
      %v518 = vsel %vm516, %v517, %v462
      %v519 = vmul.u32.u64.compose %v518, 2863311531
      %v520 = vextract.low.u32 %v519
      %v521 = vextract.high.u32 %v519
      %v522 = vshrl.u32 %v521, 4
      %v523 = vmul.u32 %v522, 24
      %v524 = vsub.s32 %v518, %v523
      %v525 = vsub.s32 0, %v524
      %v526 = vsel %vm516, %v525, %v524
      %vm527 = vcmp.lt.s32.totalorder %v463, 0
      %v528 = vsub.s32 0, %v463
      %v529 = vsel %vm527, %v528, %v463
      %v530 = vmul.u32.u64.compose %v529, 2863311531
      %v531 = vextract.low.u32 %v530
      %v532 = vextract.high.u32 %v530
      %v533 = vshrl.u32 %v532, 4
      %v534 = vmul.u32 %v533, 24
      %v535 = vsub.s32 %v529, %v534
      %v536 = vsub.s32 0, %v535
      %v537 = vsel %vm527, %v536, %v535
      %vm538 = vcmp.lt.s32.totalorder %v464, 0
      %v539 = vsub.s32 0, %v464
      %v540 = vsel %vm538, %v539, %v464
      %v541 = vmul.u32.u64.compose %v540, 2863311531
      %v542 = vextract.low.u32 %v541
      %v543 = vextract.high.u32 %v541
      %v544 = vshrl.u32 %v543, 4
      %v545 = vmul.u32 %v544, 24
      %v546 = vsub.s32 %v540, %v545
      %v547 = vsub.s32 0, %v546
      %v548 = vsel %vm538, %v547, %v546
      %vm549 = vcmp.lt.s32.totalorder %v465, 0
      %v550 = vsub.s32 0, %v465
      %v551 = vsel %vm549, %v550, %v465
      %v552 = vmul.u32.u64.compose %v551, 2863311531
      %v553 = vextract.low.u32 %v552
      %v554 = vextract.high.u32 %v552
      %v555 = vshrl.u32 %v554, 4
      %v556 = vmul.u32 %v555, 24
      %v557 = vsub.s32 %v551, %v556
      %v558 = vsub.s32 0, %v557
      %v559 = vsel %vm549, %v558, %v557
      %vm560 = vcmp.lt.s32.totalorder %v466, 0
      %v561 = vsub.s32 0, %v466
      %v562 = vsel %vm560, %v561, %v466
      %v563 = vmul.u32.u64.compose %v562, 2863311531
      %v564 = vextract.low.u32 %v563
      %v565 = vextract.high.u32 %v563
      %v566 = vshrl.u32 %v565, 4
      %v567 = vmul.u32 %v566, 24
      %v568 = vsub.s32 %v562, %v567
      %v569 = vsub.s32 0, %v568
      %v570 = vsel %vm560, %v569, %v568
      %vm571 = vcmp.lt.s32.totalorder %v467, 0
      %v572 = vsub.s32 0, %v467
      %v573 = vsel %vm571, %v572, %v467
      %v574 = vmul.u32.u64.compose %v573, 2863311531
      %v575 = vextract.low.u32 %v574
      %v576 = vextract.high.u32 %v574
      %v577 = vshrl.u32 %v576, 4
      %v578 = vmul.u32 %v577, 24
      %v579 = vsub.s32 %v573, %v578
      %v580 = vsub.s32 0, %v579
      %v581 = vsel %vm571, %v580, %v579
      %vm582 = vcmp.lt.s32.totalorder %v468, 0
      %v583 = vsub.s32 0, %v468
      %v584 = vsel %vm582, %v583, %v468
      %v585 = vmul.u32.u64.compose %v584, 2863311531
      %v586 = vextract.low.u32 %v585
      %v587 = vextract.high.u32 %v585
      %v588 = vshrl.u32 %v587, 4
      %v589 = vmul.u32 %v588, 24
      %v590 = vsub.s32 %v584, %v589
      %v591 = vsub.s32 0, %v590
      %v592 = vsel %vm582, %v591, %v590
      %vm593 = vcmp.lt.s32.totalorder %v469, 0
      %v594 = vsub.s32 0, %v469
      %v595 = vsel %vm593, %v594, %v469
      %v596 = vmul.u32.u64.compose %v595, 2863311531
      %v597 = vextract.low.u32 %v596
      %v598 = vextract.high.u32 %v596
      %v599 = vshrl.u32 %v598, 4
      %v600 = vmul.u32 %v599, 24
      %v601 = vsub.s32 %v595, %v600
      %v602 = vsub.s32 0, %v601
      %v603 = vsel %vm593, %v602, %v601
      %vm604 = vcmp.lt.s32.totalorder %v470, 0
      %v605 = vsub.s32 0, %v470
      %v606 = vsel %vm604, %v605, %v470
      %v607 = vmul.u32.u64.compose %v606, 2863311531
      %v608 = vextract.low.u32 %v607
      %v609 = vextract.high.u32 %v607
      %v610 = vshrl.u32 %v609, 4
      %v611 = vmul.u32 %v610, 24
      %v612 = vsub.s32 %v606, %v611
      %v613 = vsub.s32 0, %v612
      %v614 = vsel %vm604, %v613, %v612
      %vm615 = vcmp.lt.s32.totalorder %v471, 0
      %v616 = vsub.s32 0, %v471
      %v617 = vsel %vm615, %v616, %v471
      %v618 = vmul.u32.u64.compose %v617, 2863311531
      %v619 = vextract.low.u32 %v618
      %v620 = vextract.high.u32 %v618
      %v621 = vshrl.u32 %v620, 4
      %v622 = vmul.u32 %v621, 24
      %v623 = vsub.s32 %v617, %v622
      %v624 = vsub.s32 0, %v623
      %v625 = vsel %vm615, %v624, %v623
      %vm626 = vcmp.lt.s32.totalorder %v472, 0
      %v627 = vsub.s32 0, %v472
      %v628 = vsel %vm626, %v627, %v472
      %v629 = vmul.u32.u64.compose %v628, 2863311531
      %v630 = vextract.low.u32 %v629
      %v631 = vextract.high.u32 %v629
      %v632 = vshrl.u32 %v631, 4
      %v633 = vmul.u32 %v632, 24
      %v634 = vsub.s32 %v628, %v633
      %v635 = vsub.s32 0, %v634
      %v636 = vsel %vm626, %v635, %v634
      %vm637 = vcmp.lt.s32.totalorder %v473, 0
      %v638 = vsub.s32 0, %v473
      %v639 = vsel %vm637, %v638, %v473
      %v640 = vmul.u32.u64.compose %v639, 2863311531
      %v641 = vextract.low.u32 %v640
      %v642 = vextract.high.u32 %v640
      %v643 = vshrl.u32 %v642, 4
      %v644 = vmul.u32 %v643, 24
      %v645 = vsub.s32 %v639, %v644
      %v646 = vsub.s32 0, %v645
      %v647 = vsel %vm637, %v646, %v645
      %vm648 = vcmp.lt.s32.totalorder %v474, 0
      %v649 = vsub.s32 0, %v474
      %v650 = vsel %vm648, %v649, %v474
      %v651 = vmul.u32.u64.compose %v650, 2863311531
      %v652 = vextract.low.u32 %v651
      %v653 = vextract.high.u32 %v651
      %v654 = vshrl.u32 %v653, 4
      %v655 = vmul.u32 %v654, 24
      %v656 = vsub.s32 %v650, %v655
      %v657 = vsub.s32 0, %v656
      %v658 = vsel %vm648, %v657, %v656
      %vm659 = vcmp.lt.s32.totalorder %v475, 0
      %v660 = vsub.s32 0, %v475
      %v661 = vsel %vm659, %v660, %v475
      %v662 = vmul.u32.u64.compose %v661, 2863311531
      %v663 = vextract.low.u32 %v662
      %v664 = vextract.high.u32 %v662
      %v665 = vshrl.u32 %v664, 4
      %v666 = vmul.u32 %v665, 24
      %v667 = vsub.s32 %v661, %v666
      %v668 = vsub.s32 0, %v667
      %v669 = vsel %vm659, %v668, %v667
      %vm670 = vcmp.lt.s32.totalorder %v476, 0
      %v671 = vsub.s32 0, %v476
      %v672 = vsel %vm670, %v671, %v476
      %v673 = vmul.u32.u64.compose %v672, 2863311531
      %v674 = vextract.low.u32 %v673
      %v675 = vextract.high.u32 %v673
      %v676 = vshrl.u32 %v675, 4
      %v677 = vmul.u32 %v676, 24
      %v678 = vsub.s32 %v672, %v677
      %v679 = vsub.s32 0, %v678
      %v680 = vsel %vm670, %v679, %v678
      %vm681 = vcmp.lt.s32.totalorder %v477, 0
      %v682 = vsub.s32 0, %v477
      %v683 = vsel %vm681, %v682, %v477
      %v684 = vmul.u32.u64.compose %v683, 2863311531
      %v685 = vextract.low.u32 %v684
      %v686 = vextract.high.u32 %v684
      %v687 = vshrl.u32 %v686, 4
      %v688 = vmul.u32 %v687, 24
      %v689 = vsub.s32 %v683, %v688
      %v690 = vsub.s32 0, %v689
      %v691 = vsel %vm681, %v690, %v689
      %vm692 = vcmp.lt.s32.totalorder %v478, 0
      %v693 = vsub.s32 0, %v478
      %v694 = vsel %vm692, %v693, %v478
      %v695 = vmul.u32.u64.compose %v694, 2863311531
      %v696 = vextract.low.u32 %v695
      %v697 = vextract.high.u32 %v695
      %v698 = vshrl.u32 %v697, 4
      %v699 = vmul.u32 %v698, 24
      %v700 = vsub.s32 %v694, %v699
      %v701 = vsub.s32 0, %v700
      %v702 = vsel %vm692, %v701, %v700
      %vm703 = vcmp.lt.s32.totalorder %v479, 0
      %v704 = vsub.s32 0, %v479
      %v705 = vsel %vm703, %v704, %v479
      %v706 = vmul.u32.u64.compose %v705, 2863311531
      %v707 = vextract.low.u32 %v706
      %v708 = vextract.high.u32 %v706
      %v709 = vshrl.u32 %v708, 4
      %v710 = vmul.u32 %v709, 24
      %v711 = vsub.s32 %v705, %v710
      %v712 = vsub.s32 0, %v711
      %v713 = vsel %vm703, %v712, %v711
      %vm714 = vcmp.lt.s32.totalorder %v480, 0
      %v715 = vsub.s32 0, %v480
      %v716 = vsel %vm714, %v715, %v480
      %v717 = vmul.u32.u64.compose %v716, 2863311531
      %v718 = vextract.low.u32 %v717
      %v719 = vextract.high.u32 %v717
      %v720 = vshrl.u32 %v719, 4
      %v721 = vmul.u32 %v720, 24
      %v722 = vsub.s32 %v716, %v721
      %v723 = vsub.s32 0, %v722
      %v724 = vsel %vm714, %v723, %v722
      %vm725 = vcmp.lt.s32.totalorder %v481, 0
      %v726 = vsub.s32 0, %v481
      %v727 = vsel %vm725, %v726, %v481
      %v728 = vmul.u32.u64.compose %v727, 2863311531
      %v729 = vextract.low.u32 %v728
      %v730 = vextract.high.u32 %v728
      %v731 = vshrl.u32 %v730, 4
      %v732 = vmul.u32 %v731, 24
      %v733 = vsub.s32 %v727, %v732
      %v734 = vsub.s32 0, %v733
      %v735 = vsel %vm725, %v734, %v733
      %vm736 = vcmp.lt.s32.totalorder %v482, 0
      %v737 = vsub.s32 0, %v482
      %v738 = vsel %vm736, %v737, %v482
      %v739 = vmul.u32.u64.compose %v738, 2863311531
      %v740 = vextract.low.u32 %v739
      %v741 = vextract.high.u32 %v739
      %v742 = vshrl.u32 %v741, 4
      %v743 = vmul.u32 %v742, 24
      %v744 = vsub.s32 %v738, %v743
      %v745 = vsub.s32 0, %v744
      %v746 = vsel %vm736, %v745, %v744
      %vm747 = vcmp.ne.s32.totalorder %v493, 0
      %vm748 = vcmp.ne.s32.totalorder %v504, 0
      %vm749 = vcmp.ne.s32.totalorder %v515, 0
      %vm750 = vcmp.ne.s32.totalorder %v526, 0
      %vm751 = vcmp.ne.s32.totalorder %v537, 0
      %vm752 = vcmp.ne.s32.totalorder %v548, 0
      %vm753 = vcmp.ne.s32.totalorder %v559, 0
      %vm754 = vcmp.ne.s32.totalorder %v570, 0
      %vm755 = vcmp.ne.s32.totalorder %v581, 0
      %vm756 = vcmp.ne.s32.totalorder %v592, 0
      %vm757 = vcmp.ne.s32.totalorder %v603, 0
      %vm758 = vcmp.ne.s32.totalorder %v614, 0
      %vm759 = vcmp.ne.s32.totalorder %v625, 0
      %vm760 = vcmp.ne.s32.totalorder %v636, 0
      %vm761 = vcmp.ne.s32.totalorder %v647, 0
      %vm762 = vcmp.ne.s32.totalorder %v658, 0
      %vm763 = vcmp.ne.s32.totalorder %v669, 0
      %vm764 = vcmp.ne.s32.totalorder %v680, 0
      %vm765 = vcmp.ne.s32.totalorder %v691, 0
      %vm766 = vcmp.ne.s32.totalorder %v702, 0
      %vm767 = vcmp.ne.s32.totalorder %v713, 0
      %vm768 = vcmp.ne.s32.totalorder %v724, 0
      %vm769 = vcmp.ne.s32.totalorder %v735, 0
      %vm770 = vcmp.ne.s32.totalorder %v746, 0
      %vm771 = vcmp.lt.s32.totalorder %v493, 0
      %vm772 = vcmp.lt.s32.totalorder %v504, 0
      %vm773 = vcmp.lt.s32.totalorder %v515, 0
      %vm774 = vcmp.lt.s32.totalorder %v526, 0
      %vm775 = vcmp.lt.s32.totalorder %v537, 0
      %vm776 = vcmp.lt.s32.totalorder %v548, 0
      %vm777 = vcmp.lt.s32.totalorder %v559, 0
      %vm778 = vcmp.lt.s32.totalorder %v570, 0
      %vm779 = vcmp.lt.s32.totalorder %v581, 0
      %vm780 = vcmp.lt.s32.totalorder %v592, 0
      %vm781 = vcmp.lt.s32.totalorder %v603, 0
      %vm782 = vcmp.lt.s32.totalorder %v614, 0
      %vm783 = vcmp.lt.s32.totalorder %v625, 0
      %vm784 = vcmp.lt.s32.totalorder %v636, 0
      %vm785 = vcmp.lt.s32.totalorder %v647, 0
      %vm786 = vcmp.lt.s32.totalorder %v658, 0
      %vm787 = vcmp.lt.s32.totalorder %v669, 0
      %vm788 = vcmp.lt.s32.totalorder %v680, 0
      %vm789 = vcmp.lt.s32.totalorder %v691, 0
      %vm790 = vcmp.lt.s32.totalorder %v702, 0
      %vm791 = vcmp.lt.s32.totalorder %v713, 0
      %vm792 = vcmp.lt.s32.totalorder %v724, 0
      %vm793 = vcmp.lt.s32.totalorder %v735, 0
      %vm794 = vcmp.lt.s32.totalorder %v746, 0
      %vm795 = vmand %vm771, %vm747
      %vm796 = vmand %vm772, %vm748
      %vm797 = vmand %vm773, %vm749
      %vm798 = vmand %vm774, %vm750
      %vm799 = vmand %vm775, %vm751
      %vm800 = vmand %vm776, %vm752
      %vm801 = vmand %vm777, %vm753
      %vm802 = vmand %vm778, %vm754
      %vm803 = vmand %vm779, %vm755
      %vm804 = vmand %vm780, %vm756
      %vm805 = vmand %vm781, %vm757
      %vm806 = vmand %vm782, %vm758
      %vm807 = vmand %vm783, %vm759
      %vm808 = vmand %vm784, %vm760
      %vm809 = vmand %vm785, %vm761
      %vm810 = vmand %vm786, %vm762
      %vm811 = vmand %vm787, %vm763
      %vm812 = vmand %vm788, %vm764
      %vm813 = vmand %vm789, %vm765
      %vm814 = vmand %vm790, %vm766
      %vm815 = vmand %vm791, %vm767
      %vm816 = vmand %vm792, %vm768
      %vm817 = vmand %vm793, %vm769
      %vm818 = vmand %vm794, %vm770
      %v819 = vadd.s32 %v493, 24
      %v820 = vadd.s32 %v504, 24
      %v821 = vadd.s32 %v515, 24
      %v822 = vadd.s32 %v526, 24
      %v823 = vadd.s32 %v537, 24
      %v824 = vadd.s32 %v548, 24
      %v825 = vadd.s32 %v559, 24
      %v826 = vadd.s32 %v570, 24
      %v827 = vadd.s32 %v581, 24
      %v828 = vadd.s32 %v592, 24
      %v829 = vadd.s32 %v603, 24
      %v830 = vadd.s32 %v614, 24
      %v831 = vadd.s32 %v625, 24
      %v832 = vadd.s32 %v636, 24
      %v833 = vadd.s32 %v647, 24
      %v834 = vadd.s32 %v658, 24
      %v835 = vadd.s32 %v669, 24
      %v836 = vadd.s32 %v680, 24
      %v837 = vadd.s32 %v691, 24
      %v838 = vadd.s32 %v702, 24
      %v839 = vadd.s32 %v713, 24
      %v840 = vadd.s32 %v724, 24
      %v841 = vadd.s32 %v735, 24
      %v842 = vadd.s32 %v746, 24
      %v843 = vsel %vm795, %v819, %v493
      %v844 = vsel %vm796, %v820, %v504
      %v845 = vsel %vm797, %v821, %v515
      %v846 = vsel %vm798, %v822, %v526
      %v847 = vsel %vm799, %v823, %v537
      %v848 = vsel %vm800, %v824, %v548
      %v849 = vsel %vm801, %v825, %v559
      %v850 = vsel %vm802, %v826, %v570
      %v851 = vsel %vm803, %v827, %v581
      %v852 = vsel %vm804, %v828, %v592
      %v853 = vsel %vm805, %v829, %v603
      %v854 = vsel %vm806, %v830, %v614
      %v855 = vsel %vm807, %v831, %v625
      %v856 = vsel %vm808, %v832, %v636
      %v857 = vsel %vm809, %v833, %v647
      %v858 = vsel %vm810, %v834, %v658
      %v859 = vsel %vm811, %v835, %v669
      %v860 = vsel %vm812, %v836, %v680
      %v861 = vsel %vm813, %v837, %v691
      %v862 = vsel %vm814, %v838, %v702
      %v863 = vsel %vm815, %v839, %v713
      %v864 = vsel %vm816, %v840, %v724
      %v865 = vsel %vm817, %v841, %v735
      %v866 = vsel %vm818, %v842, %v746
      %vm867 = vcmp.lt.s32.totalorder %v843, 16
      %vm868 = vcmp.lt.s32.totalorder %v844, 16
      %vm869 = vcmp.lt.s32.totalorder %v845, 16
      %vm870 = vcmp.lt.s32.totalorder %v846, 16
      %vm871 = vcmp.lt.s32.totalorder %v847, 16
      %vm872 = vcmp.lt.s32.totalorder %v848, 16
      %vm873 = vcmp.lt.s32.totalorder %v849, 16
      %vm874 = vcmp.lt.s32.totalorder %v850, 16
      %vm875 = vcmp.lt.s32.totalorder %v851, 16
      %vm876 = vcmp.lt.s32.totalorder %v852, 16
      %vm877 = vcmp.lt.s32.totalorder %v853, 16
      %vm878 = vcmp.lt.s32.totalorder %v854, 16
      %vm879 = vcmp.lt.s32.totalorder %v855, 16
      %vm880 = vcmp.lt.s32.totalorder %v856, 16
      %vm881 = vcmp.lt.s32.totalorder %v857, 16
      %vm882 = vcmp.lt.s32.totalorder %v858, 16
      %vm883 = vcmp.lt.s32.totalorder %v859, 16
      %vm884 = vcmp.lt.s32.totalorder %v860, 16
      %vm885 = vcmp.lt.s32.totalorder %v861, 16
      %vm886 = vcmp.lt.s32.totalorder %v862, 16
      %vm887 = vcmp.lt.s32.totalorder %v863, 16
      %vm888 = vcmp.lt.s32.totalorder %v864, 16
      %vm889 = vcmp.lt.s32.totalorder %v865, 16
      %vm890 = vcmp.lt.s32.totalorder %v866, 16
      %p891 = scmp.gt.s32.totalorder %s24, 0
      // Predicated region
      $region45: #{conv_block_forward.4} parent=43 // pred_check
        %p892 = pneg %p891
      $region46: #{conv_block_forward.4} parent=43 // pred_check_branch
        %894 = sbr.rel (%p892) target = $region48
      $region47: #{conv_block_forward.4} parent=43 // pred_region
        %v895 = vld [vmem:[%s409] sm:$0xf]
        %v896 = vld [vmem:[%s409 + $0x4] sm:$0xf]
        %v897 = vld [vmem:[%s409 + $0x8] sm:$0xf]
        %v898 = vld [vmem:[%s409 + $0xc] sm:$0xf]
        %v899 = vld [vmem:[%s409 + $0x10] sm:$0xf]
        %v900 = vld [vmem:[%s409 + $0x14] sm:$0xf]
        %v901 = vunpack.c.l.bf16 %v895
        %v902 = vunpack.c.l.bf16 %v896
        %v903 = vunpack.c.l.bf16 %v897
        %v904 = vunpack.c.l.bf16 %v898
        %v905 = vunpack.c.l.bf16 %v899
        %v906 = vunpack.c.l.bf16 %v900
        %v907 = vld [vmem:[%s3] sm:$0x1]
        %v909 = vlaneseq
        %v910 = vshrl.u32 %v909, 7
        %v911 = vsub.s32 0, %v910
        %v912 = vrot.slane %v907, %v911
        %v914 = vmul.f32 %v901, %v912
        %v915 = vmul.f32 %v902, %v912
        %v916 = vmul.f32 %v903, %v912
        %v917 = vmul.f32 %v904, %v912
        %v918 = vmul.f32 %v905, %v912
        %v919 = vmul.f32 %v906, %v912
        %v920 = vld [vmem:[%s4] sm:$0x1]
        %v922 = vlaneseq
        %v923 = vshrl.u32 %v922, 7
        %v924 = vsub.s32 0, %v923
        %v925 = vrot.slane %v920, %v924
        %v927 = vadd.f32 %v914, %v925
        %v928 = vadd.f32 %v915, %v925
        %v929 = vadd.f32 %v916, %v925
        %v930 = vadd.f32 %v917, %v925
        %v931 = vadd.f32 %v918, %v925
        %v932 = vadd.f32 %v919, %v925
        %v933 = vmax.f32 %v927, 0.0
        %v934 = vmax.f32 %v928, 0.0
        %v935 = vmax.f32 %v929, 0.0
        %v936 = vmax.f32 %v930, 0.0
        %v937 = vmax.f32 %v931, 0.0
        %v938 = vmax.f32 %v932, 0.0
        %v939 = vsel %vm867, 1, 0
        %v940 = vsel %vm868, 1, 0
        %v941 = vsel %vm869, 1, 0
        %v942 = vsel %vm870, 1, 0
        %v943 = vsel %vm871, 1, 0
        %v944 = vsel %vm872, 1, 0
        %vm945 = vcmp.eq.s32.totalorder %v939, 1
        %vm946 = vcmp.eq.s32.totalorder %v940, 1
        %vm947 = vcmp.eq.s32.totalorder %v941, 1
        %vm948 = vcmp.eq.s32.totalorder %v942, 1
        %vm949 = vcmp.eq.s32.totalorder %v943, 1
        %vm950 = vcmp.eq.s32.totalorder %v944, 1
        %v951 = vsel %vm945, %v933, 0.0
        %v952 = vsel %vm946, %v934, 0.0
        %v953 = vsel %vm947, %v935, 0.0
        %v954 = vsel %vm948, %v936, 0.0
        %v955 = vsel %vm949, %v937, 0.0
        %v956 = vsel %vm950, %v938, 0.0
        %v957 = vpack.c.bf16 %v952, %v951
        %v958 = vpack.c.bf16 %v954, %v953
        %v959 = vpack.c.bf16 %v956, %v955
        %960 = vst [vmem:[#allocation2] sm:$0xff] %v957
        %961 = vst [vmem:[#allocation2 + $0x8] sm:$0xff] %v958
        %962 = vst [vmem:[#allocation2 + $0x10] sm:$0xff] %v959
      $region48: #{conv_block_forward.4} parent=43 // pred_fallthru
        _
      %p963 = scmp.eq.s32.totalorder %s24, 0
      // Predicated region
      $region49: #{conv_block_forward.4} parent=43 // pred_check
        %p964 = pneg %p963
      $region50: #{conv_block_forward.4} parent=43 // pred_check_branch
        %966 = sbr.rel (%p964) target = $region52
      $region51: #{conv_block_forward.4} parent=43 // pred_region
        %967 = vst [vmem:[#allocation2] sm:$0xff] 0
        %968 = vst [vmem:[#allocation2 + $0x8] sm:$0xff] 0
        %969 = vst [vmem:[#allocation2 + $0x10] sm:$0xff] 0
      $region52: #{conv_block_forward.4} parent=43 // pred_fallthru
        _
      %v970 = vld [vmem:[%s423] sm:$0xf]
      %v971 = vld [vmem:[%s423 + $0x4] sm:$0xf]
      %v972 = vld [vmem:[%s423 + $0x8] sm:$0xf]
      %v973 = vld [vmem:[%s423 + $0xc] sm:$0xf]
      %v974 = vld [vmem:[%s423 + $0x10] sm:$0xf]
      %v975 = vld [vmem:[%s423 + $0x14] sm:$0xf]
      %v976 = vld [vmem:[%s423 + $0x18] sm:$0xf]
      %v977 = vld [vmem:[%s423 + $0x1c] sm:$0xf]
      %v978 = vld [vmem:[%s423 + $0x20] sm:$0xf]
      %v979 = vld [vmem:[%s423 + $0x24] sm:$0xf]
      %v980 = vld [vmem:[%s423 + $0x28] sm:$0xf]
      %v981 = vld [vmem:[%s423 + $0x2c] sm:$0xf]
      %v982 = vld [vmem:[%s423 + $0x30] sm:$0xf]
      %v983 = vld [vmem:[%s423 + $0x34] sm:$0xf]
      %v984 = vld [vmem:[%s423 + $0x38] sm:$0xf]
      %v985 = vld [vmem:[%s423 + $0x3c] sm:$0xf]
      %v986 = vld [vmem:[%s423 + $0x40] sm:$0xf]
      %v987 = vld [vmem:[%s423 + $0x44] sm:$0xf]
      %v988 = vld [vmem:[%s423 + $0x48] sm:$0xf]
      %v989 = vld [vmem:[%s423 + $0x4c] sm:$0xf]
      %v990 = vld [vmem:[%s423 + $0x50] sm:$0xf]
      %v991 = vld [vmem:[%s423 + $0x54] sm:$0xf]
      %v992 = vld [vmem:[%s423 + $0x58] sm:$0xf]
      %v993 = vld [vmem:[%s423 + $0x5c] sm:$0xf]
      %v994 = vunpack.c.l.bf16 %v970
      %v995 = vunpack.c.l.bf16 %v971
      %v996 = vunpack.c.l.bf16 %v972
      %v997 = vunpack.c.l.bf16 %v973
      %v998 = vunpack.c.l.bf16 %v974
      %v999 = vunpack.c.l.bf16 %v975
      %v1000 = vunpack.c.l.bf16 %v976
      %v1001 = vunpack.c.l.bf16 %v977
      %v1002 = vunpack.c.l.bf16 %v978
      %v1003 = vunpack.c.l.bf16 %v979
      %v1004 = vunpack.c.l.bf16 %v980
      %v1005 = vunpack.c.l.bf16 %v981
      %v1006 = vunpack.c.l.bf16 %v982
      %v1007 = vunpack.c.l.bf16 %v983
      %v1008 = vunpack.c.l.bf16 %v984
      %v1009 = vunpack.c.l.bf16 %v985
      %v1010 = vunpack.c.l.bf16 %v986
      %v1011 = vunpack.c.l.bf16 %v987
      %v1012 = vunpack.c.l.bf16 %v988
      %v1013 = vunpack.c.l.bf16 %v989
      %v1014 = vunpack.c.l.bf16 %v990
      %v1015 = vunpack.c.l.bf16 %v991
      %v1016 = vunpack.c.l.bf16 %v992
      %v1017 = vunpack.c.l.bf16 %v993
      %v1018 = vld [vmem:[%s3] sm:$0x1]
      %v1020 = vlaneseq
      %v1021 = vshrl.u32 %v1020, 7
      %v1022 = vsub.s32 0, %v1021
      %v1023 = vrot.slane %v1018, %v1022
      %v1025 = vmul.f32 %v994, %v1023
      %v1026 = vmul.f32 %v995, %v1023
      %v1027 = vmul.f32 %v996, %v1023
      %v1028 = vmul.f32 %v997, %v1023
      %v1029 = vmul.f32 %v998, %v1023
      %v1030 = vmul.f32 %v999, %v1023
      %v1031 = vmul.f32 %v1000, %v1023
      %v1032 = vmul.f32 %v1001, %v1023
      %v1033 = vmul.f32 %v1002, %v1023
      %v1034 = vmul.f32 %v1003, %v1023
      %v1035 = vmul.f32 %v1004, %v1023
      %v1036 = vmul.f32 %v1005, %v1023
      %v1037 = vmul.f32 %v1006, %v1023
      %v1038 = vmul.f32 %v1007, %v1023
      %v1039 = vmul.f32 %v1008, %v1023
      %v1040 = vmul.f32 %v1009, %v1023
      %v1041 = vmul.f32 %v1010, %v1023
      %v1042 = vmul.f32 %v1011, %v1023
      %v1043 = vmul.f32 %v1012, %v1023
      %v1044 = vmul.f32 %v1013, %v1023
      %v1045 = vmul.f32 %v1014, %v1023
      %v1046 = vmul.f32 %v1015, %v1023
      %v1047 = vmul.f32 %v1016, %v1023
      %v1048 = vmul.f32 %v1017, %v1023
      %v1049 = vld [vmem:[%s4] sm:$0x1]
      %v1051 = vlaneseq
      %v1052 = vshrl.u32 %v1051, 7
      %v1053 = vsub.s32 0, %v1052
      %v1054 = vrot.slane %v1049, %v1053
      %v1056 = vadd.f32 %v1025, %v1054
      %v1057 = vadd.f32 %v1026, %v1054
      %v1058 = vadd.f32 %v1027, %v1054
      %v1059 = vadd.f32 %v1028, %v1054
      %v1060 = vadd.f32 %v1029, %v1054
      %v1061 = vadd.f32 %v1030, %v1054
      %v1062 = vadd.f32 %v1031, %v1054
      %v1063 = vadd.f32 %v1032, %v1054
      %v1064 = vadd.f32 %v1033, %v1054
      %v1065 = vadd.f32 %v1034, %v1054
      %v1066 = vadd.f32 %v1035, %v1054
      %v1067 = vadd.f32 %v1036, %v1054
      %v1068 = vadd.f32 %v1037, %v1054
      %v1069 = vadd.f32 %v1038, %v1054
      %v1070 = vadd.f32 %v1039, %v1054
      %v1071 = vadd.f32 %v1040, %v1054
      %v1072 = vadd.f32 %v1041, %v1054
      %v1073 = vadd.f32 %v1042, %v1054
      %v1074 = vadd.f32 %v1043, %v1054
      %v1075 = vadd.f32 %v1044, %v1054
      %v1076 = vadd.f32 %v1045, %v1054
      %v1077 = vadd.f32 %v1046, %v1054
      %v1078 = vadd.f32 %v1047, %v1054
      %v1079 = vadd.f32 %v1048, %v1054
      %v1080 = vmax.f32 %v1056, 0.0
      %v1081 = vmax.f32 %v1057, 0.0
      %v1082 = vmax.f32 %v1058, 0.0
      %v1083 = vmax.f32 %v1059, 0.0
      %v1084 = vmax.f32 %v1060, 0.0
      %v1085 = vmax.f32 %v1061, 0.0
      %v1086 = vmax.f32 %v1062, 0.0
      %v1087 = vmax.f32 %v1063, 0.0
      %v1088 = vmax.f32 %v1064, 0.0
      %v1089 = vmax.f32 %v1065, 0.0
      %v1090 = vmax.f32 %v1066, 0.0
      %v1091 = vmax.f32 %v1067, 0.0
      %v1092 = vmax.f32 %v1068, 0.0
      %v1093 = vmax.f32 %v1069, 0.0
      %v1094 = vmax.f32 %v1070, 0.0
      %v1095 = vmax.f32 %v1071, 0.0
      %v1096 = vmax.f32 %v1072, 0.0
      %v1097 = vmax.f32 %v1073, 0.0
      %v1098 = vmax.f32 %v1074, 0.0
      %v1099 = vmax.f32 %v1075, 0.0
      %v1100 = vmax.f32 %v1076, 0.0
      %v1101 = vmax.f32 %v1077, 0.0
      %v1102 = vmax.f32 %v1078, 0.0
      %v1103 = vmax.f32 %v1079, 0.0
      %v1104 = vsel %vm867, 1, 0
      %v1105 = vsel %vm868, 1, 0
      %v1106 = vsel %vm869, 1, 0
      %v1107 = vsel %vm870, 1, 0
      %v1108 = vsel %vm871, 1, 0
      %v1109 = vsel %vm872, 1, 0
      %v1110 = vsel %vm873, 1, 0
      %v1111 = vsel %vm874, 1, 0
      %v1112 = vsel %vm875, 1, 0
      %v1113 = vsel %vm876, 1, 0
      %v1114 = vsel %vm877, 1, 0
      %v1115 = vsel %vm878, 1, 0
      %v1116 = vsel %vm879, 1, 0
      %v1117 = vsel %vm880, 1, 0
      %v1118 = vsel %vm881, 1, 0
      %v1119 = vsel %vm882, 1, 0
      %v1120 = vsel %vm883, 1, 0
      %v1121 = vsel %vm884, 1, 0
      %v1122 = vsel %vm885, 1, 0
      %v1123 = vsel %vm886, 1, 0
      %v1124 = vsel %vm887, 1, 0
      %v1125 = vsel %vm888, 1, 0
      %v1126 = vsel %vm889, 1, 0
      %v1127 = vsel %vm890, 1, 0
      %vm1128 = vcmp.eq.s32.totalorder %v1104, 1
      %vm1129 = vcmp.eq.s32.totalorder %v1105, 1
      %vm1130 = vcmp.eq.s32.totalorder %v1106, 1
      %vm1131 = vcmp.eq.s32.totalorder %v1107, 1
      %vm1132 = vcmp.eq.s32.totalorder %v1108, 1
      %vm1133 = vcmp.eq.s32.totalorder %v1109, 1
      %vm1134 = vcmp.eq.s32.totalorder %v1110, 1
      %vm1135 = vcmp.eq.s32.totalorder %v1111, 1
      %vm1136 = vcmp.eq.s32.totalorder %v1112, 1
      %vm1137 = vcmp.eq.s32.totalorder %v1113, 1
      %vm1138 = vcmp.eq.s32.totalorder %v1114, 1
      %vm1139 = vcmp.eq.s32.totalorder %v1115, 1
      %vm1140 = vcmp.eq.s32.totalorder %v1116, 1
      %vm1141 = vcmp.eq.s32.totalorder %v1117, 1
      %vm1142 = vcmp.eq.s32.totalorder %v1118, 1
      %vm1143 = vcmp.eq.s32.totalorder %v1119, 1
      %vm1144 = vcmp.eq.s32.totalorder %v1120, 1
      %vm1145 = vcmp.eq.s32.totalorder %v1121, 1
      %vm1146 = vcmp.eq.s32.totalorder %v1122, 1
      %vm1147 = vcmp.eq.s32.totalorder %v1123, 1
      %vm1148 = vcmp.eq.s32.totalorder %v1124, 1
      %vm1149 = vcmp.eq.s32.totalorder %v1125, 1
      %vm1150 = vcmp.eq.s32.totalorder %v1126, 1
      %vm1151 = vcmp.eq.s32.totalorder %v1127, 1
      %v1152 = vsel %vm1128, %v1080, 0.0
      %v1153 = vsel %vm1129, %v1081, 0.0
      %v1154 = vsel %vm1130, %v1082, 0.0
      %v1155 = vsel %vm1131, %v1083, 0.0
      %v1156 = vsel %vm1132, %v1084, 0.0
      %v1157 = vsel %vm1133, %v1085, 0.0
      %v1158 = vsel %vm1134, %v1086, 0.0
      %v1159 = vsel %vm1135, %v1087, 0.0
      %v1160 = vsel %vm1136, %v1088, 0.0
      %v1161 = vsel %vm1137, %v1089, 0.0
      %v1162 = vsel %vm1138, %v1090, 0.0
      %v1163 = vsel %vm1139, %v1091, 0.0
      %v1164 = vsel %vm1140, %v1092, 0.0
      %v1165 = vsel %vm1141, %v1093, 0.0
      %v1166 = vsel %vm1142, %v1094, 0.0
      %v1167 = vsel %vm1143, %v1095, 0.0
      %v1168 = vsel %vm1144, %v1096, 0.0
      %v1169 = vsel %vm1145, %v1097, 0.0
      %v1170 = vsel %vm1146, %v1098, 0.0
      %v1171 = vsel %vm1147, %v1099, 0.0
      %v1172 = vsel %vm1148, %v1100, 0.0
      %v1173 = vsel %vm1149, %v1101, 0.0
      %v1174 = vsel %vm1150, %v1102, 0.0
      %v1175 = vsel %vm1151, %v1103, 0.0
      %v1176 = vpack.c.bf16 %v1153, %v1152
      %v1177 = vpack.c.bf16 %v1155, %v1154
      %v1178 = vpack.c.bf16 %v1157, %v1156
      %v1179 = vpack.c.bf16 %v1159, %v1158
      %v1180 = vpack.c.bf16 %v1161, %v1160
      %v1181 = vpack.c.bf16 %v1163, %v1162
      %v1182 = vpack.c.bf16 %v1165, %v1164
      %v1183 = vpack.c.bf16 %v1167, %v1166
      %v1184 = vpack.c.bf16 %v1169, %v1168
      %v1185 = vpack.c.bf16 %v1171, %v1170
      %v1186 = vpack.c.bf16 %v1173, %v1172
      %v1187 = vpack.c.bf16 %v1175, %v1174
      %1188 = vst [vmem:[#allocation2 + $0x18] sm:$0xff] %v1176
      %1189 = vst [vmem:[#allocation2 + $0x20] sm:$0xff] %v1177
      %1190 = vst [vmem:[#allocation2 + $0x28] sm:$0xff] %v1178
      %1191 = vst [vmem:[#allocation2 + $0x30] sm:$0xff] %v1179
      %1192 = vst [vmem:[#allocation2 + $0x38] sm:$0xff] %v1180
      %1193 = vst [vmem:[#allocation2 + $0x40] sm:$0xff] %v1181
      %1194 = vst [vmem:[#allocation2 + $0x48] sm:$0xff] %v1182
      %1195 = vst [vmem:[#allocation2 + $0x50] sm:$0xff] %v1183
      %1196 = vst [vmem:[#allocation2 + $0x58] sm:$0xff] %v1184
      %1197 = vst [vmem:[#allocation2 + $0x60] sm:$0xff] %v1185
      %1198 = vst [vmem:[#allocation2 + $0x68] sm:$0xff] %v1186
      %1199 = vst [vmem:[#allocation2 + $0x70] sm:$0xff] %v1187
      %p1200 = scmp.lt.s32.totalorder %s24, 1
      // Predicated region
      $region53: #{conv_block_forward.4} parent=43 // pred_check
        %p1201 = pneg %p1200
      $region54: #{conv_block_forward.4} parent=43 // pred_check_branch
        %1203 = sbr.rel (%p1201) target = $region56
      $region55: #{conv_block_forward.4} parent=43 // pred_region
        %v1204 = vld [vmem:[%s437] sm:$0xf]
        %v1205 = vld [vmem:[%s437 + $0x4] sm:$0xf]
        %v1206 = vld [vmem:[%s437 + $0x8] sm:$0xf]
        %v1207 = vld [vmem:[%s437 + $0xc] sm:$0xf]
        %v1208 = vld [vmem:[%s437 + $0x10] sm:$0xf]
        %v1209 = vld [vmem:[%s437 + $0x14] sm:$0xf]
        %v1210 = vunpack.c.l.bf16 %v1204
        %v1211 = vunpack.c.l.bf16 %v1205
        %v1212 = vunpack.c.l.bf16 %v1206
        %v1213 = vunpack.c.l.bf16 %v1207
        %v1214 = vunpack.c.l.bf16 %v1208
        %v1215 = vunpack.c.l.bf16 %v1209
        %v1216 = vld [vmem:[%s3] sm:$0x1]
        %v1218 = vlaneseq
        %v1219 = vshrl.u32 %v1218, 7
        %v1220 = vsub.s32 0, %v1219
        %v1221 = vrot.slane %v1216, %v1220
        %v1223 = vmul.f32 %v1210, %v1221
        %v1224 = vmul.f32 %v1211, %v1221
        %v1225 = vmul.f32 %v1212, %v1221
        %v1226 = vmul.f32 %v1213, %v1221
        %v1227 = vmul.f32 %v1214, %v1221
        %v1228 = vmul.f32 %v1215, %v1221
        %v1229 = vld [vmem:[%s4] sm:$0x1]
        %v1231 = vlaneseq
        %v1232 = vshrl.u32 %v1231, 7
        %v1233 = vsub.s32 0, %v1232
        %v1234 = vrot.slane %v1229, %v1233
        %v1236 = vadd.f32 %v1223, %v1234
        %v1237 = vadd.f32 %v1224, %v1234
        %v1238 = vadd.f32 %v1225, %v1234
        %v1239 = vadd.f32 %v1226, %v1234
        %v1240 = vadd.f32 %v1227, %v1234
        %v1241 = vadd.f32 %v1228, %v1234
        %v1242 = vmax.f32 %v1236, 0.0
        %v1243 = vmax.f32 %v1237, 0.0
        %v1244 = vmax.f32 %v1238, 0.0
        %v1245 = vmax.f32 %v1239, 0.0
        %v1246 = vmax.f32 %v1240, 0.0
        %v1247 = vmax.f32 %v1241, 0.0
        %v1248 = vsel %vm1128, %v1242, 0.0
        %v1249 = vsel %vm1129, %v1243, 0.0
        %v1250 = vsel %vm1130, %v1244, 0.0
        %v1251 = vsel %vm1131, %v1245, 0.0
        %v1252 = vsel %vm1132, %v1246, 0.0
        %v1253 = vsel %vm1133, %v1247, 0.0
        %v1254 = vpack.c.bf16 %v1249, %v1248
        %v1255 = vpack.c.bf16 %v1251, %v1250
        %v1256 = vpack.c.bf16 %v1253, %v1252
        %1257 = vst [vmem:[#allocation2 + $0x78] sm:$0xff] %v1254
        %1258 = vst [vmem:[#allocation2 + $0x80] sm:$0xff] %v1255
        %1259 = vst [vmem:[#allocation2 + $0x88] sm:$0xff] %v1256
      $region56: #{conv_block_forward.4} parent=43 // pred_fallthru
        _
      %p1260 = scmp.eq.s32.totalorder %s24, 1
      // Predicated region
      $region57: #{conv_block_forward.4} parent=43 // pred_check
        %p1261 = pneg %p1260
      $region58: #{conv_block_forward.4} parent=43 // pred_check_branch
        %1263 = sbr.rel (%p1261) target = $region60
      $region59: #{conv_block_forward.4} parent=43 // pred_region
        %1264 = vst [vmem:[#allocation2 + $0x78] sm:$0xff] 0
        %1265 = vst [vmem:[#allocation2 + $0x80] sm:$0xff] 0
        %1266 = vst [vmem:[#allocation2 + $0x88] sm:$0xff] 0
      $region60: #{conv_block_forward.4} parent=43 // pred_fallthru
        _
      %v1267 = vld [vmem:[#allocation2 + $0x8] sm:$0xf8]
      %v1268 = vld [vmem:[#allocation2 + $0x10] sm:$0xff]
      %v1269 = vld [vmem:[#allocation2 + $0x18] sm:$0xff]
      %v1270 = vld [vmem:[#allocation2 + $0x20] sm:$0xff]
      %v1271 = vld [vmem:[#allocation2 + $0x28] sm:$0xff]
      %v1272 = vld [vmem:[#allocation2 + $0x30] sm:$0xff]
      %v1273 = vld [vmem:[#allocation2 + $0x38] sm:$0xff]
      %v1274 = vld [vmem:[#allocation2 + $0x40] sm:$0xff]
      %v1275 = vld [vmem:[#allocation2 + $0x48] sm:$0xff]
      %v1276 = vld [vmem:[#allocation2 + $0x50] sm:$0xff]
      %v1277 = vld [vmem:[#allocation2 + $0x58] sm:$0xff]
      %v1278 = vld [vmem:[#allocation2 + $0x60] sm:$0xff]
      %v1279 = vld [vmem:[#allocation2 + $0x68] sm:$0xff]
      %v1280 = vld [vmem:[#allocation2 + $0x70] sm:$0xff]
      %v1281 = vld [vmem:[#allocation2 + $0x78] sm:$0xff]
      %v1282 = vld [vmem:[#allocation2 + $0x80] sm:$0xf]
      %vm1283 = vsmask.f32 4352
      %v1285 = vshrl.u32 %v1267, 16
      %v1287 = vrot.slane %v1285, 3
      %v1288 = vshll.u32 %v1267, 16
      %v1290 = vrot.slane %v1288, 4
      %v1291 = vor.u32 %v1287, %v1290
      %v1293 = vshrl.u32 %v1268, 16
      %v1295 = vrot.slane %v1293, 3
      %v1296 = vshll.u32 %v1268, 16
      %v1298 = vrot.slane %v1296, 4
      %v1299 = vor.u32 %v1295, %v1298
      %v1300 = vsel %vm1283, %v1291, %v1299
      %v1302 = vshrl.u32 %v1269, 16
      %v1304 = vrot.slane %v1302, 3
      %v1305 = vshll.u32 %v1269, 16
      %v1307 = vrot.slane %v1305, 4
      %v1308 = vor.u32 %v1304, %v1307
      %v1309 = vsel %vm1283, %v1299, %v1308
      %v1311 = vshrl.u32 %v1270, 16
      %v1313 = vrot.slane %v1311, 3
      %v1314 = vshll.u32 %v1270, 16
      %v1316 = vrot.slane %v1314, 4
      %v1317 = vor.u32 %v1313, %v1316
      %v1318 = vsel %vm1283, %v1308, %v1317
      %v1320 = vshrl.u32 %v1271, 16
      %v1322 = vrot.slane %v1320, 3
      %v1323 = vshll.u32 %v1271, 16
      %v1325 = vrot.slane %v1323, 4
      %v1326 = vor.u32 %v1322, %v1325
      %v1327 = vsel %vm1283, %v1317, %v1326
      %v1329 = vshrl.u32 %v1272, 16
      %v1331 = vrot.slane %v1329, 3
      %v1332 = vshll.u32 %v1272, 16
      %v1334 = vrot.slane %v1332, 4
      %v1335 = vor.u32 %v1331, %v1334
      %v1336 = vsel %vm1283, %v1326, %v1335
      %v1338 = vshrl.u32 %v1273, 16
      %v1340 = vrot.slane %v1338, 3
      %v1341 = vshll.u32 %v1273, 16
      %v1343 = vrot.slane %v1341, 4
      %v1344 = vor.u32 %v1340, %v1343
      %v1345 = vsel %vm1283, %v1335, %v1344
      %v1347 = vshrl.u32 %v1274, 16
      %v1349 = vrot.slane %v1347, 3
      %v1350 = vshll.u32 %v1274, 16
      %v1352 = vrot.slane %v1350, 4
      %v1353 = vor.u32 %v1349, %v1352
      %v1354 = vsel %vm1283, %v1344, %v1353
      %v1356 = vshrl.u32 %v1275, 16
      %v1358 = vrot.slane %v1356, 3
      %v1359 = vshll.u32 %v1275, 16
      %v1361 = vrot.slane %v1359, 4
      %v1362 = vor.u32 %v1358, %v1361
      %v1363 = vsel %vm1283, %v1353, %v1362
      %v1365 = vshrl.u32 %v1276, 16
      %v1367 = vrot.slane %v1365, 3
      %v1368 = vshll.u32 %v1276, 16
      %v1370 = vrot.slane %v1368, 4
      %v1371 = vor.u32 %v1367, %v1370
      %v1372 = vsel %vm1283, %v1362, %v1371
      %v1374 = vshrl.u32 %v1277, 16
      %v1376 = vrot.slane %v1374, 3
      %v1377 = vshll.u32 %v1277, 16
      %v1379 = vrot.slane %v1377, 4
      %v1380 = vor.u32 %v1376, %v1379
      %v1381 = vsel %vm1283, %v1371, %v1380
      %v1383 = vshrl.u32 %v1278, 16
      %v1385 = vrot.slane %v1383, 3
      %v1386 = vshll.u32 %v1278, 16
      %v1388 = vrot.slane %v1386, 4
      %v1389 = vor.u32 %v1385, %v1388
      %v1390 = vsel %vm1283, %v1380, %v1389
      %v1392 = vshrl.u32 %v1279, 16
      %v1394 = vrot.slane %v1392, 3
      %v1395 = vshll.u32 %v1279, 16
      %v1397 = vrot.slane %v1395, 4
      %v1398 = vor.u32 %v1394, %v1397
      %v1399 = vsel %vm1283, %v1389, %v1398
      %v1401 = vshrl.u32 %v1280, 16
      %v1403 = vrot.slane %v1401, 3
      %v1404 = vshll.u32 %v1280, 16
      %v1406 = vrot.slane %v1404, 4
      %v1407 = vor.u32 %v1403, %v1406
      %v1408 = vsel %vm1283, %v1398, %v1407
      %v1410 = vshrl.u32 %v1281, 16
      %v1412 = vrot.slane %v1410, 3
      %v1413 = vshll.u32 %v1281, 16
      %v1415 = vrot.slane %v1413, 4
      %v1416 = vor.u32 %v1412, %v1415
      %v1417 = vsel %vm1283, %v1407, %v1416
      %v1419 = vshrl.u32 %v1282, 16
      %v1421 = vrot.slane %v1419, 3
      %v1422 = vshll.u32 %v1282, 16
      %v1424 = vrot.slane %v1422, 4
      %v1425 = vor.u32 %v1421, %v1424
      %v1426 = vsel %vm1283, %v1416, %v1425
      %1442 = vst [vmem:[#allocation3] sm:$0xff] %v1300
      %1443 = vst [vmem:[#allocation3 + $0x18] sm:$0xff] %v1309
      %1444 = vst [vmem:[#allocation3 + $0x30] sm:$0xff] %v1318
      %1445 = vst [vmem:[#allocation3 + $0x48] sm:$0xff] %v1327
      %1446 = vst [vmem:[#allocation3 + $0x60] sm:$0xff] %v1336
      %1447 = vst [vmem:[#allocation3 + $0x78] sm:$0xff] %v1345
      %1448 = vst [vmem:[#allocation3 + $0x90] sm:$0xff] %v1354
      %1449 = vst [vmem:[#allocation3 + $0xa8] sm:$0xff] %v1363
      %1450 = vst [vmem:[#allocation3 + $0xc0] sm:$0xff] %v1372
      %1451 = vst [vmem:[#allocation3 + $0xd8] sm:$0xff] %v1381
      %1452 = vst [vmem:[#allocation3 + $0xf0] sm:$0xff] %v1390
      %1453 = vst [vmem:[#allocation3 + $0x108] sm:$0xff] %v1399
      %1454 = vst [vmem:[#allocation3 + $0x120] sm:$0xff] %v1408
      %1455 = vst [vmem:[#allocation3 + $0x138] sm:$0xff] %v1417
      %1456 = vst [vmem:[#allocation3 + $0x150] sm:$0xff] %v1426
      %v1457 = vld [vmem:[#allocation2 + $0x8] sm:$0xf0]
      %v1458 = vld [vmem:[#allocation2 + $0x10] sm:$0xff]
      %v1459 = vld [vmem:[#allocation2 + $0x18] sm:$0xff]
      %v1460 = vld [vmem:[#allocation2 + $0x20] sm:$0xff]
      %v1461 = vld [vmem:[#allocation2 + $0x28] sm:$0xff]
      %v1462 = vld [vmem:[#allocation2 + $0x30] sm:$0xff]
      %v1463 = vld [vmem:[#allocation2 + $0x38] sm:$0xff]
      %v1464 = vld [vmem:[#allocation2 + $0x40] sm:$0xff]
      %v1465 = vld [vmem:[#allocation2 + $0x48] sm:$0xff]
      %v1466 = vld [vmem:[#allocation2 + $0x50] sm:$0xff]
      %v1467 = vld [vmem:[#allocation2 + $0x58] sm:$0xff]
      %v1468 = vld [vmem:[#allocation2 + $0x60] sm:$0xff]
      %v1469 = vld [vmem:[#allocation2 + $0x68] sm:$0xff]
      %v1470 = vld [vmem:[#allocation2 + $0x70] sm:$0xff]
      %v1471 = vld [vmem:[#allocation2 + $0x78] sm:$0xff]
      %v1472 = vld [vmem:[#allocation2 + $0x80] sm:$0xf]
      %vm1489 = vcmask 1043456
      %v1490 = vrot.slane %v1457, 4
      %v1491 = vrot.slane %v1458, 4
      %v1492 = vsel %vm1489, %v1490, %v1491
      %v1493 = vrot.slane %v1459, 4
      %v1494 = vsel %vm1489, %v1491, %v1493
      %v1495 = vrot.slane %v1460, 4
      %v1496 = vsel %vm1489, %v1493, %v1495
      %v1497 = vrot.slane %v1461, 4
      %v1498 = vsel %vm1489, %v1495, %v1497
      %v1499 = vrot.slane %v1462, 4
      %v1500 = vsel %vm1489, %v1497, %v1499
      %v1501 = vrot.slane %v1463, 4
      %v1502 = vsel %vm1489, %v1499, %v1501
      %v1503 = vrot.slane %v1464, 4
      %v1504 = vsel %vm1489, %v1501, %v1503
      %v1505 = vrot.slane %v1465, 4
      %v1506 = vsel %vm1489, %v1503, %v1505
      %v1507 = vrot.slane %v1466, 4
      %v1508 = vsel %vm1489, %v1505, %v1507
      %v1509 = vrot.slane %v1467, 4
      %v1510 = vsel %vm1489, %v1507, %v1509
      %v1511 = vrot.slane %v1468, 4
      %v1512 = vsel %vm1489, %v1509, %v1511
      %v1513 = vrot.slane %v1469, 4
      %v1514 = vsel %vm1489, %v1511, %v1513
      %v1515 = vrot.slane %v1470, 4
      %v1516 = vsel %vm1489, %v1513, %v1515
      %v1517 = vrot.slane %v1471, 4
      %v1518 = vsel %vm1489, %v1515, %v1517
      %v1519 = vrot.slane %v1472, 4
      %v1520 = vsel %vm1489, %v1517, %v1519
      %1536 = vst [vmem:[#allocation3 + $0x8] sm:$0xff] %v1492
      %1537 = vst [vmem:[#allocation3 + $0x20] sm:$0xff] %v1494
      %1538 = vst [vmem:[#allocation3 + $0x38] sm:$0xff] %v1496
      %1539 = vst [vmem:[#allocation3 + $0x50] sm:$0xff] %v1498
      %1540 = vst [vmem:[#allocation3 + $0x68] sm:$0xff] %v1500
      %1541 = vst [vmem:[#allocation3 + $0x80] sm:$0xff] %v1502
      %1542 = vst [vmem:[#allocation3 + $0x98] sm:$0xff] %v1504
      %1543 = vst [vmem:[#allocation3 + $0xb0] sm:$0xff] %v1506
      %1544 = vst [vmem:[#allocation3 + $0xc8] sm:$0xff] %v1508
      %1545 = vst [vmem:[#allocation3 + $0xe0] sm:$0xff] %v1510
      %1546 = vst [vmem:[#allocation3 + $0xf8] sm:$0xff] %v1512
      %1547 = vst [vmem:[#allocation3 + $0x110] sm:$0xff] %v1514
      %1548 = vst [vmem:[#allocation3 + $0x128] sm:$0xff] %v1516
      %1549 = vst [vmem:[#allocation3 + $0x140] sm:$0xff] %v1518
      %1550 = vst [vmem:[#allocation3 + $0x158] sm:$0xff] %v1520
      %v1551 = vld [vmem:[#allocation2 + $0x8] sm:$0xf0]
      %v1552 = vld [vmem:[#allocation2 + $0x10] sm:$0xff]
      %v1553 = vld [vmem:[#allocation2 + $0x18] sm:$0xff]
      %v1554 = vld [vmem:[#allocation2 + $0x20] sm:$0xff]
      %v1555 = vld [vmem:[#allocation2 + $0x28] sm:$0xff]
      %v1556 = vld [vmem:[#allocation2 + $0x30] sm:$0xff]
      %v1557 = vld [vmem:[#allocation2 + $0x38] sm:$0xff]
      %v1558 = vld [vmem:[#allocation2 + $0x40] sm:$0xff]
      %v1559 = vld [vmem:[#allocation2 + $0x48] sm:$0xff]
      %v1560 = vld [vmem:[#allocation2 + $0x50] sm:$0xff]
      %v1561 = vld [vmem:[#allocation2 + $0x58] sm:$0xff]
      %v1562 = vld [vmem:[#allocation2 + $0x60] sm:$0xff]
      %v1563 = vld [vmem:[#allocation2 + $0x68] sm:$0xff]
      %v1564 = vld [vmem:[#allocation2 + $0x70] sm:$0xff]
      %v1565 = vld [vmem:[#allocation2 + $0x78] sm:$0xff]
      %v1566 = vld [vmem:[#allocation2 + $0x80] sm:$0x1f]
      %vm1567 = vsmask.f32 3328
      %v1569 = vshrl.u32 %v1551, 16
      %v1571 = vrot.slane %v1569, 4
      %v1572 = vshll.u32 %v1551, 16
      %v1574 = vrot.slane %v1572, 5
      %v1575 = vor.u32 %v1571, %v1574
      %v1577 = vshrl.u32 %v1552, 16
      %v1579 = vrot.slane %v1577, 4
      %v1580 = vshll.u32 %v1552, 16
      %v1582 = vrot.slane %v1580, 5
      %v1583 = vor.u32 %v1579, %v1582
      %v1584 = vsel %vm1567, %v1575, %v1583
      %v1586 = vshrl.u32 %v1553, 16
      %v1588 = vrot.slane %v1586, 4
      %v1589 = vshll.u32 %v1553, 16
      %v1591 = vrot.slane %v1589, 5
      %v1592 = vor.u32 %v1588, %v1591
      %v1593 = vsel %vm1567, %v1583, %v1592
      %v1595 = vshrl.u32 %v1554, 16
      %v1597 = vrot.slane %v1595, 4
      %v1598 = vshll.u32 %v1554, 16
      %v1600 = vrot.slane %v1598, 5
      %v1601 = vor.u32 %v1597, %v1600
      %v1602 = vsel %vm1567, %v1592, %v1601
      %v1604 = vshrl.u32 %v1555, 16
      %v1606 = vrot.slane %v1604, 4
      %v1607 = vshll.u32 %v1555, 16
      %v1609 = vrot.slane %v1607, 5
      %v1610 = vor.u32 %v1606, %v1609
      %v1611 = vsel %vm1567, %v1601, %v1610
      %v1613 = vshrl.u32 %v1556, 16
      %v1615 = vrot.slane %v1613, 4
      %v1616 = vshll.u32 %v1556, 16
      %v1618 = vrot.slane %v1616, 5
      %v1619 = vor.u32 %v1615, %v1618
      %v1620 = vsel %vm1567, %v1610, %v1619
      %v1622 = vshrl.u32 %v1557, 16
      %v1624 = vrot.slane %v1622, 4
      %v1625 = vshll.u32 %v1557, 16
      %v1627 = vrot.slane %v1625, 5
      %v1628 = vor.u32 %v1624, %v1627
      %v1629 = vsel %vm1567, %v1619, %v1628
      %v1631 = vshrl.u32 %v1558, 16
      %v1633 = vrot.slane %v1631, 4
      %v1634 = vshll.u32 %v1558, 16
      %v1636 = vrot.slane %v1634, 5
      %v1637 = vor.u32 %v1633, %v1636
      %v1638 = vsel %vm1567, %v1628, %v1637
      %v1640 = vshrl.u32 %v1559, 16
      %v1642 = vrot.slane %v1640, 4
      %v1643 = vshll.u32 %v1559, 16
      %v1645 = vrot.slane %v1643, 5
      %v1646 = vor.u32 %v1642, %v1645
      %v1647 = vsel %vm1567, %v1637, %v1646
      %v1649 = vshrl.u32 %v1560, 16
      %v1651 = vrot.slane %v1649, 4
      %v1652 = vshll.u32 %v1560, 16
      %v1654 = vrot.slane %v1652, 5
      %v1655 = vor.u32 %v1651, %v1654
      %v1656 = vsel %vm1567, %v1646, %v1655
      %v1658 = vshrl.u32 %v1561, 16
      %v1660 = vrot.slane %v1658, 4
      %v1661 = vshll.u32 %v1561, 16
      %v1663 = vrot.slane %v1661, 5
      %v1664 = vor.u32 %v1660, %v1663
      %v1665 = vsel %vm1567, %v1655, %v1664
      %v1667 = vshrl.u32 %v1562, 16
      %v1669 = vrot.slane %v1667, 4
      %v1670 = vshll.u32 %v1562, 16
      %v1672 = vrot.slane %v1670, 5
      %v1673 = vor.u32 %v1669, %v1672
      %v1674 = vsel %vm1567, %v1664, %v1673
      %v1676 = vshrl.u32 %v1563, 16
      %v1678 = vrot.slane %v1676, 4
      %v1679 = vshll.u32 %v1563, 16
      %v1681 = vrot.slane %v1679, 5
      %v1682 = vor.u32 %v1678, %v1681
      %v1683 = vsel %vm1567, %v1673, %v1682
      %v1685 = vshrl.u32 %v1564, 16
      %v1687 = vrot.slane %v1685, 4
      %v1688 = vshll.u32 %v1564, 16
      %v1690 = vrot.slane %v1688, 5
      %v1691 = vor.u32 %v1687, %v1690
      %v1692 = vsel %vm1567, %v1682, %v1691
      %v1694 = vshrl.u32 %v1565, 16
      %v1696 = vrot.slane %v1694, 4
      %v1697 = vshll.u32 %v1565, 16
      %v1699 = vrot.slane %v1697, 5
      %v1700 = vor.u32 %v1696, %v1699
      %v1701 = vsel %vm1567, %v1691, %v1700
      %v1703 = vshrl.u32 %v1566, 16
      %v1705 = vrot.slane %v1703, 4
      %v1706 = vshll.u32 %v1566, 16
      %v1708 = vrot.slane %v1706, 5
      %v1709 = vor.u32 %v1705, %v1708
      %v1710 = vsel %vm1567, %v1700, %v1709
      %1726 = vst [vmem:[#allocation3 + $0x10] sm:$0xff] %v1584
      %1727 = vst [vmem:[#allocation3 + $0x28] sm:$0xff] %v1593
      %1728 = vst [vmem:[#allocation3 + $0x40] sm:$0xff] %v1602
      %1729 = vst [vmem:[#allocation3 + $0x58] sm:$0xff] %v1611
      %1730 = vst [vmem:[#allocation3 + $0x70] sm:$0xff] %v1620
      %1731 = vst [vmem:[#allocation3 + $0x88] sm:$0xff] %v1629
      %1732 = vst [vmem:[#allocation3 + $0xa0] sm:$0xff] %v1638
      %1733 = vst [vmem:[#allocation3 + $0xb8] sm:$0xff] %v1647
      %1734 = vst [vmem:[#allocation3 + $0xd0] sm:$0xff] %v1656
      %1735 = vst [vmem:[#allocation3 + $0xe8] sm:$0xff] %v1665
      %1736 = vst [vmem:[#allocation3 + $0x100] sm:$0xff] %v1674
      %1737 = vst [vmem:[#allocation3 + $0x118] sm:$0xff] %v1683
      %1738 = vst [vmem:[#allocation3 + $0x130] sm:$0xff] %v1692
      %1739 = vst [vmem:[#allocation3 + $0x148] sm:$0xff] %v1701
      %1740 = vst [vmem:[#allocation3 + $0x160] sm:$0xff] %v1710
      %v1741 = vld [vmem:[#allocation3] sm:$0xff]
      %v1742 = vld [vmem:[#allocation3 + $0x8] sm:$0xff]
      %v1743 = vld [vmem:[#allocation3 + $0x10] sm:$0xff]
      %v1744 = vld [vmem:[#allocation3 + $0x18] sm:$0xff]
      %v1745 = vld [vmem:[#allocation3 + $0x20] sm:$0xff]
      %v1746 = vld [vmem:[#allocation3 + $0x28] sm:$0xff]
      %v1747 = vld [vmem:[#allocation3 + $0x30] sm:$0xff]
      %v1748 = vld [vmem:[#allocation3 + $0x38] sm:$0xff]
      %v1749 = vld [vmem:[#allocation3 + $0x40] sm:$0xff]
      %v1750 = vld [vmem:[#allocation3 + $0x48] sm:$0xff]
      %v1751 = vld [vmem:[#allocation3 + $0x50] sm:$0xff]
      %v1752 = vld [vmem:[#allocation3 + $0x58] sm:$0xff]
      %v1753 = vld [vmem:[#allocation3 + $0x60] sm:$0xff]
      %v1754 = vld [vmem:[#allocation3 + $0x68] sm:$0xff]
      %v1755 = vld [vmem:[#allocation3 + $0x70] sm:$0xff]
      %v1756 = vld [vmem:[#allocation3 + $0x78] sm:$0xff]
      %v1757 = vld [vmem:[#allocation3 + $0x80] sm:$0xff]
      %v1758 = vld [vmem:[#allocation3 + $0x88] sm:$0xff]
      %v1759 = vld [vmem:[#allocation3 + $0x90] sm:$0xff]
      %v1760 = vld [vmem:[#allocation3 + $0x98] sm:$0xff]
      %v1761 = vld [vmem:[#allocation3 + $0xa0] sm:$0xff]
      %v1762 = vld [vmem:[#allocation3 + $0xa8] sm:$0xff]
      %v1763 = vld [vmem:[#allocation3 + $0xb0] sm:$0xff]
      %v1764 = vld [vmem:[#allocation3 + $0xb8] sm:$0xff]
      %v1765 = vld [vmem:[#allocation3 + $0xc0] sm:$0xff]
      %v1766 = vld [vmem:[#allocation3 + $0xc8] sm:$0xff]
      %v1767 = vld [vmem:[#allocation3 + $0xd0] sm:$0xff]
      %v1768 = vld [vmem:[#allocation3 + $0xd8] sm:$0xff]
      %v1769 = vld [vmem:[#allocation3 + $0xe0] sm:$0xff]
      %v1770 = vld [vmem:[#allocation3 + $0xe8] sm:$0xff]
      %v1771 = vld [vmem:[#allocation3 + $0xf0] sm:$0xff]
      %v1772 = vld [vmem:[#allocation3 + $0xf8] sm:$0xff]
      %v1773 = vld [vmem:[#allocation3 + $0x100] sm:$0xff]
      %v1774 = vld [vmem:[#allocation3 + $0x108] sm:$0xff]
      %v1775 = vld [vmem:[#allocation3 + $0x110] sm:$0xff]
      %v1776 = vld [vmem:[#allocation3 + $0x118] sm:$0xff]
      %v1777 = vld [vmem:[%s5] sm:$0xf]
      %v1778 = vld [vmem:[%s5 + $0x4] sm:$0xf]
      %v1779 = vld [vmem:[%s5 + $0x8] sm:$0xf]
      %v1780 = vld [vmem:[%s5 + $0xc] sm:$0xf]
      %v1781 = vld [vmem:[%s5 + $0x10] sm:$0xf]
      %v1782 = vld [vmem:[%s5 + $0x14] sm:$0xf]
      %v1783 = vld [vmem:[%s5 + $0x18] sm:$0xf]
      %v1784 = vld [vmem:[%s5 + $0x1c] sm:$0xf]
      %v1785 = vld [vmem:[%s5 + $0x20] sm:$0xf]
      %v1786 = vld [vmem:[%s5 + $0x24] sm:$0xf]
      %v1787 = vld [vmem:[%s5 + $0x28] sm:$0xf]
      %v1788 = vld [vmem:[%s5 + $0x2c] sm:$0xf]
      %v1789 = vld [vmem:[%s5 + $0x30] sm:$0xf]
      %v1790 = vld [vmem:[%s5 + $0x34] sm:$0xf]
      %v1791 = vld [vmem:[%s5 + $0x38] sm:$0xf]
      %v1792 = vld [vmem:[%s5 + $0x3c] sm:$0xf]
      %v1793 = vld [vmem:[%s5 + $0x40] sm:$0xf]
      %v1794 = vld [vmem:[%s5 + $0x44] sm:$0xf]
      %v1795 = vld [vmem:[%s5 + $0x48] sm:$0xf]
      %v1796 = vld [vmem:[%s5 + $0x4c] sm:$0xf]
      %v1797 = vld [vmem:[%s5 + $0x50] sm:$0xf]
      %v1798 = vld [vmem:[%s5 + $0x54] sm:$0xf]
      %v1799 = vld [vmem:[%s5 + $0x58] sm:$0xf]
      %v1800 = vld [vmem:[%s5 + $0x5c] sm:$0xf]
      %v1801 = vld [vmem:[%s5 + $0x60] sm:$0xf]
      %v1802 = vld [vmem:[%s5 + $0x64] sm:$0xf]
      %v1803 = vld [vmem:[%s5 + $0x68] sm:$0xf]
      %v1804 = vld [vmem:[%s5 + $0x6c] sm:$0xf]
      %v1805 = vld [vmem:[%s5 + $0x70] sm:$0xf]
      %v1806 = vld [vmem:[%s5 + $0x74] sm:$0xf]
      %v1807 = vld [vmem:[%s5 + $0x78] sm:$0xf]
      %v1808 = vld [vmem:[%s5 + $0x7c] sm:$0xf]
      %v1809 = vld [vmem:[%s5 + $0x80] sm:$0xf]
      %v1810 = vld [vmem:[%s5 + $0x84] sm:$0xf]
      %v1811 = vld [vmem:[%s5 + $0x88] sm:$0xf]
      %v1812 = vld [vmem:[%s5 + $0x8c] sm:$0xf]
      %v1813 = vld [vmem:[%s5 + $0x90] sm:$0xf]
      %v1814 = vld [vmem:[%s5 + $0x94] sm:$0xf]
      %v1815 = vld [vmem:[%s5 + $0x98] sm:$0xf]
      %v1816 = vld [vmem:[%s5 + $0x9c] sm:$0xf]
      %v1817 = vld [vmem:[%s5 + $0xa0] sm:$0xf]
      %v1818 = vld [vmem:[%s5 + $0xa4] sm:$0xf]
      %v1819 = vld [vmem:[%s5 + $0xa8] sm:$0xf]
      %v1820 = vld [vmem:[%s5 + $0xac] sm:$0xf]
      %v1821 = vld [vmem:[%s5 + $0xb0] sm:$0xf]
      %v1822 = vld [vmem:[%s5 + $0xb4] sm:$0xf]
      %v1823 = vld [vmem:[%s5 + $0xb8] sm:$0xf]
      %v1824 = vld [vmem:[%s5 + $0xbc] sm:$0xf]
      %v1825 = vld [vmem:[#allocation3 + $0x18] sm:$0xf0]
      %v1826 = vld [vmem:[#allocation3 + $0x20] sm:$0xf0]
      %v1827 = vld [vmem:[#allocation3 + $0x28] sm:$0xf0]
      %v1828 = vld [vmem:[#allocation3 + $0x120] sm:$0xff]
      %v1829 = vld [vmem:[#allocation3 + $0x128] sm:$0xff]
      %v1830 = vld [vmem:[#allocation3 + $0x130] sm:$0xff]
      %v1831 = vld [vmem:[#allocation3 + $0x138] sm:$0xf]
      %v1832 = vld [vmem:[#allocation3 + $0x140] sm:$0xf]
      %v1833 = vld [vmem:[#allocation3 + $0x148] sm:$0xf]
      %s1834 = scalar_lea.vmem %s5, 192
      %v1835 = vld [vmem:[%s1834] sm:$0xf]
      %v1836 = vld [vmem:[%s1834 + $0x4] sm:$0xf]
      %v1837 = vld [vmem:[%s1834 + $0x8] sm:$0xf]
      %v1838 = vld [vmem:[%s1834 + $0xc] sm:$0xf]
      %v1839 = vld [vmem:[%s1834 + $0x10] sm:$0xf]
      %v1840 = vld [vmem:[%s1834 + $0x14] sm:$0xf]
      %v1841 = vld [vmem:[%s1834 + $0x18] sm:$0xf]
      %v1842 = vld [vmem:[%s1834 + $0x1c] sm:$0xf]
      %v1843 = vld [vmem:[%s1834 + $0x20] sm:$0xf]
      %v1844 = vld [vmem:[%s1834 + $0x24] sm:$0xf]
      %v1845 = vld [vmem:[%s1834 + $0x28] sm:$0xf]
      %v1846 = vld [vmem:[%s1834 + $0x2c] sm:$0xf]
      %v1847 = vld [vmem:[%s1834 + $0x30] sm:$0xf]
      %v1848 = vld [vmem:[%s1834 + $0x34] sm:$0xf]
      %v1849 = vld [vmem:[%s1834 + $0x38] sm:$0xf]
      %v1850 = vld [vmem:[%s1834 + $0x3c] sm:$0xf]
      %v1851 = vld [vmem:[%s1834 + $0x40] sm:$0xf]
      %v1852 = vld [vmem:[%s1834 + $0x44] sm:$0xf]
      %v1853 = vld [vmem:[%s1834 + $0x48] sm:$0xf]
      %v1854 = vld [vmem:[%s1834 + $0x4c] sm:$0xf]
      %v1855 = vld [vmem:[%s1834 + $0x50] sm:$0xf]
      %v1856 = vld [vmem:[%s1834 + $0x54] sm:$0xf]
      %v1857 = vld [vmem:[%s1834 + $0x58] sm:$0xf]
      %v1858 = vld [vmem:[%s1834 + $0x5c] sm:$0xf]
      %v1859 = vld [vmem:[%s1834 + $0x60] sm:$0xf]
      %v1860 = vld [vmem:[%s1834 + $0x64] sm:$0xf]
      %v1861 = vld [vmem:[%s1834 + $0x68] sm:$0xf]
      %v1862 = vld [vmem:[%s1834 + $0x6c] sm:$0xf]
      %v1863 = vld [vmem:[%s1834 + $0x70] sm:$0xf]
      %v1864 = vld [vmem:[%s1834 + $0x74] sm:$0xf]
      %v1865 = vld [vmem:[%s1834 + $0x78] sm:$0xf]
      %v1866 = vld [vmem:[%s1834 + $0x7c] sm:$0xf]
      %v1867 = vld [vmem:[%s1834 + $0x80] sm:$0xf]
      %v1868 = vld [vmem:[%s1834 + $0x84] sm:$0xf]
      %v1869 = vld [vmem:[%s1834 + $0x88] sm:$0xf]
      %v1870 = vld [vmem:[%s1834 + $0x8c] sm:$0xf]
      %v1871 = vld [vmem:[%s1834 + $0x90] sm:$0xf]
      %v1872 = vld [vmem:[%s1834 + $0x94] sm:$0xf]
      %v1873 = vld [vmem:[%s1834 + $0x98] sm:$0xf]
      %v1874 = vld [vmem:[%s1834 + $0x9c] sm:$0xf]
      %v1875 = vld [vmem:[%s1834 + $0xa0] sm:$0xf]
      %v1876 = vld [vmem:[%s1834 + $0xa4] sm:$0xf]
      %v1877 = vld [vmem:[%s1834 + $0xa8] sm:$0xf]
      %v1878 = vld [vmem:[%s1834 + $0xac] sm:$0xf]
      %v1879 = vld [vmem:[%s1834 + $0xb0] sm:$0xf]
      %v1880 = vld [vmem:[%s1834 + $0xb4] sm:$0xf]
      %v1881 = vld [vmem:[%s1834 + $0xb8] sm:$0xf]
      %v1882 = vld [vmem:[%s1834 + $0xbc] sm:$0xf]
      %v1922 = vrot.slane %v1825, 4
      %v1923 = vrot.slane %v1747, 4
      %v1924 = vsel %vm1489, %v1922, %v1923
      %v1925 = vrot.slane %v1826, 4
      %v1926 = vrot.slane %v1748, 4
      %v1927 = vsel %vm1489, %v1925, %v1926
      %v1928 = vrot.slane %v1827, 4
      %v1929 = vrot.slane %v1749, 4
      %v1930 = vsel %vm1489, %v1928, %v1929
      %v1931 = vrot.slane %v1750, 4
      %v1932 = vsel %vm1489, %v1923, %v1931
      %v1933 = vrot.slane %v1751, 4
      %v1934 = vsel %vm1489, %v1926, %v1933
      %v1935 = vrot.slane %v1752, 4
      %v1936 = vsel %vm1489, %v1929, %v1935
      %v1937 = vrot.slane %v1753, 4
      %v1938 = vsel %vm1489, %v1931, %v1937
      %v1939 = vrot.slane %v1754, 4
      %v1940 = vsel %vm1489, %v1933, %v1939
      %v1941 = vrot.slane %v1755, 4
      %v1942 = vsel %vm1489, %v1935, %v1941
      %v1943 = vrot.slane %v1756, 4
      %v1944 = vsel %vm1489, %v1937, %v1943
      %v1945 = vrot.slane %v1757, 4
      %v1946 = vsel %vm1489, %v1939, %v1945
      %v1947 = vrot.slane %v1758, 4
      %v1948 = vsel %vm1489, %v1941, %v1947
      %v1949 = vrot.slane %v1759, 4
      %v1950 = vsel %vm1489, %v1943, %v1949
      %v1951 = vrot.slane %v1760, 4
      %v1952 = vsel %vm1489, %v1945, %v1951
      %v1953 = vrot.slane %v1761, 4
      %v1954 = vsel %vm1489, %v1947, %v1953
      %v1955 = vrot.slane %v1762, 4
      %v1956 = vsel %vm1489, %v1949, %v1955
      %v1957 = vrot.slane %v1763, 4
      %v1958 = vsel %vm1489, %v1951, %v1957
      %v1959 = vrot.slane %v1764, 4
      %v1960 = vsel %vm1489, %v1953, %v1959
      %v1961 = vrot.slane %v1765, 4
      %v1962 = vsel %vm1489, %v1955, %v1961
      %v1963 = vrot.slane %v1766, 4
      %v1964 = vsel %vm1489, %v1957, %v1963
      %v1965 = vrot.slane %v1767, 4
      %v1966 = vsel %vm1489, %v1959, %v1965
      %v1967 = vrot.slane %v1768, 4
      %v1968 = vsel %vm1489, %v1961, %v1967
      %v1969 = vrot.slane %v1769, 4
      %v1970 = vsel %vm1489, %v1963, %v1969
      %v1971 = vrot.slane %v1770, 4
      %v1972 = vsel %vm1489, %v1965, %v1971
      %v1973 = vrot.slane %v1771, 4
      %v1974 = vsel %vm1489, %v1967, %v1973
      %v1975 = vrot.slane %v1772, 4
      %v1976 = vsel %vm1489, %v1969, %v1975
      %v1977 = vrot.slane %v1773, 4
      %v1978 = vsel %vm1489, %v1971, %v1977
      %v1979 = vrot.slane %v1774, 4
      %v1980 = vsel %vm1489, %v1973, %v1979
      %v1981 = vrot.slane %v1775, 4
      %v1982 = vsel %vm1489, %v1975, %v1981
      %v1983 = vrot.slane %v1776, 4
      %v1984 = vsel %vm1489, %v1977, %v1983
      %v1985 = vrot.slane %v1828, 4
      %v1986 = vsel %vm1489, %v1979, %v1985
      %v1987 = vrot.slane %v1829, 4
      %v1988 = vsel %vm1489, %v1981, %v1987
      %v1989 = vrot.slane %v1830, 4
      %v1990 = vsel %vm1489, %v1983, %v1989
      %v1991 = vrot.slane %v1831, 4
      %v1992 = vsel %vm1489, %v1985, %v1991
      %v1993 = vrot.slane %v1832, 4
      %v1994 = vsel %vm1489, %v1987, %v1993
      %v1995 = vrot.slane %v1833, 4
      %v1996 = vsel %vm1489, %v1989, %v1995
      %v2081 = vunpack.c.l.b16 %v1835
      %v2082 = vunpack.c.l.b16 %v1836
      %v2083 = vunpack.c.l.b16 %v1837
      %v2084 = vunpack.c.l.b16 %v1838
      %v2085 = vunpack.c.l.b16 %v1839
      %v2086 = vunpack.c.l.b16 %v1840
      %v2087 = vunpack.c.l.b16 %v1841
      %v2088 = vunpack.c.l.b16 %v1842
      %v2089 = vunpack.c.l.b16 %v1843
      %v2090 = vunpack.c.l.b16 %v1844
      %v2091 = vunpack.c.l.b16 %v1845
      %v2092 = vunpack.c.l.b16 %v1846
      %v2093 = vunpack.c.l.b16 %v1847
      %v2094 = vunpack.c.l.b16 %v1848
      %v2095 = vunpack.c.l.b16 %v1849
      %v2096 = vunpack.c.l.b16 %v1850
      %v2097 = vunpack.c.l.b16 %v1851
      %v2098 = vunpack.c.l.b16 %v1852
      %v2099 = vunpack.c.l.b16 %v1853
      %v2100 = vunpack.c.l.b16 %v1854
      %v2101 = vunpack.c.l.b16 %v1855
      %v2102 = vunpack.c.l.b16 %v1856
      %v2103 = vunpack.c.l.b16 %v1857
      %v2104 = vunpack.c.l.b16 %v1858
      %v2105 = vunpack.c.l.b16 %v1859
      %v2106 = vunpack.c.l.b16 %v1860
      %v2107 = vunpack.c.l.b16 %v1861
      %v2108 = vunpack.c.l.b16 %v1862
      %v2109 = vunpack.c.l.b16 %v1863
      %v2110 = vunpack.c.l.b16 %v1864
      %v2111 = vunpack.c.l.b16 %v1865
      %v2112 = vunpack.c.l.b16 %v1866
      %v2113 = vunpack.c.l.b16 %v1867
      %v2114 = vunpack.c.l.b16 %v1868
      %v2115 = vunpack.c.l.b16 %v1869
      %v2116 = vunpack.c.l.b16 %v1870
      %v2117 = vunpack.c.l.b16 %v1871
      %v2118 = vunpack.c.l.b16 %v1872
      %v2119 = vunpack.c.l.b16 %v1873
      %v2120 = vunpack.c.l.b16 %v1874
      %v2121 = vunpack.c.l.b16 %v1875
      %v2122 = vunpack.c.l.b16 %v1876
      %v2123 = vunpack.c.l.b16 %v1877
      %v2124 = vunpack.c.l.b16 %v1878
      %v2125 = vunpack.c.l.b16 %v1879
      %v2126 = vunpack.c.l.b16 %v1880
      %v2127 = vunpack.c.l.b16 %v1881
      %v2128 = vunpack.c.l.b16 %v1882
      %v2129 = vpack.c.b16 %v2082, %v2081
      %v2130 = vpack.c.b16 %v2084, %v2083
      %v2131 = vpack.c.b16 %v2086, %v2085
      %v2132 = vpack.c.b16 %v2088, %v2087
      %v2133 = vpack.c.b16 %v2090, %v2089
      %v2134 = vpack.c.b16 %v2092, %v2091
      %v2135 = vpack.c.b16 %v2094, %v2093
      %v2136 = vpack.c.b16 %v2096, %v2095
      %v2137 = vpack.c.b16 %v2098, %v2097
      %v2138 = vpack.c.b16 %v2100, %v2099
      %v2139 = vpack.c.b16 %v2102, %v2101
      %v2140 = vpack.c.b16 %v2104, %v2103
      %v2141 = vpack.c.b16 %v2106, %v2105
      %v2142 = vpack.c.b16 %v2108, %v2107
      %v2143 = vpack.c.b16 %v2110, %v2109
      %v2144 = vpack.c.b16 %v2112, %v2111
      %v2145 = vpack.c.b16 %v2114, %v2113
      %v2146 = vpack.c.b16 %v2116, %v2115
      %v2147 = vpack.c.b16 %v2118, %v2117
      %v2148 = vpack.c.b16 %v2120, %v2119
      %v2149 = vpack.c.b16 %v2122, %v2121
      %v2150 = vpack.c.b16 %v2124, %v2123
      %v2151 = vpack.c.b16 %v2126, %v2125
      %v2152 = vpack.c.b16 %v2128, %v2127
      %2177 = vmatprep.subr.bf16.mxu0 0
      %2178 = vmatpush1.bf16.msra.mxu0 %v2129
      %2179 = vmatprep.subr.bf16.mxu0 0
      %2180 = vmatpush1.bf16.msra.mxu0 %v2130
      %2181 = vmatprep.subr.bf16.mxu0 0
      %2182 = vmatpush1.bf16.msra.mxu0 %v2131
      %2183 = vmatprep.subr.bf16.mxu0 0
      %2184 = vmatpush1.bf16.msra.mxu0 %v2132
      %2185 = vmatprep.subr.bf16.mxu0 0
      %2186 = vmatpush1.bf16.msra.mxu0 %v2133
      %2187 = vmatprep.subr.bf16.mxu0 0
      %2188 = vmatpush1.bf16.msra.mxu0 %v2134
      %2189 = vmatprep.subr.bf16.mxu0 0
      %2190 = vmatpush1.bf16.msra.mxu0 %v2135
      %2191 = vmatprep.subr.bf16.mxu0 0
      %2192 = vmatpush1.bf16.msra.mxu0 %v2136
      %2193 = vmatprep.subr.bf16.mxu0 0
      %2194 = vmatpush1.bf16.msra.mxu0 %v2137
      %2195 = vmatprep.subr.bf16.mxu0 0
      %2196 = vmatpush1.bf16.msra.mxu0 %v2138
      %2197 = vmatprep.subr.bf16.mxu0 0
      %2198 = vmatpush1.bf16.msra.mxu0 %v2139
      %2199 = vmatprep.subr.bf16.mxu0 0
      %2200 = vmatpush1.bf16.msra.mxu0 %v2140
      %2201 = vmatprep.subr.bf16.mxu0 0
      %2202 = vmatpush1.bf16.msra.mxu0 %v2141
      %2203 = vmatprep.subr.bf16.mxu0 0
      %2204 = vmatpush1.bf16.msra.mxu0 %v2142
      %2205 = vmatprep.subr.bf16.mxu0 0
      %2206 = vmatpush1.bf16.msra.mxu0 %v2143
      %2207 = vmatprep.subr.bf16.mxu0 0
      %2208 = vmatpush1.bf16.msra.mxu0 %v2144
      %2209 = vmatprep.mubr.bf16.mxu0 %v1927
      %2210 = vmatmul.mubr.bf16.gmra.mrb[0].mxu0 %v1924
      %v2211 = vpop.f32.mrb[0].mxu0
      %v2212 = vadd.f32 0.0, %v2211
      %v2213 = vpop.f32.mrb[0].mxu0
      %v2214 = vpop.f32.mrb[0].mxu0
      %v2215 = vadd.f32 0.0, %v2214
      %v2216 = vpop.f32.mrb[0].mxu0
      %2217 = vmatprep.mubr.bf16.mxu0 %v1934
      %2218 = vmatmul.mubr.bf16.gmra.mrb[0].mxu0 %v1932
      %v2219 = vpop.f32.mrb[0].mxu0
      %v2220 = vadd.f32 0.0, %v2219
      %v2221 = vpop.f32.mrb[0].mxu0
      %v2222 = vpop.f32.mrb[0].mxu0
      %v2223 = vadd.f32 0.0, %v2222
      %v2224 = vpop.f32.mrb[0].mxu0
      %2225 = vmatprep.mubr.bf16.mxu0 %v1940
      %2226 = vmatmul.mubr.bf16.gmra.mrb[0].mxu0 %v1938
      %v2227 = vpop.f32.mrb[0].mxu0
      %v2228 = vadd.f32 0.0, %v2227
      %v2229 = vpop.f32.mrb[0].mxu0
      %v2230 = vpop.f32.mrb[0].mxu0
      %v2231 = vadd.f32 0.0, %v2230
      %v2232 = vpop.f32.mrb[0].mxu0
      %2233 = vmatprep.mubr.bf16.mxu0 %v1946
      %2234 = vmatmul.mubr.bf16.gmra.mrb[0].mxu0 %v1944
      %v2235 = vpop.f32.mrb[0].mxu0
      %v2236 = vadd.f32 0.0, %v2235
      %v2237 = vpop.f32.mrb[0].mxu0
      %v2238 = vpop.f32.mrb[0].mxu0
      %v2239 = vadd.f32 0.0, %v2238
      %v2240 = vpop.f32.mrb[0].mxu0
      %2241 = vmatprep.mubr.bf16.mxu0 %v1952
      %2242 = vmatmul.mubr.bf16.gmra.mrb[0].mxu0 %v1950
      %v2243 = vpop.f32.mrb[0].mxu0
      %v2244 = vadd.f32 0.0, %v2243
      %v2245 = vpop.f32.mrb[0].mxu0
      %v2246 = vpop.f32.mrb[0].mxu0
      %v2247 = vadd.f32 0.0, %v2246
      %v2248 = vpop.f32.mrb[0].mxu0
      %2249 = vmatprep.mubr.bf16.mxu0 %v1958
      %2250 = vmatmul.mubr.bf16.gmra.mrb[0].mxu0 %v1956
      %v2251 = vpop.f32.mrb[0].mxu0
      %v2252 = vadd.f32 0.0, %v2251
      %v2253 = vpop.f32.mrb[0].mxu0
      %v2254 = vpop.f32.mrb[0].mxu0
      %v2255 = vadd.f32 0.0, %v2254
      %v2256 = vpop.f32.mrb[0].mxu0
      %2257 = vmatprep.mubr.bf16.mxu0 %v1964
      %2258 = vmatmul.mubr.bf16.gmra.mrb[0].mxu0 %v1962
      %v2259 = vpop.f32.mrb[0].mxu0
      %v2260 = vadd.f32 0.0, %v2259
      %v2261 = vpop.f32.mrb[0].mxu0
      %v2262 = vpop.f32.mrb[0].mxu0
      %v2263 = vadd.f32 0.0, %v2262
      %v2264 = vpop.f32.mrb[0].mxu0
      %2265 = vmatprep.mubr.bf16.mxu0 %v1970
      %2266 = vmatmul.mubr.bf16.gmra.mrb[0].mxu0 %v1968
      %v2267 = vpop.f32.mrb[0].mxu0
      %v2268 = vadd.f32 0.0, %v2267
      %v2269 = vpop.f32.mrb[0].mxu0
      %v2270 = vpop.f32.mrb[0].mxu0
      %v2271 = vadd.f32 0.0, %v2270
      %v2272 = vpop.f32.mrb[0].mxu0
      %2273 = vmatprep.mubr.bf16.mxu0 %v1976
      %2274 = vmatmul.mubr.bf16.gmra.mrb[0].mxu0 %v1974
      %v2275 = vpop.f32.mrb[0].mxu0
      %v2276 = vadd.f32 0.0, %v2275
      %v2277 = vpop.f32.mrb[0].mxu0
      %v2278 = vpop.f32.mrb[0].mxu0
      %v2279 = vadd.f32 0.0, %v2278
      %v2280 = vpop.f32.mrb[0].mxu0
      %2281 = vmatprep.mubr.bf16.mxu0 %v1982
      %2282 = vmatmul.mubr.bf16.gmra.mrb[0].mxu0 %v1980
      %v2283 = vpop.f32.mrb[0].mxu0
      %v2284 = vadd.f32 0.0, %v2283
      %v2285 = vpop.f32.mrb[0].mxu0
      %v2286 = vpop.f32.mrb[0].mxu0
      %v2287 = vadd.f32 0.0, %v2286
      %v2288 = vpop.f32.mrb[0].mxu0
      %2289 = vmatprep.mubr.bf16.mxu0 %v1988
      %2290 = vmatmul.mubr.bf16.gmra.mrb[0].mxu0 %v1986
      %v2291 = vpop.f32.mrb[0].mxu0
      %v2292 = vadd.f32 0.0, %v2291
      %v2293 = vpop.f32.mrb[0].mxu0
      %v2294 = vpop.f32.mrb[0].mxu0
      %v2295 = vadd.f32 0.0, %v2294
      %v2296 = vpop.f32.mrb[0].mxu0
      %2297 = vmatprep.mubr.bf16.mxu0 %v1994
      %2298 = vmatmul.mubr.bf16.gmra.mrb[0].mxu0 %v1992
      %v2299 = vpop.f32.mrb[0].mxu0
      %v2300 = vadd.f32 0.0, %v2299
      %v2301 = vpop.f32.mrb[0].mxu0
      %v2302 = vpop.f32.mrb[0].mxu0
      %v2303 = vadd.f32 0.0, %v2302
      %v2304 = vpop.f32.mrb[0].mxu0
      %2305 = vdwg.mxu0
      %2306 = vmatprep.subr.bf16.mxu0 0
      %2307 = vmatpush1.bf16.msra.mxu0 %v2145
      %2308 = vmatprep.subr.bf16.mxu0 0
      %2309 = vmatpush1.bf16.msra.mxu0 %v2146
      %2310 = vmatprep.subr.bf16.mxu0 0
      %2311 = vmatpush1.bf16.msra.mxu0 %v2147
      %2312 = vmatprep.subr.bf16.mxu0 0
      %2313 = vmatpush1.bf16.msra.mxu0 %v2148
      %2314 = vmatprep.subr.bf16.mxu0 0
      %2315 = vmatpush1.bf16.msra.mxu0 %v2149
      %2316 = vmatprep.subr.bf16.mxu0 0
      %2317 = vmatpush1.bf16.msra.mxu0 %v2150
      %2318 = vmatprep.subr.bf16.mxu0 0
      %2319 = vmatpush1.bf16.msra.mxu0 %v2151
      %2320 = vmatprep.subr.bf16.mxu0 0
      %2321 = vmatpush1.bf16.msra.mxu0 %v2152
      %2322 = vmatprep.subr.bf16.mxu0 0
      %2323 = vmatpush1.bf16.msra.mxu0 0
      %2324 = vmatprep.subr.bf16.mxu0 0
      %2325 = vmatpush1.bf16.msra.mxu0 0
      %2326 = vmatprep.subr.bf16.mxu0 0
      %2327 = vmatpush1.bf16.msra.mxu0 0
      %2328 = vmatprep.subr.bf16.mxu0 0
      %2329 = vmatpush1.bf16.msra.mxu0 0
      %2330 = vmatprep.subr.bf16.mxu0 0
      %2331 = vmatpush1.bf16.msra.mxu0 0
      %2332 = vmatprep.subr.bf16.mxu0 0
      %2333 = vmatpush1.bf16.msra.mxu0 0
      %2334 = vmatprep.subr.bf16.mxu0 0
      %2335 = vmatpush1.bf16.msra.mxu0 0
      %2336 = vmatprep.subr.bf16.mxu0 0
      %2337 = vmatpush1.bf16.msra.mxu0 0
      %2338 = vmatprep.mubr.bf16.mxu0 0
      %2339 = vmatmul.mubr.bf16.gmra.mrb[0].mxu0 %v1930
      %v2340 = vpop.f32.mrb[0].mxu0
      %v2341 = vadd.f32 %v2212, %v2340
      %v2342 = vpop.f32.mrb[0].mxu0
      %v2343 = vpop.f32.mrb[0].mxu0
      %v2344 = vadd.f32 %v2215, %v2343
      %v2345 = vpop.f32.mrb[0].mxu0
      %2346 = vmatprep.mubr.bf16.mxu0 0
      %2347 = vmatmul.mubr.bf16.gmra.mrb[0].mxu0 %v1936
      %v2348 = vpop.f32.mrb[0].mxu0
      %v2349 = vadd.f32 %v2220, %v2348
      %v2350 = vpop.f32.mrb[0].mxu0
      %v2351 = vpop.f32.mrb[0].mxu0
      %v2352 = vadd.f32 %v2223, %v2351
      %v2353 = vpop.f32.mrb[0].mxu0
      %2354 = vmatprep.mubr.bf16.mxu0 0
      %2355 = vmatmul.mubr.bf16.gmra.mrb[0].mxu0 %v1942
      %v2356 = vpop.f32.mrb[0].mxu0
      %v2357 = vadd.f32 %v2228, %v2356
      %v2358 = vpop.f32.mrb[0].mxu0
      %v2359 = vpop.f32.mrb[0].mxu0
      %v2360 = vadd.f32 %v2231, %v2359
      %v2361 = vpop.f32.mrb[0].mxu0
      %2362 = vmatprep.mubr.bf16.mxu0 0
      %2363 = vmatmul.mubr.bf16.gmra.mrb[0].mxu0 %v1948
      %v2364 = vpop.f32.mrb[0].mxu0
      %v2365 = vadd.f32 %v2236, %v2364
      %v2366 = vpop.f32.mrb[0].mxu0
      %v2367 = vpop.f32.mrb[0].mxu0
      %v2368 = vadd.f32 %v2239, %v2367
      %v2369 = vpop.f32.mrb[0].mxu0
      %2370 = vmatprep.mubr.bf16.mxu0 0
      %2371 = vmatmul.mubr.bf16.gmra.mrb[0].mxu0 %v1954
      %v2372 = vpop.f32.mrb[0].mxu0
      %v2373 = vadd.f32 %v2244, %v2372
      %v2374 = vpop.f32.mrb[0].mxu0
      %v2375 = vpop.f32.mrb[0].mxu0
      %v2376 = vadd.f32 %v2247, %v2375
      %v2377 = vpop.f32.mrb[0].mxu0
      %2378 = vmatprep.mubr.bf16.mxu0 0
      %2379 = vmatmul.mubr.bf16.gmra.mrb[0].mxu0 %v1960
      %v2380 = vpop.f32.mrb[0].mxu0
      %v2381 = vadd.f32 %v2252, %v2380
      %v2382 = vpop.f32.mrb[0].mxu0
      %v2383 = vpop.f32.mrb[0].mxu0
      %v2384 = vadd.f32 %v2255, %v2383
      %v2385 = vpop.f32.mrb[0].mxu0
      %2386 = vmatprep.mubr.bf16.mxu0 0
      %2387 = vmatmul.mubr.bf16.gmra.mrb[0].mxu0 %v1966
      %v2388 = vpop.f32.mrb[0].mxu0
      %v2389 = vadd.f32 %v2260, %v2388
      %v2390 = vpop.f32.mrb[0].mxu0
      %v2391 = vpop.f32.mrb[0].mxu0
      %v2392 = vadd.f32 %v2263, %v2391
      %v2393 = vpop.f32.mrb[0].mxu0
      %2394 = vmatprep.mubr.bf16.mxu0 0
      %2395 = vmatmul.mubr.bf16.gmra.mrb[0].mxu0 %v1972
      %v2396 = vpop.f32.mrb[0].mxu0
      %v2397 = vadd.f32 %v2268, %v2396
      %v2398 = vpop.f32.mrb[0].mxu0
      %v2399 = vpop.f32.mrb[0].mxu0
      %v2400 = vadd.f32 %v2271, %v2399
      %v2401 = vpop.f32.mrb[0].mxu0
      %2402 = vmatprep.mubr.bf16.mxu0 0
      %2403 = vmatmul.mubr.bf16.gmra.mrb[0].mxu0 %v1978
      %v2404 = vpop.f32.mrb[0].mxu0
      %v2405 = vadd.f32 %v2276, %v2404
      %v2406 = vpop.f32.mrb[0].mxu0
      %v2407 = vpop.f32.mrb[0].mxu0
      %v2408 = vadd.f32 %v2279, %v2407
      %v2409 = vpop.f32.mrb[0].mxu0
      %2410 = vmatprep.mubr.bf16.mxu0 0
      %2411 = vmatmul.mubr.bf16.gmra.mrb[0].mxu0 %v1984
      %v2412 = vpop.f32.mrb[0].mxu0
      %v2413 = vadd.f32 %v2284, %v2412
      %v2414 = vpop.f32.mrb[0].mxu0
      %v2415 = vpop.f32.mrb[0].mxu0
      %v2416 = vadd.f32 %v2287, %v2415
      %v2417 = vpop.f32.mrb[0].mxu0
      %2418 = vmatprep.mubr.bf16.mxu0 0
      %2419 = vmatmul.mubr.bf16.gmra.mrb[0].mxu0 %v1990
      %v2420 = vpop.f32.mrb[0].mxu0
      %v2421 = vadd.f32 %v2292, %v2420
      %v2422 = vpop.f32.mrb[0].mxu0
      %v2423 = vpop.f32.mrb[0].mxu0
      %v2424 = vadd.f32 %v2295, %v2423
      %v2425 = vpop.f32.mrb[0].mxu0
      %2426 = vmatprep.mubr.bf16.mxu0 0
      %2427 = vmatmul.mubr.bf16.gmra.mrb[0].mxu0 %v1996
      %v2428 = vpop.f32.mrb[0].mxu0
      %v2429 = vadd.f32 %v2300, %v2428
      %v2430 = vpop.f32.mrb[0].mxu0
      %v2431 = vpop.f32.mrb[0].mxu0
      %v2432 = vadd.f32 %v2303, %v2431
      %v2433 = vpop.f32.mrb[0].mxu0
      %2434 = vdwg.mxu0
      %v2483 = vunpack.c.l.b16 %v1777
      %v2484 = vunpack.c.l.b16 %v1778
      %v2485 = vunpack.c.l.b16 %v1779
      %v2486 = vunpack.c.l.b16 %v1780
      %v2487 = vunpack.c.l.b16 %v1781
      %v2488 = vunpack.c.l.b16 %v1782
      %v2489 = vunpack.c.l.b16 %v1783
      %v2490 = vunpack.c.l.b16 %v1784
      %v2491 = vunpack.c.l.b16 %v1785
      %v2492 = vunpack.c.l.b16 %v1786
      %v2493 = vunpack.c.l.b16 %v1787
      %v2494 = vunpack.c.l.b16 %v1788
      %v2495 = vunpack.c.l.b16 %v1789
      %v2496 = vunpack.c.l.b16 %v1790
      %v2497 = vunpack.c.l.b16 %v1791
      %v2498 = vunpack.c.l.b16 %v1792
      %v2499 = vunpack.c.l.b16 %v1793
      %v2500 = vunpack.c.l.b16 %v1794
      %v2501 = vunpack.c.l.b16 %v1795
      %v2502 = vunpack.c.l.b16 %v1796
      %v2503 = vunpack.c.l.b16 %v1797
      %v2504 = vunpack.c.l.b16 %v1798
      %v2505 = vunpack.c.l.b16 %v1799
      %v2506 = vunpack.c.l.b16 %v1800
      %v2507 = vunpack.c.l.b16 %v1801
      %v2508 = vunpack.c.l.b16 %v1802
      %v2509 = vunpack.c.l.b16 %v1803
      %v2510 = vunpack.c.l.b16 %v1804
      %v2511 = vunpack.c.l.b16 %v1805
      %v2512 = vunpack.c.l.b16 %v1806
      %v2513 = vunpack.c.l.b16 %v1807
      %v2514 = vunpack.c.l.b16 %v1808
      %v2515 = vunpack.c.l.b16 %v1809
      %v2516 = vunpack.c.l.b16 %v1810
      %v2517 = vunpack.c.l.b16 %v1811
      %v2518 = vunpack.c.l.b16 %v1812
      %v2519 = vunpack.c.l.b16 %v1813
      %v2520 = vunpack.c.l.b16 %v1814
      %v2521 = vunpack.c.l.b16 %v1815
      %v2522 = vunpack.c.l.b16 %v1816
      %v2523 = vunpack.c.l.b16 %v1817
      %v2524 = vunpack.c.l.b16 %v1818
      %v2525 = vunpack.c.l.b16 %v1819
      %v2526 = vunpack.c.l.b16 %v1820
      %v2527 = vunpack.c.l.b16 %v1821
      %v2528 = vunpack.c.l.b16 %v1822
      %v2529 = vunpack.c.l.b16 %v1823
      %v2530 = vunpack.c.l.b16 %v1824
      %v2531 = vpack.c.b16 %v2484, %v2483
      %v2532 = vpack.c.b16 %v2486, %v2485
      %v2533 = vpack.c.b16 %v2488, %v2487
      %v2534 = vpack.c.b16 %v2490, %v2489
      %v2535 = vpack.c.b16 %v2492, %v2491
      %v2536 = vpack.c.b16 %v2494, %v2493
      %v2537 = vpack.c.b16 %v2496, %v2495
      %v2538 = vpack.c.b16 %v2498, %v2497
      %v2539 = vpack.c.b16 %v2500, %v2499
      %v2540 = vpack.c.b16 %v2502, %v2501
      %v2541 = vpack.c.b16 %v2504, %v2503
      %v2542 = vpack.c.b16 %v2506, %v2505
      %v2543 = vpack.c.b16 %v2508, %v2507
      %v2544 = vpack.c.b16 %v2510, %v2509
      %v2545 = vpack.c.b16 %v2512, %v2511
      %v2546 = vpack.c.b16 %v2514, %v2513
      %v2547 = vpack.c.b16 %v2516, %v2515
      %v2548 = vpack.c.b16 %v2518, %v2517
      %v2549 = vpack.c.b16 %v2520, %v2519
      %v2550 = vpack.c.b16 %v2522, %v2521
      %v2551 = vpack.c.b16 %v2524, %v2523
      %v2552 = vpack.c.b16 %v2526, %v2525
      %v2553 = vpack.c.b16 %v2528, %v2527
      %v2554 = vpack.c.b16 %v2530, %v2529
      %2579 = vmatprep.subr.bf16.mxu0 0
      %2580 = vmatpush1.bf16.msra.mxu0 %v2531
      %2581 = vmatprep.subr.bf16.mxu0 0
      %2582 = vmatpush1.bf16.msra.mxu0 %v2532
      %2583 = vmatprep.subr.bf16.mxu0 0
      %2584 = vmatpush1.bf16.msra.mxu0 %v2533
      %2585 = vmatprep.subr.bf16.mxu0 0
      %2586 = vmatpush1.bf16.msra.mxu0 %v2534
      %2587 = vmatprep.subr.bf16.mxu0 0
      %2588 = vmatpush1.bf16.msra.mxu0 %v2535
      %2589 = vmatprep.subr.bf16.mxu0 0
      %2590 = vmatpush1.bf16.msra.mxu0 %v2536
      %2591 = vmatprep.subr.bf16.mxu0 0
      %2592 = vmatpush1.bf16.msra.mxu0 %v2537
      %2593 = vmatprep.subr.bf16.mxu0 0
      %2594 = vmatpush1.bf16.msra.mxu0 %v2538
      %2595 = vmatprep.subr.bf16.mxu0 0
      %2596 = vmatpush1.bf16.msra.mxu0 %v2539
      %2597 = vmatprep.subr.bf16.mxu0 0
      %2598 = vmatpush1.bf16.msra.mxu0 %v2540
      %2599 = vmatprep.subr.bf16.mxu0 0
      %2600 = vmatpush1.bf16.msra.mxu0 %v2541
      %2601 = vmatprep.subr.bf16.mxu0 0
      %2602 = vmatpush1.bf16.msra.mxu0 %v2542
      %2603 = vmatprep.subr.bf16.mxu0 0
      %2604 = vmatpush1.bf16.msra.mxu0 %v2543
      %2605 = vmatprep.subr.bf16.mxu0 0
      %2606 = vmatpush1.bf16.msra.mxu0 %v2544
      %2607 = vmatprep.subr.bf16.mxu0 0
      %2608 = vmatpush1.bf16.msra.mxu0 %v2545
      %2609 = vmatprep.subr.bf16.mxu0 0
      %2610 = vmatpush1.bf16.msra.mxu0 %v2546
      %2611 = vmatprep.mubr.bf16.mxu0 %v1742
      %2612 = vmatmul.mubr.bf16.gmra.mrb[0].mxu0 %v1741
      %v2613 = vpop.f32.mrb[0].mxu0
      %v2614 = vadd.f32 %v2341, %v2613
      %v2615 = vpop.f32.mrb[0].mxu0
      %v2616 = vpop.f32.mrb[0].mxu0
      %v2617 = vadd.f32 %v2344, %v2616
      %v2618 = vpop.f32.mrb[0].mxu0
      %2619 = vmatprep.mubr.bf16.mxu0 %v1745
      %2620 = vmatmul.mubr.bf16.gmra.mrb[0].mxu0 %v1744
      %v2621 = vpop.f32.mrb[0].mxu0
      %v2622 = vadd.f32 %v2349, %v2621
      %v2623 = vpop.f32.mrb[0].mxu0
      %v2624 = vpop.f32.mrb[0].mxu0
      %v2625 = vadd.f32 %v2352, %v2624
      %v2626 = vpop.f32.mrb[0].mxu0
      %2627 = vmatprep.mubr.bf16.mxu0 %v1748
      %2628 = vmatmul.mubr.bf16.gmra.mrb[0].mxu0 %v1747
      %v2629 = vpop.f32.mrb[0].mxu0
      %v2630 = vadd.f32 %v2357, %v2629
      %v2631 = vpop.f32.mrb[0].mxu0
      %v2632 = vpop.f32.mrb[0].mxu0
      %v2633 = vadd.f32 %v2360, %v2632
      %v2634 = vpop.f32.mrb[0].mxu0
      %2635 = vmatprep.mubr.bf16.mxu0 %v1751
      %2636 = vmatmul.mubr.bf16.gmra.mrb[0].mxu0 %v1750
      %v2637 = vpop.f32.mrb[0].mxu0
      %v2638 = vadd.f32 %v2365, %v2637
      %v2639 = vpop.f32.mrb[0].mxu0
      %v2640 = vpop.f32.mrb[0].mxu0
      %v2641 = vadd.f32 %v2368, %v2640
      %v2642 = vpop.f32.mrb[0].mxu0
      %2643 = vmatprep.mubr.bf16.mxu0 %v1754
      %2644 = vmatmul.mubr.bf16.gmra.mrb[0].mxu0 %v1753
      %v2645 = vpop.f32.mrb[0].mxu0
      %v2646 = vadd.f32 %v2373, %v2645
      %v2647 = vpop.f32.mrb[0].mxu0
      %v2648 = vpop.f32.mrb[0].mxu0
      %v2649 = vadd.f32 %v2376, %v2648
      %v2650 = vpop.f32.mrb[0].mxu0
      %2651 = vmatprep.mubr.bf16.mxu0 %v1757
      %2652 = vmatmul.mubr.bf16.gmra.mrb[0].mxu0 %v1756
      %v2653 = vpop.f32.mrb[0].mxu0
      %v2654 = vadd.f32 %v2381, %v2653
      %v2655 = vpop.f32.mrb[0].mxu0
      %v2656 = vpop.f32.mrb[0].mxu0
      %v2657 = vadd.f32 %v2384, %v2656
      %v2658 = vpop.f32.mrb[0].mxu0
      %2659 = vmatprep.mubr.bf16.mxu0 %v1760
      %2660 = vmatmul.mubr.bf16.gmra.mrb[0].mxu0 %v1759
      %v2661 = vpop.f32.mrb[0].mxu0
      %v2662 = vadd.f32 %v2389, %v2661
      %v2663 = vpop.f32.mrb[0].mxu0
      %v2664 = vpop.f32.mrb[0].mxu0
      %v2665 = vadd.f32 %v2392, %v2664
      %v2666 = vpop.f32.mrb[0].mxu0
      %2667 = vmatprep.mubr.bf16.mxu0 %v1763
      %2668 = vmatmul.mubr.bf16.gmra.mrb[0].mxu0 %v1762
      %v2669 = vpop.f32.mrb[0].mxu0
      %v2670 = vadd.f32 %v2397, %v2669
      %v2671 = vpop.f32.mrb[0].mxu0
      %v2672 = vpop.f32.mrb[0].mxu0
      %v2673 = vadd.f32 %v2400, %v2672
      %v2674 = vpop.f32.mrb[0].mxu0
      %2675 = vmatprep.mubr.bf16.mxu0 %v1766
      %2676 = vmatmul.mubr.bf16.gmra.mrb[0].mxu0 %v1765
      %v2677 = vpop.f32.mrb[0].mxu0
      %v2678 = vadd.f32 %v2405, %v2677
      %v2679 = vpop.f32.mrb[0].mxu0
      %v2680 = vpop.f32.mrb[0].mxu0
      %v2681 = vadd.f32 %v2408, %v2680
      %v2682 = vpop.f32.mrb[0].mxu0
      %2683 = vmatprep.mubr.bf16.mxu0 %v1769
      %2684 = vmatmul.mubr.bf16.gmra.mrb[0].mxu0 %v1768
      %v2685 = vpop.f32.mrb[0].mxu0
      %v2686 = vadd.f32 %v2413, %v2685
      %v2687 = vpop.f32.mrb[0].mxu0
      %v2688 = vpop.f32.mrb[0].mxu0
      %v2689 = vadd.f32 %v2416, %v2688
      %v2690 = vpop.f32.mrb[0].mxu0
      %2691 = vmatprep.mubr.bf16.mxu0 %v1772
      %2692 = vmatmul.mubr.bf16.gmra.mrb[0].mxu0 %v1771
      %v2693 = vpop.f32.mrb[0].mxu0
      %v2694 = vadd.f32 %v2421, %v2693
      %v2695 = vpop.f32.mrb[0].mxu0
      %v2696 = vpop.f32.mrb[0].mxu0
      %v2697 = vadd.f32 %v2424, %v2696
      %v2698 = vpop.f32.mrb[0].mxu0
      %2699 = vmatprep.mubr.bf16.mxu0 %v1775
      %2700 = vmatmul.mubr.bf16.gmra.mrb[0].mxu0 %v1774
      %v2701 = vpop.f32.mrb[0].mxu0
      %v2702 = vadd.f32 %v2429, %v2701
      %v2703 = vpop.f32.mrb[0].mxu0
      %v2704 = vpop.f32.mrb[0].mxu0
      %v2705 = vadd.f32 %v2432, %v2704
      %v2706 = vpop.f32.mrb[0].mxu0
      %2707 = vdwg.mxu0
      %2708 = vmatprep.subr.bf16.mxu0 0
      %2709 = vmatpush1.bf16.msra.mxu0 %v2547
      %2710 = vmatprep.subr.bf16.mxu0 0
      %2711 = vmatpush1.bf16.msra.mxu0 %v2548
      %2712 = vmatprep.subr.bf16.mxu0 0
      %2713 = vmatpush1.bf16.msra.mxu0 %v2549
      %2714 = vmatprep.subr.bf16.mxu0 0
      %2715 = vmatpush1.bf16.msra.mxu0 %v2550
      %2716 = vmatprep.subr.bf16.mxu0 0
      %2717 = vmatpush1.bf16.msra.mxu0 %v2551
      %2718 = vmatprep.subr.bf16.mxu0 0
      %2719 = vmatpush1.bf16.msra.mxu0 %v2552
      %2720 = vmatprep.subr.bf16.mxu0 0
      %2721 = vmatpush1.bf16.msra.mxu0 %v2553
      %2722 = vmatprep.subr.bf16.mxu0 0
      %2723 = vmatpush1.bf16.msra.mxu0 %v2554
      %2724 = vmatprep.subr.bf16.mxu0 0
      %2725 = vmatpush1.bf16.msra.mxu0 0
      %2726 = vmatprep.subr.bf16.mxu0 0
      %2727 = vmatpush1.bf16.msra.mxu0 0
      %2728 = vmatprep.subr.bf16.mxu0 0
      %2729 = vmatpush1.bf16.msra.mxu0 0
      %2730 = vmatprep.subr.bf16.mxu0 0
      %2731 = vmatpush1.bf16.msra.mxu0 0
      %2732 = vmatprep.subr.bf16.mxu0 0
      %2733 = vmatpush1.bf16.msra.mxu0 0
      %2734 = vmatprep.subr.bf16.mxu0 0
      %2735 = vmatpush1.bf16.msra.mxu0 0
      %2736 = vmatprep.subr.bf16.mxu0 0
      %2737 = vmatpush1.bf16.msra.mxu0 0
      %2738 = vmatprep.subr.bf16.mxu0 0
      %2739 = vmatpush1.bf16.msra.mxu0 0
      %2740 = vmatprep.mubr.bf16.mxu0 0
      %2741 = vmatmul.mubr.bf16.gmra.mrb[0].mxu0 %v1743
      %v2742 = vpop.f32.mrb[0].mxu0
      %v2743 = vadd.f32 %v2614, %v2742
      %v2744 = vpop.f32.mrb[0].mxu0
      %v2745 = vpop.f32.mrb[0].mxu0
      %v2746 = vadd.f32 %v2617, %v2745
      %v2747 = vpop.f32.mrb[0].mxu0
      %2748 = vmatprep.mubr.bf16.mxu0 0
      %2749 = vmatmul.mubr.bf16.gmra.mrb[0].mxu0 %v1746
      %v2750 = vpop.f32.mrb[0].mxu0
      %v2751 = vadd.f32 %v2622, %v2750
      %v2752 = vpop.f32.mrb[0].mxu0
      %v2753 = vpop.f32.mrb[0].mxu0
      %v2754 = vadd.f32 %v2625, %v2753
      %v2755 = vpop.f32.mrb[0].mxu0
      %2756 = vmatprep.mubr.bf16.mxu0 0
      %2757 = vmatmul.mubr.bf16.gmra.mrb[0].mxu0 %v1749
      %v2758 = vpop.f32.mrb[0].mxu0
      %v2759 = vadd.f32 %v2630, %v2758
      %v2760 = vpop.f32.mrb[0].mxu0
      %v2761 = vpop.f32.mrb[0].mxu0
      %v2762 = vadd.f32 %v2633, %v2761
      %v2763 = vpop.f32.mrb[0].mxu0
      %2764 = vmatprep.mubr.bf16.mxu0 0
      %2765 = vmatmul.mubr.bf16.gmra.mrb[0].mxu0 %v1752
      %v2766 = vpop.f32.mrb[0].mxu0
      %v2767 = vadd.f32 %v2638, %v2766
      %v2768 = vpop.f32.mrb[0].mxu0
      %v2769 = vpop.f32.mrb[0].mxu0
      %v2770 = vadd.f32 %v2641, %v2769
      %v2771 = vpop.f32.mrb[0].mxu0
      %2772 = vmatprep.mubr.bf16.mxu0 0
      %2773 = vmatmul.mubr.bf16.gmra.mrb[0].mxu0 %v1755
      %v2774 = vpop.f32.mrb[0].mxu0
      %v2775 = vadd.f32 %v2646, %v2774
      %v2776 = vpop.f32.mrb[0].mxu0
      %v2777 = vpop.f32.mrb[0].mxu0
      %v2778 = vadd.f32 %v2649, %v2777
      %v2779 = vpop.f32.mrb[0].mxu0
      %2780 = vmatprep.mubr.bf16.mxu0 0
      %2781 = vmatmul.mubr.bf16.gmra.mrb[0].mxu0 %v1758
      %v2782 = vpop.f32.mrb[0].mxu0
      %v2783 = vadd.f32 %v2654, %v2782
      %v2784 = vpop.f32.mrb[0].mxu0
      %v2785 = vpop.f32.mrb[0].mxu0
      %v2786 = vadd.f32 %v2657, %v2785
      %v2787 = vpop.f32.mrb[0].mxu0
      %2788 = vmatprep.mubr.bf16.mxu0 0
      %2789 = vmatmul.mubr.bf16.gmra.mrb[0].mxu0 %v1761
      %v2790 = vpop.f32.mrb[0].mxu0
      %v2791 = vadd.f32 %v2662, %v2790
      %v2792 = vpop.f32.mrb[0].mxu0
      %v2793 = vpop.f32.mrb[0].mxu0
      %v2794 = vadd.f32 %v2665, %v2793
      %v2795 = vpop.f32.mrb[0].mxu0
      %2796 = vmatprep.mubr.bf16.mxu0 0
      %2797 = vmatmul.mubr.bf16.gmra.mrb[0].mxu0 %v1764
      %v2798 = vpop.f32.mrb[0].mxu0
      %v2799 = vadd.f32 %v2670, %v2798
      %v2800 = vpop.f32.mrb[0].mxu0
      %v2801 = vpop.f32.mrb[0].mxu0
      %v2802 = vadd.f32 %v2673, %v2801
      %v2803 = vpop.f32.mrb[0].mxu0
      %2804 = vmatprep.mubr.bf16.mxu0 0
      %2805 = vmatmul.mubr.bf16.gmra.mrb[0].mxu0 %v1767
      %v2806 = vpop.f32.mrb[0].mxu0
      %v2807 = vadd.f32 %v2678, %v2806
      %v2808 = vpop.f32.mrb[0].mxu0
      %v2809 = vpop.f32.mrb[0].mxu0
      %v2810 = vadd.f32 %v2681, %v2809
      %v2811 = vpop.f32.mrb[0].mxu0
      %2812 = vmatprep.mubr.bf16.mxu0 0
      %2813 = vmatmul.mubr.bf16.gmra.mrb[0].mxu0 %v1770
      %v2814 = vpop.f32.mrb[0].mxu0
      %v2815 = vadd.f32 %v2686, %v2814
      %v2816 = vpop.f32.mrb[0].mxu0
      %v2817 = vpop.f32.mrb[0].mxu0
      %v2818 = vadd.f32 %v2689, %v2817
      %v2819 = vpop.f32.mrb[0].mxu0
      %2820 = vmatprep.mubr.bf16.mxu0 0
      %2821 = vmatmul.mubr.bf16.gmra.mrb[0].mxu0 %v1773
      %v2822 = vpop.f32.mrb[0].mxu0
      %v2823 = vadd.f32 %v2694, %v2822
      %v2824 = vpop.f32.mrb[0].mxu0
      %v2825 = vpop.f32.mrb[0].mxu0
      %v2826 = vadd.f32 %v2697, %v2825
      %v2827 = vpop.f32.mrb[0].mxu0
      %2828 = vmatprep.mubr.bf16.mxu0 0
      %2829 = vmatmul.mubr.bf16.gmra.mrb[0].mxu0 %v1776
      %v2830 = vpop.f32.mrb[0].mxu0
      %v2831 = vadd.f32 %v2702, %v2830
      %v2832 = vpop.f32.mrb[0].mxu0
      %v2833 = vpop.f32.mrb[0].mxu0
      %v2834 = vadd.f32 %v2705, %v2833
      %v2835 = vpop.f32.mrb[0].mxu0
      %2836 = vdwg.mxu0
      %v2837 = vld [vmem:[#allocation3 + $0x48] sm:$0xff]
      %v2838 = vld [vmem:[#allocation3 + $0x50] sm:$0xff]
      %v2839 = vld [vmem:[#allocation3 + $0x58] sm:$0xff]
      %v2840 = vld [vmem:[#allocation3 + $0x60] sm:$0xff]
      %v2841 = vld [vmem:[#allocation3 + $0x68] sm:$0xff]
      %v2842 = vld [vmem:[#allocation3 + $0x70] sm:$0xff]
      %v2843 = vld [vmem:[#allocation3 + $0x78] sm:$0xff]
      %v2844 = vld [vmem:[#allocation3 + $0x80] sm:$0xff]
      %v2845 = vld [vmem:[#allocation3 + $0x88] sm:$0xff]
      %v2846 = vld [vmem:[#allocation3 + $0x90] sm:$0xff]
      %v2847 = vld [vmem:[#allocation3 + $0x98] sm:$0xff]
      %v2848 = vld [vmem:[#allocation3 + $0xa0] sm:$0xff]
      %v2849 = vld [vmem:[#allocation3 + $0xa8] sm:$0xff]
      %v2850 = vld [vmem:[#allocation3 + $0xb0] sm:$0xff]
      %v2851 = vld [vmem:[#allocation3 + $0xb8] sm:$0xff]
      %v2852 = vld [vmem:[#allocation3 + $0xc0] sm:$0xff]
      %v2853 = vld [vmem:[#allocation3 + $0xc8] sm:$0xff]
      %v2854 = vld [vmem:[#allocation3 + $0xd0] sm:$0xff]
      %v2855 = vld [vmem:[#allocation3 + $0xd8] sm:$0xff]
      %v2856 = vld [vmem:[#allocation3 + $0xe0] sm:$0xff]
      %v2857 = vld [vmem:[#allocation3 + $0xe8] sm:$0xff]
      %v2858 = vld [vmem:[#allocation3 + $0xf0] sm:$0xff]
      %v2859 = vld [vmem:[#allocation3 + $0xf8] sm:$0xff]
      %v2860 = vld [vmem:[#allocation3 + $0x100] sm:$0xff]
      %v2861 = vld [vmem:[#allocation3 + $0x108] sm:$0xff]
      %v2862 = vld [vmem:[#allocation3 + $0x110] sm:$0xff]
      %v2863 = vld [vmem:[#allocation3 + $0x118] sm:$0xff]
      %v2864 = vld [vmem:[#allocation3 + $0x120] sm:$0xff]
      %v2865 = vld [vmem:[#allocation3 + $0x128] sm:$0xff]
      %v2866 = vld [vmem:[#allocation3 + $0x130] sm:$0xff]
      %v2867 = vld [vmem:[#allocation3 + $0x138] sm:$0xff]
      %v2868 = vld [vmem:[#allocation3 + $0x140] sm:$0xff]
      %v2869 = vld [vmem:[#allocation3 + $0x148] sm:$0xff]
      %v2870 = vld [vmem:[#allocation3 + $0x150] sm:$0xff]
      %v2871 = vld [vmem:[#allocation3 + $0x158] sm:$0xff]
      %v2872 = vld [vmem:[#allocation3 + $0x160] sm:$0xff]
      %s2873 = scalar_lea.vmem %s5, 384
      %v2874 = vld [vmem:[%s2873] sm:$0xf]
      %v2875 = vld [vmem:[%s2873 + $0x4] sm:$0xf]
      %v2876 = vld [vmem:[%s2873 + $0x8] sm:$0xf]
      %v2877 = vld [vmem:[%s2873 + $0xc] sm:$0xf]
      %v2878 = vld [vmem:[%s2873 + $0x10] sm:$0xf]
      %v2879 = vld [vmem:[%s2873 + $0x14] sm:$0xf]
      %v2880 = vld [vmem:[%s2873 + $0x18] sm:$0xf]
      %v2881 = vld [vmem:[%s2873 + $0x1c] sm:$0xf]
      %v2882 = vld [vmem:[%s2873 + $0x20] sm:$0xf]
      %v2883 = vld [vmem:[%s2873 + $0x24] sm:$0xf]
      %v2884 = vld [vmem:[%s2873 + $0x28] sm:$0xf]
      %v2885 = vld [vmem:[%s2873 + $0x2c] sm:$0xf]
      %v2886 = vld [vmem:[%s2873 + $0x30] sm:$0xf]
      %v2887 = vld [vmem:[%s2873 + $0x34] sm:$0xf]
      %v2888 = vld [vmem:[%s2873 + $0x38] sm:$0xf]
      %v2889 = vld [vmem:[%s2873 + $0x3c] sm:$0xf]
      %v2890 = vld [vmem:[%s2873 + $0x40] sm:$0xf]
      %v2891 = vld [vmem:[%s2873 + $0x44] sm:$0xf]
      %v2892 = vld [vmem:[%s2873 + $0x48] sm:$0xf]
      %v2893 = vld [vmem:[%s2873 + $0x4c] sm:$0xf]
      %v2894 = vld [vmem:[%s2873 + $0x50] sm:$0xf]
      %v2895 = vld [vmem:[%s2873 + $0x54] sm:$0xf]
      %v2896 = vld [vmem:[%s2873 + $0x58] sm:$0xf]
      %v2897 = vld [vmem:[%s2873 + $0x5c] sm:$0xf]
      %v2898 = vld [vmem:[%s2873 + $0x60] sm:$0xf]
      %v2899 = vld [vmem:[%s2873 + $0x64] sm:$0xf]
      %v2900 = vld [vmem:[%s2873 + $0x68] sm:$0xf]
      %v2901 = vld [vmem:[%s2873 + $0x6c] sm:$0xf]
      %v2902 = vld [vmem:[%s2873 + $0x70] sm:$0xf]
      %v2903 = vld [vmem:[%s2873 + $0x74] sm:$0xf]
      %v2904 = vld [vmem:[%s2873 + $0x78] sm:$0xf]
      %v2905 = vld [vmem:[%s2873 + $0x7c] sm:$0xf]
      %v2906 = vld [vmem:[%s2873 + $0x80] sm:$0xf]
      %v2907 = vld [vmem:[%s2873 + $0x84] sm:$0xf]
      %v2908 = vld [vmem:[%s2873 + $0x88] sm:$0xf]
      %v2909 = vld [vmem:[%s2873 + $0x8c] sm:$0xf]
      %v2910 = vld [vmem:[%s2873 + $0x90] sm:$0xf]
      %v2911 = vld [vmem:[%s2873 + $0x94] sm:$0xf]
      %v2912 = vld [vmem:[%s2873 + $0x98] sm:$0xf]
      %v2913 = vld [vmem:[%s2873 + $0x9c] sm:$0xf]
      %v2914 = vld [vmem:[%s2873 + $0xa0] sm:$0xf]
      %v2915 = vld [vmem:[%s2873 + $0xa4] sm:$0xf]
      %v2916 = vld [vmem:[%s2873 + $0xa8] sm:$0xf]
      %v2917 = vld [vmem:[%s2873 + $0xac] sm:$0xf]
      %v2918 = vld [vmem:[%s2873 + $0xb0] sm:$0xf]
      %v2919 = vld [vmem:[%s2873 + $0xb4] sm:$0xf]
      %v2920 = vld [vmem:[%s2873 + $0xb8] sm:$0xf]
      %v2921 = vld [vmem:[%s2873 + $0xbc] sm:$0xf]
      %v2970 = vunpack.c.l.b16 %v2874
      %v2971 = vunpack.c.l.b16 %v2875
      %v2972 = vunpack.c.l.b16 %v2876
      %v2973 = vunpack.c.l.b16 %v2877
      %v2974 = vunpack.c.l.b16 %v2878
      %v2975 = vunpack.c.l.b16 %v2879
      %v2976 = vunpack.c.l.b16 %v2880
      %v2977 = vunpack.c.l.b16 %v2881
      %v2978 = vunpack.c.l.b16 %v2882
      %v2979 = vunpack.c.l.b16 %v2883
      %v2980 = vunpack.c.l.b16 %v2884
      %v2981 = vunpack.c.l.b16 %v2885
      %v2982 = vunpack.c.l.b16 %v2886
      %v2983 = vunpack.c.l.b16 %v2887
      %v2984 = vunpack.c.l.b16 %v2888
      %v2985 = vunpack.c.l.b16 %v2889
      %v2986 = vunpack.c.l.b16 %v2890
      %v2987 = vunpack.c.l.b16 %v2891
      %v2988 = vunpack.c.l.b16 %v2892
      %v2989 = vunpack.c.l.b16 %v2893
      %v2990 = vunpack.c.l.b16 %v2894
      %v2991 = vunpack.c.l.b16 %v2895
      %v2992 = vunpack.c.l.b16 %v2896
      %v2993 = vunpack.c.l.b16 %v2897
      %v2994 = vunpack.c.l.b16 %v2898
      %v2995 = vunpack.c.l.b16 %v2899
      %v2996 = vunpack.c.l.b16 %v2900
      %v2997 = vunpack.c.l.b16 %v2901
      %v2998 = vunpack.c.l.b16 %v2902
      %v2999 = vunpack.c.l.b16 %v2903
      %v3000 = vunpack.c.l.b16 %v2904
      %v3001 = vunpack.c.l.b16 %v2905
      %v3002 = vunpack.c.l.b16 %v2906
      %v3003 = vunpack.c.l.b16 %v2907
      %v3004 = vunpack.c.l.b16 %v2908
      %v3005 = vunpack.c.l.b16 %v2909
      %v3006 = vunpack.c.l.b16 %v2910
      %v3007 = vunpack.c.l.b16 %v2911
      %v3008 = vunpack.c.l.b16 %v2912
      %v3009 = vunpack.c.l.b16 %v2913
      %v3010 = vunpack.c.l.b16 %v2914
      %v3011 = vunpack.c.l.b16 %v2915
      %v3012 = vunpack.c.l.b16 %v2916
      %v3013 = vunpack.c.l.b16 %v2917
      %v3014 = vunpack.c.l.b16 %v2918
      %v3015 = vunpack.c.l.b16 %v2919
      %v3016 = vunpack.c.l.b16 %v2920
      %v3017 = vunpack.c.l.b16 %v2921
      %v3018 = vpack.c.b16 %v2971, %v2970
      %v3019 = vpack.c.b16 %v2973, %v2972
      %v3020 = vpack.c.b16 %v2975, %v2974
      %v3021 = vpack.c.b16 %v2977, %v2976
      %v3022 = vpack.c.b16 %v2979, %v2978
      %v3023 = vpack.c.b16 %v2981, %v2980
      %v3024 = vpack.c.b16 %v2983, %v2982
      %v3025 = vpack.c.b16 %v2985, %v2984
      %v3026 = vpack.c.b16 %v2987, %v2986
      %v3027 = vpack.c.b16 %v2989, %v2988
      %v3028 = vpack.c.b16 %v2991, %v2990
      %v3029 = vpack.c.b16 %v2993, %v2992
      %v3030 = vpack.c.b16 %v2995, %v2994
      %v3031 = vpack.c.b16 %v2997, %v2996
      %v3032 = vpack.c.b16 %v2999, %v2998
      %v3033 = vpack.c.b16 %v3001, %v3000
      %v3034 = vpack.c.b16 %v3003, %v3002
      %v3035 = vpack.c.b16 %v3005, %v3004
      %v3036 = vpack.c.b16 %v3007, %v3006
      %v3037 = vpack.c.b16 %v3009, %v3008
      %v3038 = vpack.c.b16 %v3011, %v3010
      %v3039 = vpack.c.b16 %v3013, %v3012
      %v3040 = vpack.c.b16 %v3015, %v3014
      %v3041 = vpack.c.b16 %v3017, %v3016
      %3066 = vmatprep.subr.bf16.mxu0 0
      %3067 = vmatpush1.bf16.msra.mxu0 %v3018
      %3068 = vmatprep.subr.bf16.mxu0 0
      %3069 = vmatpush1.bf16.msra.mxu0 %v3019
      %3070 = vmatprep.subr.bf16.mxu0 0
      %3071 = vmatpush1.bf16.msra.mxu0 %v3020
      %3072 = vmatprep.subr.bf16.mxu0 0
      %3073 = vmatpush1.bf16.msra.mxu0 %v3021
      %3074 = vmatprep.subr.bf16.mxu0 0
      %3075 = vmatpush1.bf16.msra.mxu0 %v3022
      %3076 = vmatprep.subr.bf16.mxu0 0
      %3077 = vmatpush1.bf16.msra.mxu0 %v3023
      %3078 = vmatprep.subr.bf16.mxu0 0
      %3079 = vmatpush1.bf16.msra.mxu0 %v3024
      %3080 = vmatprep.subr.bf16.mxu0 0
      %3081 = vmatpush1.bf16.msra.mxu0 %v3025
      %3082 = vmatprep.subr.bf16.mxu0 0
      %3083 = vmatpush1.bf16.msra.mxu0 %v3026
      %3084 = vmatprep.subr.bf16.mxu0 0
      %3085 = vmatpush1.bf16.msra.mxu0 %v3027
      %3086 = vmatprep.subr.bf16.mxu0 0
      %3087 = vmatpush1.bf16.msra.mxu0 %v3028
      %3088 = vmatprep.subr.bf16.mxu0 0
      %3089 = vmatpush1.bf16.msra.mxu0 %v3029
      %3090 = vmatprep.subr.bf16.mxu0 0
      %3091 = vmatpush1.bf16.msra.mxu0 %v3030
      %3092 = vmatprep.subr.bf16.mxu0 0
      %3093 = vmatpush1.bf16.msra.mxu0 %v3031
      %3094 = vmatprep.subr.bf16.mxu0 0
      %3095 = vmatpush1.bf16.msra.mxu0 %v3032
      %3096 = vmatprep.subr.bf16.mxu0 0
      %3097 = vmatpush1.bf16.msra.mxu0 %v3033
      %3098 = vmatprep.mubr.bf16.mxu0 %v2838
      %3099 = vmatmul.mubr.bf16.gmra.mrb[0].mxu0 %v2837
      %v3100 = vpop.f32.mrb[0].mxu0
      %v3101 = vadd.f32 0.0, %v3100
      %v3102 = vpop.f32.mrb[0].mxu0
      %v3103 = vpop.f32.mrb[0].mxu0
      %v3104 = vadd.f32 0.0, %v3103
      %v3105 = vpop.f32.mrb[0].mxu0
      %3106 = vmatprep.mubr.bf16.mxu0 %v2841
      %3107 = vmatmul.mubr.bf16.gmra.mrb[0].mxu0 %v2840
      %v3108 = vpop.f32.mrb[0].mxu0
      %v3109 = vadd.f32 0.0, %v3108
      %v3110 = vpop.f32.mrb[0].mxu0
      %v3111 = vpop.f32.mrb[0].mxu0
      %v3112 = vadd.f32 0.0, %v3111
      %v3113 = vpop.f32.mrb[0].mxu0
      %3114 = vmatprep.mubr.bf16.mxu0 %v2844
      %3115 = vmatmul.mubr.bf16.gmra.mrb[0].mxu0 %v2843
      %v3116 = vpop.f32.mrb[0].mxu0
      %v3117 = vadd.f32 0.0, %v3116
      %v3118 = vpop.f32.mrb[0].mxu0
      %v3119 = vpop.f32.mrb[0].mxu0
      %v3120 = vadd.f32 0.0, %v3119
      %v3121 = vpop.f32.mrb[0].mxu0
      %3122 = vmatprep.mubr.bf16.mxu0 %v2847
      %3123 = vmatmul.mubr.bf16.gmra.mrb[0].mxu0 %v2846
      %v3124 = vpop.f32.mrb[0].mxu0
      %v3125 = vadd.f32 0.0, %v3124
      %v3126 = vpop.f32.mrb[0].mxu0
      %v3127 = vpop.f32.mrb[0].mxu0
      %v3128 = vadd.f32 0.0, %v3127
      %v3129 = vpop.f32.mrb[0].mxu0
      %3130 = vmatprep.mubr.bf16.mxu0 %v2850
      %3131 = vmatmul.mubr.bf16.gmra.mrb[0].mxu0 %v2849
      %v3132 = vpop.f32.mrb[0].mxu0
      %v3133 = vadd.f32 0.0, %v3132
      %v3134 = vpop.f32.mrb[0].mxu0
      %v3135 = vpop.f32.mrb[0].mxu0
      %v3136 = vadd.f32 0.0, %v3135
      %v3137 = vpop.f32.mrb[0].mxu0
      %3138 = vmatprep.mubr.bf16.mxu0 %v2853
      %3139 = vmatmul.mubr.bf16.gmra.mrb[0].mxu0 %v2852
      %v3140 = vpop.f32.mrb[0].mxu0
      %v3141 = vadd.f32 0.0, %v3140
      %v3142 = vpop.f32.mrb[0].mxu0
      %v3143 = vpop.f32.mrb[0].mxu0
      %v3144 = vadd.f32 0.0, %v3143
      %v3145 = vpop.f32.mrb[0].mxu0
      %3146 = vmatprep.mubr.bf16.mxu0 %v2856
      %3147 = vmatmul.mubr.bf16.gmra.mrb[0].mxu0 %v2855
      %v3148 = vpop.f32.mrb[0].mxu0
      %v3149 = vadd.f32 0.0, %v3148
      %v3150 = vpop.f32.mrb[0].mxu0
      %v3151 = vpop.f32.mrb[0].mxu0
      %v3152 = vadd.f32 0.0, %v3151
      %v3153 = vpop.f32.mrb[0].mxu0
      %3154 = vmatprep.mubr.bf16.mxu0 %v2859
      %3155 = vmatmul.mubr.bf16.gmra.mrb[0].mxu0 %v2858
      %v3156 = vpop.f32.mrb[0].mxu0
      %v3157 = vadd.f32 0.0, %v3156
      %v3158 = vpop.f32.mrb[0].mxu0
      %v3159 = vpop.f32.mrb[0].mxu0
      %v3160 = vadd.f32 0.0, %v3159
      %v3161 = vpop.f32.mrb[0].mxu0
      %3162 = vmatprep.mubr.bf16.mxu0 %v2862
      %3163 = vmatmul.mubr.bf16.gmra.mrb[0].mxu0 %v2861
      %v3164 = vpop.f32.mrb[0].mxu0
      %v3165 = vadd.f32 0.0, %v3164
      %v3166 = vpop.f32.mrb[0].mxu0
      %v3167 = vpop.f32.mrb[0].mxu0
      %v3168 = vadd.f32 0.0, %v3167
      %v3169 = vpop.f32.mrb[0].mxu0
      %3170 = vmatprep.mubr.bf16.mxu0 %v2865
      %3171 = vmatmul.mubr.bf16.gmra.mrb[0].mxu0 %v2864
      %v3172 = vpop.f32.mrb[0].mxu0
      %v3173 = vadd.f32 0.0, %v3172
      %v3174 = vpop.f32.mrb[0].mxu0
      %v3175 = vpop.f32.mrb[0].mxu0
      %v3176 = vadd.f32 0.0, %v3175
      %v3177 = vpop.f32.mrb[0].mxu0
      %3178 = vmatprep.mubr.bf16.mxu0 %v2868
      %3179 = vmatmul.mubr.bf16.gmra.mrb[0].mxu0 %v2867
      %v3180 = vpop.f32.mrb[0].mxu0
      %v3181 = vadd.f32 0.0, %v3180
      %v3182 = vpop.f32.mrb[0].mxu0
      %v3183 = vpop.f32.mrb[0].mxu0
      %v3184 = vadd.f32 0.0, %v3183
      %v3185 = vpop.f32.mrb[0].mxu0
      %3186 = vmatprep.mubr.bf16.mxu0 %v2871
      %3187 = vmatmul.mubr.bf16.gmra.mrb[0].mxu0 %v2870
      %v3188 = vpop.f32.mrb[0].mxu0
      %v3189 = vadd.f32 0.0, %v3188
      %v3190 = vpop.f32.mrb[0].mxu0
      %v3191 = vpop.f32.mrb[0].mxu0
      %v3192 = vadd.f32 0.0, %v3191
      %v3193 = vpop.f32.mrb[0].mxu0
      %3194 = vdwg.mxu0
      %3195 = vmatprep.subr.bf16.mxu0 0
      %3196 = vmatpush1.bf16.msra.mxu0 %v3034
      %3197 = vmatprep.subr.bf16.mxu0 0
      %3198 = vmatpush1.bf16.msra.mxu0 %v3035
      %3199 = vmatprep.subr.bf16.mxu0 0
      %3200 = vmatpush1.bf16.msra.mxu0 %v3036
      %3201 = vmatprep.subr.bf16.mxu0 0
      %3202 = vmatpush1.bf16.msra.mxu0 %v3037
      %3203 = vmatprep.subr.bf16.mxu0 0
      %3204 = vmatpush1.bf16.msra.mxu0 %v3038
      %3205 = vmatprep.subr.bf16.mxu0 0
      %3206 = vmatpush1.bf16.msra.mxu0 %v3039
      %3207 = vmatprep.subr.bf16.mxu0 0
      %3208 = vmatpush1.bf16.msra.mxu0 %v3040
      %3209 = vmatprep.subr.bf16.mxu0 0
      %3210 = vmatpush1.bf16.msra.mxu0 %v3041
      %3211 = vmatprep.subr.bf16.mxu0 0
      %3212 = vmatpush1.bf16.msra.mxu0 0
      %3213 = vmatprep.subr.bf16.mxu0 0
      %3214 = vmatpush1.bf16.msra.mxu0 0
      %3215 = vmatprep.subr.bf16.mxu0 0
      %3216 = vmatpush1.bf16.msra.mxu0 0
      %3217 = vmatprep.subr.bf16.mxu0 0
      %3218 = vmatpush1.bf16.msra.mxu0 0
      %3219 = vmatprep.subr.bf16.mxu0 0
      %3220 = vmatpush1.bf16.msra.mxu0 0
      %3221 = vmatprep.subr.bf16.mxu0 0
      %3222 = vmatpush1.bf16.msra.mxu0 0
      %3223 = vmatprep.subr.bf16.mxu0 0
      %3224 = vmatpush1.bf16.msra.mxu0 0
      %3225 = vmatprep.subr.bf16.mxu0 0
      %3226 = vmatpush1.bf16.msra.mxu0 0
      %3227 = vmatprep.mubr.bf16.mxu0 0
      %3228 = vmatmul.mubr.bf16.gmra.mrb[0].mxu0 %v2839
      %v3229 = vpop.f32.mrb[0].mxu0
      %v3230 = vadd.f32 %v3101, %v3229
      %v3231 = vpop.f32.mrb[0].mxu0
      %v3232 = vpop.f32.mrb[0].mxu0
      %v3233 = vadd.f32 %v3104, %v3232
      %v3234 = vpop.f32.mrb[0].mxu0
      %3235 = vmatprep.mubr.bf16.mxu0 0
      %3236 = vmatmul.mubr.bf16.gmra.mrb[0].mxu0 %v2842
      %v3237 = vpop.f32.mrb[0].mxu0
      %v3238 = vadd.f32 %v3109, %v3237
      %v3239 = vpop.f32.mrb[0].mxu0
      %v3240 = vpop.f32.mrb[0].mxu0
      %v3241 = vadd.f32 %v3112, %v3240
      %v3242 = vpop.f32.mrb[0].mxu0
      %3243 = vmatprep.mubr.bf16.mxu0 0
      %3244 = vmatmul.mubr.bf16.gmra.mrb[0].mxu0 %v2845
      %v3245 = vpop.f32.mrb[0].mxu0
      %v3246 = vadd.f32 %v3117, %v3245
      %v3247 = vpop.f32.mrb[0].mxu0
      %v3248 = vpop.f32.mrb[0].mxu0
      %v3249 = vadd.f32 %v3120, %v3248
      %v3250 = vpop.f32.mrb[0].mxu0
      %3251 = vmatprep.mubr.bf16.mxu0 0
      %3252 = vmatmul.mubr.bf16.gmra.mrb[0].mxu0 %v2848
      %v3253 = vpop.f32.mrb[0].mxu0
      %v3254 = vadd.f32 %v3125, %v3253
      %v3255 = vpop.f32.mrb[0].mxu0
      %v3256 = vpop.f32.mrb[0].mxu0
      %v3257 = vadd.f32 %v3128, %v3256
      %v3258 = vpop.f32.mrb[0].mxu0
      %3259 = vmatprep.mubr.bf16.mxu0 0
      %3260 = vmatmul.mubr.bf16.gmra.mrb[0].mxu0 %v2851
      %v3261 = vpop.f32.mrb[0].mxu0
      %v3262 = vadd.f32 %v3133, %v3261
      %v3263 = vpop.f32.mrb[0].mxu0
      %v3264 = vpop.f32.mrb[0].mxu0
      %v3265 = vadd.f32 %v3136, %v3264
      %v3266 = vpop.f32.mrb[0].mxu0
      %3267 = vmatprep.mubr.bf16.mxu0 0
      %3268 = vmatmul.mubr.bf16.gmra.mrb[0].mxu0 %v2854
      %v3269 = vpop.f32.mrb[0].mxu0
      %v3270 = vadd.f32 %v3141, %v3269
      %v3271 = vpop.f32.mrb[0].mxu0
      %v3272 = vpop.f32.mrb[0].mxu0
      %v3273 = vadd.f32 %v3144, %v3272
      %v3274 = vpop.f32.mrb[0].mxu0
      %3275 = vmatprep.mubr.bf16.mxu0 0
      %3276 = vmatmul.mubr.bf16.gmra.mrb[0].mxu0 %v2857
      %v3277 = vpop.f32.mrb[0].mxu0
      %v3278 = vadd.f32 %v3149, %v3277
      %v3279 = vpop.f32.mrb[0].mxu0
      %v3280 = vpop.f32.mrb[0].mxu0
      %v3281 = vadd.f32 %v3152, %v3280
      %v3282 = vpop.f32.mrb[0].mxu0
      %3283 = vmatprep.mubr.bf16.mxu0 0
      %3284 = vmatmul.mubr.bf16.gmra.mrb[0].mxu0 %v2860
      %v3285 = vpop.f32.mrb[0].mxu0
      %v3286 = vadd.f32 %v3157, %v3285
      %v3287 = vpop.f32.mrb[0].mxu0
      %v3288 = vpop.f32.mrb[0].mxu0
      %v3289 = vadd.f32 %v3160, %v3288
      %v3290 = vpop.f32.mrb[0].mxu0
      %3291 = vmatprep.mubr.bf16.mxu0 0
      %3292 = vmatmul.mubr.bf16.gmra.mrb[0].mxu0 %v2863
      %v3293 = vpop.f32.mrb[0].mxu0
      %v3294 = vadd.f32 %v3165, %v3293
      %v3295 = vpop.f32.mrb[0].mxu0
      %v3296 = vpop.f32.mrb[0].mxu0
      %v3297 = vadd.f32 %v3168, %v3296
      %v3298 = vpop.f32.mrb[0].mxu0
      %3299 = vmatprep.mubr.bf16.mxu0 0
      %3300 = vmatmul.mubr.bf16.gmra.mrb[0].mxu0 %v2866
      %v3301 = vpop.f32.mrb[0].mxu0
      %v3302 = vadd.f32 %v3173, %v3301
      %v3303 = vpop.f32.mrb[0].mxu0
      %v3304 = vpop.f32.mrb[0].mxu0
      %v3305 = vadd.f32 %v3176, %v3304
      %v3306 = vpop.f32.mrb[0].mxu0
      %3307 = vmatprep.mubr.bf16.mxu0 0
      %3308 = vmatmul.mubr.bf16.gmra.mrb[0].mxu0 %v2869
      %v3309 = vpop.f32.mrb[0].mxu0
      %v3310 = vadd.f32 %v3181, %v3309
      %v3311 = vpop.f32.mrb[0].mxu0
      %v3312 = vpop.f32.mrb[0].mxu0
      %v3313 = vadd.f32 %v3184, %v3312
      %v3314 = vpop.f32.mrb[0].mxu0
      %3315 = vmatprep.mubr.bf16.mxu0 0
      %3316 = vmatmul.mubr.bf16.gmra.mrb[0].mxu0 %v2872
      %v3317 = vpop.f32.mrb[0].mxu0
      %v3318 = vadd.f32 %v3189, %v3317
      %v3319 = vpop.f32.mrb[0].mxu0
      %v3320 = vpop.f32.mrb[0].mxu0
      %v3321 = vadd.f32 %v3192, %v3320
      %v3322 = vpop.f32.mrb[0].mxu0
      %3323 = vdwg.mxu0
      %v3324 = vadd.f32 %v2743, %v3230
      %v3325 = vadd.f32 %v2746, %v3233
      %v3326 = vadd.f32 %v2751, %v3238
      %v3327 = vadd.f32 %v2754, %v3241
      %v3328 = vadd.f32 %v2759, %v3246
      %v3329 = vadd.f32 %v2762, %v3249
      %v3330 = vadd.f32 %v2767, %v3254
      %v3331 = vadd.f32 %v2770, %v3257
      %v3332 = vadd.f32 %v2775, %v3262
      %v3333 = vadd.f32 %v2778, %v3265
      %v3334 = vadd.f32 %v2783, %v3270
      %v3335 = vadd.f32 %v2786, %v3273
      %v3336 = vadd.f32 %v2791, %v3278
      %v3337 = vadd.f32 %v2794, %v3281
      %v3338 = vadd.f32 %v2799, %v3286
      %v3339 = vadd.f32 %v2802, %v3289
      %v3340 = vadd.f32 %v2807, %v3294
      %v3341 = vadd.f32 %v2810, %v3297
      %v3342 = vadd.f32 %v2815, %v3302
      %v3343 = vadd.f32 %v2818, %v3305
      %v3344 = vadd.f32 %v2823, %v3310
      %v3345 = vadd.f32 %v2826, %v3313
      %v3346 = vadd.f32 %v2831, %v3318
      %v3347 = vadd.f32 %v2834, %v3321
      %v3348 = vlaneseq
      %v3349 = vand.u32 %v3348, 127
      %v3350 = vadd.s32 %v3349, 128
      %vm3351 = vcmp.lt.s32.totalorder %v3349, 0
      %v3352 = vsub.s32 0, %v3349
      %v3353 = vsel %vm3351, %v3352, %v3349
      %v3354 = vmul.u32.u64.compose %v3353, 2863311531
      %v3355 = vextract.low.u32 %v3354
      %v3356 = vextract.high.u32 %v3354
      %v3357 = vshrl.u32 %v3356, 4
      %v3358 = vmul.u32 %v3357, 24
      %v3359 = vsub.s32 %v3353, %v3358
      %v3360 = vsub.s32 0, %v3359
      %v3361 = vsel %vm3351, %v3360, %v3359
      %vm3362 = vcmp.lt.s32.totalorder %v3350, 0
      %v3363 = vsub.s32 0, %v3350
      %v3364 = vsel %vm3362, %v3363, %v3350
      %v3365 = vmul.u32.u64.compose %v3364, 2863311531
      %v3366 = vextract.low.u32 %v3365
      %v3367 = vextract.high.u32 %v3365
      %v3368 = vshrl.u32 %v3367, 4
      %v3369 = vmul.u32 %v3368, 24
      %v3370 = vsub.s32 %v3364, %v3369
      %v3371 = vsub.s32 0, %v3370
      %v3372 = vsel %vm3362, %v3371, %v3370
      %vm3373 = vcmp.ne.s32.totalorder %v3361, 0
      %vm3374 = vcmp.ne.s32.totalorder %v3372, 0
      %vm3375 = vcmp.lt.s32.totalorder %v3361, 0
      %vm3376 = vcmp.lt.s32.totalorder %v3372, 0
      %vm3377 = vmand %vm3375, %vm3373
      %vm3378 = vmand %vm3376, %vm3374
      %v3379 = vadd.s32 %v3361, 24
      %v3380 = vadd.s32 %v3372, 24
      %v3381 = vsel %vm3377, %v3379, %v3361
      %v3382 = vsel %vm3378, %v3380, %v3372
      %vm3383 = vcmp.lt.s32.totalorder %v3381, 16
      %vm3384 = vcmp.lt.s32.totalorder %v3382, 16
      %v3385 = vsel %vm3383, 1, 0
      %v3386 = vsel %vm3384, 1, 0
      %v3387 = vcvt.s32.f32 %v3385
      %v3388 = vcvt.s32.f32 %v3386
      %vm3389 = vcmask 523264
      %v3391 = vsel %vm3389, %v3388, 0
      %3393 = vmatprep.subr.mxu0 0.0
      %3394 = vmatpush1.msra.mxu0 %v3324
      %3395 = vmatprep.subr.mxu0 0.0
      %3396 = vmatpush1.msra.mxu0 %v3325
      %3397 = vmatprep.subr.mxu0 0.0
      %3398 = vmatpush1.msra.mxu0 %v3326
      %3399 = vmatprep.subr.mxu0 0.0
      %3400 = vmatpush1.msra.mxu0 %v3327
      %3401 = vmatprep.subr.mxu0 0.0
      %3402 = vmatpush1.msra.mxu0 %v3328
      %3403 = vmatprep.subr.mxu0 0.0
      %3404 = vmatpush1.msra.mxu0 %v3329
      %3405 = vmatprep.subr.mxu0 0.0
      %3406 = vmatpush1.msra.mxu0 %v3330
      %3407 = vmatprep.subr.mxu0 0.0
      %3408 = vmatpush1.msra.mxu0 %v3331
      %3409 = vmatprep.subr.mxu0 0.0
      %3410 = vmatpush1.msra.mxu0 %v3332
      %3411 = vmatprep.subr.mxu0 0.0
      %3412 = vmatpush1.msra.mxu0 %v3333
      %3413 = vmatprep.subr.mxu0 0.0
      %3414 = vmatpush1.msra.mxu0 %v3334
      %3415 = vmatprep.subr.mxu0 0.0
      %3416 = vmatpush1.msra.mxu0 %v3335
      %3417 = vmatprep.subr.mxu0 0.0
      %3418 = vmatpush1.msra.mxu0 %v3336
      %3419 = vmatprep.subr.mxu0 0.0
      %3420 = vmatpush1.msra.mxu0 %v3337
      %3421 = vmatprep.subr.mxu0 0.0
      %3422 = vmatpush1.msra.mxu0 %v3338
      %3423 = vmatprep.subr.mxu0 0.0
      %3424 = vmatpush1.msra.mxu0 %v3339
      %3425 = vmatprep.subr.mxu0 0.0
      %3426 = vmatpush1.msra.mxu0 %v3340
      %3427 = vmatprep.subr.mxu0 0.0
      %3428 = vmatpush1.msra.mxu0 %v3341
      %3429 = vmatprep.subr.mxu0 0.0
      %3430 = vmatpush1.msra.mxu0 %v3342
      %3431 = vmatprep.subr.mxu0 0.0
      %3432 = vmatpush1.msra.mxu0 %v3343
      %3433 = vmatprep.subr.mxu0 0.0
      %3434 = vmatpush1.msra.mxu0 %v3344
      %3435 = vmatprep.subr.mxu0 0.0
      %3436 = vmatpush1.msra.mxu0 %v3345
      %3437 = vmatprep.subr.mxu0 0.0
      %3438 = vmatpush1.msra.mxu0 %v3346
      %3439 = vmatprep.subr.mxu0 0.0
      %3440 = vmatpush1.msra.mxu0 %v3347
      %3441 = vmatprep.subr.mxu0 0.0
      %3442 = vmatpush1.msra.mxu0 0.0
      %3443 = vmatprep.subr.mxu0 0.0
      %3444 = vmatpush1.msra.mxu0 0.0
      %3445 = vmatprep.subr.mxu0 0.0
      %3446 = vmatpush1.msra.mxu0 0.0
      %3447 = vmatprep.subr.mxu0 0.0
      %3448 = vmatpush1.msra.mxu0 0.0
      %3449 = vmatprep.subr.mxu0 0.0
      %3450 = vmatpush1.msra.mxu0 0.0
      %3451 = vmatprep.subr.mxu0 0.0
      %3452 = vmatpush1.msra.mxu0 0.0
      %3453 = vmatprep.subr.mxu0 0.0
      %3454 = vmatpush1.msra.mxu0 0.0
      %3455 = vmatprep.subr.mxu0 0.0
      %3456 = vmatpush1.msra.mxu0 0.0
      %3457 = vmatprep.mubr.f32.mxu0 %v3391
      %3458 = vmatmul.mubr.f32.gmra.mrb[0].mxu0 %v3387
      %v3459 = vpop.f32.mrb[0].mxu0
      %v3460 = vadd.f32 0.0, %v3459
      %v3461 = vpop.f32.mrb[0].mxu0
      %3462 = vdwg.mxu0
      %v3463 = vmul.f32 %v3324, %v3324
      %v3464 = vmul.f32 %v3325, %v3325
      %v3465 = vmul.f32 %v3326, %v3326
      %v3466 = vmul.f32 %v3327, %v3327
      %v3467 = vmul.f32 %v3328, %v3328
      %v3468 = vmul.f32 %v3329, %v3329
      %v3469 = vmul.f32 %v3330, %v3330
      %v3470 = vmul.f32 %v3331, %v3331
      %v3471 = vmul.f32 %v3332, %v3332
      %v3472 = vmul.f32 %v3333, %v3333
      %v3473 = vmul.f32 %v3334, %v3334
      %v3474 = vmul.f32 %v3335, %v3335
      %v3475 = vmul.f32 %v3336, %v3336
      %v3476 = vmul.f32 %v3337, %v3337
      %v3477 = vmul.f32 %v3338, %v3338
      %v3478 = vmul.f32 %v3339, %v3339
      %v3479 = vmul.f32 %v3340, %v3340
      %v3480 = vmul.f32 %v3341, %v3341
      %v3481 = vmul.f32 %v3342, %v3342
      %v3482 = vmul.f32 %v3343, %v3343
      %v3483 = vmul.f32 %v3344, %v3344
      %v3484 = vmul.f32 %v3345, %v3345
      %v3485 = vmul.f32 %v3346, %v3346
      %v3486 = vmul.f32 %v3347, %v3347
      %3487 = vmatprep.subr.mxu0 0.0
      %3488 = vmatpush1.msra.mxu0 %v3463
      %3489 = vmatprep.subr.mxu0 0.0
      %3490 = vmatpush1.msra.mxu0 %v3464
      %3491 = vmatprep.subr.mxu0 0.0
      %3492 = vmatpush1.msra.mxu0 %v3465
      %3493 = vmatprep.subr.mxu0 0.0
      %3494 = vmatpush1.msra.mxu0 %v3466
      %3495 = vmatprep.subr.mxu0 0.0
      %3496 = vmatpush1.msra.mxu0 %v3467
      %3497 = vmatprep.subr.mxu0 0.0
      %3498 = vmatpush1.msra.mxu0 %v3468
      %3499 = vmatprep.subr.mxu0 0.0
      %3500 = vmatpush1.msra.mxu0 %v3469
      %3501 = vmatprep.subr.mxu0 0.0
      %3502 = vmatpush1.msra.mxu0 %v3470
      %3503 = vmatprep.subr.mxu0 0.0
      %3504 = vmatpush1.msra.mxu0 %v3471
      %3505 = vmatprep.subr.mxu0 0.0
      %3506 = vmatpush1.msra.mxu0 %v3472
      %3507 = vmatprep.subr.mxu0 0.0
      %3508 = vmatpush1.msra.mxu0 %v3473
      %3509 = vmatprep.subr.mxu0 0.0
      %3510 = vmatpush1.msra.mxu0 %v3474
      %3511 = vmatprep.subr.mxu0 0.0
      %3512 = vmatpush1.msra.mxu0 %v3475
      %3513 = vmatprep.subr.mxu0 0.0
      %3514 = vmatpush1.msra.mxu0 %v3476
      %3515 = vmatprep.subr.mxu0 0.0
      %3516 = vmatpush1.msra.mxu0 %v3477
      %3517 = vmatprep.subr.mxu0 0.0
      %3518 = vmatpush1.msra.mxu0 %v3478
      %3519 = vmatprep.subr.mxu0 0.0
      %3520 = vmatpush1.msra.mxu0 %v3479
      %3521 = vmatprep.subr.mxu0 0.0
      %3522 = vmatpush1.msra.mxu0 %v3480
      %3523 = vmatprep.subr.mxu0 0.0
      %3524 = vmatpush1.msra.mxu0 %v3481
      %3525 = vmatprep.subr.mxu0 0.0
      %3526 = vmatpush1.msra.mxu0 %v3482
      %3527 = vmatprep.subr.mxu0 0.0
      %3528 = vmatpush1.msra.mxu0 %v3483
      %3529 = vmatprep.subr.mxu0 0.0
      %3530 = vmatpush1.msra.mxu0 %v3484
      %3531 = vmatprep.subr.mxu0 0.0
      %3532 = vmatpush1.msra.mxu0 %v3485
      %3533 = vmatprep.subr.mxu0 0.0
      %3534 = vmatpush1.msra.mxu0 %v3486
      %3535 = vmatprep.subr.mxu0 0.0
      %3536 = vmatpush1.msra.mxu0 0.0
      %3537 = vmatprep.subr.mxu0 0.0
      %3538 = vmatpush1.msra.mxu0 0.0
      %3539 = vmatprep.subr.mxu0 0.0
      %3540 = vmatpush1.msra.mxu0 0.0
      %3541 = vmatprep.subr.mxu0 0.0
      %3542 = vmatpush1.msra.mxu0 0.0
      %3543 = vmatprep.subr.mxu0 0.0
      %3544 = vmatpush1.msra.mxu0 0.0
      %3545 = vmatprep.subr.mxu0 0.0
      %3546 = vmatpush1.msra.mxu0 0.0
      %3547 = vmatprep.subr.mxu0 0.0
      %3548 = vmatpush1.msra.mxu0 0.0
      %3549 = vmatprep.subr.mxu0 0.0
      %3550 = vmatpush1.msra.mxu0 0.0
      %3551 = vmatprep.mubr.f32.mxu0 %v3391
      %3552 = vmatmul.mubr.f32.gmra.mrb[0].mxu0 %v3387
      %v3553 = vpop.f32.mrb[0].mxu0
      %v3554 = vadd.f32 0.0, %v3553
      %v3555 = vpop.f32.mrb[0].mxu0
      %3556 = vdwg.mxu0
      // Predicated region
      $region61: #{conv_block_forward.4} parent=43 // pred_check
        %p3557 = pneg %p963
      $region62: #{conv_block_forward.4} parent=43 // pred_check_branch
        %3559 = sbr.rel (%p3557) target = $region64
      $region63: #{conv_block_forward.4} parent=43 // pred_region
        %3560 = vst [vmem:[%s456] sm:$0x3] 0.0
      $region64: #{conv_block_forward.4} parent=43 // pred_fallthru
        _
      %v3561 = vld [vmem:[%s456] sm:$0x3]
      %v3563 = vrot.slane %v3554, 7
      %vm3565 = vcmask 1040384
      %v3566 = vsel %vm3565, %v3460, %v3563
      %v3567 = vadd.f32 %v3561, %v3566
      %3568 = vst [vmem:[%s456] sm:$0x3] %v3567
      %v3569 = vpack.c.bf16 %v3325, %v3324
      %v3570 = vpack.c.bf16 %v3327, %v3326
      %v3571 = vpack.c.bf16 %v3329, %v3328
      %v3572 = vpack.c.bf16 %v3331, %v3330
      %v3573 = vpack.c.bf16 %v3333, %v3332
      %v3574 = vpack.c.bf16 %v3335, %v3334
      %v3575 = vpack.c.bf16 %v3337, %v3336
      %v3576 = vpack.c.bf16 %v3339, %v3338
      %v3577 = vpack.c.bf16 %v3341, %v3340
      %v3578 = vpack.c.bf16 %v3343, %v3342
      %v3579 = vpack.c.bf16 %v3345, %v3344
      %v3580 = vpack.c.bf16 %v3347, %v3346
      %v3593 = vunpack.c.l.b16 %v3569
      %v3594 = vunpack.c.h.b16 %v3569
      %v3595 = vunpack.c.l.b16 %v3570
      %v3596 = vunpack.c.h.b16 %v3570
      %v3597 = vunpack.c.l.b16 %v3571
      %v3598 = vunpack.c.h.b16 %v3571
      %v3599 = vunpack.c.l.b16 %v3572
      %v3600 = vunpack.c.h.b16 %v3572
      %v3601 = vunpack.c.l.b16 %v3573
      %v3602 = vunpack.c.h.b16 %v3573
      %v3603 = vunpack.c.l.b16 %v3574
      %v3604 = vunpack.c.h.b16 %v3574
      %v3605 = vunpack.c.l.b16 %v3575
      %v3606 = vunpack.c.h.b16 %v3575
      %v3607 = vunpack.c.l.b16 %v3576
      %v3608 = vunpack.c.h.b16 %v3576
      %v3609 = vunpack.c.l.b16 %v3577
      %v3610 = vunpack.c.h.b16 %v3577
      %v3611 = vunpack.c.l.b16 %v3578
      %v3612 = vunpack.c.h.b16 %v3578
      %v3613 = vunpack.c.l.b16 %v3579
      %v3614 = vunpack.c.h.b16 %v3579
      %v3615 = vunpack.c.l.b16 %v3580
      %v3616 = vunpack.c.h.b16 %v3580
      %v3617 = vpack.c.b16 %v3593, %v3593
      %v3618 = vpack.c.b16 %v3594, %v3594
      %v3619 = vpack.c.b16 %v3595, %v3595
      %v3620 = vpack.c.b16 %v3596, %v3596
      %v3621 = vpack.c.b16 %v3597, %v3597
      %v3622 = vpack.c.b16 %v3598, %v3598
      %v3623 = vpack.c.b16 %v3599, %v3599
      %v3624 = vpack.c.b16 %v3600, %v3600
      %v3625 = vpack.c.b16 %v3601, %v3601
      %v3626 = vpack.c.b16 %v3602, %v3602
      %v3627 = vpack.c.b16 %v3603, %v3603
      %v3628 = vpack.c.b16 %v3604, %v3604
      %v3629 = vpack.c.b16 %v3605, %v3605
      %v3630 = vpack.c.b16 %v3606, %v3606
      %v3631 = vpack.c.b16 %v3607, %v3607
      %v3632 = vpack.c.b16 %v3608, %v3608
      %v3633 = vpack.c.b16 %v3609, %v3609
      %v3634 = vpack.c.b16 %v3610, %v3610
      %v3635 = vpack.c.b16 %v3611, %v3611
      %v3636 = vpack.c.b16 %v3612, %v3612
      %v3637 = vpack.c.b16 %v3613, %v3613
      %v3638 = vpack.c.b16 %v3614, %v3614
      %v3639 = vpack.c.b16 %v3615, %v3615
      %v3640 = vpack.c.b16 %v3616, %v3616
      %3665 = vst [vmem:[%s451] sm:$0xf] %v3617
      %3666 = vst [vmem:[%s451 + $0x4] sm:$0xf] %v3618
      %3667 = vst [vmem:[%s451 + $0x8] sm:$0xf] %v3619
      %3668 = vst [vmem:[%s451 + $0xc] sm:$0xf] %v3620
      %3669 = vst [vmem:[%s451 + $0x10] sm:$0xf] %v3621
      %3670 = vst [vmem:[%s451 + $0x14] sm:$0xf] %v3622
      %3671 = vst [vmem:[%s451 + $0x18] sm:$0xf] %v3623
      %3672 = vst [vmem:[%s451 + $0x1c] sm:$0xf] %v3624
      %3673 = vst [vmem:[%s451 + $0x20] sm:$0xf] %v3625
      %3674 = vst [vmem:[%s451 + $0x24] sm:$0xf] %v3626
      %3675 = vst [vmem:[%s451 + $0x28] sm:$0xf] %v3627
      %3676 = vst [vmem:[%s451 + $0x2c] sm:$0xf] %v3628
      %3677 = vst [vmem:[%s451 + $0x30] sm:$0xf] %v3629
      %3678 = vst [vmem:[%s451 + $0x34] sm:$0xf] %v3630
      %3679 = vst [vmem:[%s451 + $0x38] sm:$0xf] %v3631
      %3680 = vst [vmem:[%s451 + $0x3c] sm:$0xf] %v3632
      %3681 = vst [vmem:[%s451 + $0x40] sm:$0xf] %v3633
      %3682 = vst [vmem:[%s451 + $0x44] sm:$0xf] %v3634
      %3683 = vst [vmem:[%s451 + $0x48] sm:$0xf] %v3635
      %3684 = vst [vmem:[%s451 + $0x4c] sm:$0xf] %v3636
      %3685 = vst [vmem:[%s451 + $0x50] sm:$0xf] %v3637
      %3686 = vst [vmem:[%s451 + $0x54] sm:$0xf] %v3638
      %3687 = vst [vmem:[%s451 + $0x58] sm:$0xf] %v3639
      %3688 = vst [vmem:[%s451 + $0x5c] sm:$0xf] %v3640
      %s3689 = smul.u32 24, %s24
      %p3690 = scmp.lt.s32.totalorder %s23, 1
      %s3691 = scalar_select %p3690, %s23, 1
      %p3692 = scmp.lt.s32.totalorder %s3689, 47
      %s3693 = scalar_select %p3692, %s3689, 47
      %s3694 = smul.addr %s3691, 48
      %s3695 = sadd.s32 %s3693, %s3694
      %s3696 = smul.addr %s3695, 4
      %s3697 = scalar_lea.vmem %s6, %s3696
      %p3698 = scmp.lt.s32.totalorder %s23, 1
      %s3699 = scalar_select %p3698, %s23, 1
      %s3700 = smul.addr %s3699, 2
      %s3701 = scalar_lea.vmem %s7, %s3700
      // Predicated region
      $region65: #{conv_block_forward.4} parent=43 // pred_check
        %p3702 = pneg %p214
      $region66: #{conv_block_forward.4} parent=43 // pred_check_branch
        %3704 = sbr.rel (%p3702) target = $region68
      $region67: #{conv_block_forward.4} parent=43 // pred_region
        %s3705 = smul.u32 24, %s24
      $region68: #{conv_block_forward.4} parent=43 // pred_fallthru
        _
      // Predicated region
      $region69: #{conv_block_forward.4} parent=43 // pred_check
        %p3706 = pneg %p240
      $region70: #{conv_block_forward.4} parent=43 // pred_check_branch
        %3708 = sbr.rel (%p3706) target = $region72
      $region71: #{conv_block_forward.4} parent=43 // pred_region
        _
      $region72: #{conv_block_forward.4} parent=43 // pred_fallthru
        _
    $region44: #{conv_block_forward.4} parent=5 // pred_fallthru
      _
    %p3709 = scmp.le.s32.totalorder 2, %s14
    // Predicated region
    $region73: #{conv_block_forward.4} parent=5 // pred_check
      %p3710 = pneg %p3709
    $region74: #{conv_block_forward.4} parent=5 // pred_check_branch
      %3712 = sbr.rel (%p3710) target = $region76
    $region75: #{conv_block_forward.4} parent=5 // pred_region
      %s3713 = ssub.s32 %s14, 2
      // Predicated region
      $region77: #{conv_block_forward.4} parent=75 // pred_check
        %p3714 = pneg %p220
      $region78: #{conv_block_forward.4} parent=75 // pred_check_branch
        %3716 = sbr.rel (%p3714) target = $region80
      $region79: #{conv_block_forward.4} parent=75 // pred_region
        %s3717 = smul.u32 24, %s26
        %p3718 = scmp.lt.s32.totalorder %s25, 1
        %s3719 = scalar_select %p3718, %s25, 1
        %p3720 = scmp.lt.s32.totalorder %s3717, 47
        %s3721 = scalar_select %p3720, %s3717, 47
        %s3722 = smul.addr %s3719, 48
        %s3723 = sadd.s32 %s3721, %s3722
        %s3724 = smul.addr %s3723, 4
        %s3725 = scalar_lea.vmem %s6, %s3724
      $region80: #{conv_block_forward.4} parent=75 // pred_fallthru
        _
      // Predicated region
      $region81: #{conv_block_forward.4} parent=75 // pred_check
        %p3726 = pneg %p246
      $region82: #{conv_block_forward.4} parent=75 // pred_check_branch
        %3728 = sbr.rel (%p3726) target = $region84
      $region83: #{conv_block_forward.4} parent=75 // pred_region
        %p3729 = scmp.lt.s32.totalorder %s25, 1
        %s3730 = scalar_select %p3729, %s25, 1
        %s3731 = smul.addr %s3730, 2
        %s3732 = scalar_lea.vmem %s7, %s3731
      $region84: #{conv_block_forward.4} parent=75 // pred_fallthru
        _
    $region76: #{conv_block_forward.4} parent=5 // pred_fallthru
      _
  $region6: #{conv_block_forward.4} parent=0 // loop_footer
    %s18 = sadd.s32 1, %s14
  $region7: #{conv_block_forward.4} parent=0 // loop_footer_branch
    %13 = sbr.rel target = $region3
  $region8: #{conv_block_forward.4} parent=0 // loop_exit
    _

</llo_original>
